<compile_context>
chip_gen: v7x
topology: tpu7x:2x2x1
jax: 0.10.0
libtpu: 0.0.40
codegen_flags: <defaults>
</compile_context>

<pallas_src>
import functools
import math

import jax
import jax.numpy as jnp
from jax.experimental import pallas as pl
from jax.experimental.pallas import tpu as pltpu

VMEM_LIMIT_BYTES = 32 * 1024 * 1024                 # fits v5e/v6e/v7x scoped VMEM
CONV_CFG = ((8, 4, 32), (4, 2, 64), (3, 1, 64))     # (kernel, stride, out_channels)


def conv2d_size_out(size, kernel_size, stride):
    return (size - (kernel_size - 1) - 1) // stride + 1


def _round_up(x, m):
    return (x + m - 1) // m * m


# ----------------------------------------------------------------------------
# Pallas kernel 1: fused conv (+bias +ReLU) on a space-to-depth input.
# One image per grid step; the kh*kw patch gather happens in-kernel via
# contiguous static slices, so no inflated im2col array ever touches HBM.
# ----------------------------------------------------------------------------
def _conv_kernel(x_ref, w_ref, b_ref, o_ref, *, q, ho, wo, cexp, relu):
    """x_ref: (1, H', W', cexp) bf16   (H' >= ho+q-1, W' >= wo+q-1)
       w_ref: (q*q*cexp, cout)  bf16   rows ordered (tap, ri, rj, cin)
       b_ref: (1, cout)         f32
       o_ref: (1, ho, wo, cout) bf16
    """
    cout = o_ref.shape[-1]
    bias = b_ref[...]                                        # (1, cout) f32
    for oh in range(ho):                                     # static unrolled loop
        acc = jnp.zeros((wo, cout), jnp.float32)
        for t in range(q * q):                               # conv taps
            qi, qj = divmod(t, q)
            lhs = x_ref[0, oh + qi, pl.ds(qj, wo), :]        # (wo, cexp) bf16
            rhs = w_ref[pl.ds(t * cexp, cexp), :]            # (cexp, cout) bf16
            acc = acc + jnp.dot(lhs, rhs, preferred_element_type=jnp.float32)
        acc = acc + bias
        if relu:
            acc = jnp.maximum(acc, 0.0)
        o_ref[0, oh, :, :] = acc.astype(o_ref.dtype)


def pallas_conv(x, w, b, *, q, ho, wo, relu=True):
    batch, hs, ws, cexp = x.shape
    kp, cout = w.shape
    assert kp == q * q * cexp
    flops = 2 * batch * ho * wo * kp * cout
    bytes_accessed = (x.size * 2 + w.size * 2 + b.size * 4
                      + batch * ho * wo * cout * 2)
    kernel = functools.partial(_conv_kernel, q=q, ho=ho, wo=wo, cexp=cexp,
                               relu=relu)
    return pl.pallas_call(
        kernel,
        out_shape=jax.ShapeDtypeStruct((batch, ho, wo, cout), jnp.bfloat16),
        grid=(batch,),
        in_specs=[
            pl.BlockSpec((1, hs, ws, cexp), lambda i: (i, 0, 0, 0)),
            pl.BlockSpec((kp, cout), lambda i: (0, 0)),
            pl.BlockSpec((1, cout), lambda i: (0, 0)),
        ],
        out_specs=pl.BlockSpec((1, ho, wo, cout), lambda i: (i, 0, 0, 0)),
        compiler_params=pltpu.CompilerParams(
            dimension_semantics=("parallel",),
            vmem_limit_bytes=VMEM_LIMIT_BYTES),
        cost_estimate=pl.CostEstimate(
            flops=flops, transcendentals=0, bytes_accessed=bytes_accessed),
    )(x, w, b)


# ----------------------------------------------------------------------------
# Pallas kernel 2: fused linear head  q = (x @ w1 + b1) @ w2 + b2   (no ReLU,
# matching the reference forward()).  Tiled over the batch dimension.
# ----------------------------------------------------------------------------
def _head_kernel(x_ref, w1_ref, b1_ref, w2_ref, b2_ref, o_ref):
    h = jnp.dot(x_ref[...], w1_ref[...], preferred_element_type=jnp.float32)
    h = h + b1_ref[...]                      # lin1 epilogue in f32
    h = h.astype(w2_ref.dtype)               # back to bf16 for the second MXU pass
    out = jnp.dot(h, w2_ref[...], preferred_element_type=jnp.float32)
    o_ref[...] = (out + b2_ref[...]).astype(o_ref.dtype)


def pallas_head(x, w1, b1, w2, b2, *, tm=128):
    m, f = x.shape
    f2, hdim = w1.shape
    hdim2, a = w2.shape
    assert f == f2 and hdim == hdim2
    tm = min(tm, _round_up(m, 8))
    mp = _round_up(m, tm)
    if mp != m:                              # pad batch rows to a whole tile
        x = jnp.pad(x, ((0, mp - m), (0, 0)))
    flops = 2 * mp * f * hdim + 2 * mp * hdim * a
    bytes_accessed = mp * f * 2 + f * hdim * 2 + hdim * a * 2 + mp * a * 4
    out = pl.pallas_call(
        _head_kernel,
        out_shape=jax.ShapeDtypeStruct((mp, a), jnp.float32),
        grid=(mp // tm,),
        in_specs=[
            pl.BlockSpec((tm, f), lambda i: (i, 0)),
            pl.BlockSpec((f, hdim), lambda i: (0, 0)),
            pl.BlockSpec((1, hdim), lambda i: (0, 0)),
            pl.BlockSpec((hdim, a), lambda i: (0, 0)),
            pl.BlockSpec((1, a), lambda i: (0, 0)),
        ],
        out_specs=pl.BlockSpec((tm, a), lambda i: (i, 0)),
        compiler_params=pltpu.CompilerParams(
            dimension_semantics=("parallel",),
            vmem_limit_bytes=VMEM_LIMIT_BYTES),
        cost_estimate=pl.CostEstimate(
            flops=flops, transcendentals=0, bytes_accessed=bytes_accessed),
    )(x, w1, b1, w2, b2)
    return out[:m]


# ----------------------------------------------------------------------------
# Glue: space-to-depth (one cheap XLA transpose of the raw input — much smaller
# than the old im2col patches), weight packing, param init / preparation.
# ----------------------------------------------------------------------------
def space_to_depth(x, s):
    """(B,H,W,C) -> (B, ceil(H/s), ceil(W/s), s*s*C); turns a stride-s conv into
    a stride-1 conv so the kernel only needs contiguous slices."""
    if s == 1:
        return x
    b, h, w, c = x.shape
    hp, wp = _round_up(h, s), _round_up(w, s)
    if (hp, wp) != (h, w):
        x = jnp.pad(x, ((0, 0), (0, hp - h), (0, wp - w), (0, 0)))
    x = x.reshape(b, hp // s, s, wp // s, s, c)
    x = x.transpose(0, 1, 3, 2, 4, 5)
    return x.reshape(b, hp // s, wp // s, s * s * c)


def pack_conv_weight(w4, stride):
    """(kh, kw, cin, cout) -> (q*q*stride*stride*cin, cout), rows ordered
    tap-major then (ri, rj, cin) to match the space-to-depth channel layout."""
    kh, kw, cin, cout = w4.shape
    q = -(-kh // stride)
    w4 = jnp.pad(w4, ((0, q * stride - kh), (0, q * stride - kw), (0, 0), (0, 0)))
    w4 = w4.reshape(q, stride, q, stride, cin, cout)
    w4 = w4.transpose(0, 2, 1, 3, 4, 5)          # (qi, qj, ri, rj, cin, cout)
    return w4.reshape(q * q * stride * stride * cin, cout)


def init_params(key, input_dims, nr_actions, nr_consecutive_frames):
    """Synthetic parameters in torch-equivalent layouts."""
    h = w = input_dims[0]                 # reference module uses input_dims[0] twice
    keys = iter(jax.random.split(key, 16))

    def u(shape, fan_in):
        bound = 1.0 / math.sqrt(fan_in)
        return jax.random.uniform(next(keys), shape, jnp.float32, -bound, bound)

    params = {}
    cin = nr_consecutive_frames
    for li, (k, s, cout) in enumerate(CONV_CFG, 1):
        fan_in = k * k * cin
        # layout (kh, kw, cin, cout) == torch conv.weight.permute(2, 3, 1, 0)
        params[f"c{li}_w"] = u((k, k, cin, cout), fan_in)
        params[f"c{li}_b"] = u((cout,), fan_in)
        h, w = conv2d_size_out(h, k, s), conv2d_size_out(w, k, s)
        cin = cout
    flattened = h * w * cin
    # lin1 rows in torch.flatten(NCHW) order, i.e. (c, h, w) == torch lin1.weight.T
    params["l1_w"] = u((flattened, 512), flattened)
    params["l1_b"] = u((512,), flattened)
    params["l2_w"] = u((512, nr_actions), 512)
    params["l2_b"] = u((nr_actions,), 512)
    return params, (h, w, cin)


def prepare_params(params, conv_out_hwc):
    """One-time repack: conv weights to space-to-depth layout, lin1 rows permuted
    from torch (C,H,W) flatten order to the kernel's (H,W,C) order, bf16 weights."""
    h3, w3, c3 = conv_out_hwc
    prep = {}
    for li, (k, s, cout) in enumerate(CONV_CFG, 1):
        prep[f"c{li}_w"] = pack_conv_weight(params[f"c{li}_w"], s).astype(jnp.bfloat16)
        prep[f"c{li}_b"] = params[f"c{li}_b"].reshape(1, cout).astype(jnp.float32)
    wl1 = params["l1_w"].reshape(c3, h3, w3, -1).transpose(1, 2, 0, 3)
    prep["l1_w"] = wl1.reshape(h3 * w3 * c3, -1).astype(jnp.bfloat16)
    prep["l1_b"] = params["l1_b"].reshape(1, -1).astype(jnp.float32)
    prep["l2_w"] = params["l2_w"].astype(jnp.bfloat16)
    prep["l2_b"] = params["l2_b"].reshape(1, -1).astype(jnp.float32)
    return prep


# ----------------------------------------------------------------------------
# Forward pass (matches DeepQNetwork.forward semantics).
# ----------------------------------------------------------------------------
def dqn_forward(prep, state_nchw):
    x = jnp.transpose(state_nchw, (0, 2, 3, 1)).astype(jnp.bfloat16)   # NHWC bf16
    for li, (k, s, _cout) in enumerate(CONV_CFG, 1):
        _, h, w, _ = x.shape
        ho, wo = conv2d_size_out(h, k, s), conv2d_size_out(w, k, s)
        q = -(-k // s)
        x = pallas_conv(space_to_depth(x, s),
                        prep[f"c{li}_w"], prep[f"c{li}_b"],
                        q=q, ho=ho, wo=wo, relu=True)
    batch = x.shape[0]
    flat = x.reshape(batch, -1)   # (H,W,C) order; l1_w rows are pre-permuted to match
    return pallas_head(flat, prep["l1_w"], prep["l1_b"], prep["l2_w"], prep["l2_b"])


# Pure-JAX reference (f32) for a correctness check.
def dqn_reference(params, state_nchw):
    x = jnp.transpose(state_nchw, (0, 2, 3, 1)).astype(jnp.float32)
    for li, (k, s, _cout) in enumerate(CONV_CFG, 1):
        x = jax.lax.conv_general_dilated(
            x, params[f"c{li}_w"], window_strides=(s, s), padding="VALID",
            dimension_numbers=("NHWC", "HWIO", "NHWC"))
        x = jnp.maximum(x + params[f"c{li}_b"], 0.0)
    b = x.shape[0]
    flat = jnp.transpose(x, (0, 3, 1, 2)).reshape(b, -1)   # torch flatten of NCHW
    h = flat @ params["l1_w"] + params["l1_b"]
    return h @ params["l2_w"] + params["l2_b"]


# ----------------------------------------------------------------------------
if __name__ == "__main__":
    # Small but valid shapes: input 44x44 -> conv spatial dims 10 -> 4 -> 2,
    # flattened = 2*2*64 = 256.
    B = 2
    NR_FRAMES = 1
    NR_ACTIONS = 4
    INPUT_DIMS = (44, 44)

    key = jax.random.PRNGKey(0)
    kparam, kx = jax.random.split(key)

    params, conv_out = init_params(kparam, INPUT_DIMS, NR_ACTIONS, NR_FRAMES)
    prep = prepare_params(params, conv_out)

    state = jax.random.normal(
        kx, (B, NR_FRAMES, INPUT_DIMS[0], INPUT_DIMS[0]), jnp.float32)

    fwd = jax.jit(dqn_forward)
    q_values = fwd(prep, state)
    jax.block_until_ready(q_values)

    assert q_values.shape == (B, NR_ACTIONS)
    assert q_values.dtype == jnp.float32

    # Correctness check against the pure-JAX f32 reference (loose bf16 tolerance).
    q_ref = jax.jit(dqn_reference)(params, state)
    jax.block_until_ready(q_ref)
    err = float(jnp.max(jnp.abs(q_values - q_ref)))
    scale = float(jnp.max(jnp.abs(q_ref))) + 1e-6
    assert err < 5e-2 * scale + 5e-2, f"mismatch: max|diff|={err}, ref scale={scale}"

    print("KERNEL_OK")
</pallas_src>

<mosaic_0001>
module attributes {stable_mosaic.version = 11 : i64} {
  func.func @_conv_kernel(%arg0: i32, %arg1: memref<1x11x11x16xbf16, #tpu.memory_space<vmem>>, %arg2: memref<64x32xbf16, #tpu.memory_space<vmem>>, %arg3: memref<1x32xf32, #tpu.memory_space<vmem>>, %arg4: memref<1x10x10x32xbf16, #tpu.memory_space<vmem>>) attributes {dimension_semantics = [#tpu.dimension_semantics<parallel>], iteration_bounds = array<i64: 2>, scalar_prefetch = 0 : i64, scratch_operands = 0 : i64, tpu.core_type = #tpu.core_type<tc>, window_params = [{transform_indices = @transform_0, window_bounds = array<i64: 1, 11, 11, 16>}, {pipeline_mode = #tpu.pipeline_mode<synchronous>, transform_indices = @transform_1, window_bounds = array<i64: 64, 32>}, {pipeline_mode = #tpu.pipeline_mode<synchronous>, transform_indices = @transform_2, window_bounds = array<i64: 1, 32>}, {transform_indices = @transform_3, window_bounds = array<i64: 1, 10, 10, 32>}]} {
    %c0 = arith.constant 0 : index
    %c0_0 = arith.constant 0 : index
    %0 = vector.load %arg3[%c0, %c0_0] : memref<1x32xf32, #tpu.memory_space<vmem>>, vector<1x32xf32>
    %cst = arith.constant 0.000000e+00 : f32
    %1 = vector.broadcast %cst : f32 to vector<10x32xf32>
    %c0_1 = arith.constant 0 : index
    %c0_2 = arith.constant 0 : index
    %c0_3 = arith.constant 0 : index
    %c0_4 = arith.constant 0 : index
    %2 = vector.load %arg1[%c0_1, %c0_2, %c0_3, %c0_4] : memref<1x11x11x16xbf16, #tpu.memory_space<vmem>>, vector<1x1x10x16xbf16>
    %3 = vector.shape_cast %2 : vector<1x1x10x16xbf16> to vector<10x16xbf16>
    %c0_5 = arith.constant 0 : index
    %c0_6 = arith.constant 0 : index
    %4 = vector.load %arg2[%c0_5, %c0_6] : memref<64x32xbf16, #tpu.memory_space<vmem>>, vector<16x32xbf16>
    %cst_7 = arith.constant dense<0.000000e+00> : vector<10x32xf32>
    %5 = tpu.matmul %3, %4, %cst_7 {dimension_numbers = #tpu.dot_dimension_numbers<[1], [0], [0], [1], [0, 0, 1, 1], [], []>} : vector<10x16xbf16>, vector<16x32xbf16>, vector<10x32xf32> -> vector<10x32xf32>
    %6 = arith.addf %1, %5 : vector<10x32xf32>
    %c0_8 = arith.constant 0 : index
    %c0_9 = arith.constant 0 : index
    %c1 = arith.constant 1 : index
    %c0_10 = arith.constant 0 : index
    %7 = vector.load %arg1[%c0_8, %c0_9, %c1, %c0_10] : memref<1x11x11x16xbf16, #tpu.memory_space<vmem>>, vector<1x1x10x16xbf16>
    %8 = vector.shape_cast %7 : vector<1x1x10x16xbf16> to vector<10x16xbf16>
    %c16 = arith.constant 16 : index
    %c0_11 = arith.constant 0 : index
    %9 = vector.load %arg2[%c16, %c0_11] : memref<64x32xbf16, #tpu.memory_space<vmem>>, vector<16x32xbf16>
    %cst_12 = arith.constant dense<0.000000e+00> : vector<10x32xf32>
    %10 = tpu.matmul %8, %9, %cst_12 {dimension_numbers = #tpu.dot_dimension_numbers<[1], [0], [0], [1], [0, 0, 1, 1], [], []>} : vector<10x16xbf16>, vector<16x32xbf16>, vector<10x32xf32> -> vector<10x32xf32>
    %11 = arith.addf %6, %10 : vector<10x32xf32>
    %c0_13 = arith.constant 0 : index
    %c1_14 = arith.constant 1 : index
    %c0_15 = arith.constant 0 : index
    %c0_16 = arith.constant 0 : index
    %12 = vector.load %arg1[%c0_13, %c1_14, %c0_15, %c0_16] : memref<1x11x11x16xbf16, #tpu.memory_space<vmem>>, vector<1x1x10x16xbf16>
    %13 = vector.shape_cast %12 : vector<1x1x10x16xbf16> to vector<10x16xbf16>
    %c32 = arith.constant 32 : index
    %c0_17 = arith.constant 0 : index
    %14 = vector.load %arg2[%c32, %c0_17] : memref<64x32xbf16, #tpu.memory_space<vmem>>, vector<16x32xbf16>
    %cst_18 = arith.constant dense<0.000000e+00> : vector<10x32xf32>
    %15 = tpu.matmul %13, %14, %cst_18 {dimension_numbers = #tpu.dot_dimension_numbers<[1], [0], [0], [1], [0, 0, 1, 1], [], []>} : vector<10x16xbf16>, vector<16x32xbf16>, vector<10x32xf32> -> vector<10x32xf32>
    %16 = arith.addf %11, %15 : vector<10x32xf32>
    %c0_19 = arith.constant 0 : index
    %c1_20 = arith.constant 1 : index
    %c1_21 = arith.constant 1 : index
    %c0_22 = arith.constant 0 : index
    %17 = vector.load %arg1[%c0_19, %c1_20, %c1_21, %c0_22] : memref<1x11x11x16xbf16, #tpu.memory_space<vmem>>, vector<1x1x10x16xbf16>
    %18 = vector.shape_cast %17 : vector<1x1x10x16xbf16> to vector<10x16xbf16>
    %c48 = arith.constant 48 : index
    %c0_23 = arith.constant 0 : index
    %19 = vector.load %arg2[%c48, %c0_23] : memref<64x32xbf16, #tpu.memory_space<vmem>>, vector<16x32xbf16>
    %cst_24 = arith.constant dense<0.000000e+00> : vector<10x32xf32>
    %20 = tpu.matmul %18, %19, %cst_24 {dimension_numbers = #tpu.dot_dimension_numbers<[1], [0], [0], [1], [0, 0, 1, 1], [], []>} : vector<10x16xbf16>, vector<16x32xbf16>, vector<10x32xf32> -> vector<10x32xf32>
    %21 = arith.addf %16, %20 : vector<10x32xf32>
    %22 = vector.broadcast %0 : vector<1x32xf32> to vector<10x32xf32>
    %23 = arith.addf %21, %22 : vector<10x32xf32>
    %cst_25 = arith.constant 0.000000e+00 : f32
    %24 = vector.broadcast %cst_25 : f32 to vector<10x32xf32>
    %25 = arith.maximumf %23, %24 : vector<10x32xf32>
    %26 = arith.truncf %25 : vector<10x32xf32> to vector<10x32xbf16>
    %c0_26 = arith.constant 0 : index
    %c0_27 = arith.constant 0 : index
    %c0_28 = arith.constant 0 : index
    %c0_29 = arith.constant 0 : index
    %27 = vector.load %arg4[%c0_26, %c0_27, %c0_28, %c0_29] : memref<1x10x10x32xbf16, #tpu.memory_space<vmem>>, vector<1x1x10x32xbf16>
    %28 = vector.shape_cast %27 : vector<1x1x10x32xbf16> to vector<10x32xbf16>
    %29 = vector.shape_cast %26 : vector<10x32xbf16> to vector<1x1x10x32xbf16>
    tpu.vector_store %arg4[%c0_26, %c0_27, %c0_28, %c0_29], %29 {strides = array<i32>} : memref<1x10x10x32xbf16, #tpu.memory_space<vmem>>, vector<1x1x10x32xbf16>,
    %cst_30 = arith.constant 0.000000e+00 : f32
    %30 = vector.broadcast %cst_30 : f32 to vector<10x32xf32>
    %c0_31 = arith.constant 0 : index
    %c1_32 = arith.constant 1 : index
    %c0_33 = arith.constant 0 : index
    %c0_34 = arith.constant 0 : index
    %31 = vector.load %arg1[%c0_31, %c1_32, %c0_33, %c0_34] : memref<1x11x11x16xbf16, #tpu.memory_space<vmem>>, vector<1x1x10x16xbf16>
    %32 = vector.shape_cast %31 : vector<1x1x10x16xbf16> to vector<10x16xbf16>
    %c0_35 = arith.constant 0 : index
    %c0_36 = arith.constant 0 : index
    %33 = vector.load %arg2[%c0_35, %c0_36] : memref<64x32xbf16, #tpu.memory_space<vmem>>, vector<16x32xbf16>
    %cst_37 = arith.constant dense<0.000000e+00> : vector<10x32xf32>
    %34 = tpu.matmul %32, %33, %cst_37 {dimension_numbers = #tpu.dot_dimension_numbers<[1], [0], [0], [1], [0, 0, 1, 1], [], []>} : vector<10x16xbf16>, vector<16x32xbf16>, vector<10x32xf32> -> vector<10x32xf32>
    %35 = arith.addf %30, %34 : vector<10x32xf32>
    %c0_38 = arith.constant 0 : index
    %c1_39 = arith.constant 1 : index
    %c1_40 = arith.constant 1 : index
    %c0_41 = arith.constant 0 : index
    %36 = vector.load %arg1[%c0_38, %c1_39, %c1_40, %c0_41] : memref<1x11x11x16xbf16, #tpu.memory_space<vmem>>, vector<1x1x10x16xbf16>
    %37 = vector.shape_cast %36 : vector<1x1x10x16xbf16> to vector<10x16xbf16>
    %c16_42 = arith.constant 16 : index
    %c0_43 = arith.constant 0 : index
    %38 = vector.load %arg2[%c16_42, %c0_43] : memref<64x32xbf16, #tpu.memory_space<vmem>>, vector<16x32xbf16>
    %cst_44 = arith.constant dense<0.000000e+00> : vector<10x32xf32>
    %39 = tpu.matmul %37, %38, %cst_44 {dimension_numbers = #tpu.dot_dimension_numbers<[1], [0], [0], [1], [0, 0, 1, 1], [], []>} : vector<10x16xbf16>, vector<16x32xbf16>, vector<10x32xf32> -> vector<10x32xf32>
    %40 = arith.addf %35, %39 : vector<10x32xf32>
    %c0_45 = arith.constant 0 : index
    %c2 = arith.constant 2 : index
    %c0_46 = arith.constant 0 : index
    %c0_47 = arith.constant 0 : index
    %41 = vector.load %arg1[%c0_45, %c2, %c0_46, %c0_47] : memref<1x11x11x16xbf16, #tpu.memory_space<vmem>>, vector<1x1x10x16xbf16>
    %42 = vector.shape_cast %41 : vector<1x1x10x16xbf16> to vector<10x16xbf16>
    %c32_48 = arith.constant 32 : index
    %c0_49 = arith.constant 0 : index
    %43 = vector.load %arg2[%c32_48, %c0_49] : memref<64x32xbf16, #tpu.memory_space<vmem>>, vector<16x32xbf16>
    %cst_50 = arith.constant dense<0.000000e+00> : vector<10x32xf32>
    %44 = tpu.matmul %42, %43, %cst_50 {dimension_numbers = #tpu.dot_dimension_numbers<[1], [0], [0], [1], [0, 0, 1, 1], [], []>} : vector<10x16xbf16>, vector<16x32xbf16>, vector<10x32xf32> -> vector<10x32xf32>
    %45 = arith.addf %40, %44 : vector<10x32xf32>
    %c0_51 = arith.constant 0 : index
    %c2_52 = arith.constant 2 : index
    %c1_53 = arith.constant 1 : index
    %c0_54 = arith.constant 0 : index
    %46 = vector.load %arg1[%c0_51, %c2_52, %c1_53, %c0_54] : memref<1x11x11x16xbf16, #tpu.memory_space<vmem>>, vector<1x1x10x16xbf16>
    %47 = vector.shape_cast %46 : vector<1x1x10x16xbf16> to vector<10x16xbf16>
    %c48_55 = arith.constant 48 : index
    %c0_56 = arith.constant 0 : index
    %48 = vector.load %arg2[%c48_55, %c0_56] : memref<64x32xbf16, #tpu.memory_space<vmem>>, vector<16x32xbf16>
    %cst_57 = arith.constant dense<0.000000e+00> : vector<10x32xf32>
    %49 = tpu.matmul %47, %48, %cst_57 {dimension_numbers = #tpu.dot_dimension_numbers<[1], [0], [0], [1], [0, 0, 1, 1], [], []>} : vector<10x16xbf16>, vector<16x32xbf16>, vector<10x32xf32> -> vector<10x32xf32>
    %50 = arith.addf %45, %49 : vector<10x32xf32>
    %51 = vector.broadcast %0 : vector<1x32xf32> to vector<10x32xf32>
    %52 = arith.addf %50, %51 : vector<10x32xf32>
    %cst_58 = arith.constant 0.000000e+00 : f32
    %53 = vector.broadcast %cst_58 : f32 to vector<10x32xf32>
    %54 = arith.maximumf %52, %53 : vector<10x32xf32>
    %55 = arith.truncf %54 : vector<10x32xf32> to vector<10x32xbf16>
    %c0_59 = arith.constant 0 : index
    %c1_60 = arith.constant 1 : index
    %c0_61 = arith.constant 0 : index
    %c0_62 = arith.constant 0 : index
    %56 = vector.load %arg4[%c0_59, %c1_60, %c0_61, %c0_62] : memref<1x10x10x32xbf16, #tpu.memory_space<vmem>>, vector<1x1x10x32xbf16>
    %57 = vector.shape_cast %56 : vector<1x1x10x32xbf16> to vector<10x32xbf16>
    %58 = vector.shape_cast %55 : vector<10x32xbf16> to vector<1x1x10x32xbf16>
    tpu.vector_store %arg4[%c0_59, %c1_60, %c0_61, %c0_62], %58 {strides = array<i32>} : memref<1x10x10x32xbf16, #tpu.memory_space<vmem>>, vector<1x1x10x32xbf16>,
    %cst_63 = arith.constant 0.000000e+00 : f32
    %59 = vector.broadcast %cst_63 : f32 to vector<10x32xf32>
    %c0_64 = arith.constant 0 : index
    %c2_65 = arith.constant 2 : index
    %c0_66 = arith.constant 0 : index
    %c0_67 = arith.constant 0 : index
    %60 = vector.load %arg1[%c0_64, %c2_65, %c0_66, %c0_67] : memref<1x11x11x16xbf16, #tpu.memory_space<vmem>>, vector<1x1x10x16xbf16>
    %61 = vector.shape_cast %60 : vector<1x1x10x16xbf16> to vector<10x16xbf16>
    %c0_68 = arith.constant 0 : index
    %c0_69 = arith.constant 0 : index
    %62 = vector.load %arg2[%c0_68, %c0_69] : memref<64x32xbf16, #tpu.memory_space<vmem>>, vector<16x32xbf16>
    %cst_70 = arith.constant dense<0.000000e+00> : vector<10x32xf32>
    %63 = tpu.matmul %61, %62, %cst_70 {dimension_numbers = #tpu.dot_dimension_numbers<[1], [0], [0], [1], [0, 0, 1, 1], [], []>} : vector<10x16xbf16>, vector<16x32xbf16>, vector<10x32xf32> -> vector<10x32xf32>
    %64 = arith.addf %59, %63 : vector<10x32xf32>
    %c0_71 = arith.constant 0 : index
    %c2_72 = arith.constant 2 : index
    %c1_73 = arith.constant 1 : index
    %c0_74 = arith.constant 0 : index
    %65 = vector.load %arg1[%c0_71, %c2_72, %c1_73, %c0_74] : memref<1x11x11x16xbf16, #tpu.memory_space<vmem>>, vector<1x1x10x16xbf16>
    %66 = vector.shape_cast %65 : vector<1x1x10x16xbf16> to vector<10x16xbf16>
    %c16_75 = arith.constant 16 : index
    %c0_76 = arith.constant 0 : index
    %67 = vector.load %arg2[%c16_75, %c0_76] : memref<64x32xbf16, #tpu.memory_space<vmem>>, vector<16x32xbf16>
    %cst_77 = arith.constant dense<0.000000e+00> : vector<10x32xf32>
    %68 = tpu.matmul %66, %67, %cst_77 {dimension_numbers = #tpu.dot_dimension_numbers<[1], [0], [0], [1], [0, 0, 1, 1], [], []>} : vector<10x16xbf16>, vector<16x32xbf16>, vector<10x32xf32> -> vector<10x32xf32>
    %69 = arith.addf %64, %68 : vector<10x32xf32>
    %c0_78 = arith.constant 0 : index
    %c3 = arith.constant 3 : index
    %c0_79 = arith.constant 0 : index
    %c0_80 = arith.constant 0 : index
    %70 = vector.load %arg1[%c0_78, %c3, %c0_79, %c0_80] : memref<1x11x11x16xbf16, #tpu.memory_space<vmem>>, vector<1x1x10x16xbf16>
    %71 = vector.shape_cast %70 : vector<1x1x10x16xbf16> to vector<10x16xbf16>
    %c32_81 = arith.constant 32 : index
    %c0_82 = arith.constant 0 : index
    %72 = vector.load %arg2[%c32_81, %c0_82] : memref<64x32xbf16, #tpu.memory_space<vmem>>, vector<16x32xbf16>
    %cst_83 = arith.constant dense<0.000000e+00> : vector<10x32xf32>
    %73 = tpu.matmul %71, %72, %cst_83 {dimension_numbers = #tpu.dot_dimension_numbers<[1], [0], [0], [1], [0, 0, 1, 1], [], []>} : vector<10x16xbf16>, vector<16x32xbf16>, vector<10x32xf32> -> vector<10x32xf32>
    %74 = arith.addf %69, %73 : vector<10x32xf32>
    %c0_84 = arith.constant 0 : index
    %c3_85 = arith.constant 3 : index
    %c1_86 = arith.constant 1 : index
    %c0_87 = arith.constant 0 : index
    %75 = vector.load %arg1[%c0_84, %c3_85, %c1_86, %c0_87] : memref<1x11x11x16xbf16, #tpu.memory_space<vmem>>, vector<1x1x10x16xbf16>
    %76 = vector.shape_cast %75 : vector<1x1x10x16xbf16> to vector<10x16xbf16>
    %c48_88 = arith.constant 48 : index
    %c0_89 = arith.constant 0 : index
    %77 = vector.load %arg2[%c48_88, %c0_89] : memref<64x32xbf16, #tpu.memory_space<vmem>>, vector<16x32xbf16>
    %cst_90 = arith.constant dense<0.000000e+00> : vector<10x32xf32>
    %78 = tpu.matmul %76, %77, %cst_90 {dimension_numbers = #tpu.dot_dimension_numbers<[1], [0], [0], [1], [0, 0, 1, 1], [], []>} : vector<10x16xbf16>, vector<16x32xbf16>, vector<10x32xf32> -> vector<10x32xf32>
    %79 = arith.addf %74, %78 : vector<10x32xf32>
    %80 = vector.broadcast %0 : vector<1x32xf32> to vector<10x32xf32>
    %81 = arith.addf %79, %80 : vector<10x32xf32>
    %cst_91 = arith.constant 0.000000e+00 : f32
    %82 = vector.broadcast %cst_91 : f32 to vector<10x32xf32>
    %83 = arith.maximumf %81, %82 : vector<10x32xf32>
    %84 = arith.truncf %83 : vector<10x32xf32> to vector<10x32xbf16>
    %c0_92 = arith.constant 0 : index
    %c2_93 = arith.constant 2 : index
    %c0_94 = arith.constant 0 : index
    %c0_95 = arith.constant 0 : index
    %85 = vector.load %arg4[%c0_92, %c2_93, %c0_94, %c0_95] : memref<1x10x10x32xbf16, #tpu.memory_space<vmem>>, vector<1x1x10x32xbf16>
    %86 = vector.shape_cast %85 : vector<1x1x10x32xbf16> to vector<10x32xbf16>
    %87 = vector.shape_cast %84 : vector<10x32xbf16> to vector<1x1x10x32xbf16>
    tpu.vector_store %arg4[%c0_92, %c2_93, %c0_94, %c0_95], %87 {strides = array<i32>} : memref<1x10x10x32xbf16, #tpu.memory_space<vmem>>, vector<1x1x10x32xbf16>,
    %cst_96 = arith.constant 0.000000e+00 : f32
    %88 = vector.broadcast %cst_96 : f32 to vector<10x32xf32>
    %c0_97 = arith.constant 0 : index
    %c3_98 = arith.constant 3 : index
    %c0_99 = arith.constant 0 : index
    %c0_100 = arith.constant 0 : index
    %89 = vector.load %arg1[%c0_97, %c3_98, %c0_99, %c0_100] : memref<1x11x11x16xbf16, #tpu.memory_space<vmem>>, vector<1x1x10x16xbf16>
    %90 = vector.shape_cast %89 : vector<1x1x10x16xbf16> to vector<10x16xbf16>
    %c0_101 = arith.constant 0 : index
    %c0_102 = arith.constant 0 : index
    %91 = vector.load %arg2[%c0_101, %c0_102] : memref<64x32xbf16, #tpu.memory_space<vmem>>, vector<16x32xbf16>
    %cst_103 = arith.constant dense<0.000000e+00> : vector<10x32xf32>
    %92 = tpu.matmul %90, %91, %cst_103 {dimension_numbers = #tpu.dot_dimension_numbers<[1], [0], [0], [1], [0, 0, 1, 1], [], []>} : vector<10x16xbf16>, vector<16x32xbf16>, vector<10x32xf32> -> vector<10x32xf32>
    %93 = arith.addf %88, %92 : vector<10x32xf32>
    %c0_104 = arith.constant 0 : index
    %c3_105 = arith.constant 3 : index
    %c1_106 = arith.constant 1 : index
    %c0_107 = arith.constant 0 : index
    %94 = vector.load %arg1[%c0_104, %c3_105, %c1_106, %c0_107] : memref<1x11x11x16xbf16, #tpu.memory_space<vmem>>, vector<1x1x10x16xbf16>
    %95 = vector.shape_cast %94 : vector<1x1x10x16xbf16> to vector<10x16xbf16>
    %c16_108 = arith.constant 16 : index
    %c0_109 = arith.constant 0 : index
    %96 = vector.load %arg2[%c16_108, %c0_109] : memref<64x32xbf16, #tpu.memory_space<vmem>>, vector<16x32xbf16>
    %cst_110 = arith.constant dense<0.000000e+00> : vector<10x32xf32>
    %97 = tpu.matmul %95, %96, %cst_110 {dimension_numbers = #tpu.dot_dimension_numbers<[1], [0], [0], [1], [0, 0, 1, 1], [], []>} : vector<10x16xbf16>, vector<16x32xbf16>, vector<10x32xf32> -> vector<10x32xf32>
    %98 = arith.addf %93, %97 : vector<10x32xf32>
    %c0_111 = arith.constant 0 : index
    %c4 = arith.constant 4 : index
    %c0_112 = arith.constant 0 : index
    %c0_113 = arith.constant 0 : index
    %99 = vector.load %arg1[%c0_111, %c4, %c0_112, %c0_113] : memref<1x11x11x16xbf16, #tpu.memory_space<vmem>>, vector<1x1x10x16xbf16>
    %100 = vector.shape_cast %99 : vector<1x1x10x16xbf16> to vector<10x16xbf16>
    %c32_114 = arith.constant 32 : index
    %c0_115 = arith.constant 0 : index
    %101 = vector.load %arg2[%c32_114, %c0_115] : memref<64x32xbf16, #tpu.memory_space<vmem>>, vector<16x32xbf16>
    %cst_116 = arith.constant dense<0.000000e+00> : vector<10x32xf32>
    %102 = tpu.matmul %100, %101, %cst_116 {dimension_numbers = #tpu.dot_dimension_numbers<[1], [0], [0], [1], [0, 0, 1, 1], [], []>} : vector<10x16xbf16>, vector<16x32xbf16>, vector<10x32xf32> -> vector<10x32xf32>
    %103 = arith.addf %98, %102 : vector<10x32xf32>
    %c0_117 = arith.constant 0 : index
    %c4_118 = arith.constant 4 : index
    %c1_119 = arith.constant 1 : index
    %c0_120 = arith.constant 0 : index
    %104 = vector.load %arg1[%c0_117, %c4_118, %c1_119, %c0_120] : memref<1x11x11x16xbf16, #tpu.memory_space<vmem>>, vector<1x1x10x16xbf16>
    %105 = vector.shape_cast %104 : vector<1x1x10x16xbf16> to vector<10x16xbf16>
    %c48_121 = arith.constant 48 : index
    %c0_122 = arith.constant 0 : index
    %106 = vector.load %arg2[%c48_121, %c0_122] : memref<64x32xbf16, #tpu.memory_space<vmem>>, vector<16x32xbf16>
    %cst_123 = arith.constant dense<0.000000e+00> : vector<10x32xf32>
    %107 = tpu.matmul %105, %106, %cst_123 {dimension_numbers = #tpu.dot_dimension_numbers<[1], [0], [0], [1], [0, 0, 1, 1], [], []>} : vector<10x16xbf16>, vector<16x32xbf16>, vector<10x32xf32> -> vector<10x32xf32>
    %108 = arith.addf %103, %107 : vector<10x32xf32>
    %109 = vector.broadcast %0 : vector<1x32xf32> to vector<10x32xf32>
    %110 = arith.addf %108, %109 : vector<10x32xf32>
    %cst_124 = arith.constant 0.000000e+00 : f32
    %111 = vector.broadcast %cst_124 : f32 to vector<10x32xf32>
    %112 = arith.maximumf %110, %111 : vector<10x32xf32>
    %113 = arith.truncf %112 : vector<10x32xf32> to vector<10x32xbf16>
    %c0_125 = arith.constant 0 : index
    %c3_126 = arith.constant 3 : index
    %c0_127 = arith.constant 0 : index
    %c0_128 = arith.constant 0 : index
    %114 = vector.load %arg4[%c0_125, %c3_126, %c0_127, %c0_128] : memref<1x10x10x32xbf16, #tpu.memory_space<vmem>>, vector<1x1x10x32xbf16>
    %115 = vector.shape_cast %114 : vector<1x1x10x32xbf16> to vector<10x32xbf16>
    %116 = vector.shape_cast %113 : vector<10x32xbf16> to vector<1x1x10x32xbf16>
    tpu.vector_store %arg4[%c0_125, %c3_126, %c0_127, %c0_128], %116 {strides = array<i32>} : memref<1x10x10x32xbf16, #tpu.memory_space<vmem>>, vector<1x1x10x32xbf16>,
    %cst_129 = arith.constant 0.000000e+00 : f32
    %117 = vector.broadcast %cst_129 : f32 to vector<10x32xf32>
    %c0_130 = arith.constant 0 : index
    %c4_131 = arith.constant 4 : index
    %c0_132 = arith.constant 0 : index
    %c0_133 = arith.constant 0 : index
    %118 = vector.load %arg1[%c0_130, %c4_131, %c0_132, %c0_133] : memref<1x11x11x16xbf16, #tpu.memory_space<vmem>>, vector<1x1x10x16xbf16>
    %119 = vector.shape_cast %118 : vector<1x1x10x16xbf16> to vector<10x16xbf16>
    %c0_134 = arith.constant 0 : index
    %c0_135 = arith.constant 0 : index
    %120 = vector.load %arg2[%c0_134, %c0_135] : memref<64x32xbf16, #tpu.memory_space<vmem>>, vector<16x32xbf16>
    %cst_136 = arith.constant dense<0.000000e+00> : vector<10x32xf32>
    %121 = tpu.matmul %119, %120, %cst_136 {dimension_numbers = #tpu.dot_dimension_numbers<[1], [0], [0], [1], [0, 0, 1, 1], [], []>} : vector<10x16xbf16>, vector<16x32xbf16>, vector<10x32xf32> -> vector<10x32xf32>
    %122 = arith.addf %117, %121 : vector<10x32xf32>
    %c0_137 = arith.constant 0 : index
    %c4_138 = arith.constant 4 : index
    %c1_139 = arith.constant 1 : index
    %c0_140 = arith.constant 0 : index
    %123 = vector.load %arg1[%c0_137, %c4_138, %c1_139, %c0_140] : memref<1x11x11x16xbf16, #tpu.memory_space<vmem>>, vector<1x1x10x16xbf16>
    %124 = vector.shape_cast %123 : vector<1x1x10x16xbf16> to vector<10x16xbf16>
    %c16_141 = arith.constant 16 : index
    %c0_142 = arith.constant 0 : index
    %125 = vector.load %arg2[%c16_141, %c0_142] : memref<64x32xbf16, #tpu.memory_space<vmem>>, vector<16x32xbf16>
    %cst_143 = arith.constant dense<0.000000e+00> : vector<10x32xf32>
    %126 = tpu.matmul %124, %125, %cst_143 {dimension_numbers = #tpu.dot_dimension_numbers<[1], [0], [0], [1], [0, 0, 1, 1], [], []>} : vector<10x16xbf16>, vector<16x32xbf16>, vector<10x32xf32> -> vector<10x32xf32>
    %127 = arith.addf %122, %126 : vector<10x32xf32>
    %c0_144 = arith.constant 0 : index
    %c5 = arith.constant 5 : index
    %c0_145 = arith.constant 0 : index
    %c0_146 = arith.constant 0 : index
    %128 = vector.load %arg1[%c0_144, %c5, %c0_145, %c0_146] : memref<1x11x11x16xbf16, #tpu.memory_space<vmem>>, vector<1x1x10x16xbf16>
    %129 = vector.shape_cast %128 : vector<1x1x10x16xbf16> to vector<10x16xbf16>
    %c32_147 = arith.constant 32 : index
    %c0_148 = arith.constant 0 : index
    %130 = vector.load %arg2[%c32_147, %c0_148] : memref<64x32xbf16, #tpu.memory_space<vmem>>, vector<16x32xbf16>
    %cst_149 = arith.constant dense<0.000000e+00> : vector<10x32xf32>
    %131 = tpu.matmul %129, %130, %cst_149 {dimension_numbers = #tpu.dot_dimension_numbers<[1], [0], [0], [1], [0, 0, 1, 1], [], []>} : vector<10x16xbf16>, vector<16x32xbf16>, vector<10x32xf32> -> vector<10x32xf32>
    %132 = arith.addf %127, %131 : vector<10x32xf32>
    %c0_150 = arith.constant 0 : index
    %c5_151 = arith.constant 5 : index
    %c1_152 = arith.constant 1 : index
    %c0_153 = arith.constant 0 : index
    %133 = vector.load %arg1[%c0_150, %c5_151, %c1_152, %c0_153] : memref<1x11x11x16xbf16, #tpu.memory_space<vmem>>, vector<1x1x10x16xbf16>
    %134 = vector.shape_cast %133 : vector<1x1x10x16xbf16> to vector<10x16xbf16>
    %c48_154 = arith.constant 48 : index
    %c0_155 = arith.constant 0 : index
    %135 = vector.load %arg2[%c48_154, %c0_155] : memref<64x32xbf16, #tpu.memory_space<vmem>>, vector<16x32xbf16>
    %cst_156 = arith.constant dense<0.000000e+00> : vector<10x32xf32>
    %136 = tpu.matmul %134, %135, %cst_156 {dimension_numbers = #tpu.dot_dimension_numbers<[1], [0], [0], [1], [0, 0, 1, 1], [], []>} : vector<10x16xbf16>, vector<16x32xbf16>, vector<10x32xf32> -> vector<10x32xf32>
    %137 = arith.addf %132, %136 : vector<10x32xf32>
    %138 = vector.broadcast %0 : vector<1x32xf32> to vector<10x32xf32>
    %139 = arith.addf %137, %138 : vector<10x32xf32>
    %cst_157 = arith.constant 0.000000e+00 : f32
    %140 = vector.broadcast %cst_157 : f32 to vector<10x32xf32>
    %141 = arith.maximumf %139, %140 : vector<10x32xf32>
    %142 = arith.truncf %141 : vector<10x32xf32> to vector<10x32xbf16>
    %c0_158 = arith.constant 0 : index
    %c4_159 = arith.constant 4 : index
    %c0_160 = arith.constant 0 : index
    %c0_161 = arith.constant 0 : index
    %143 = vector.load %arg4[%c0_158, %c4_159, %c0_160, %c0_161] : memref<1x10x10x32xbf16, #tpu.memory_space<vmem>>, vector<1x1x10x32xbf16>
    %144 = vector.shape_cast %143 : vector<1x1x10x32xbf16> to vector<10x32xbf16>
    %145 = vector.shape_cast %142 : vector<10x32xbf16> to vector<1x1x10x32xbf16>
    tpu.vector_store %arg4[%c0_158, %c4_159, %c0_160, %c0_161], %145 {strides = array<i32>} : memref<1x10x10x32xbf16, #tpu.memory_space<vmem>>, vector<1x1x10x32xbf16>,
    %cst_162 = arith.constant 0.000000e+00 : f32
    %146 = vector.broadcast %cst_162 : f32 to vector<10x32xf32>
    %c0_163 = arith.constant 0 : index
    %c5_164 = arith.constant 5 : index
    %c0_165 = arith.constant 0 : index
    %c0_166 = arith.constant 0 : index
    %147 = vector.load %arg1[%c0_163, %c5_164, %c0_165, %c0_166] : memref<1x11x11x16xbf16, #tpu.memory_space<vmem>>, vector<1x1x10x16xbf16>
    %148 = vector.shape_cast %147 : vector<1x1x10x16xbf16> to vector<10x16xbf16>
    %c0_167 = arith.constant 0 : index
    %c0_168 = arith.constant 0 : index
    %149 = vector.load %arg2[%c0_167, %c0_168] : memref<64x32xbf16, #tpu.memory_space<vmem>>, vector<16x32xbf16>
    %cst_169 = arith.constant dense<0.000000e+00> : vector<10x32xf32>
    %150 = tpu.matmul %148, %149, %cst_169 {dimension_numbers = #tpu.dot_dimension_numbers<[1], [0], [0], [1], [0, 0, 1, 1], [], []>} : vector<10x16xbf16>, vector<16x32xbf16>, vector<10x32xf32> -> vector<10x32xf32>
    %151 = arith.addf %146, %150 : vector<10x32xf32>
    %c0_170 = arith.constant 0 : index
    %c5_171 = arith.constant 5 : index
    %c1_172 = arith.constant 1 : index
    %c0_173 = arith.constant 0 : index
    %152 = vector.load %arg1[%c0_170, %c5_171, %c1_172, %c0_173] : memref<1x11x11x16xbf16, #tpu.memory_space<vmem>>, vector<1x1x10x16xbf16>
    %153 = vector.shape_cast %152 : vector<1x1x10x16xbf16> to vector<10x16xbf16>
    %c16_174 = arith.constant 16 : index
    %c0_175 = arith.constant 0 : index
    %154 = vector.load %arg2[%c16_174, %c0_175] : memref<64x32xbf16, #tpu.memory_space<vmem>>, vector<16x32xbf16>
    %cst_176 = arith.constant dense<0.000000e+00> : vector<10x32xf32>
    %155 = tpu.matmul %153, %154, %cst_176 {dimension_numbers = #tpu.dot_dimension_numbers<[1], [0], [0], [1], [0, 0, 1, 1], [], []>} : vector<10x16xbf16>, vector<16x32xbf16>, vector<10x32xf32> -> vector<10x32xf32>
    %156 = arith.addf %151, %155 : vector<10x32xf32>
    %c0_177 = arith.constant 0 : index
    %c6 = arith.constant 6 : index
    %c0_178 = arith.constant 0 : index
    %c0_179 = arith.constant 0 : index
    %157 = vector.load %arg1[%c0_177, %c6, %c0_178, %c0_179] : memref<1x11x11x16xbf16, #tpu.memory_space<vmem>>, vector<1x1x10x16xbf16>
    %158 = vector.shape_cast %157 : vector<1x1x10x16xbf16> to vector<10x16xbf16>
    %c32_180 = arith.constant 32 : index
    %c0_181 = arith.constant 0 : index
    %159 = vector.load %arg2[%c32_180, %c0_181] : memref<64x32xbf16, #tpu.memory_space<vmem>>, vector<16x32xbf16>
    %cst_182 = arith.constant dense<0.000000e+00> : vector<10x32xf32>
    %160 = tpu.matmul %158, %159, %cst_182 {dimension_numbers = #tpu.dot_dimension_numbers<[1], [0], [0], [1], [0, 0, 1, 1], [], []>} : vector<10x16xbf16>, vector<16x32xbf16>, vector<10x32xf32> -> vector<10x32xf32>
    %161 = arith.addf %156, %160 : vector<10x32xf32>
    %c0_183 = arith.constant 0 : index
    %c6_184 = arith.constant 6 : index
    %c1_185 = arith.constant 1 : index
    %c0_186 = arith.constant 0 : index
    %162 = vector.load %arg1[%c0_183, %c6_184, %c1_185, %c0_186] : memref<1x11x11x16xbf16, #tpu.memory_space<vmem>>, vector<1x1x10x16xbf16>
    %163 = vector.shape_cast %162 : vector<1x1x10x16xbf16> to vector<10x16xbf16>
    %c48_187 = arith.constant 48 : index
    %c0_188 = arith.constant 0 : index
    %164 = vector.load %arg2[%c48_187, %c0_188] : memref<64x32xbf16, #tpu.memory_space<vmem>>, vector<16x32xbf16>
    %cst_189 = arith.constant dense<0.000000e+00> : vector<10x32xf32>
    %165 = tpu.matmul %163, %164, %cst_189 {dimension_numbers = #tpu.dot_dimension_numbers<[1], [0], [0], [1], [0, 0, 1, 1], [], []>} : vector<10x16xbf16>, vector<16x32xbf16>, vector<10x32xf32> -> vector<10x32xf32>
    %166 = arith.addf %161, %165 : vector<10x32xf32>
    %167 = vector.broadcast %0 : vector<1x32xf32> to vector<10x32xf32>
    %168 = arith.addf %166, %167 : vector<10x32xf32>
    %cst_190 = arith.constant 0.000000e+00 : f32
    %169 = vector.broadcast %cst_190 : f32 to vector<10x32xf32>
    %170 = arith.maximumf %168, %169 : vector<10x32xf32>
    %171 = arith.truncf %170 : vector<10x32xf32> to vector<10x32xbf16>
    %c0_191 = arith.constant 0 : index
    %c5_192 = arith.constant 5 : index
    %c0_193 = arith.constant 0 : index
    %c0_194 = arith.constant 0 : index
    %172 = vector.load %arg4[%c0_191, %c5_192, %c0_193, %c0_194] : memref<1x10x10x32xbf16, #tpu.memory_space<vmem>>, vector<1x1x10x32xbf16>
    %173 = vector.shape_cast %172 : vector<1x1x10x32xbf16> to vector<10x32xbf16>
    %174 = vector.shape_cast %171 : vector<10x32xbf16> to vector<1x1x10x32xbf16>
    tpu.vector_store %arg4[%c0_191, %c5_192, %c0_193, %c0_194], %174 {strides = array<i32>} : memref<1x10x10x32xbf16, #tpu.memory_space<vmem>>, vector<1x1x10x32xbf16>,
    %cst_195 = arith.constant 0.000000e+00 : f32
    %175 = vector.broadcast %cst_195 : f32 to vector<10x32xf32>
    %c0_196 = arith.constant 0 : index
    %c6_197 = arith.constant 6 : index
    %c0_198 = arith.constant 0 : index
    %c0_199 = arith.constant 0 : index
    %176 = vector.load %arg1[%c0_196, %c6_197, %c0_198, %c0_199] : memref<1x11x11x16xbf16, #tpu.memory_space<vmem>>, vector<1x1x10x16xbf16>
    %177 = vector.shape_cast %176 : vector<1x1x10x16xbf16> to vector<10x16xbf16>
    %c0_200 = arith.constant 0 : index
    %c0_201 = arith.constant 0 : index
    %178 = vector.load %arg2[%c0_200, %c0_201] : memref<64x32xbf16, #tpu.memory_space<vmem>>, vector<16x32xbf16>
    %cst_202 = arith.constant dense<0.000000e+00> : vector<10x32xf32>
    %179 = tpu.matmul %177, %178, %cst_202 {dimension_numbers = #tpu.dot_dimension_numbers<[1], [0], [0], [1], [0, 0, 1, 1], [], []>} : vector<10x16xbf16>, vector<16x32xbf16>, vector<10x32xf32> -> vector<10x32xf32>
    %180 = arith.addf %175, %179 : vector<10x32xf32>
    %c0_203 = arith.constant 0 : index
    %c6_204 = arith.constant 6 : index
    %c1_205 = arith.constant 1 : index
    %c0_206 = arith.constant 0 : index
    %181 = vector.load %arg1[%c0_203, %c6_204, %c1_205, %c0_206] : memref<1x11x11x16xbf16, #tpu.memory_space<vmem>>, vector<1x1x10x16xbf16>
    %182 = vector.shape_cast %181 : vector<1x1x10x16xbf16> to vector<10x16xbf16>
    %c16_207 = arith.constant 16 : index
    %c0_208 = arith.constant 0 : index
    %183 = vector.load %arg2[%c16_207, %c0_208] : memref<64x32xbf16, #tpu.memory_space<vmem>>, vector<16x32xbf16>
    %cst_209 = arith.constant dense<0.000000e+00> : vector<10x32xf32>
    %184 = tpu.matmul %182, %183, %cst_209 {dimension_numbers = #tpu.dot_dimension_numbers<[1], [0], [0], [1], [0, 0, 1, 1], [], []>} : vector<10x16xbf16>, vector<16x32xbf16>, vector<10x32xf32> -> vector<10x32xf32>
    %185 = arith.addf %180, %184 : vector<10x32xf32>
    %c0_210 = arith.constant 0 : index
    %c7 = arith.constant 7 : index
    %c0_211 = arith.constant 0 : index
    %c0_212 = arith.constant 0 : index
    %186 = vector.load %arg1[%c0_210, %c7, %c0_211, %c0_212] : memref<1x11x11x16xbf16, #tpu.memory_space<vmem>>, vector<1x1x10x16xbf16>
    %187 = vector.shape_cast %186 : vector<1x1x10x16xbf16> to vector<10x16xbf16>
    %c32_213 = arith.constant 32 : index
    %c0_214 = arith.constant 0 : index
    %188 = vector.load %arg2[%c32_213, %c0_214] : memref<64x32xbf16, #tpu.memory_space<vmem>>, vector<16x32xbf16>
    %cst_215 = arith.constant dense<0.000000e+00> : vector<10x32xf32>
    %189 = tpu.matmul %187, %188, %cst_215 {dimension_numbers = #tpu.dot_dimension_numbers<[1], [0], [0], [1], [0, 0, 1, 1], [], []>} : vector<10x16xbf16>, vector<16x32xbf16>, vector<10x32xf32> -> vector<10x32xf32>
    %190 = arith.addf %185, %189 : vector<10x32xf32>
    %c0_216 = arith.constant 0 : index
    %c7_217 = arith.constant 7 : index
    %c1_218 = arith.constant 1 : index
    %c0_219 = arith.constant 0 : index
    %191 = vector.load %arg1[%c0_216, %c7_217, %c1_218, %c0_219] : memref<1x11x11x16xbf16, #tpu.memory_space<vmem>>, vector<1x1x10x16xbf16>
    %192 = vector.shape_cast %191 : vector<1x1x10x16xbf16> to vector<10x16xbf16>
    %c48_220 = arith.constant 48 : index
    %c0_221 = arith.constant 0 : index
    %193 = vector.load %arg2[%c48_220, %c0_221] : memref<64x32xbf16, #tpu.memory_space<vmem>>, vector<16x32xbf16>
    %cst_222 = arith.constant dense<0.000000e+00> : vector<10x32xf32>
    %194 = tpu.matmul %192, %193, %cst_222 {dimension_numbers = #tpu.dot_dimension_numbers<[1], [0], [0], [1], [0, 0, 1, 1], [], []>} : vector<10x16xbf16>, vector<16x32xbf16>, vector<10x32xf32> -> vector<10x32xf32>
    %195 = arith.addf %190, %194 : vector<10x32xf32>
    %196 = vector.broadcast %0 : vector<1x32xf32> to vector<10x32xf32>
    %197 = arith.addf %195, %196 : vector<10x32xf32>
    %cst_223 = arith.constant 0.000000e+00 : f32
    %198 = vector.broadcast %cst_223 : f32 to vector<10x32xf32>
    %199 = arith.maximumf %197, %198 : vector<10x32xf32>
    %200 = arith.truncf %199 : vector<10x32xf32> to vector<10x32xbf16>
    %c0_224 = arith.constant 0 : index
    %c6_225 = arith.constant 6 : index
    %c0_226 = arith.constant 0 : index
    %c0_227 = arith.constant 0 : index
    %201 = vector.load %arg4[%c0_224, %c6_225, %c0_226, %c0_227] : memref<1x10x10x32xbf16, #tpu.memory_space<vmem>>, vector<1x1x10x32xbf16>
    %202 = vector.shape_cast %201 : vector<1x1x10x32xbf16> to vector<10x32xbf16>
    %203 = vector.shape_cast %200 : vector<10x32xbf16> to vector<1x1x10x32xbf16>
    tpu.vector_store %arg4[%c0_224, %c6_225, %c0_226, %c0_227], %203 {strides = array<i32>} : memref<1x10x10x32xbf16, #tpu.memory_space<vmem>>, vector<1x1x10x32xbf16>,
    %cst_228 = arith.constant 0.000000e+00 : f32
    %204 = vector.broadcast %cst_228 : f32 to vector<10x32xf32>
    %c0_229 = arith.constant 0 : index
    %c7_230 = arith.constant 7 : index
    %c0_231 = arith.constant 0 : index
    %c0_232 = arith.constant 0 : index
    %205 = vector.load %arg1[%c0_229, %c7_230, %c0_231, %c0_232] : memref<1x11x11x16xbf16, #tpu.memory_space<vmem>>, vector<1x1x10x16xbf16>
    %206 = vector.shape_cast %205 : vector<1x1x10x16xbf16> to vector<10x16xbf16>
    %c0_233 = arith.constant 0 : index
    %c0_234 = arith.constant 0 : index
    %207 = vector.load %arg2[%c0_233, %c0_234] : memref<64x32xbf16, #tpu.memory_space<vmem>>, vector<16x32xbf16>
    %cst_235 = arith.constant dense<0.000000e+00> : vector<10x32xf32>
    %208 = tpu.matmul %206, %207, %cst_235 {dimension_numbers = #tpu.dot_dimension_numbers<[1], [0], [0], [1], [0, 0, 1, 1], [], []>} : vector<10x16xbf16>, vector<16x32xbf16>, vector<10x32xf32> -> vector<10x32xf32>
    %209 = arith.addf %204, %208 : vector<10x32xf32>
    %c0_236 = arith.constant 0 : index
    %c7_237 = arith.constant 7 : index
    %c1_238 = arith.constant 1 : index
    %c0_239 = arith.constant 0 : index
    %210 = vector.load %arg1[%c0_236, %c7_237, %c1_238, %c0_239] : memref<1x11x11x16xbf16, #tpu.memory_space<vmem>>, vector<1x1x10x16xbf16>
    %211 = vector.shape_cast %210 : vector<1x1x10x16xbf16> to vector<10x16xbf16>
    %c16_240 = arith.constant 16 : index
    %c0_241 = arith.constant 0 : index
    %212 = vector.load %arg2[%c16_240, %c0_241] : memref<64x32xbf16, #tpu.memory_space<vmem>>, vector<16x32xbf16>
    %cst_242 = arith.constant dense<0.000000e+00> : vector<10x32xf32>
    %213 = tpu.matmul %211, %212, %cst_242 {dimension_numbers = #tpu.dot_dimension_numbers<[1], [0], [0], [1], [0, 0, 1, 1], [], []>} : vector<10x16xbf16>, vector<16x32xbf16>, vector<10x32xf32> -> vector<10x32xf32>
    %214 = arith.addf %209, %213 : vector<10x32xf32>
    %c0_243 = arith.constant 0 : index
    %c8 = arith.constant 8 : index
    %c0_244 = arith.constant 0 : index
    %c0_245 = arith.constant 0 : index
    %215 = vector.load %arg1[%c0_243, %c8, %c0_244, %c0_245] : memref<1x11x11x16xbf16, #tpu.memory_space<vmem>>, vector<1x1x10x16xbf16>
    %216 = vector.shape_cast %215 : vector<1x1x10x16xbf16> to vector<10x16xbf16>
    %c32_246 = arith.constant 32 : index
    %c0_247 = arith.constant 0 : index
    %217 = vector.load %arg2[%c32_246, %c0_247] : memref<64x32xbf16, #tpu.memory_space<vmem>>, vector<16x32xbf16>
    %cst_248 = arith.constant dense<0.000000e+00> : vector<10x32xf32>
    %218 = tpu.matmul %216, %217, %cst_248 {dimension_numbers = #tpu.dot_dimension_numbers<[1], [0], [0], [1], [0, 0, 1, 1], [], []>} : vector<10x16xbf16>, vector<16x32xbf16>, vector<10x32xf32> -> vector<10x32xf32>
    %219 = arith.addf %214, %218 : vector<10x32xf32>
    %c0_249 = arith.constant 0 : index
    %c8_250 = arith.constant 8 : index
    %c1_251 = arith.constant 1 : index
    %c0_252 = arith.constant 0 : index
    %220 = vector.load %arg1[%c0_249, %c8_250, %c1_251, %c0_252] : memref<1x11x11x16xbf16, #tpu.memory_space<vmem>>, vector<1x1x10x16xbf16>
    %221 = vector.shape_cast %220 : vector<1x1x10x16xbf16> to vector<10x16xbf16>
    %c48_253 = arith.constant 48 : index
    %c0_254 = arith.constant 0 : index
    %222 = vector.load %arg2[%c48_253, %c0_254] : memref<64x32xbf16, #tpu.memory_space<vmem>>, vector<16x32xbf16>
    %cst_255 = arith.constant dense<0.000000e+00> : vector<10x32xf32>
    %223 = tpu.matmul %221, %222, %cst_255 {dimension_numbers = #tpu.dot_dimension_numbers<[1], [0], [0], [1], [0, 0, 1, 1], [], []>} : vector<10x16xbf16>, vector<16x32xbf16>, vector<10x32xf32> -> vector<10x32xf32>
    %224 = arith.addf %219, %223 : vector<10x32xf32>
    %225 = vector.broadcast %0 : vector<1x32xf32> to vector<10x32xf32>
    %226 = arith.addf %224, %225 : vector<10x32xf32>
    %cst_256 = arith.constant 0.000000e+00 : f32
    %227 = vector.broadcast %cst_256 : f32 to vector<10x32xf32>
    %228 = arith.maximumf %226, %227 : vector<10x32xf32>
    %229 = arith.truncf %228 : vector<10x32xf32> to vector<10x32xbf16>
    %c0_257 = arith.constant 0 : index
    %c7_258 = arith.constant 7 : index
    %c0_259 = arith.constant 0 : index
    %c0_260 = arith.constant 0 : index
    %230 = vector.load %arg4[%c0_257, %c7_258, %c0_259, %c0_260] : memref<1x10x10x32xbf16, #tpu.memory_space<vmem>>, vector<1x1x10x32xbf16>
    %231 = vector.shape_cast %230 : vector<1x1x10x32xbf16> to vector<10x32xbf16>
    %232 = vector.shape_cast %229 : vector<10x32xbf16> to vector<1x1x10x32xbf16>
    tpu.vector_store %arg4[%c0_257, %c7_258, %c0_259, %c0_260], %232 {strides = array<i32>} : memref<1x10x10x32xbf16, #tpu.memory_space<vmem>>, vector<1x1x10x32xbf16>,
    %cst_261 = arith.constant 0.000000e+00 : f32
    %233 = vector.broadcast %cst_261 : f32 to vector<10x32xf32>
    %c0_262 = arith.constant 0 : index
    %c8_263 = arith.constant 8 : index
    %c0_264 = arith.constant 0 : index
    %c0_265 = arith.constant 0 : index
    %234 = vector.load %arg1[%c0_262, %c8_263, %c0_264, %c0_265] : memref<1x11x11x16xbf16, #tpu.memory_space<vmem>>, vector<1x1x10x16xbf16>
    %235 = vector.shape_cast %234 : vector<1x1x10x16xbf16> to vector<10x16xbf16>
    %c0_266 = arith.constant 0 : index
    %c0_267 = arith.constant 0 : index
    %236 = vector.load %arg2[%c0_266, %c0_267] : memref<64x32xbf16, #tpu.memory_space<vmem>>, vector<16x32xbf16>
    %cst_268 = arith.constant dense<0.000000e+00> : vector<10x32xf32>
    %237 = tpu.matmul %235, %236, %cst_268 {dimension_numbers = #tpu.dot_dimension_numbers<[1], [0], [0], [1], [0, 0, 1, 1], [], []>} : vector<10x16xbf16>, vector<16x32xbf16>, vector<10x32xf32> -> vector<10x32xf32>
    %238 = arith.addf %233, %237 : vector<10x32xf32>
    %c0_269 = arith.constant 0 : index
    %c8_270 = arith.constant 8 : index
    %c1_271 = arith.constant 1 : index
    %c0_272 = arith.constant 0 : index
    %239 = vector.load %arg1[%c0_269, %c8_270, %c1_271, %c0_272] : memref<1x11x11x16xbf16, #tpu.memory_space<vmem>>, vector<1x1x10x16xbf16>
    %240 = vector.shape_cast %239 : vector<1x1x10x16xbf16> to vector<10x16xbf16>
    %c16_273 = arith.constant 16 : index
    %c0_274 = arith.constant 0 : index
    %241 = vector.load %arg2[%c16_273, %c0_274] : memref<64x32xbf16, #tpu.memory_space<vmem>>, vector<16x32xbf16>
    %cst_275 = arith.constant dense<0.000000e+00> : vector<10x32xf32>
    %242 = tpu.matmul %240, %241, %cst_275 {dimension_numbers = #tpu.dot_dimension_numbers<[1], [0], [0], [1], [0, 0, 1, 1], [], []>} : vector<10x16xbf16>, vector<16x32xbf16>, vector<10x32xf32> -> vector<10x32xf32>
    %243 = arith.addf %238, %242 : vector<10x32xf32>
    %c0_276 = arith.constant 0 : index
    %c9 = arith.constant 9 : index
    %c0_277 = arith.constant 0 : index
    %c0_278 = arith.constant 0 : index
    %244 = vector.load %arg1[%c0_276, %c9, %c0_277, %c0_278] : memref<1x11x11x16xbf16, #tpu.memory_space<vmem>>, vector<1x1x10x16xbf16>
    %245 = vector.shape_cast %244 : vector<1x1x10x16xbf16> to vector<10x16xbf16>
    %c32_279 = arith.constant 32 : index
    %c0_280 = arith.constant 0 : index
    %246 = vector.load %arg2[%c32_279, %c0_280] : memref<64x32xbf16, #tpu.memory_space<vmem>>, vector<16x32xbf16>
    %cst_281 = arith.constant dense<0.000000e+00> : vector<10x32xf32>
    %247 = tpu.matmul %245, %246, %cst_281 {dimension_numbers = #tpu.dot_dimension_numbers<[1], [0], [0], [1], [0, 0, 1, 1], [], []>} : vector<10x16xbf16>, vector<16x32xbf16>, vector<10x32xf32> -> vector<10x32xf32>
    %248 = arith.addf %243, %247 : vector<10x32xf32>
    %c0_282 = arith.constant 0 : index
    %c9_283 = arith.constant 9 : index
    %c1_284 = arith.constant 1 : index
    %c0_285 = arith.constant 0 : index
    %249 = vector.load %arg1[%c0_282, %c9_283, %c1_284, %c0_285] : memref<1x11x11x16xbf16, #tpu.memory_space<vmem>>, vector<1x1x10x16xbf16>
    %250 = vector.shape_cast %249 : vector<1x1x10x16xbf16> to vector<10x16xbf16>
    %c48_286 = arith.constant 48 : index
    %c0_287 = arith.constant 0 : index
    %251 = vector.load %arg2[%c48_286, %c0_287] : memref<64x32xbf16, #tpu.memory_space<vmem>>, vector<16x32xbf16>
    %cst_288 = arith.constant dense<0.000000e+00> : vector<10x32xf32>
    %252 = tpu.matmul %250, %251, %cst_288 {dimension_numbers = #tpu.dot_dimension_numbers<[1], [0], [0], [1], [0, 0, 1, 1], [], []>} : vector<10x16xbf16>, vector<16x32xbf16>, vector<10x32xf32> -> vector<10x32xf32>
    %253 = arith.addf %248, %252 : vector<10x32xf32>
    %254 = vector.broadcast %0 : vector<1x32xf32> to vector<10x32xf32>
    %255 = arith.addf %253, %254 : vector<10x32xf32>
    %cst_289 = arith.constant 0.000000e+00 : f32
    %256 = vector.broadcast %cst_289 : f32 to vector<10x32xf32>
    %257 = arith.maximumf %255, %256 : vector<10x32xf32>
    %258 = arith.truncf %257 : vector<10x32xf32> to vector<10x32xbf16>
    %c0_290 = arith.constant 0 : index
    %c8_291 = arith.constant 8 : index
    %c0_292 = arith.constant 0 : index
    %c0_293 = arith.constant 0 : index
    %259 = vector.load %arg4[%c0_290, %c8_291, %c0_292, %c0_293] : memref<1x10x10x32xbf16, #tpu.memory_space<vmem>>, vector<1x1x10x32xbf16>
    %260 = vector.shape_cast %259 : vector<1x1x10x32xbf16> to vector<10x32xbf16>
    %261 = vector.shape_cast %258 : vector<10x32xbf16> to vector<1x1x10x32xbf16>
    tpu.vector_store %arg4[%c0_290, %c8_291, %c0_292, %c0_293], %261 {strides = array<i32>} : memref<1x10x10x32xbf16, #tpu.memory_space<vmem>>, vector<1x1x10x32xbf16>,
    %cst_294 = arith.constant 0.000000e+00 : f32
    %262 = vector.broadcast %cst_294 : f32 to vector<10x32xf32>
    %c0_295 = arith.constant 0 : index
    %c9_296 = arith.constant 9 : index
    %c0_297 = arith.constant 0 : index
    %c0_298 = arith.constant 0 : index
    %263 = vector.load %arg1[%c0_295, %c9_296, %c0_297, %c0_298] : memref<1x11x11x16xbf16, #tpu.memory_space<vmem>>, vector<1x1x10x16xbf16>
    %264 = vector.shape_cast %263 : vector<1x1x10x16xbf16> to vector<10x16xbf16>
    %c0_299 = arith.constant 0 : index
    %c0_300 = arith.constant 0 : index
    %265 = vector.load %arg2[%c0_299, %c0_300] : memref<64x32xbf16, #tpu.memory_space<vmem>>, vector<16x32xbf16>
    %cst_301 = arith.constant dense<0.000000e+00> : vector<10x32xf32>
    %266 = tpu.matmul %264, %265, %cst_301 {dimension_numbers = #tpu.dot_dimension_numbers<[1], [0], [0], [1], [0, 0, 1, 1], [], []>} : vector<10x16xbf16>, vector<16x32xbf16>, vector<10x32xf32> -> vector<10x32xf32>
    %267 = arith.addf %262, %266 : vector<10x32xf32>
    %c0_302 = arith.constant 0 : index
    %c9_303 = arith.constant 9 : index
    %c1_304 = arith.constant 1 : index
    %c0_305 = arith.constant 0 : index
    %268 = vector.load %arg1[%c0_302, %c9_303, %c1_304, %c0_305] : memref<1x11x11x16xbf16, #tpu.memory_space<vmem>>, vector<1x1x10x16xbf16>
    %269 = vector.shape_cast %268 : vector<1x1x10x16xbf16> to vector<10x16xbf16>
    %c16_306 = arith.constant 16 : index
    %c0_307 = arith.constant 0 : index
    %270 = vector.load %arg2[%c16_306, %c0_307] : memref<64x32xbf16, #tpu.memory_space<vmem>>, vector<16x32xbf16>
    %cst_308 = arith.constant dense<0.000000e+00> : vector<10x32xf32>
    %271 = tpu.matmul %269, %270, %cst_308 {dimension_numbers = #tpu.dot_dimension_numbers<[1], [0], [0], [1], [0, 0, 1, 1], [], []>} : vector<10x16xbf16>, vector<16x32xbf16>, vector<10x32xf32> -> vector<10x32xf32>
    %272 = arith.addf %267, %271 : vector<10x32xf32>
    %c0_309 = arith.constant 0 : index
    %c10 = arith.constant 10 : index
    %c0_310 = arith.constant 0 : index
    %c0_311 = arith.constant 0 : index
    %273 = vector.load %arg1[%c0_309, %c10, %c0_310, %c0_311] : memref<1x11x11x16xbf16, #tpu.memory_space<vmem>>, vector<1x1x10x16xbf16>
    %274 = vector.shape_cast %273 : vector<1x1x10x16xbf16> to vector<10x16xbf16>
    %c32_312 = arith.constant 32 : index
    %c0_313 = arith.constant 0 : index
    %275 = vector.load %arg2[%c32_312, %c0_313] : memref<64x32xbf16, #tpu.memory_space<vmem>>, vector<16x32xbf16>
    %cst_314 = arith.constant dense<0.000000e+00> : vector<10x32xf32>
    %276 = tpu.matmul %274, %275, %cst_314 {dimension_numbers = #tpu.dot_dimension_numbers<[1], [0], [0], [1], [0, 0, 1, 1], [], []>} : vector<10x16xbf16>, vector<16x32xbf16>, vector<10x32xf32> -> vector<10x32xf32>
    %277 = arith.addf %272, %276 : vector<10x32xf32>
    %c0_315 = arith.constant 0 : index
    %c10_316 = arith.constant 10 : index
    %c1_317 = arith.constant 1 : index
    %c0_318 = arith.constant 0 : index
    %278 = vector.load %arg1[%c0_315, %c10_316, %c1_317, %c0_318] : memref<1x11x11x16xbf16, #tpu.memory_space<vmem>>, vector<1x1x10x16xbf16>
    %279 = vector.shape_cast %278 : vector<1x1x10x16xbf16> to vector<10x16xbf16>
    %c48_319 = arith.constant 48 : index
    %c0_320 = arith.constant 0 : index
    %280 = vector.load %arg2[%c48_319, %c0_320] : memref<64x32xbf16, #tpu.memory_space<vmem>>, vector<16x32xbf16>
    %cst_321 = arith.constant dense<0.000000e+00> : vector<10x32xf32>
    %281 = tpu.matmul %279, %280, %cst_321 {dimension_numbers = #tpu.dot_dimension_numbers<[1], [0], [0], [1], [0, 0, 1, 1], [], []>} : vector<10x16xbf16>, vector<16x32xbf16>, vector<10x32xf32> -> vector<10x32xf32>
    %282 = arith.addf %277, %281 : vector<10x32xf32>
    %283 = vector.broadcast %0 : vector<1x32xf32> to vector<10x32xf32>
    %284 = arith.addf %282, %283 : vector<10x32xf32>
    %cst_322 = arith.constant 0.000000e+00 : f32
    %285 = vector.broadcast %cst_322 : f32 to vector<10x32xf32>
    %286 = arith.maximumf %284, %285 : vector<10x32xf32>
    %287 = arith.truncf %286 : vector<10x32xf32> to vector<10x32xbf16>
    %c0_323 = arith.constant 0 : index
    %c9_324 = arith.constant 9 : index
    %c0_325 = arith.constant 0 : index
    %c0_326 = arith.constant 0 : index
    %288 = vector.load %arg4[%c0_323, %c9_324, %c0_325, %c0_326] : memref<1x10x10x32xbf16, #tpu.memory_space<vmem>>, vector<1x1x10x32xbf16>
    %289 = vector.shape_cast %288 : vector<1x1x10x32xbf16> to vector<10x32xbf16>
    %290 = vector.shape_cast %287 : vector<10x32xbf16> to vector<1x1x10x32xbf16>
    tpu.vector_store %arg4[%c0_323, %c9_324, %c0_325, %c0_326], %290 {strides = array<i32>} : memref<1x10x10x32xbf16, #tpu.memory_space<vmem>>, vector<1x1x10x32xbf16>,
    return
  }
  func.func @transform_0(%arg0: i32) -> (i32, i32, i32, i32) {
    %c0_i32 = arith.constant 0 : i32
    %c0_i32_0 = arith.constant 0 : i32
    %c0_i32_1 = arith.constant 0 : i32
    %c0_i32_2 = arith.constant 0 : i32
    return %arg0, %c0_i32, %c0_i32_0, %c0_i32_1 : i32, i32, i32, i32
  }
  func.func @transform_1(%arg0: i32) -> (i32, i32) {
    %c0_i32 = arith.constant 0 : i32
    %c0_i32_0 = arith.constant 0 : i32
    %c0_i32_1 = arith.constant 0 : i32
    return %c0_i32, %c0_i32_0 : i32, i32
  }
  func.func @transform_2(%arg0: i32) -> (i32, i32) {
    %c0_i32 = arith.constant 0 : i32
    %c0_i32_0 = arith.constant 0 : i32
    %c0_i32_1 = arith.constant 0 : i32
    return %c0_i32, %c0_i32_0 : i32, i32
  }
  func.func @transform_3(%arg0: i32) -> (i32, i32, i32, i32) {
    %c0_i32 = arith.constant 0 : i32
    %c0_i32_0 = arith.constant 0 : i32
    %c0_i32_1 = arith.constant 0 : i32
    %c0_i32_2 = arith.constant 0 : i32
    return %arg0, %c0_i32, %c0_i32_0, %c0_i32_1 : i32, i32, i32, i32
  }
}

module attributes {stable_mosaic.version = 11 : i64} {
  func.func @_conv_kernel(%arg0: i32, %arg1: memref<1x5x5x128xbf16, #tpu.memory_space<vmem>>, %arg2: memref<512x64xbf16, #tpu.memory_space<vmem>>, %arg3: memref<1x64xf32, #tpu.memory_space<vmem>>, %arg4: memref<1x4x4x64xbf16, #tpu.memory_space<vmem>>) attributes {dimension_semantics = [#tpu.dimension_semantics<parallel>], iteration_bounds = array<i64: 2>, scalar_prefetch = 0 : i64, scratch_operands = 0 : i64, tpu.core_type = #tpu.core_type<tc>, window_params = [{transform_indices = @transform_0, window_bounds = array<i64: 1, 5, 5, 128>}, {pipeline_mode = #tpu.pipeline_mode<synchronous>, transform_indices = @transform_1, window_bounds = array<i64: 512, 64>}, {pipeline_mode = #tpu.pipeline_mode<synchronous>, transform_indices = @transform_2, window_bounds = array<i64: 1, 64>}, {transform_indices = @transform_3, window_bounds = array<i64: 1, 4, 4, 64>}]} {
    %c0 = arith.constant 0 : index
    %c0_0 = arith.constant 0 : index
    %0 = vector.load %arg3[%c0, %c0_0] : memref<1x64xf32, #tpu.memory_space<vmem>>, vector<1x64xf32>
    %cst = arith.constant 0.000000e+00 : f32
    %1 = vector.broadcast %cst : f32 to vector<4x64xf32>
    %c0_1 = arith.constant 0 : index
    %c0_2 = arith.constant 0 : index
    %c0_3 = arith.constant 0 : index
    %c0_4 = arith.constant 0 : index
    %2 = vector.load %arg1[%c0_1, %c0_2, %c0_3, %c0_4] : memref<1x5x5x128xbf16, #tpu.memory_space<vmem>>, vector<1x1x4x128xbf16>
    %3 = vector.shape_cast %2 : vector<1x1x4x128xbf16> to vector<4x128xbf16>
    %c0_5 = arith.constant 0 : index
    %c0_6 = arith.constant 0 : index
    %4 = vector.load %arg2[%c0_5, %c0_6] : memref<512x64xbf16, #tpu.memory_space<vmem>>, vector<128x64xbf16>
    %cst_7 = arith.constant dense<0.000000e+00> : vector<4x64xf32>
    %5 = tpu.matmul %3, %4, %cst_7 {dimension_numbers = #tpu.dot_dimension_numbers<[1], [0], [0], [1], [0, 0, 1, 1], [], []>} : vector<4x128xbf16>, vector<128x64xbf16>, vector<4x64xf32> -> vector<4x64xf32>
    %6 = arith.addf %1, %5 : vector<4x64xf32>
    %c0_8 = arith.constant 0 : index
    %c0_9 = arith.constant 0 : index
    %c1 = arith.constant 1 : index
    %c0_10 = arith.constant 0 : index
    %7 = vector.load %arg1[%c0_8, %c0_9, %c1, %c0_10] : memref<1x5x5x128xbf16, #tpu.memory_space<vmem>>, vector<1x1x4x128xbf16>
    %8 = vector.shape_cast %7 : vector<1x1x4x128xbf16> to vector<4x128xbf16>
    %c128 = arith.constant 128 : index
    %c0_11 = arith.constant 0 : index
    %9 = vector.load %arg2[%c128, %c0_11] : memref<512x64xbf16, #tpu.memory_space<vmem>>, vector<128x64xbf16>
    %cst_12 = arith.constant dense<0.000000e+00> : vector<4x64xf32>
    %10 = tpu.matmul %8, %9, %cst_12 {dimension_numbers = #tpu.dot_dimension_numbers<[1], [0], [0], [1], [0, 0, 1, 1], [], []>} : vector<4x128xbf16>, vector<128x64xbf16>, vector<4x64xf32> -> vector<4x64xf32>
    %11 = arith.addf %6, %10 : vector<4x64xf32>
    %c0_13 = arith.constant 0 : index
    %c1_14 = arith.constant 1 : index
    %c0_15 = arith.constant 0 : index
    %c0_16 = arith.constant 0 : index
    %12 = vector.load %arg1[%c0_13, %c1_14, %c0_15, %c0_16] : memref<1x5x5x128xbf16, #tpu.memory_space<vmem>>, vector<1x1x4x128xbf16>
    %13 = vector.shape_cast %12 : vector<1x1x4x128xbf16> to vector<4x128xbf16>
    %c256 = arith.constant 256 : index
    %c0_17 = arith.constant 0 : index
    %14 = vector.load %arg2[%c256, %c0_17] : memref<512x64xbf16, #tpu.memory_space<vmem>>, vector<128x64xbf16>
    %cst_18 = arith.constant dense<0.000000e+00> : vector<4x64xf32>
    %15 = tpu.matmul %13, %14, %cst_18 {dimension_numbers = #tpu.dot_dimension_numbers<[1], [0], [0], [1], [0, 0, 1, 1], [], []>} : vector<4x128xbf16>, vector<128x64xbf16>, vector<4x64xf32> -> vector<4x64xf32>
    %16 = arith.addf %11, %15 : vector<4x64xf32>
    %c0_19 = arith.constant 0 : index
    %c1_20 = arith.constant 1 : index
    %c1_21 = arith.constant 1 : index
    %c0_22 = arith.constant 0 : index
    %17 = vector.load %arg1[%c0_19, %c1_20, %c1_21, %c0_22] : memref<1x5x5x128xbf16, #tpu.memory_space<vmem>>, vector<1x1x4x128xbf16>
    %18 = vector.shape_cast %17 : vector<1x1x4x128xbf16> to vector<4x128xbf16>
    %c384 = arith.constant 384 : index
    %c0_23 = arith.constant 0 : index
    %19 = vector.load %arg2[%c384, %c0_23] : memref<512x64xbf16, #tpu.memory_space<vmem>>, vector<128x64xbf16>
    %cst_24 = arith.constant dense<0.000000e+00> : vector<4x64xf32>
    %20 = tpu.matmul %18, %19, %cst_24 {dimension_numbers = #tpu.dot_dimension_numbers<[1], [0], [0], [1], [0, 0, 1, 1], [], []>} : vector<4x128xbf16>, vector<128x64xbf16>, vector<4x64xf32> -> vector<4x64xf32>
    %21 = arith.addf %16, %20 : vector<4x64xf32>
    %22 = vector.broadcast %0 : vector<1x64xf32> to vector<4x64xf32>
    %23 = arith.addf %21, %22 : vector<4x64xf32>
    %cst_25 = arith.constant 0.000000e+00 : f32
    %24 = vector.broadcast %cst_25 : f32 to vector<4x64xf32>
    %25 = arith.maximumf %23, %24 : vector<4x64xf32>
    %26 = arith.truncf %25 : vector<4x64xf32> to vector<4x64xbf16>
    %c0_26 = arith.constant 0 : index
    %c0_27 = arith.constant 0 : index
    %c0_28 = arith.constant 0 : index
    %c0_29 = arith.constant 0 : index
    %27 = vector.load %arg4[%c0_26, %c0_27, %c0_28, %c0_29] : memref<1x4x4x64xbf16, #tpu.memory_space<vmem>>, vector<1x1x4x64xbf16>
    %28 = vector.shape_cast %27 : vector<1x1x4x64xbf16> to vector<4x64xbf16>
    %29 = vector.shape_cast %26 : vector<4x64xbf16> to vector<1x1x4x64xbf16>
    tpu.vector_store %arg4[%c0_26, %c0_27, %c0_28, %c0_29], %29 {strides = array<i32>} : memref<1x4x4x64xbf16, #tpu.memory_space<vmem>>, vector<1x1x4x64xbf16>,
    %cst_30 = arith.constant 0.000000e+00 : f32
    %30 = vector.broadcast %cst_30 : f32 to vector<4x64xf32>
    %c0_31 = arith.constant 0 : index
    %c1_32 = arith.constant 1 : index
    %c0_33 = arith.constant 0 : index
    %c0_34 = arith.constant 0 : index
    %31 = vector.load %arg1[%c0_31, %c1_32, %c0_33, %c0_34] : memref<1x5x5x128xbf16, #tpu.memory_space<vmem>>, vector<1x1x4x128xbf16>
    %32 = vector.shape_cast %31 : vector<1x1x4x128xbf16> to vector<4x128xbf16>
    %c0_35 = arith.constant 0 : index
    %c0_36 = arith.constant 0 : index
    %33 = vector.load %arg2[%c0_35, %c0_36] : memref<512x64xbf16, #tpu.memory_space<vmem>>, vector<128x64xbf16>
    %cst_37 = arith.constant dense<0.000000e+00> : vector<4x64xf32>
    %34 = tpu.matmul %32, %33, %cst_37 {dimension_numbers = #tpu.dot_dimension_numbers<[1], [0], [0], [1], [0, 0, 1, 1], [], []>} : vector<4x128xbf16>, vector<128x64xbf16>, vector<4x64xf32> -> vector<4x64xf32>
    %35 = arith.addf %30, %34 : vector<4x64xf32>
    %c0_38 = arith.constant 0 : index
    %c1_39 = arith.constant 1 : index
    %c1_40 = arith.constant 1 : index
    %c0_41 = arith.constant 0 : index
    %36 = vector.load %arg1[%c0_38, %c1_39, %c1_40, %c0_41] : memref<1x5x5x128xbf16, #tpu.memory_space<vmem>>, vector<1x1x4x128xbf16>
    %37 = vector.shape_cast %36 : vector<1x1x4x128xbf16> to vector<4x128xbf16>
    %c128_42 = arith.constant 128 : index
    %c0_43 = arith.constant 0 : index
    %38 = vector.load %arg2[%c128_42, %c0_43] : memref<512x64xbf16, #tpu.memory_space<vmem>>, vector<128x64xbf16>
    %cst_44 = arith.constant dense<0.000000e+00> : vector<4x64xf32>
    %39 = tpu.matmul %37, %38, %cst_44 {dimension_numbers = #tpu.dot_dimension_numbers<[1], [0], [0], [1], [0, 0, 1, 1], [], []>} : vector<4x128xbf16>, vector<128x64xbf16>, vector<4x64xf32> -> vector<4x64xf32>
    %40 = arith.addf %35, %39 : vector<4x64xf32>
    %c0_45 = arith.constant 0 : index
    %c2 = arith.constant 2 : index
    %c0_46 = arith.constant 0 : index
    %c0_47 = arith.constant 0 : index
    %41 = vector.load %arg1[%c0_45, %c2, %c0_46, %c0_47] : memref<1x5x5x128xbf16, #tpu.memory_space<vmem>>, vector<1x1x4x128xbf16>
    %42 = vector.shape_cast %41 : vector<1x1x4x128xbf16> to vector<4x128xbf16>
    %c256_48 = arith.constant 256 : index
    %c0_49 = arith.constant 0 : index
    %43 = vector.load %arg2[%c256_48, %c0_49] : memref<512x64xbf16, #tpu.memory_space<vmem>>, vector<128x64xbf16>
    %cst_50 = arith.constant dense<0.000000e+00> : vector<4x64xf32>
    %44 = tpu.matmul %42, %43, %cst_50 {dimension_numbers = #tpu.dot_dimension_numbers<[1], [0], [0], [1], [0, 0, 1, 1], [], []>} : vector<4x128xbf16>, vector<128x64xbf16>, vector<4x64xf32> -> vector<4x64xf32>
    %45 = arith.addf %40, %44 : vector<4x64xf32>
    %c0_51 = arith.constant 0 : index
    %c2_52 = arith.constant 2 : index
    %c1_53 = arith.constant 1 : index
    %c0_54 = arith.constant 0 : index
    %46 = vector.load %arg1[%c0_51, %c2_52, %c1_53, %c0_54] : memref<1x5x5x128xbf16, #tpu.memory_space<vmem>>, vector<1x1x4x128xbf16>
    %47 = vector.shape_cast %46 : vector<1x1x4x128xbf16> to vector<4x128xbf16>
    %c384_55 = arith.constant 384 : index
    %c0_56 = arith.constant 0 : index
    %48 = vector.load %arg2[%c384_55, %c0_56] : memref<512x64xbf16, #tpu.memory_space<vmem>>, vector<128x64xbf16>
    %cst_57 = arith.constant dense<0.000000e+00> : vector<4x64xf32>
    %49 = tpu.matmul %47, %48, %cst_57 {dimension_numbers = #tpu.dot_dimension_numbers<[1], [0], [0], [1], [0, 0, 1, 1], [], []>} : vector<4x128xbf16>, vector<128x64xbf16>, vector<4x64xf32> -> vector<4x64xf32>
    %50 = arith.addf %45, %49 : vector<4x64xf32>
    %51 = vector.broadcast %0 : vector<1x64xf32> to vector<4x64xf32>
    %52 = arith.addf %50, %51 : vector<4x64xf32>
    %cst_58 = arith.constant 0.000000e+00 : f32
    %53 = vector.broadcast %cst_58 : f32 to vector<4x64xf32>
    %54 = arith.maximumf %52, %53 : vector<4x64xf32>
    %55 = arith.truncf %54 : vector<4x64xf32> to vector<4x64xbf16>
    %c0_59 = arith.constant 0 : index
    %c1_60 = arith.constant 1 : index
    %c0_61 = arith.constant 0 : index
    %c0_62 = arith.constant 0 : index
    %56 = vector.load %arg4[%c0_59, %c1_60, %c0_61, %c0_62] : memref<1x4x4x64xbf16, #tpu.memory_space<vmem>>, vector<1x1x4x64xbf16>
    %57 = vector.shape_cast %56 : vector<1x1x4x64xbf16> to vector<4x64xbf16>
    %58 = vector.shape_cast %55 : vector<4x64xbf16> to vector<1x1x4x64xbf16>
    tpu.vector_store %arg4[%c0_59, %c1_60, %c0_61, %c0_62], %58 {strides = array<i32>} : memref<1x4x4x64xbf16, #tpu.memory_space<vmem>>, vector<1x1x4x64xbf16>,
    %cst_63 = arith.constant 0.000000e+00 : f32
    %59 = vector.broadcast %cst_63 : f32 to vector<4x64xf32>
    %c0_64 = arith.constant 0 : index
    %c2_65 = arith.constant 2 : index
    %c0_66 = arith.constant 0 : index
    %c0_67 = arith.constant 0 : index
    %60 = vector.load %arg1[%c0_64, %c2_65, %c0_66, %c0_67] : memref<1x5x5x128xbf16, #tpu.memory_space<vmem>>, vector<1x1x4x128xbf16>
    %61 = vector.shape_cast %60 : vector<1x1x4x128xbf16> to vector<4x128xbf16>
    %c0_68 = arith.constant 0 : index
    %c0_69 = arith.constant 0 : index
    %62 = vector.load %arg2[%c0_68, %c0_69] : memref<512x64xbf16, #tpu.memory_space<vmem>>, vector<128x64xbf16>
    %cst_70 = arith.constant dense<0.000000e+00> : vector<4x64xf32>
    %63 = tpu.matmul %61, %62, %cst_70 {dimension_numbers = #tpu.dot_dimension_numbers<[1], [0], [0], [1], [0, 0, 1, 1], [], []>} : vector<4x128xbf16>, vector<128x64xbf16>, vector<4x64xf32> -> vector<4x64xf32>
    %64 = arith.addf %59, %63 : vector<4x64xf32>
    %c0_71 = arith.constant 0 : index
    %c2_72 = arith.constant 2 : index
    %c1_73 = arith.constant 1 : index
    %c0_74 = arith.constant 0 : index
    %65 = vector.load %arg1[%c0_71, %c2_72, %c1_73, %c0_74] : memref<1x5x5x128xbf16, #tpu.memory_space<vmem>>, vector<1x1x4x128xbf16>
    %66 = vector.shape_cast %65 : vector<1x1x4x128xbf16> to vector<4x128xbf16>
    %c128_75 = arith.constant 128 : index
    %c0_76 = arith.constant 0 : index
    %67 = vector.load %arg2[%c128_75, %c0_76] : memref<512x64xbf16, #tpu.memory_space<vmem>>, vector<128x64xbf16>
    %cst_77 = arith.constant dense<0.000000e+00> : vector<4x64xf32>
    %68 = tpu.matmul %66, %67, %cst_77 {dimension_numbers = #tpu.dot_dimension_numbers<[1], [0], [0], [1], [0, 0, 1, 1], [], []>} : vector<4x128xbf16>, vector<128x64xbf16>, vector<4x64xf32> -> vector<4x64xf32>
    %69 = arith.addf %64, %68 : vector<4x64xf32>
    %c0_78 = arith.constant 0 : index
    %c3 = arith.constant 3 : index
    %c0_79 = arith.constant 0 : index
    %c0_80 = arith.constant 0 : index
    %70 = vector.load %arg1[%c0_78, %c3, %c0_79, %c0_80] : memref<1x5x5x128xbf16, #tpu.memory_space<vmem>>, vector<1x1x4x128xbf16>
    %71 = vector.shape_cast %70 : vector<1x1x4x128xbf16> to vector<4x128xbf16>
    %c256_81 = arith.constant 256 : index
    %c0_82 = arith.constant 0 : index
    %72 = vector.load %arg2[%c256_81, %c0_82] : memref<512x64xbf16, #tpu.memory_space<vmem>>, vector<128x64xbf16>
    %cst_83 = arith.constant dense<0.000000e+00> : vector<4x64xf32>
    %73 = tpu.matmul %71, %72, %cst_83 {dimension_numbers = #tpu.dot_dimension_numbers<[1], [0], [0], [1], [0, 0, 1, 1], [], []>} : vector<4x128xbf16>, vector<128x64xbf16>, vector<4x64xf32> -> vector<4x64xf32>
    %74 = arith.addf %69, %73 : vector<4x64xf32>
    %c0_84 = arith.constant 0 : index
    %c3_85 = arith.constant 3 : index
    %c1_86 = arith.constant 1 : index
    %c0_87 = arith.constant 0 : index
    %75 = vector.load %arg1[%c0_84, %c3_85, %c1_86, %c0_87] : memref<1x5x5x128xbf16, #tpu.memory_space<vmem>>, vector<1x1x4x128xbf16>
    %76 = vector.shape_cast %75 : vector<1x1x4x128xbf16> to vector<4x128xbf16>
    %c384_88 = arith.constant 384 : index
    %c0_89 = arith.constant 0 : index
    %77 = vector.load %arg2[%c384_88, %c0_89] : memref<512x64xbf16, #tpu.memory_space<vmem>>, vector<128x64xbf16>
    %cst_90 = arith.constant dense<0.000000e+00> : vector<4x64xf32>
    %78 = tpu.matmul %76, %77, %cst_90 {dimension_numbers = #tpu.dot_dimension_numbers<[1], [0], [0], [1], [0, 0, 1, 1], [], []>} : vector<4x128xbf16>, vector<128x64xbf16>, vector<4x64xf32> -> vector<4x64xf32>
    %79 = arith.addf %74, %78 : vector<4x64xf32>
    %80 = vector.broadcast %0 : vector<1x64xf32> to vector<4x64xf32>
    %81 = arith.addf %79, %80 : vector<4x64xf32>
    %cst_91 = arith.constant 0.000000e+00 : f32
    %82 = vector.broadcast %cst_91 : f32 to vector<4x64xf32>
    %83 = arith.maximumf %81, %82 : vector<4x64xf32>
    %84 = arith.truncf %83 : vector<4x64xf32> to vector<4x64xbf16>
    %c0_92 = arith.constant 0 : index
    %c2_93 = arith.constant 2 : index
    %c0_94 = arith.constant 0 : index
    %c0_95 = arith.constant 0 : index
    %85 = vector.load %arg4[%c0_92, %c2_93, %c0_94, %c0_95] : memref<1x4x4x64xbf16, #tpu.memory_space<vmem>>, vector<1x1x4x64xbf16>
    %86 = vector.shape_cast %85 : vector<1x1x4x64xbf16> to vector<4x64xbf16>
    %87 = vector.shape_cast %84 : vector<4x64xbf16> to vector<1x1x4x64xbf16>
    tpu.vector_store %arg4[%c0_92, %c2_93, %c0_94, %c0_95], %87 {strides = array<i32>} : memref<1x4x4x64xbf16, #tpu.memory_space<vmem>>, vector<1x1x4x64xbf16>,
    %cst_96 = arith.constant 0.000000e+00 : f32
    %88 = vector.broadcast %cst_96 : f32 to vector<4x64xf32>
    %c0_97 = arith.constant 0 : index
    %c3_98 = arith.constant 3 : index
    %c0_99 = arith.constant 0 : index
    %c0_100 = arith.constant 0 : index
    %89 = vector.load %arg1[%c0_97, %c3_98, %c0_99, %c0_100] : memref<1x5x5x128xbf16, #tpu.memory_space<vmem>>, vector<1x1x4x128xbf16>
    %90 = vector.shape_cast %89 : vector<1x1x4x128xbf16> to vector<4x128xbf16>
    %c0_101 = arith.constant 0 : index
    %c0_102 = arith.constant 0 : index
    %91 = vector.load %arg2[%c0_101, %c0_102] : memref<512x64xbf16, #tpu.memory_space<vmem>>, vector<128x64xbf16>
    %cst_103 = arith.constant dense<0.000000e+00> : vector<4x64xf32>
    %92 = tpu.matmul %90, %91, %cst_103 {dimension_numbers = #tpu.dot_dimension_numbers<[1], [0], [0], [1], [0, 0, 1, 1], [], []>} : vector<4x128xbf16>, vector<128x64xbf16>, vector<4x64xf32> -> vector<4x64xf32>
    %93 = arith.addf %88, %92 : vector<4x64xf32>
    %c0_104 = arith.constant 0 : index
    %c3_105 = arith.constant 3 : index
    %c1_106 = arith.constant 1 : index
    %c0_107 = arith.constant 0 : index
    %94 = vector.load %arg1[%c0_104, %c3_105, %c1_106, %c0_107] : memref<1x5x5x128xbf16, #tpu.memory_space<vmem>>, vector<1x1x4x128xbf16>
    %95 = vector.shape_cast %94 : vector<1x1x4x128xbf16> to vector<4x128xbf16>
    %c128_108 = arith.constant 128 : index
    %c0_109 = arith.constant 0 : index
    %96 = vector.load %arg2[%c128_108, %c0_109] : memref<512x64xbf16, #tpu.memory_space<vmem>>, vector<128x64xbf16>
    %cst_110 = arith.constant dense<0.000000e+00> : vector<4x64xf32>
    %97 = tpu.matmul %95, %96, %cst_110 {dimension_numbers = #tpu.dot_dimension_numbers<[1], [0], [0], [1], [0, 0, 1, 1], [], []>} : vector<4x128xbf16>, vector<128x64xbf16>, vector<4x64xf32> -> vector<4x64xf32>
    %98 = arith.addf %93, %97 : vector<4x64xf32>
    %c0_111 = arith.constant 0 : index
    %c4 = arith.constant 4 : index
    %c0_112 = arith.constant 0 : index
    %c0_113 = arith.constant 0 : index
    %99 = vector.load %arg1[%c0_111, %c4, %c0_112, %c0_113] : memref<1x5x5x128xbf16, #tpu.memory_space<vmem>>, vector<1x1x4x128xbf16>
    %100 = vector.shape_cast %99 : vector<1x1x4x128xbf16> to vector<4x128xbf16>
    %c256_114 = arith.constant 256 : index
    %c0_115 = arith.constant 0 : index
    %101 = vector.load %arg2[%c256_114, %c0_115] : memref<512x64xbf16, #tpu.memory_space<vmem>>, vector<128x64xbf16>
    %cst_116 = arith.constant dense<0.000000e+00> : vector<4x64xf32>
    %102 = tpu.matmul %100, %101, %cst_116 {dimension_numbers = #tpu.dot_dimension_numbers<[1], [0], [0], [1], [0, 0, 1, 1], [], []>} : vector<4x128xbf16>, vector<128x64xbf16>, vector<4x64xf32> -> vector<4x64xf32>
    %103 = arith.addf %98, %102 : vector<4x64xf32>
    %c0_117 = arith.constant 0 : index
    %c4_118 = arith.constant 4 : index
    %c1_119 = arith.constant 1 : index
    %c0_120 = arith.constant 0 : index
    %104 = vector.load %arg1[%c0_117, %c4_118, %c1_119, %c0_120] : memref<1x5x5x128xbf16, #tpu.memory_space<vmem>>, vector<1x1x4x128xbf16>
    %105 = vector.shape_cast %104 : vector<1x1x4x128xbf16> to vector<4x128xbf16>
    %c384_121 = arith.constant 384 : index
    %c0_122 = arith.constant 0 : index
    %106 = vector.load %arg2[%c384_121, %c0_122] : memref<512x64xbf16, #tpu.memory_space<vmem>>, vector<128x64xbf16>
    %cst_123 = arith.constant dense<0.000000e+00> : vector<4x64xf32>
    %107 = tpu.matmul %105, %106, %cst_123 {dimension_numbers = #tpu.dot_dimension_numbers<[1], [0], [0], [1], [0, 0, 1, 1], [], []>} : vector<4x128xbf16>, vector<128x64xbf16>, vector<4x64xf32> -> vector<4x64xf32>
    %108 = arith.addf %103, %107 : vector<4x64xf32>
    %109 = vector.broadcast %0 : vector<1x64xf32> to vector<4x64xf32>
    %110 = arith.addf %108, %109 : vector<4x64xf32>
    %cst_124 = arith.constant 0.000000e+00 : f32
    %111 = vector.broadcast %cst_124 : f32 to vector<4x64xf32>
    %112 = arith.maximumf %110, %111 : vector<4x64xf32>
    %113 = arith.truncf %112 : vector<4x64xf32> to vector<4x64xbf16>
    %c0_125 = arith.constant 0 : index
    %c3_126 = arith.constant 3 : index
    %c0_127 = arith.constant 0 : index
    %c0_128 = arith.constant 0 : index
    %114 = vector.load %arg4[%c0_125, %c3_126, %c0_127, %c0_128] : memref<1x4x4x64xbf16, #tpu.memory_space<vmem>>, vector<1x1x4x64xbf16>
    %115 = vector.shape_cast %114 : vector<1x1x4x64xbf16> to vector<4x64xbf16>
    %116 = vector.shape_cast %113 : vector<4x64xbf16> to vector<1x1x4x64xbf16>
    tpu.vector_store %arg4[%c0_125, %c3_126, %c0_127, %c0_128], %116 {strides = array<i32>} : memref<1x4x4x64xbf16, #tpu.memory_space<vmem>>, vector<1x1x4x64xbf16>,
    return
  }
  func.func @transform_0(%arg0: i32) -> (i32, i32, i32, i32) {
    %c0_i32 = arith.constant 0 : i32
    %c0_i32_0 = arith.constant 0 : i32
    %c0_i32_1 = arith.constant 0 : i32
    %c0_i32_2 = arith.constant 0 : i32
    return %arg0, %c0_i32, %c0_i32_0, %c0_i32_1 : i32, i32, i32, i32
  }
  func.func @transform_1(%arg0: i32) -> (i32, i32) {
    %c0_i32 = arith.constant 0 : i32
    %c0_i32_0 = arith.constant 0 : i32
    %c0_i32_1 = arith.constant 0 : i32
    return %c0_i32, %c0_i32_0 : i32, i32
  }
  func.func @transform_2(%arg0: i32) -> (i32, i32) {
    %c0_i32 = arith.constant 0 : i32
    %c0_i32_0 = arith.constant 0 : i32
    %c0_i32_1 = arith.constant 0 : i32
    return %c0_i32, %c0_i32_0 : i32, i32
  }
  func.func @transform_3(%arg0: i32) -> (i32, i32, i32, i32) {
    %c0_i32 = arith.constant 0 : i32
    %c0_i32_0 = arith.constant 0 : i32
    %c0_i32_1 = arith.constant 0 : i32
    %c0_i32_2 = arith.constant 0 : i32
    return %arg0, %c0_i32, %c0_i32_0, %c0_i32_1 : i32, i32, i32, i32
  }
}

module attributes {stable_mosaic.version = 11 : i64} {
  func.func @_conv_kernel(%arg0: i32, %arg1: memref<1x4x4x64xbf16, #tpu.memory_space<vmem>>, %arg2: memref<576x64xbf16, #tpu.memory_space<vmem>>, %arg3: memref<1x64xf32, #tpu.memory_space<vmem>>, %arg4: memref<1x2x2x64xbf16, #tpu.memory_space<vmem>>) attributes {dimension_semantics = [#tpu.dimension_semantics<parallel>], iteration_bounds = array<i64: 2>, scalar_prefetch = 0 : i64, scratch_operands = 0 : i64, tpu.core_type = #tpu.core_type<tc>, window_params = [{transform_indices = @transform_0, window_bounds = array<i64: 1, 4, 4, 64>}, {pipeline_mode = #tpu.pipeline_mode<synchronous>, transform_indices = @transform_1, window_bounds = array<i64: 576, 64>}, {pipeline_mode = #tpu.pipeline_mode<synchronous>, transform_indices = @transform_2, window_bounds = array<i64: 1, 64>}, {transform_indices = @transform_3, window_bounds = array<i64: 1, 2, 2, 64>}]} {
    %c0 = arith.constant 0 : index
    %c0_0 = arith.constant 0 : index
    %0 = vector.load %arg3[%c0, %c0_0] : memref<1x64xf32, #tpu.memory_space<vmem>>, vector<1x64xf32>
    %cst = arith.constant 0.000000e+00 : f32
    %1 = vector.broadcast %cst : f32 to vector<2x64xf32>
    %c0_1 = arith.constant 0 : index
    %c0_2 = arith.constant 0 : index
    %c0_3 = arith.constant 0 : index
    %c0_4 = arith.constant 0 : index
    %2 = vector.load %arg1[%c0_1, %c0_2, %c0_3, %c0_4] : memref<1x4x4x64xbf16, #tpu.memory_space<vmem>>, vector<1x1x2x64xbf16>
    %3 = vector.shape_cast %2 : vector<1x1x2x64xbf16> to vector<2x64xbf16>
    %c0_5 = arith.constant 0 : index
    %c0_6 = arith.constant 0 : index
    %4 = vector.load %arg2[%c0_5, %c0_6] : memref<576x64xbf16, #tpu.memory_space<vmem>>, vector<64x64xbf16>
    %cst_7 = arith.constant dense<0.000000e+00> : vector<2x64xf32>
    %5 = tpu.matmul %3, %4, %cst_7 {dimension_numbers = #tpu.dot_dimension_numbers<[1], [0], [0], [1], [0, 0, 1, 1], [], []>} : vector<2x64xbf16>, vector<64x64xbf16>, vector<2x64xf32> -> vector<2x64xf32>
    %6 = arith.addf %1, %5 : vector<2x64xf32>
    %c0_8 = arith.constant 0 : index
    %c0_9 = arith.constant 0 : index
    %c1 = arith.constant 1 : index
    %c0_10 = arith.constant 0 : index
    %7 = vector.load %arg1[%c0_8, %c0_9, %c1, %c0_10] : memref<1x4x4x64xbf16, #tpu.memory_space<vmem>>, vector<1x1x2x64xbf16>
    %8 = vector.shape_cast %7 : vector<1x1x2x64xbf16> to vector<2x64xbf16>
    %c64 = arith.constant 64 : index
    %c0_11 = arith.constant 0 : index
    %9 = vector.load %arg2[%c64, %c0_11] : memref<576x64xbf16, #tpu.memory_space<vmem>>, vector<64x64xbf16>
    %cst_12 = arith.constant dense<0.000000e+00> : vector<2x64xf32>
    %10 = tpu.matmul %8, %9, %cst_12 {dimension_numbers = #tpu.dot_dimension_numbers<[1], [0], [0], [1], [0, 0, 1, 1], [], []>} : vector<2x64xbf16>, vector<64x64xbf16>, vector<2x64xf32> -> vector<2x64xf32>
    %11 = arith.addf %6, %10 : vector<2x64xf32>
    %c0_13 = arith.constant 0 : index
    %c0_14 = arith.constant 0 : index
    %c2 = arith.constant 2 : index
    %c0_15 = arith.constant 0 : index
    %12 = vector.load %arg1[%c0_13, %c0_14, %c2, %c0_15] : memref<1x4x4x64xbf16, #tpu.memory_space<vmem>>, vector<1x1x2x64xbf16>
    %13 = vector.shape_cast %12 : vector<1x1x2x64xbf16> to vector<2x64xbf16>
    %c128 = arith.constant 128 : index
    %c0_16 = arith.constant 0 : index
    %14 = vector.load %arg2[%c128, %c0_16] : memref<576x64xbf16, #tpu.memory_space<vmem>>, vector<64x64xbf16>
    %cst_17 = arith.constant dense<0.000000e+00> : vector<2x64xf32>
    %15 = tpu.matmul %13, %14, %cst_17 {dimension_numbers = #tpu.dot_dimension_numbers<[1], [0], [0], [1], [0, 0, 1, 1], [], []>} : vector<2x64xbf16>, vector<64x64xbf16>, vector<2x64xf32> -> vector<2x64xf32>
    %16 = arith.addf %11, %15 : vector<2x64xf32>
    %c0_18 = arith.constant 0 : index
    %c1_19 = arith.constant 1 : index
    %c0_20 = arith.constant 0 : index
    %c0_21 = arith.constant 0 : index
    %17 = vector.load %arg1[%c0_18, %c1_19, %c0_20, %c0_21] : memref<1x4x4x64xbf16, #tpu.memory_space<vmem>>, vector<1x1x2x64xbf16>
    %18 = vector.shape_cast %17 : vector<1x1x2x64xbf16> to vector<2x64xbf16>
    %c192 = arith.constant 192 : index
    %c0_22 = arith.constant 0 : index
    %19 = vector.load %arg2[%c192, %c0_22] : memref<576x64xbf16, #tpu.memory_space<vmem>>, vector<64x64xbf16>
    %cst_23 = arith.constant dense<0.000000e+00> : vector<2x64xf32>
    %20 = tpu.matmul %18, %19, %cst_23 {dimension_numbers = #tpu.dot_dimension_numbers<[1], [0], [0], [1], [0, 0, 1, 1], [], []>} : vector<2x64xbf16>, vector<64x64xbf16>, vector<2x64xf32> -> vector<2x64xf32>
    %21 = arith.addf %16, %20 : vector<2x64xf32>
    %c0_24 = arith.constant 0 : index
    %c1_25 = arith.constant 1 : index
    %c1_26 = arith.constant 1 : index
    %c0_27 = arith.constant 0 : index
    %22 = vector.load %arg1[%c0_24, %c1_25, %c1_26, %c0_27] : memref<1x4x4x64xbf16, #tpu.memory_space<vmem>>, vector<1x1x2x64xbf16>
    %23 = vector.shape_cast %22 : vector<1x1x2x64xbf16> to vector<2x64xbf16>
    %c256 = arith.constant 256 : index
    %c0_28 = arith.constant 0 : index
    %24 = vector.load %arg2[%c256, %c0_28] : memref<576x64xbf16, #tpu.memory_space<vmem>>, vector<64x64xbf16>
    %cst_29 = arith.constant dense<0.000000e+00> : vector<2x64xf32>
    %25 = tpu.matmul %23, %24, %cst_29 {dimension_numbers = #tpu.dot_dimension_numbers<[1], [0], [0], [1], [0, 0, 1, 1], [], []>} : vector<2x64xbf16>, vector<64x64xbf16>, vector<2x64xf32> -> vector<2x64xf32>
    %26 = arith.addf %21, %25 : vector<2x64xf32>
    %c0_30 = arith.constant 0 : index
    %c1_31 = arith.constant 1 : index
    %c2_32 = arith.constant 2 : index
    %c0_33 = arith.constant 0 : index
    %27 = vector.load %arg1[%c0_30, %c1_31, %c2_32, %c0_33] : memref<1x4x4x64xbf16, #tpu.memory_space<vmem>>, vector<1x1x2x64xbf16>
    %28 = vector.shape_cast %27 : vector<1x1x2x64xbf16> to vector<2x64xbf16>
    %c320 = arith.constant 320 : index
    %c0_34 = arith.constant 0 : index
    %29 = vector.load %arg2[%c320, %c0_34] : memref<576x64xbf16, #tpu.memory_space<vmem>>, vector<64x64xbf16>
    %cst_35 = arith.constant dense<0.000000e+00> : vector<2x64xf32>
    %30 = tpu.matmul %28, %29, %cst_35 {dimension_numbers = #tpu.dot_dimension_numbers<[1], [0], [0], [1], [0, 0, 1, 1], [], []>} : vector<2x64xbf16>, vector<64x64xbf16>, vector<2x64xf32> -> vector<2x64xf32>
    %31 = arith.addf %26, %30 : vector<2x64xf32>
    %c0_36 = arith.constant 0 : index
    %c2_37 = arith.constant 2 : index
    %c0_38 = arith.constant 0 : index
    %c0_39 = arith.constant 0 : index
    %32 = vector.load %arg1[%c0_36, %c2_37, %c0_38, %c0_39] : memref<1x4x4x64xbf16, #tpu.memory_space<vmem>>, vector<1x1x2x64xbf16>
    %33 = vector.shape_cast %32 : vector<1x1x2x64xbf16> to vector<2x64xbf16>
    %c384 = arith.constant 384 : index
    %c0_40 = arith.constant 0 : index
    %34 = vector.load %arg2[%c384, %c0_40] : memref<576x64xbf16, #tpu.memory_space<vmem>>, vector<64x64xbf16>
    %cst_41 = arith.constant dense<0.000000e+00> : vector<2x64xf32>
    %35 = tpu.matmul %33, %34, %cst_41 {dimension_numbers = #tpu.dot_dimension_numbers<[1], [0], [0], [1], [0, 0, 1, 1], [], []>} : vector<2x64xbf16>, vector<64x64xbf16>, vector<2x64xf32> -> vector<2x64xf32>
    %36 = arith.addf %31, %35 : vector<2x64xf32>
    %c0_42 = arith.constant 0 : index
    %c2_43 = arith.constant 2 : index
    %c1_44 = arith.constant 1 : index
    %c0_45 = arith.constant 0 : index
    %37 = vector.load %arg1[%c0_42, %c2_43, %c1_44, %c0_45] : memref<1x4x4x64xbf16, #tpu.memory_space<vmem>>, vector<1x1x2x64xbf16>
    %38 = vector.shape_cast %37 : vector<1x1x2x64xbf16> to vector<2x64xbf16>
    %c448 = arith.constant 448 : index
    %c0_46 = arith.constant 0 : index
    %39 = vector.load %arg2[%c448, %c0_46] : memref<576x64xbf16, #tpu.memory_space<vmem>>, vector<64x64xbf16>
    %cst_47 = arith.constant dense<0.000000e+00> : vector<2x64xf32>
    %40 = tpu.matmul %38, %39, %cst_47 {dimension_numbers = #tpu.dot_dimension_numbers<[1], [0], [0], [1], [0, 0, 1, 1], [], []>} : vector<2x64xbf16>, vector<64x64xbf16>, vector<2x64xf32> -> vector<2x64xf32>
    %41 = arith.addf %36, %40 : vector<2x64xf32>
    %c0_48 = arith.constant 0 : index
    %c2_49 = arith.constant 2 : index
    %c2_50 = arith.constant 2 : index
    %c0_51 = arith.constant 0 : index
    %42 = vector.load %arg1[%c0_48, %c2_49, %c2_50, %c0_51] : memref<1x4x4x64xbf16, #tpu.memory_space<vmem>>, vector<1x1x2x64xbf16>
    %43 = vector.shape_cast %42 : vector<1x1x2x64xbf16> to vector<2x64xbf16>
    %c512 = arith.constant 512 : index
    %c0_52 = arith.constant 0 : index
    %44 = vector.load %arg2[%c512, %c0_52] : memref<576x64xbf16, #tpu.memory_space<vmem>>, vector<64x64xbf16>
    %cst_53 = arith.constant dense<0.000000e+00> : vector<2x64xf32>
    %45 = tpu.matmul %43, %44, %cst_53 {dimension_numbers = #tpu.dot_dimension_numbers<[1], [0], [0], [1], [0, 0, 1, 1], [], []>} : vector<2x64xbf16>, vector<64x64xbf16>, vector<2x64xf32> -> vector<2x64xf32>
    %46 = arith.addf %41, %45 : vector<2x64xf32>
    %47 = vector.broadcast %0 : vector<1x64xf32> to vector<2x64xf32>
    %48 = arith.addf %46, %47 : vector<2x64xf32>
    %cst_54 = arith.constant 0.000000e+00 : f32
    %49 = vector.broadcast %cst_54 : f32 to vector<2x64xf32>
    %50 = arith.maximumf %48, %49 : vector<2x64xf32>
    %51 = arith.truncf %50 : vector<2x64xf32> to vector<2x64xbf16>
    %c0_55 = arith.constant 0 : index
    %c0_56 = arith.constant 0 : index
    %c0_57 = arith.constant 0 : index
    %c0_58 = arith.constant 0 : index
    %52 = vector.load %arg4[%c0_55, %c0_56, %c0_57, %c0_58] : memref<1x2x2x64xbf16, #tpu.memory_space<vmem>>, vector<1x1x2x64xbf16>
    %53 = vector.shape_cast %52 : vector<1x1x2x64xbf16> to vector<2x64xbf16>
    %54 = vector.shape_cast %51 : vector<2x64xbf16> to vector<1x1x2x64xbf16>
    tpu.vector_store %arg4[%c0_55, %c0_56, %c0_57, %c0_58], %54 {strides = array<i32>} : memref<1x2x2x64xbf16, #tpu.memory_space<vmem>>, vector<1x1x2x64xbf16>,
    %cst_59 = arith.constant 0.000000e+00 : f32
    %55 = vector.broadcast %cst_59 : f32 to vector<2x64xf32>
    %c0_60 = arith.constant 0 : index
    %c1_61 = arith.constant 1 : index
    %c0_62 = arith.constant 0 : index
    %c0_63 = arith.constant 0 : index
    %56 = vector.load %arg1[%c0_60, %c1_61, %c0_62, %c0_63] : memref<1x4x4x64xbf16, #tpu.memory_space<vmem>>, vector<1x1x2x64xbf16>
    %57 = vector.shape_cast %56 : vector<1x1x2x64xbf16> to vector<2x64xbf16>
    %c0_64 = arith.constant 0 : index
    %c0_65 = arith.constant 0 : index
    %58 = vector.load %arg2[%c0_64, %c0_65] : memref<576x64xbf16, #tpu.memory_space<vmem>>, vector<64x64xbf16>
    %cst_66 = arith.constant dense<0.000000e+00> : vector<2x64xf32>
    %59 = tpu.matmul %57, %58, %cst_66 {dimension_numbers = #tpu.dot_dimension_numbers<[1], [0], [0], [1], [0, 0, 1, 1], [], []>} : vector<2x64xbf16>, vector<64x64xbf16>, vector<2x64xf32> -> vector<2x64xf32>
    %60 = arith.addf %55, %59 : vector<2x64xf32>
    %c0_67 = arith.constant 0 : index
    %c1_68 = arith.constant 1 : index
    %c1_69 = arith.constant 1 : index
    %c0_70 = arith.constant 0 : index
    %61 = vector.load %arg1[%c0_67, %c1_68, %c1_69, %c0_70] : memref<1x4x4x64xbf16, #tpu.memory_space<vmem>>, vector<1x1x2x64xbf16>
    %62 = vector.shape_cast %61 : vector<1x1x2x64xbf16> to vector<2x64xbf16>
    %c64_71 = arith.constant 64 : index
    %c0_72 = arith.constant 0 : index
    %63 = vector.load %arg2[%c64_71, %c0_72] : memref<576x64xbf16, #tpu.memory_space<vmem>>, vector<64x64xbf16>
    %cst_73 = arith.constant dense<0.000000e+00> : vector<2x64xf32>
    %64 = tpu.matmul %62, %63, %cst_73 {dimension_numbers = #tpu.dot_dimension_numbers<[1], [0], [0], [1], [0, 0, 1, 1], [], []>} : vector<2x64xbf16>, vector<64x64xbf16>, vector<2x64xf32> -> vector<2x64xf32>
    %65 = arith.addf %60, %64 : vector<2x64xf32>
    %c0_74 = arith.constant 0 : index
    %c1_75 = arith.constant 1 : index
    %c2_76 = arith.constant 2 : index
    %c0_77 = arith.constant 0 : index
    %66 = vector.load %arg1[%c0_74, %c1_75, %c2_76, %c0_77] : memref<1x4x4x64xbf16, #tpu.memory_space<vmem>>, vector<1x1x2x64xbf16>
    %67 = vector.shape_cast %66 : vector<1x1x2x64xbf16> to vector<2x64xbf16>
    %c128_78 = arith.constant 128 : index
    %c0_79 = arith.constant 0 : index
    %68 = vector.load %arg2[%c128_78, %c0_79] : memref<576x64xbf16, #tpu.memory_space<vmem>>, vector<64x64xbf16>
    %cst_80 = arith.constant dense<0.000000e+00> : vector<2x64xf32>
    %69 = tpu.matmul %67, %68, %cst_80 {dimension_numbers = #tpu.dot_dimension_numbers<[1], [0], [0], [1], [0, 0, 1, 1], [], []>} : vector<2x64xbf16>, vector<64x64xbf16>, vector<2x64xf32> -> vector<2x64xf32>
    %70 = arith.addf %65, %69 : vector<2x64xf32>
    %c0_81 = arith.constant 0 : index
    %c2_82 = arith.constant 2 : index
    %c0_83 = arith.constant 0 : index
    %c0_84 = arith.constant 0 : index
    %71 = vector.load %arg1[%c0_81, %c2_82, %c0_83, %c0_84] : memref<1x4x4x64xbf16, #tpu.memory_space<vmem>>, vector<1x1x2x64xbf16>
    %72 = vector.shape_cast %71 : vector<1x1x2x64xbf16> to vector<2x64xbf16>
    %c192_85 = arith.constant 192 : index
    %c0_86 = arith.constant 0 : index
    %73 = vector.load %arg2[%c192_85, %c0_86] : memref<576x64xbf16, #tpu.memory_space<vmem>>, vector<64x64xbf16>
    %cst_87 = arith.constant dense<0.000000e+00> : vector<2x64xf32>
    %74 = tpu.matmul %72, %73, %cst_87 {dimension_numbers = #tpu.dot_dimension_numbers<[1], [0], [0], [1], [0, 0, 1, 1], [], []>} : vector<2x64xbf16>, vector<64x64xbf16>, vector<2x64xf32> -> vector<2x64xf32>
    %75 = arith.addf %70, %74 : vector<2x64xf32>
    %c0_88 = arith.constant 0 : index
    %c2_89 = arith.constant 2 : index
    %c1_90 = arith.constant 1 : index
    %c0_91 = arith.constant 0 : index
    %76 = vector.load %arg1[%c0_88, %c2_89, %c1_90, %c0_91] : memref<1x4x4x64xbf16, #tpu.memory_space<vmem>>, vector<1x1x2x64xbf16>
    %77 = vector.shape_cast %76 : vector<1x1x2x64xbf16> to vector<2x64xbf16>
    %c256_92 = arith.constant 256 : index
    %c0_93 = arith.constant 0 : index
    %78 = vector.load %arg2[%c256_92, %c0_93] : memref<576x64xbf16, #tpu.memory_space<vmem>>, vector<64x64xbf16>
    %cst_94 = arith.constant dense<0.000000e+00> : vector<2x64xf32>
    %79 = tpu.matmul %77, %78, %cst_94 {dimension_numbers = #tpu.dot_dimension_numbers<[1], [0], [0], [1], [0, 0, 1, 1], [], []>} : vector<2x64xbf16>, vector<64x64xbf16>, vector<2x64xf32> -> vector<2x64xf32>
    %80 = arith.addf %75, %79 : vector<2x64xf32>
    %c0_95 = arith.constant 0 : index
    %c2_96 = arith.constant 2 : index
    %c2_97 = arith.constant 2 : index
    %c0_98 = arith.constant 0 : index
    %81 = vector.load %arg1[%c0_95, %c2_96, %c2_97, %c0_98] : memref<1x4x4x64xbf16, #tpu.memory_space<vmem>>, vector<1x1x2x64xbf16>
    %82 = vector.shape_cast %81 : vector<1x1x2x64xbf16> to vector<2x64xbf16>
    %c320_99 = arith.constant 320 : index
    %c0_100 = arith.constant 0 : index
    %83 = vector.load %arg2[%c320_99, %c0_100] : memref<576x64xbf16, #tpu.memory_space<vmem>>, vector<64x64xbf16>
    %cst_101 = arith.constant dense<0.000000e+00> : vector<2x64xf32>
    %84 = tpu.matmul %82, %83, %cst_101 {dimension_numbers = #tpu.dot_dimension_numbers<[1], [0], [0], [1], [0, 0, 1, 1], [], []>} : vector<2x64xbf16>, vector<64x64xbf16>, vector<2x64xf32> -> vector<2x64xf32>
    %85 = arith.addf %80, %84 : vector<2x64xf32>
    %c0_102 = arith.constant 0 : index
    %c3 = arith.constant 3 : index
    %c0_103 = arith.constant 0 : index
    %c0_104 = arith.constant 0 : index
    %86 = vector.load %arg1[%c0_102, %c3, %c0_103, %c0_104] : memref<1x4x4x64xbf16, #tpu.memory_space<vmem>>, vector<1x1x2x64xbf16>
    %87 = vector.shape_cast %86 : vector<1x1x2x64xbf16> to vector<2x64xbf16>
    %c384_105 = arith.constant 384 : index
    %c0_106 = arith.constant 0 : index
    %88 = vector.load %arg2[%c384_105, %c0_106] : memref<576x64xbf16, #tpu.memory_space<vmem>>, vector<64x64xbf16>
    %cst_107 = arith.constant dense<0.000000e+00> : vector<2x64xf32>
    %89 = tpu.matmul %87, %88, %cst_107 {dimension_numbers = #tpu.dot_dimension_numbers<[1], [0], [0], [1], [0, 0, 1, 1], [], []>} : vector<2x64xbf16>, vector<64x64xbf16>, vector<2x64xf32> -> vector<2x64xf32>
    %90 = arith.addf %85, %89 : vector<2x64xf32>
    %c0_108 = arith.constant 0 : index
    %c3_109 = arith.constant 3 : index
    %c1_110 = arith.constant 1 : index
    %c0_111 = arith.constant 0 : index
    %91 = vector.load %arg1[%c0_108, %c3_109, %c1_110, %c0_111] : memref<1x4x4x64xbf16, #tpu.memory_space<vmem>>, vector<1x1x2x64xbf16>
    %92 = vector.shape_cast %91 : vector<1x1x2x64xbf16> to vector<2x64xbf16>
    %c448_112 = arith.constant 448 : index
    %c0_113 = arith.constant 0 : index
    %93 = vector.load %arg2[%c448_112, %c0_113] : memref<576x64xbf16, #tpu.memory_space<vmem>>, vector<64x64xbf16>
    %cst_114 = arith.constant dense<0.000000e+00> : vector<2x64xf32>
    %94 = tpu.matmul %92, %93, %cst_114 {dimension_numbers = #tpu.dot_dimension_numbers<[1], [0], [0], [1], [0, 0, 1, 1], [], []>} : vector<2x64xbf16>, vector<64x64xbf16>, vector<2x64xf32> -> vector<2x64xf32>
    %95 = arith.addf %90, %94 : vector<2x64xf32>
    %c0_115 = arith.constant 0 : index
    %c3_116 = arith.constant 3 : index
    %c2_117 = arith.constant 2 : index
    %c0_118 = arith.constant 0 : index
    %96 = vector.load %arg1[%c0_115, %c3_116, %c2_117, %c0_118] : memref<1x4x4x64xbf16, #tpu.memory_space<vmem>>, vector<1x1x2x64xbf16>
    %97 = vector.shape_cast %96 : vector<1x1x2x64xbf16> to vector<2x64xbf16>
    %c512_119 = arith.constant 512 : index
    %c0_120 = arith.constant 0 : index
    %98 = vector.load %arg2[%c512_119, %c0_120] : memref<576x64xbf16, #tpu.memory_space<vmem>>, vector<64x64xbf16>
    %cst_121 = arith.constant dense<0.000000e+00> : vector<2x64xf32>
    %99 = tpu.matmul %97, %98, %cst_121 {dimension_numbers = #tpu.dot_dimension_numbers<[1], [0], [0], [1], [0, 0, 1, 1], [], []>} : vector<2x64xbf16>, vector<64x64xbf16>, vector<2x64xf32> -> vector<2x64xf32>
    %100 = arith.addf %95, %99 : vector<2x64xf32>
    %101 = vector.broadcast %0 : vector<1x64xf32> to vector<2x64xf32>
    %102 = arith.addf %100, %101 : vector<2x64xf32>
    %cst_122 = arith.constant 0.000000e+00 : f32
    %103 = vector.broadcast %cst_122 : f32 to vector<2x64xf32>
    %104 = arith.maximumf %102, %103 : vector<2x64xf32>
    %105 = arith.truncf %104 : vector<2x64xf32> to vector<2x64xbf16>
    %c0_123 = arith.constant 0 : index
    %c1_124 = arith.constant 1 : index
    %c0_125 = arith.constant 0 : index
    %c0_126 = arith.constant 0 : index
    %106 = vector.load %arg4[%c0_123, %c1_124, %c0_125, %c0_126] : memref<1x2x2x64xbf16, #tpu.memory_space<vmem>>, vector<1x1x2x64xbf16>
    %107 = vector.shape_cast %106 : vector<1x1x2x64xbf16> to vector<2x64xbf16>
    %108 = vector.shape_cast %105 : vector<2x64xbf16> to vector<1x1x2x64xbf16>
    tpu.vector_store %arg4[%c0_123, %c1_124, %c0_125, %c0_126], %108 {strides = array<i32>} : memref<1x2x2x64xbf16, #tpu.memory_space<vmem>>, vector<1x1x2x64xbf16>,
    return
  }
  func.func @transform_0(%arg0: i32) -> (i32, i32, i32, i32) {
    %c0_i32 = arith.constant 0 : i32
    %c0_i32_0 = arith.constant 0 : i32
    %c0_i32_1 = arith.constant 0 : i32
    %c0_i32_2 = arith.constant 0 : i32
    return %arg0, %c0_i32, %c0_i32_0, %c0_i32_1 : i32, i32, i32, i32
  }
  func.func @transform_1(%arg0: i32) -> (i32, i32) {
    %c0_i32 = arith.constant 0 : i32
    %c0_i32_0 = arith.constant 0 : i32
    %c0_i32_1 = arith.constant 0 : i32
    return %c0_i32, %c0_i32_0 : i32, i32
  }
  func.func @transform_2(%arg0: i32) -> (i32, i32) {
    %c0_i32 = arith.constant 0 : i32
    %c0_i32_0 = arith.constant 0 : i32
    %c0_i32_1 = arith.constant 0 : i32
    return %c0_i32, %c0_i32_0 : i32, i32
  }
  func.func @transform_3(%arg0: i32) -> (i32, i32, i32, i32) {
    %c0_i32 = arith.constant 0 : i32
    %c0_i32_0 = arith.constant 0 : i32
    %c0_i32_1 = arith.constant 0 : i32
    %c0_i32_2 = arith.constant 0 : i32
    return %arg0, %c0_i32, %c0_i32_0, %c0_i32_1 : i32, i32, i32, i32
  }
}

module attributes {stable_mosaic.version = 11 : i64} {
  func.func @_head_kernel(%arg0: i32, %arg1: memref<8x256xbf16, #tpu.memory_space<vmem>>, %arg2: memref<256x512xbf16, #tpu.memory_space<vmem>>, %arg3: memref<1x512xf32, #tpu.memory_space<vmem>>, %arg4: memref<512x4xbf16, #tpu.memory_space<vmem>>, %arg5: memref<1x4xf32, #tpu.memory_space<vmem>>, %arg6: memref<8x4xf32, #tpu.memory_space<vmem>>) attributes {dimension_semantics = [#tpu.dimension_semantics<parallel>], iteration_bounds = array<i64: 1>, scalar_prefetch = 0 : i64, scratch_operands = 0 : i64, tpu.core_type = #tpu.core_type<tc>, window_params = [{transform_indices = @transform_0, window_bounds = array<i64: 8, 256>}, {pipeline_mode = #tpu.pipeline_mode<synchronous>, transform_indices = @transform_1, window_bounds = array<i64: 256, 512>}, {pipeline_mode = #tpu.pipeline_mode<synchronous>, transform_indices = @transform_2, window_bounds = array<i64: 1, 512>}, {pipeline_mode = #tpu.pipeline_mode<synchronous>, transform_indices = @transform_3, window_bounds = array<i64: 512, 4>}, {pipeline_mode = #tpu.pipeline_mode<synchronous>, transform_indices = @transform_4, window_bounds = array<i64: 1, 4>}, {transform_indices = @transform_5, window_bounds = array<i64: 8, 4>}]} {
    %c0 = arith.constant 0 : index
    %c0_0 = arith.constant 0 : index
    %0 = vector.load %arg1[%c0, %c0_0] : memref<8x256xbf16, #tpu.memory_space<vmem>>, vector<8x256xbf16>
    %c0_1 = arith.constant 0 : index
    %c0_2 = arith.constant 0 : index
    %1 = vector.load %arg2[%c0_1, %c0_2] : memref<256x512xbf16, #tpu.memory_space<vmem>>, vector<256x512xbf16>
    %cst = arith.constant dense<0.000000e+00> : vector<8x512xf32>
    %2 = tpu.matmul %0, %1, %cst {dimension_numbers = #tpu.dot_dimension_numbers<[1], [0], [0], [1], [0, 0, 1, 1], [], []>} : vector<8x256xbf16>, vector<256x512xbf16>, vector<8x512xf32> -> vector<8x512xf32>
    %c0_3 = arith.constant 0 : index
    %c0_4 = arith.constant 0 : index
    %3 = vector.load %arg3[%c0_3, %c0_4] : memref<1x512xf32, #tpu.memory_space<vmem>>, vector<1x512xf32>
    %4 = vector.broadcast %3 : vector<1x512xf32> to vector<8x512xf32>
    %5 = arith.addf %2, %4 : vector<8x512xf32>
    %6 = arith.truncf %5 : vector<8x512xf32> to vector<8x512xbf16>
    %c0_5 = arith.constant 0 : index
    %c0_6 = arith.constant 0 : index
    %7 = vector.load %arg4[%c0_5, %c0_6] : memref<512x4xbf16, #tpu.memory_space<vmem>>, vector<512x4xbf16>
    %cst_7 = arith.constant dense<0.000000e+00> : vector<8x4xf32>
    %8 = tpu.matmul %6, %7, %cst_7 {dimension_numbers = #tpu.dot_dimension_numbers<[1], [0], [0], [1], [0, 0, 1, 1], [], []>} : vector<8x512xbf16>, vector<512x4xbf16>, vector<8x4xf32> -> vector<8x4xf32>
    %c0_8 = arith.constant 0 : index
    %c0_9 = arith.constant 0 : index
    %9 = vector.load %arg5[%c0_8, %c0_9] : memref<1x4xf32, #tpu.memory_space<vmem>>, vector<1x4xf32>
    %10 = vector.broadcast %9 : vector<1x4xf32> to vector<8x4xf32>
    %11 = arith.addf %8, %10 : vector<8x4xf32>
    %c0_10 = arith.constant 0 : index
    %c0_11 = arith.constant 0 : index
    %12 = vector.load %arg6[%c0_10, %c0_11] : memref<8x4xf32, #tpu.memory_space<vmem>>, vector<8x4xf32>
    tpu.vector_store %arg6[%c0_10, %c0_11], %11 {strides = array<i32>} : memref<8x4xf32, #tpu.memory_space<vmem>>, vector<8x4xf32>,
    return
  }
  func.func @transform_0(%arg0: i32) -> (i32, i32) {
    %c0_i32 = arith.constant 0 : i32
    %c0_i32_0 = arith.constant 0 : i32
    return %arg0, %c0_i32 : i32, i32
  }
  func.func @transform_1(%arg0: i32) -> (i32, i32) {
    %c0_i32 = arith.constant 0 : i32
    %c0_i32_0 = arith.constant 0 : i32
    %c0_i32_1 = arith.constant 0 : i32
    return %c0_i32, %c0_i32_0 : i32, i32
  }
  func.func @transform_2(%arg0: i32) -> (i32, i32) {
    %c0_i32 = arith.constant 0 : i32
    %c0_i32_0 = arith.constant 0 : i32
    %c0_i32_1 = arith.constant 0 : i32
    return %c0_i32, %c0_i32_0 : i32, i32
  }
  func.func @transform_3(%arg0: i32) -> (i32, i32) {
    %c0_i32 = arith.constant 0 : i32
    %c0_i32_0 = arith.constant 0 : i32
    %c0_i32_1 = arith.constant 0 : i32
    return %c0_i32, %c0_i32_0 : i32, i32
  }
  func.func @transform_4(%arg0: i32) -> (i32, i32) {
    %c0_i32 = arith.constant 0 : i32
    %c0_i32_0 = arith.constant 0 : i32
    %c0_i32_1 = arith.constant 0 : i32
    return %c0_i32, %c0_i32_0 : i32, i32
  }
  func.func @transform_5(%arg0: i32) -> (i32, i32) {
    %c0_i32 = arith.constant 0 : i32
    %c0_i32_0 = arith.constant 0 : i32
    return %arg0, %c0_i32 : i32, i32
  }
}

</mosaic_0001>

<llo_original>
// kernel: dqn_forward.6
$region0: #{dqn_forward.6}
  #allocation0 [shape = 'u32[]', space=smem, size = 0x4, offset = 0x4, fixed_abs, tag = 'smem constant byte address 0x4 - core index']
  #allocation1 [shape = 'u32[144,128]{1,0:T(1,128)}', space=vmem, size = 0x12000, scoped, tag = 'internal scratch']
  %s0 = inlined_call_operand.vmem [shape: bf16[2,4,4,64], index: 0, kind: input, shape index: {}]
  %s1 = inlined_call_operand.vmem [shape: bf16[576,64], index: 1, kind: input, shape index: {}]
  %s2 = inlined_call_operand.vmem [shape: f32[1,64], index: 2, kind: input, shape index: {}]
  %s3 = inlined_call_operand.vmem [shape: bf16[2,2,2,64], index: 3, kind: output, shape index: {}]
  %s4 = sld [smem:[#allocation0]]
  $region45: #{dqn_forward.6} parent=0
    _
  %s6 = ssub.s32 1, %s4
  %s7 = scalar_select 0, %s6, %s4
  loop: start=0, step=1, limit=4
  $region2: #{dqn_forward.6} parent=0 // loop_pre_header
    _
  $region3: #{dqn_forward.6} parent=0 // loop_header
    %s9 = sphi 0, %s13
    %p10 = scmp.ge.s32.totalorder %s9, 4
    %s19 = sphi 0, %s21
    %s22 = sphi 0, %s19
    %s23 = sphi 0, %s22
    %s39 = sphi 0, %s23
    %s43 = sphi 0, %s43
    %s45 = sphi 0, %s43
    %s46 = sphi 0, %s45
    %s60 = sphi 0, %s46
    %s64 = sphi 0, %s64
    %s66 = sphi 0, %s64
    %s67 = sphi 0, %s66
    %s81 = sphi 0, %s67
    %s87 = sphi 0, %s89
    %s90 = sphi 0, %s87
    %s91 = sphi 0, %s90
    %s107 = sphi 0, %s91
  $region4: #{dqn_forward.6} parent=0 // loop_header_branch
    %12 = sbr.rel (%p10) target = $region8
  $region5: #{dqn_forward.6} parent=0 // loop_body
    %s14 = ssub.s32 %s9, 1
    %s15 = ssub.s32 %s9, 2
    %s16 = sadd.s32 %s9, 1
    %s17 = ssub.s32 %s9, %s16
    %p18 = scmp.eq.s32.totalorder %s17, 0
    %s20 = sadd.s32 %s19, 1
    %s21 = scalar_select %p18, %s19, %s20
    %p24 = pneg %p18
    %p25 = scmp.eq.s32.totalorder %s9, 1
    %p26 = por %p24, %p25
    %p27 = scmp.ne.s32.totalorder %s19, %s22
    %p28 = scmp.eq.s32.totalorder %s9, 0
    %p29 = por %p27, %p28
    %p30 = scmp.ne.s32.totalorder %s19, %s22
    %p31 = scmp.eq.s32.totalorder %s14, 1
    %p32 = por %p30, %p31
    %p33 = scmp.ne.s32.totalorder %s22, %s23
    %p34 = scmp.eq.s32.totalorder %s14, 0
    %p35 = por %p33, %p34
    %p36 = scmp.ne.s32.totalorder %s22, %s23
    %p37 = scmp.eq.s32.totalorder %s15, 1
    %p38 = por %p36, %p37
    %p40 = scmp.ne.s32.totalorder %s23, %s39
    %p41 = scmp.eq.s32.totalorder %s15, 0
    %p42 = por %p40, %p41
    %s44 = sadd.s32 %s43, 1
    %p47 = scmp.eq.s32.totalorder %s9, 1
    %p48 = scmp.ne.s32.totalorder %s43, %s45
    %p49 = scmp.eq.s32.totalorder %s9, 0
    %p50 = por %p48, %p49
    %p51 = scmp.ne.s32.totalorder %s43, %s45
    %p52 = scmp.eq.s32.totalorder %s14, 1
    %p53 = por %p51, %p52
    %p54 = scmp.ne.s32.totalorder %s45, %s46
    %p55 = scmp.eq.s32.totalorder %s14, 0
    %p56 = por %p54, %p55
    %p57 = scmp.ne.s32.totalorder %s45, %s46
    %p58 = scmp.eq.s32.totalorder %s15, 1
    %p59 = por %p57, %p58
    %p61 = scmp.ne.s32.totalorder %s46, %s60
    %p62 = scmp.eq.s32.totalorder %s15, 0
    %p63 = por %p61, %p62
    %s65 = sadd.s32 %s64, 1
    %p68 = scmp.eq.s32.totalorder %s9, 1
    %p69 = scmp.ne.s32.totalorder %s64, %s66
    %p70 = scmp.eq.s32.totalorder %s9, 0
    %p71 = por %p69, %p70
    %p72 = scmp.ne.s32.totalorder %s64, %s66
    %p73 = scmp.eq.s32.totalorder %s14, 1
    %p74 = por %p72, %p73
    %p75 = scmp.ne.s32.totalorder %s66, %s67
    %p76 = scmp.eq.s32.totalorder %s14, 0
    %p77 = por %p75, %p76
    %p78 = scmp.ne.s32.totalorder %s66, %s67
    %p79 = scmp.eq.s32.totalorder %s15, 1
    %p80 = por %p78, %p79
    %p82 = scmp.ne.s32.totalorder %s67, %s81
    %p83 = scmp.eq.s32.totalorder %s15, 0
    %p84 = por %p82, %p83
    %s85 = ssub.s32 %s9, %s16
    %p86 = scmp.eq.s32.totalorder %s85, 0
    %s88 = sadd.s32 %s87, 1
    %s89 = scalar_select %p86, %s87, %s88
    %p92 = pneg %p86
    %p93 = scmp.eq.s32.totalorder %s9, 1
    %p94 = por %p92, %p93
    %p95 = scmp.ne.s32.totalorder %s87, %s90
    %p96 = scmp.eq.s32.totalorder %s9, 0
    %p97 = por %p95, %p96
    %p98 = scmp.ne.s32.totalorder %s87, %s90
    %p99 = scmp.eq.s32.totalorder %s14, 1
    %p100 = por %p98, %p99
    %p101 = scmp.ne.s32.totalorder %s90, %s91
    %p102 = scmp.eq.s32.totalorder %s14, 0
    %p103 = por %p101, %p102
    %p104 = scmp.ne.s32.totalorder %s90, %s91
    %p105 = scmp.eq.s32.totalorder %s15, 1
    %p106 = por %p104, %p105
    %p108 = scmp.ne.s32.totalorder %s91, %s107
    %p109 = scmp.eq.s32.totalorder %s15, 0
    %p110 = por %p108, %p109
    %p111 = scmp.le.s32.totalorder 1, %s9
    %p112 = scmp.lt.s32.totalorder %s9, 3
    %p113 = pnand %p111, %p112
    %p114 = pneg %p113
    // Predicated region
    $region9: #{dqn_forward.6} parent=5 // pred_check
      _
    $region10: #{dqn_forward.6} parent=5 // pred_check_branch
      %116 = sbr.rel (%p113) target = $region12
    $region11: #{dqn_forward.6} parent=5 // pred_region
      %s117 = ssub.s32 %s9, 1
      // Predicated region
      $region13: #{dqn_forward.6} parent=11 // pred_check
        %p118 = pneg %p56
      $region14: #{dqn_forward.6} parent=11 // pred_check_branch
        %120 = sbr.rel (%p118) target = $region16
      $region15: #{dqn_forward.6} parent=11 // pred_region
        _
      $region16: #{dqn_forward.6} parent=11 // pred_fallthru
        _
      // Predicated region
      $region17: #{dqn_forward.6} parent=11 // pred_check
        %p121 = pneg %p77
      $region18: #{dqn_forward.6} parent=11 // pred_check_branch
        %123 = sbr.rel (%p121) target = $region20
      $region19: #{dqn_forward.6} parent=11 // pred_region
        _
      $region20: #{dqn_forward.6} parent=11 // pred_fallthru
        _
    $region12: #{dqn_forward.6} parent=5 // pred_fallthru
      _
    %p124 = scmp.lt.s32.totalorder %s9, 2
    // Predicated region
    $region21: #{dqn_forward.6} parent=5 // pred_check
      %p125 = pneg %p124
    $region22: #{dqn_forward.6} parent=5 // pred_check_branch
      %127 = sbr.rel (%p125) target = $region24
    $region23: #{dqn_forward.6} parent=5 // pred_region
      // Predicated region
      $region25: #{dqn_forward.6} parent=23 // pred_check
        %p128 = pneg %p29
      $region26: #{dqn_forward.6} parent=23 // pred_check_branch
        %130 = sbr.rel (%p128) target = $region28
      $region27: #{dqn_forward.6} parent=23 // pred_region
        %p131 = scmp.lt.s32.totalorder %s9, 1
        %s132 = scalar_select %p131, %s9, 1
        %s133 = smul.addr %s132, 4
        %s134 = smul.addr %s133, 2
        %s135 = scalar_lea.vmem %s0, %s134
      $region28: #{dqn_forward.6} parent=23 // pred_fallthru
        _
    $region24: #{dqn_forward.6} parent=5 // pred_fallthru
      _
    %p136 = scmp.le.s32.totalorder 1, %s9
    %p137 = scmp.lt.s32.totalorder %s9, 3
    %p138 = pnand %p136, %p137
    %p139 = pneg %p138
    // Predicated region
    $region29: #{dqn_forward.6} parent=5 // pred_check
      _
    $region30: #{dqn_forward.6} parent=5 // pred_check_branch
      %141 = sbr.rel (%p138) target = $region32
    $region31: #{dqn_forward.6} parent=5 // pred_region
      %s142 = ssub.s32 %s9, 1
      %p143 = scmp.lt.s32.totalorder %s14, 1
      %s144 = scalar_select %p143, %s14, 1
      %s145 = smul.addr %s144, 4
      %s146 = smul.addr %s145, 2
      %s147 = scalar_lea.vmem %s0, %s146
      %p148 = pneg %p35
      %p149 = pneg %p32
      %p150 = pneg %p56
      %p151 = pneg %p53
      %p152 = pneg %p77
      %p153 = pneg %p74
      %p154 = pneg %p103
      %p155 = pneg %p100
      %p156 = scmp.lt.s32.totalorder %s14, 1
      %s157 = scalar_select %p156, %s14, 1
      %s158 = smul.addr %s157, 2
      %s159 = scalar_lea.vmem %s3, %s158
      %p160 = scmp.lt.s32.totalorder %s14, 1
      %s161 = scalar_select %p160, %s14, 1
      %s162 = smul.addr %s161, 4
      %s163 = smul.addr %s162, 2
      %s164 = scalar_lea.vmem %s0, %s163
      %p165 = scmp.lt.s32.totalorder %s14, 1
      %s166 = scalar_select %p165, %s14, 1
      %s167 = smul.addr %s166, 2
      %s168 = scalar_lea.vmem %s3, %s167
      %v170 = vld [vmem:[%s2] sm:$0x1]
      %v171 = vld [vmem:[%s164] sm:$0x1]
      %v172 = vld [vmem:[%s1] sm:$0xf]
      %v173 = vld [vmem:[%s1 + $0x4] sm:$0xf]
      %v174 = vld [vmem:[%s1 + $0x8] sm:$0xf]
      %v175 = vld [vmem:[%s1 + $0xc] sm:$0xf]
      %v176 = vld [vmem:[%s1 + $0x10] sm:$0xf]
      %v177 = vld [vmem:[%s1 + $0x14] sm:$0xf]
      %v178 = vld [vmem:[%s1 + $0x18] sm:$0xf]
      %v179 = vld [vmem:[%s1 + $0x1c] sm:$0xf]
      %v180 = vld [vmem:[%s164] sm:$0x3]
      %v181 = vld [vmem:[%s1 + $0x20] sm:$0xf]
      %v182 = vld [vmem:[%s1 + $0x24] sm:$0xf]
      %v183 = vld [vmem:[%s1 + $0x28] sm:$0xf]
      %v184 = vld [vmem:[%s1 + $0x2c] sm:$0xf]
      %v185 = vld [vmem:[%s1 + $0x30] sm:$0xf]
      %v186 = vld [vmem:[%s1 + $0x34] sm:$0xf]
      %v187 = vld [vmem:[%s1 + $0x38] sm:$0xf]
      %v188 = vld [vmem:[%s1 + $0x3c] sm:$0xf]
      %v191 = vunpack.c.l.s4 1983009808
      %v192 = vunpack.c.0.s8 %v191
      %v193 = vlaneseq
      %v194 = vshrl.u32 %v193, 7
      %v195 = vsub.s32 %v192, %v194
      %v196 = vrot.slane %v180, %v195
      %v198 = vshrl.u32 %v196, 16
      %v200 = vshll.u32 %v196, 16
      %v202 = vrot.slane %v200, 1
      %v203 = vor.u32 %v198, %v202
      %v212 = vunpack.c.l.b16 %v181
      %v213 = vunpack.c.l.b16 %v182
      %v214 = vunpack.c.l.b16 %v183
      %v215 = vunpack.c.l.b16 %v184
      %v216 = vunpack.c.l.b16 %v185
      %v217 = vunpack.c.l.b16 %v186
      %v218 = vunpack.c.l.b16 %v187
      %v219 = vunpack.c.l.b16 %v188
      %v220 = vpack.c.b16 %v213, %v212
      %v221 = vpack.c.b16 %v215, %v214
      %v222 = vpack.c.b16 %v217, %v216
      %v223 = vpack.c.b16 %v219, %v218
      %vm228 = vcmask 523264
      %v230 = vsel %vm228, %v203, 0
      %232 = vmatprep.subr.bf16.mxu0 0
      %233 = vmatpush1.bf16.msra.mxu0 %v220
      %234 = vmatprep.subr.bf16.mxu0 0
      %235 = vmatpush1.bf16.msra.mxu0 %v221
      %236 = vmatprep.subr.bf16.mxu0 0
      %237 = vmatpush1.bf16.msra.mxu0 %v222
      %238 = vmatprep.subr.bf16.mxu0 0
      %239 = vmatpush1.bf16.msra.mxu0 %v223
      %240 = vmatprep.subr.bf16.mxu0 0
      %241 = vmatpush1.bf16.msra.mxu0 0
      %242 = vmatprep.subr.bf16.mxu0 0
      %243 = vmatpush1.bf16.msra.mxu0 0
      %244 = vmatprep.subr.bf16.mxu0 0
      %245 = vmatpush1.bf16.msra.mxu0 0
      %246 = vmatprep.subr.bf16.mxu0 0
      %247 = vmatpush1.bf16.msra.mxu0 0
      %248 = vmatprep.subr.bf16.mxu0 0
      %249 = vmatpush1.bf16.msra.mxu0 0
      %250 = vmatprep.subr.bf16.mxu0 0
      %251 = vmatpush1.bf16.msra.mxu0 0
      %252 = vmatprep.subr.bf16.mxu0 0
      %253 = vmatpush1.bf16.msra.mxu0 0
      %254 = vmatprep.subr.bf16.mxu0 0
      %255 = vmatpush1.bf16.msra.mxu0 0
      %256 = vmatprep.subr.bf16.mxu0 0
      %257 = vmatpush1.bf16.msra.mxu0 0
      %258 = vmatprep.subr.bf16.mxu0 0
      %259 = vmatpush1.bf16.msra.mxu0 0
      %260 = vmatprep.subr.bf16.mxu0 0
      %261 = vmatpush1.bf16.msra.mxu0 0
      %262 = vmatprep.subr.bf16.mxu0 0
      %263 = vmatpush1.bf16.msra.mxu0 0
      %264 = vmatprep.mubr.bf16.mxu0 0
      %265 = vmatmul.mubr.bf16.gmra.mrb[0].mxu0 %v230
      %v266 = vpop.f32.mrb[0].mxu0
      %v267 = vadd.f32 0.0, %v266
      %v268 = vpop.f32.mrb[0].mxu0
      %v269 = vpop.f32.mrb[0].mxu0
      %v270 = vpop.f32.mrb[0].mxu0
      %271 = vdwg.mxu0
      %v280 = vunpack.c.l.b16 %v172
      %v281 = vunpack.c.l.b16 %v173
      %v282 = vunpack.c.l.b16 %v174
      %v283 = vunpack.c.l.b16 %v175
      %v284 = vunpack.c.l.b16 %v176
      %v285 = vunpack.c.l.b16 %v177
      %v286 = vunpack.c.l.b16 %v178
      %v287 = vunpack.c.l.b16 %v179
      %v288 = vpack.c.b16 %v281, %v280
      %v289 = vpack.c.b16 %v283, %v282
      %v290 = vpack.c.b16 %v285, %v284
      %v291 = vpack.c.b16 %v287, %v286
      %v297 = vsel %vm228, %v171, 0
      %299 = vmatprep.subr.bf16.mxu0 0
      %300 = vmatpush1.bf16.msra.mxu0 %v288
      %301 = vmatprep.subr.bf16.mxu0 0
      %302 = vmatpush1.bf16.msra.mxu0 %v289
      %303 = vmatprep.subr.bf16.mxu0 0
      %304 = vmatpush1.bf16.msra.mxu0 %v290
      %305 = vmatprep.subr.bf16.mxu0 0
      %306 = vmatpush1.bf16.msra.mxu0 %v291
      %307 = vmatprep.subr.bf16.mxu0 0
      %308 = vmatpush1.bf16.msra.mxu0 0
      %309 = vmatprep.subr.bf16.mxu0 0
      %310 = vmatpush1.bf16.msra.mxu0 0
      %311 = vmatprep.subr.bf16.mxu0 0
      %312 = vmatpush1.bf16.msra.mxu0 0
      %313 = vmatprep.subr.bf16.mxu0 0
      %314 = vmatpush1.bf16.msra.mxu0 0
      %315 = vmatprep.subr.bf16.mxu0 0
      %316 = vmatpush1.bf16.msra.mxu0 0
      %317 = vmatprep.subr.bf16.mxu0 0
      %318 = vmatpush1.bf16.msra.mxu0 0
      %319 = vmatprep.subr.bf16.mxu0 0
      %320 = vmatpush1.bf16.msra.mxu0 0
      %321 = vmatprep.subr.bf16.mxu0 0
      %322 = vmatpush1.bf16.msra.mxu0 0
      %323 = vmatprep.subr.bf16.mxu0 0
      %324 = vmatpush1.bf16.msra.mxu0 0
      %325 = vmatprep.subr.bf16.mxu0 0
      %326 = vmatpush1.bf16.msra.mxu0 0
      %327 = vmatprep.subr.bf16.mxu0 0
      %328 = vmatpush1.bf16.msra.mxu0 0
      %329 = vmatprep.subr.bf16.mxu0 0
      %330 = vmatpush1.bf16.msra.mxu0 0
      %331 = vmatprep.mubr.bf16.mxu0 0
      %332 = vmatmul.mubr.bf16.gmra.mrb[0].mxu0 %v297
      %v333 = vpop.f32.mrb[0].mxu0
      %v334 = vadd.f32 %v267, %v333
      %v335 = vpop.f32.mrb[0].mxu0
      %v336 = vpop.f32.mrb[0].mxu0
      %v337 = vpop.f32.mrb[0].mxu0
      %338 = vdwg.mxu0
      %v339 = vld [vmem:[%s164] sm:$0x2]
      %v340 = vld [vmem:[%s1 + $0x40] sm:$0xf]
      %v341 = vld [vmem:[%s1 + $0x44] sm:$0xf]
      %v342 = vld [vmem:[%s1 + $0x48] sm:$0xf]
      %v343 = vld [vmem:[%s1 + $0x4c] sm:$0xf]
      %v344 = vld [vmem:[%s1 + $0x50] sm:$0xf]
      %v345 = vld [vmem:[%s1 + $0x54] sm:$0xf]
      %v346 = vld [vmem:[%s1 + $0x58] sm:$0xf]
      %v347 = vld [vmem:[%s1 + $0x5c] sm:$0xf]
      %v350 = vunpack.c.l.s4 1983009808
      %v351 = vunpack.c.0.s8 %v350
      %v352 = vlaneseq
      %v353 = vshrl.u32 %v352, 7
      %v354 = vsub.s32 %v351, %v353
      %v355 = vrot.slane %v339, %v354
      %v356 = vrot.slane %v355, 1
      %v365 = vunpack.c.l.b16 %v340
      %v366 = vunpack.c.l.b16 %v341
      %v367 = vunpack.c.l.b16 %v342
      %v368 = vunpack.c.l.b16 %v343
      %v369 = vunpack.c.l.b16 %v344
      %v370 = vunpack.c.l.b16 %v345
      %v371 = vunpack.c.l.b16 %v346
      %v372 = vunpack.c.l.b16 %v347
      %v373 = vpack.c.b16 %v366, %v365
      %v374 = vpack.c.b16 %v368, %v367
      %v375 = vpack.c.b16 %v370, %v369
      %v376 = vpack.c.b16 %v372, %v371
      %v382 = vsel %vm228, %v356, 0
      %384 = vmatprep.subr.bf16.mxu0 0
      %385 = vmatpush1.bf16.msra.mxu0 %v373
      %386 = vmatprep.subr.bf16.mxu0 0
      %387 = vmatpush1.bf16.msra.mxu0 %v374
      %388 = vmatprep.subr.bf16.mxu0 0
      %389 = vmatpush1.bf16.msra.mxu0 %v375
      %390 = vmatprep.subr.bf16.mxu0 0
      %391 = vmatpush1.bf16.msra.mxu0 %v376
      %392 = vmatprep.subr.bf16.mxu0 0
      %393 = vmatpush1.bf16.msra.mxu0 0
      %394 = vmatprep.subr.bf16.mxu0 0
      %395 = vmatpush1.bf16.msra.mxu0 0
      %396 = vmatprep.subr.bf16.mxu0 0
      %397 = vmatpush1.bf16.msra.mxu0 0
      %398 = vmatprep.subr.bf16.mxu0 0
      %399 = vmatpush1.bf16.msra.mxu0 0
      %400 = vmatprep.subr.bf16.mxu0 0
      %401 = vmatpush1.bf16.msra.mxu0 0
      %402 = vmatprep.subr.bf16.mxu0 0
      %403 = vmatpush1.bf16.msra.mxu0 0
      %404 = vmatprep.subr.bf16.mxu0 0
      %405 = vmatpush1.bf16.msra.mxu0 0
      %406 = vmatprep.subr.bf16.mxu0 0
      %407 = vmatpush1.bf16.msra.mxu0 0
      %408 = vmatprep.subr.bf16.mxu0 0
      %409 = vmatpush1.bf16.msra.mxu0 0
      %410 = vmatprep.subr.bf16.mxu0 0
      %411 = vmatpush1.bf16.msra.mxu0 0
      %412 = vmatprep.subr.bf16.mxu0 0
      %413 = vmatpush1.bf16.msra.mxu0 0
      %414 = vmatprep.subr.bf16.mxu0 0
      %415 = vmatpush1.bf16.msra.mxu0 0
      %416 = vmatprep.mubr.bf16.mxu0 0
      %417 = vmatmul.mubr.bf16.gmra.mrb[0].mxu0 %v382
      %v418 = vpop.f32.mrb[0].mxu0
      %v419 = vadd.f32 0.0, %v418
      %v420 = vpop.f32.mrb[0].mxu0
      %v421 = vpop.f32.mrb[0].mxu0
      %v422 = vpop.f32.mrb[0].mxu0
      %423 = vdwg.mxu0
      %v424 = vadd.f32 %v334, %v419
      %s425 = scalar_lea.vmem %s164, 2
      %v426 = vld [vmem:[%s425] sm:$0x1]
      %v427 = vld [vmem:[%s1 + $0x60] sm:$0xf]
      %v428 = vld [vmem:[%s1 + $0x64] sm:$0xf]
      %v429 = vld [vmem:[%s1 + $0x68] sm:$0xf]
      %v430 = vld [vmem:[%s1 + $0x6c] sm:$0xf]
      %v431 = vld [vmem:[%s1 + $0x70] sm:$0xf]
      %v432 = vld [vmem:[%s1 + $0x74] sm:$0xf]
      %v433 = vld [vmem:[%s1 + $0x78] sm:$0xf]
      %v434 = vld [vmem:[%s1 + $0x7c] sm:$0xf]
      %v443 = vunpack.c.l.b16 %v427
      %v444 = vunpack.c.l.b16 %v428
      %v445 = vunpack.c.l.b16 %v429
      %v446 = vunpack.c.l.b16 %v430
      %v447 = vunpack.c.l.b16 %v431
      %v448 = vunpack.c.l.b16 %v432
      %v449 = vunpack.c.l.b16 %v433
      %v450 = vunpack.c.l.b16 %v434
      %v451 = vpack.c.b16 %v444, %v443
      %v452 = vpack.c.b16 %v446, %v445
      %v453 = vpack.c.b16 %v448, %v447
      %v454 = vpack.c.b16 %v450, %v449
      %v460 = vsel %vm228, %v426, 0
      %462 = vmatprep.subr.bf16.mxu0 0
      %463 = vmatpush1.bf16.msra.mxu0 %v451
      %464 = vmatprep.subr.bf16.mxu0 0
      %465 = vmatpush1.bf16.msra.mxu0 %v452
      %466 = vmatprep.subr.bf16.mxu0 0
      %467 = vmatpush1.bf16.msra.mxu0 %v453
      %468 = vmatprep.subr.bf16.mxu0 0
      %469 = vmatpush1.bf16.msra.mxu0 %v454
      %470 = vmatprep.subr.bf16.mxu0 0
      %471 = vmatpush1.bf16.msra.mxu0 0
      %472 = vmatprep.subr.bf16.mxu0 0
      %473 = vmatpush1.bf16.msra.mxu0 0
      %474 = vmatprep.subr.bf16.mxu0 0
      %475 = vmatpush1.bf16.msra.mxu0 0
      %476 = vmatprep.subr.bf16.mxu0 0
      %477 = vmatpush1.bf16.msra.mxu0 0
      %478 = vmatprep.subr.bf16.mxu0 0
      %479 = vmatpush1.bf16.msra.mxu0 0
      %480 = vmatprep.subr.bf16.mxu0 0
      %481 = vmatpush1.bf16.msra.mxu0 0
      %482 = vmatprep.subr.bf16.mxu0 0
      %483 = vmatpush1.bf16.msra.mxu0 0
      %484 = vmatprep.subr.bf16.mxu0 0
      %485 = vmatpush1.bf16.msra.mxu0 0
      %486 = vmatprep.subr.bf16.mxu0 0
      %487 = vmatpush1.bf16.msra.mxu0 0
      %488 = vmatprep.subr.bf16.mxu0 0
      %489 = vmatpush1.bf16.msra.mxu0 0
      %490 = vmatprep.subr.bf16.mxu0 0
      %491 = vmatpush1.bf16.msra.mxu0 0
      %492 = vmatprep.subr.bf16.mxu0 0
      %493 = vmatpush1.bf16.msra.mxu0 0
      %494 = vmatprep.mubr.bf16.mxu0 0
      %495 = vmatmul.mubr.bf16.gmra.mrb[0].mxu0 %v460
      %v496 = vpop.f32.mrb[0].mxu0
      %v497 = vadd.f32 0.0, %v496
      %v498 = vpop.f32.mrb[0].mxu0
      %v499 = vpop.f32.mrb[0].mxu0
      %v500 = vpop.f32.mrb[0].mxu0
      %501 = vdwg.mxu0
      %v502 = vadd.f32 %v424, %v497
      %v503 = vld [vmem:[%s425] sm:$0x3]
      %v504 = vld [vmem:[%s1 + $0x80] sm:$0xf]
      %v505 = vld [vmem:[%s1 + $0x84] sm:$0xf]
      %v506 = vld [vmem:[%s1 + $0x88] sm:$0xf]
      %v507 = vld [vmem:[%s1 + $0x8c] sm:$0xf]
      %v508 = vld [vmem:[%s1 + $0x90] sm:$0xf]
      %v509 = vld [vmem:[%s1 + $0x94] sm:$0xf]
      %v510 = vld [vmem:[%s1 + $0x98] sm:$0xf]
      %v511 = vld [vmem:[%s1 + $0x9c] sm:$0xf]
      %v514 = vunpack.c.l.s4 1983009808
      %v515 = vunpack.c.0.s8 %v514
      %v516 = vlaneseq
      %v517 = vshrl.u32 %v516, 7
      %v518 = vsub.s32 %v515, %v517
      %v519 = vrot.slane %v503, %v518
      %v521 = vshrl.u32 %v519, 16
      %v523 = vshll.u32 %v519, 16
      %v525 = vrot.slane %v523, 1
      %v526 = vor.u32 %v521, %v525
      %v535 = vunpack.c.l.b16 %v504
      %v536 = vunpack.c.l.b16 %v505
      %v537 = vunpack.c.l.b16 %v506
      %v538 = vunpack.c.l.b16 %v507
      %v539 = vunpack.c.l.b16 %v508
      %v540 = vunpack.c.l.b16 %v509
      %v541 = vunpack.c.l.b16 %v510
      %v542 = vunpack.c.l.b16 %v511
      %v543 = vpack.c.b16 %v536, %v535
      %v544 = vpack.c.b16 %v538, %v537
      %v545 = vpack.c.b16 %v540, %v539
      %v546 = vpack.c.b16 %v542, %v541
      %v552 = vsel %vm228, %v526, 0
      %554 = vmatprep.subr.bf16.mxu0 0
      %555 = vmatpush1.bf16.msra.mxu0 %v543
      %556 = vmatprep.subr.bf16.mxu0 0
      %557 = vmatpush1.bf16.msra.mxu0 %v544
      %558 = vmatprep.subr.bf16.mxu0 0
      %559 = vmatpush1.bf16.msra.mxu0 %v545
      %560 = vmatprep.subr.bf16.mxu0 0
      %561 = vmatpush1.bf16.msra.mxu0 %v546
      %562 = vmatprep.subr.bf16.mxu0 0
      %563 = vmatpush1.bf16.msra.mxu0 0
      %564 = vmatprep.subr.bf16.mxu0 0
      %565 = vmatpush1.bf16.msra.mxu0 0
      %566 = vmatprep.subr.bf16.mxu0 0
      %567 = vmatpush1.bf16.msra.mxu0 0
      %568 = vmatprep.subr.bf16.mxu0 0
      %569 = vmatpush1.bf16.msra.mxu0 0
      %570 = vmatprep.subr.bf16.mxu0 0
      %571 = vmatpush1.bf16.msra.mxu0 0
      %572 = vmatprep.subr.bf16.mxu0 0
      %573 = vmatpush1.bf16.msra.mxu0 0
      %574 = vmatprep.subr.bf16.mxu0 0
      %575 = vmatpush1.bf16.msra.mxu0 0
      %576 = vmatprep.subr.bf16.mxu0 0
      %577 = vmatpush1.bf16.msra.mxu0 0
      %578 = vmatprep.subr.bf16.mxu0 0
      %579 = vmatpush1.bf16.msra.mxu0 0
      %580 = vmatprep.subr.bf16.mxu0 0
      %581 = vmatpush1.bf16.msra.mxu0 0
      %582 = vmatprep.subr.bf16.mxu0 0
      %583 = vmatpush1.bf16.msra.mxu0 0
      %584 = vmatprep.subr.bf16.mxu0 0
      %585 = vmatpush1.bf16.msra.mxu0 0
      %586 = vmatprep.mubr.bf16.mxu0 0
      %587 = vmatmul.mubr.bf16.gmra.mrb[0].mxu0 %v552
      %v588 = vpop.f32.mrb[0].mxu0
      %v589 = vadd.f32 0.0, %v588
      %v590 = vpop.f32.mrb[0].mxu0
      %v591 = vpop.f32.mrb[0].mxu0
      %v592 = vpop.f32.mrb[0].mxu0
      %593 = vdwg.mxu0
      %v594 = vadd.f32 %v502, %v589
      %v595 = vld [vmem:[%s425] sm:$0x2]
      %v596 = vld [vmem:[%s1 + $0xa0] sm:$0xf]
      %v597 = vld [vmem:[%s1 + $0xa4] sm:$0xf]
      %v598 = vld [vmem:[%s1 + $0xa8] sm:$0xf]
      %v599 = vld [vmem:[%s1 + $0xac] sm:$0xf]
      %v600 = vld [vmem:[%s1 + $0xb0] sm:$0xf]
      %v601 = vld [vmem:[%s1 + $0xb4] sm:$0xf]
      %v602 = vld [vmem:[%s1 + $0xb8] sm:$0xf]
      %v603 = vld [vmem:[%s1 + $0xbc] sm:$0xf]
      %v606 = vunpack.c.l.s4 1983009808
      %v607 = vunpack.c.0.s8 %v606
      %v608 = vlaneseq
      %v609 = vshrl.u32 %v608, 7
      %v610 = vsub.s32 %v607, %v609
      %v611 = vrot.slane %v595, %v610
      %v612 = vrot.slane %v611, 1
      %v621 = vunpack.c.l.b16 %v596
      %v622 = vunpack.c.l.b16 %v597
      %v623 = vunpack.c.l.b16 %v598
      %v624 = vunpack.c.l.b16 %v599
      %v625 = vunpack.c.l.b16 %v600
      %v626 = vunpack.c.l.b16 %v601
      %v627 = vunpack.c.l.b16 %v602
      %v628 = vunpack.c.l.b16 %v603
      %v629 = vpack.c.b16 %v622, %v621
      %v630 = vpack.c.b16 %v624, %v623
      %v631 = vpack.c.b16 %v626, %v625
      %v632 = vpack.c.b16 %v628, %v627
      %v638 = vsel %vm228, %v612, 0
      %640 = vmatprep.subr.bf16.mxu0 0
      %641 = vmatpush1.bf16.msra.mxu0 %v629
      %642 = vmatprep.subr.bf16.mxu0 0
      %643 = vmatpush1.bf16.msra.mxu0 %v630
      %644 = vmatprep.subr.bf16.mxu0 0
      %645 = vmatpush1.bf16.msra.mxu0 %v631
      %646 = vmatprep.subr.bf16.mxu0 0
      %647 = vmatpush1.bf16.msra.mxu0 %v632
      %648 = vmatprep.subr.bf16.mxu0 0
      %649 = vmatpush1.bf16.msra.mxu0 0
      %650 = vmatprep.subr.bf16.mxu0 0
      %651 = vmatpush1.bf16.msra.mxu0 0
      %652 = vmatprep.subr.bf16.mxu0 0
      %653 = vmatpush1.bf16.msra.mxu0 0
      %654 = vmatprep.subr.bf16.mxu0 0
      %655 = vmatpush1.bf16.msra.mxu0 0
      %656 = vmatprep.subr.bf16.mxu0 0
      %657 = vmatpush1.bf16.msra.mxu0 0
      %658 = vmatprep.subr.bf16.mxu0 0
      %659 = vmatpush1.bf16.msra.mxu0 0
      %660 = vmatprep.subr.bf16.mxu0 0
      %661 = vmatpush1.bf16.msra.mxu0 0
      %662 = vmatprep.subr.bf16.mxu0 0
      %663 = vmatpush1.bf16.msra.mxu0 0
      %664 = vmatprep.subr.bf16.mxu0 0
      %665 = vmatpush1.bf16.msra.mxu0 0
      %666 = vmatprep.subr.bf16.mxu0 0
      %667 = vmatpush1.bf16.msra.mxu0 0
      %668 = vmatprep.subr.bf16.mxu0 0
      %669 = vmatpush1.bf16.msra.mxu0 0
      %670 = vmatprep.subr.bf16.mxu0 0
      %671 = vmatpush1.bf16.msra.mxu0 0
      %672 = vmatprep.mubr.bf16.mxu0 0
      %673 = vmatmul.mubr.bf16.gmra.mrb[0].mxu0 %v638
      %v674 = vpop.f32.mrb[0].mxu0
      %v675 = vadd.f32 0.0, %v674
      %v676 = vpop.f32.mrb[0].mxu0
      %v677 = vpop.f32.mrb[0].mxu0
      %v678 = vpop.f32.mrb[0].mxu0
      %679 = vdwg.mxu0
      %v680 = vadd.f32 %v594, %v675
      %s681 = scalar_lea.vmem %s164, 4
      %v682 = vld [vmem:[%s681] sm:$0x1]
      %v683 = vld [vmem:[%s1 + $0xc0] sm:$0xf]
      %v684 = vld [vmem:[%s1 + $0xc4] sm:$0xf]
      %v685 = vld [vmem:[%s1 + $0xc8] sm:$0xf]
      %v686 = vld [vmem:[%s1 + $0xcc] sm:$0xf]
      %v687 = vld [vmem:[%s1 + $0xd0] sm:$0xf]
      %v688 = vld [vmem:[%s1 + $0xd4] sm:$0xf]
      %v689 = vld [vmem:[%s1 + $0xd8] sm:$0xf]
      %v690 = vld [vmem:[%s1 + $0xdc] sm:$0xf]
      %v699 = vunpack.c.l.b16 %v683
      %v700 = vunpack.c.l.b16 %v684
      %v701 = vunpack.c.l.b16 %v685
      %v702 = vunpack.c.l.b16 %v686
      %v703 = vunpack.c.l.b16 %v687
      %v704 = vunpack.c.l.b16 %v688
      %v705 = vunpack.c.l.b16 %v689
      %v706 = vunpack.c.l.b16 %v690
      %v707 = vpack.c.b16 %v700, %v699
      %v708 = vpack.c.b16 %v702, %v701
      %v709 = vpack.c.b16 %v704, %v703
      %v710 = vpack.c.b16 %v706, %v705
      %v716 = vsel %vm228, %v682, 0
      %718 = vmatprep.subr.bf16.mxu0 0
      %719 = vmatpush1.bf16.msra.mxu0 %v707
      %720 = vmatprep.subr.bf16.mxu0 0
      %721 = vmatpush1.bf16.msra.mxu0 %v708
      %722 = vmatprep.subr.bf16.mxu0 0
      %723 = vmatpush1.bf16.msra.mxu0 %v709
      %724 = vmatprep.subr.bf16.mxu0 0
      %725 = vmatpush1.bf16.msra.mxu0 %v710
      %726 = vmatprep.subr.bf16.mxu0 0
      %727 = vmatpush1.bf16.msra.mxu0 0
      %728 = vmatprep.subr.bf16.mxu0 0
      %729 = vmatpush1.bf16.msra.mxu0 0
      %730 = vmatprep.subr.bf16.mxu0 0
      %731 = vmatpush1.bf16.msra.mxu0 0
      %732 = vmatprep.subr.bf16.mxu0 0
      %733 = vmatpush1.bf16.msra.mxu0 0
      %734 = vmatprep.subr.bf16.mxu0 0
      %735 = vmatpush1.bf16.msra.mxu0 0
      %736 = vmatprep.subr.bf16.mxu0 0
      %737 = vmatpush1.bf16.msra.mxu0 0
      %738 = vmatprep.subr.bf16.mxu0 0
      %739 = vmatpush1.bf16.msra.mxu0 0
      %740 = vmatprep.subr.bf16.mxu0 0
      %741 = vmatpush1.bf16.msra.mxu0 0
      %742 = vmatprep.subr.bf16.mxu0 0
      %743 = vmatpush1.bf16.msra.mxu0 0
      %744 = vmatprep.subr.bf16.mxu0 0
      %745 = vmatpush1.bf16.msra.mxu0 0
      %746 = vmatprep.subr.bf16.mxu0 0
      %747 = vmatpush1.bf16.msra.mxu0 0
      %748 = vmatprep.subr.bf16.mxu0 0
      %749 = vmatpush1.bf16.msra.mxu0 0
      %750 = vmatprep.mubr.bf16.mxu0 0
      %751 = vmatmul.mubr.bf16.gmra.mrb[0].mxu0 %v716
      %v752 = vpop.f32.mrb[0].mxu0
      %v753 = vadd.f32 0.0, %v752
      %v754 = vpop.f32.mrb[0].mxu0
      %v755 = vpop.f32.mrb[0].mxu0
      %v756 = vpop.f32.mrb[0].mxu0
      %757 = vdwg.mxu0
      %v758 = vadd.f32 %v680, %v753
      %v759 = vld [vmem:[%s681] sm:$0x3]
      %v760 = vld [vmem:[%s1 + $0xe0] sm:$0xf]
      %v761 = vld [vmem:[%s1 + $0xe4] sm:$0xf]
      %v762 = vld [vmem:[%s1 + $0xe8] sm:$0xf]
      %v763 = vld [vmem:[%s1 + $0xec] sm:$0xf]
      %v764 = vld [vmem:[%s1 + $0xf0] sm:$0xf]
      %v765 = vld [vmem:[%s1 + $0xf4] sm:$0xf]
      %v766 = vld [vmem:[%s1 + $0xf8] sm:$0xf]
      %v767 = vld [vmem:[%s1 + $0xfc] sm:$0xf]
      %v770 = vunpack.c.l.s4 1983009808
      %v771 = vunpack.c.0.s8 %v770
      %v772 = vlaneseq
      %v773 = vshrl.u32 %v772, 7
      %v774 = vsub.s32 %v771, %v773
      %v775 = vrot.slane %v759, %v774
      %v777 = vshrl.u32 %v775, 16
      %v779 = vshll.u32 %v775, 16
      %v781 = vrot.slane %v779, 1
      %v782 = vor.u32 %v777, %v781
      %v791 = vunpack.c.l.b16 %v760
      %v792 = vunpack.c.l.b16 %v761
      %v793 = vunpack.c.l.b16 %v762
      %v794 = vunpack.c.l.b16 %v763
      %v795 = vunpack.c.l.b16 %v764
      %v796 = vunpack.c.l.b16 %v765
      %v797 = vunpack.c.l.b16 %v766
      %v798 = vunpack.c.l.b16 %v767
      %v799 = vpack.c.b16 %v792, %v791
      %v800 = vpack.c.b16 %v794, %v793
      %v801 = vpack.c.b16 %v796, %v795
      %v802 = vpack.c.b16 %v798, %v797
      %v808 = vsel %vm228, %v782, 0
      %810 = vmatprep.subr.bf16.mxu0 0
      %811 = vmatpush1.bf16.msra.mxu0 %v799
      %812 = vmatprep.subr.bf16.mxu0 0
      %813 = vmatpush1.bf16.msra.mxu0 %v800
      %814 = vmatprep.subr.bf16.mxu0 0
      %815 = vmatpush1.bf16.msra.mxu0 %v801
      %816 = vmatprep.subr.bf16.mxu0 0
      %817 = vmatpush1.bf16.msra.mxu0 %v802
      %818 = vmatprep.subr.bf16.mxu0 0
      %819 = vmatpush1.bf16.msra.mxu0 0
      %820 = vmatprep.subr.bf16.mxu0 0
      %821 = vmatpush1.bf16.msra.mxu0 0
      %822 = vmatprep.subr.bf16.mxu0 0
      %823 = vmatpush1.bf16.msra.mxu0 0
      %824 = vmatprep.subr.bf16.mxu0 0
      %825 = vmatpush1.bf16.msra.mxu0 0
      %826 = vmatprep.subr.bf16.mxu0 0
      %827 = vmatpush1.bf16.msra.mxu0 0
      %828 = vmatprep.subr.bf16.mxu0 0
      %829 = vmatpush1.bf16.msra.mxu0 0
      %830 = vmatprep.subr.bf16.mxu0 0
      %831 = vmatpush1.bf16.msra.mxu0 0
      %832 = vmatprep.subr.bf16.mxu0 0
      %833 = vmatpush1.bf16.msra.mxu0 0
      %834 = vmatprep.subr.bf16.mxu0 0
      %835 = vmatpush1.bf16.msra.mxu0 0
      %836 = vmatprep.subr.bf16.mxu0 0
      %837 = vmatpush1.bf16.msra.mxu0 0
      %838 = vmatprep.subr.bf16.mxu0 0
      %839 = vmatpush1.bf16.msra.mxu0 0
      %840 = vmatprep.subr.bf16.mxu0 0
      %841 = vmatpush1.bf16.msra.mxu0 0
      %842 = vmatprep.mubr.bf16.mxu0 0
      %843 = vmatmul.mubr.bf16.gmra.mrb[0].mxu0 %v808
      %v844 = vpop.f32.mrb[0].mxu0
      %v845 = vadd.f32 0.0, %v844
      %v846 = vpop.f32.mrb[0].mxu0
      %v847 = vpop.f32.mrb[0].mxu0
      %v848 = vpop.f32.mrb[0].mxu0
      %849 = vdwg.mxu0
      %v850 = vadd.f32 %v758, %v845
      %v851 = vld [vmem:[%s681] sm:$0x2]
      %v852 = vld [vmem:[%s1 + $0x100] sm:$0xf]
      %v853 = vld [vmem:[%s1 + $0x104] sm:$0xf]
      %v854 = vld [vmem:[%s1 + $0x108] sm:$0xf]
      %v855 = vld [vmem:[%s1 + $0x10c] sm:$0xf]
      %v856 = vld [vmem:[%s1 + $0x110] sm:$0xf]
      %v857 = vld [vmem:[%s1 + $0x114] sm:$0xf]
      %v858 = vld [vmem:[%s1 + $0x118] sm:$0xf]
      %v859 = vld [vmem:[%s1 + $0x11c] sm:$0xf]
      %v862 = vunpack.c.l.s4 1983009808
      %v863 = vunpack.c.0.s8 %v862
      %v864 = vlaneseq
      %v865 = vshrl.u32 %v864, 7
      %v866 = vsub.s32 %v863, %v865
      %v867 = vrot.slane %v851, %v866
      %v868 = vrot.slane %v867, 1
      %v877 = vunpack.c.l.b16 %v852
      %v878 = vunpack.c.l.b16 %v853
      %v879 = vunpack.c.l.b16 %v854
      %v880 = vunpack.c.l.b16 %v855
      %v881 = vunpack.c.l.b16 %v856
      %v882 = vunpack.c.l.b16 %v857
      %v883 = vunpack.c.l.b16 %v858
      %v884 = vunpack.c.l.b16 %v859
      %v885 = vpack.c.b16 %v878, %v877
      %v886 = vpack.c.b16 %v880, %v879
      %v887 = vpack.c.b16 %v882, %v881
      %v888 = vpack.c.b16 %v884, %v883
      %v894 = vsel %vm228, %v868, 0
      %896 = vmatprep.subr.bf16.mxu0 0
      %897 = vmatpush1.bf16.msra.mxu0 %v885
      %898 = vmatprep.subr.bf16.mxu0 0
      %899 = vmatpush1.bf16.msra.mxu0 %v886
      %900 = vmatprep.subr.bf16.mxu0 0
      %901 = vmatpush1.bf16.msra.mxu0 %v887
      %902 = vmatprep.subr.bf16.mxu0 0
      %903 = vmatpush1.bf16.msra.mxu0 %v888
      %904 = vmatprep.subr.bf16.mxu0 0
      %905 = vmatpush1.bf16.msra.mxu0 0
      %906 = vmatprep.subr.bf16.mxu0 0
      %907 = vmatpush1.bf16.msra.mxu0 0
      %908 = vmatprep.subr.bf16.mxu0 0
      %909 = vmatpush1.bf16.msra.mxu0 0
      %910 = vmatprep.subr.bf16.mxu0 0
      %911 = vmatpush1.bf16.msra.mxu0 0
      %912 = vmatprep.subr.bf16.mxu0 0
      %913 = vmatpush1.bf16.msra.mxu0 0
      %914 = vmatprep.subr.bf16.mxu0 0
      %915 = vmatpush1.bf16.msra.mxu0 0
      %916 = vmatprep.subr.bf16.mxu0 0
      %917 = vmatpush1.bf16.msra.mxu0 0
      %918 = vmatprep.subr.bf16.mxu0 0
      %919 = vmatpush1.bf16.msra.mxu0 0
      %920 = vmatprep.subr.bf16.mxu0 0
      %921 = vmatpush1.bf16.msra.mxu0 0
      %922 = vmatprep.subr.bf16.mxu0 0
      %923 = vmatpush1.bf16.msra.mxu0 0
      %924 = vmatprep.subr.bf16.mxu0 0
      %925 = vmatpush1.bf16.msra.mxu0 0
      %926 = vmatprep.subr.bf16.mxu0 0
      %927 = vmatpush1.bf16.msra.mxu0 0
      %928 = vmatprep.mubr.bf16.mxu0 0
      %929 = vmatmul.mubr.bf16.gmra.mrb[0].mxu0 %v894
      %v930 = vpop.f32.mrb[0].mxu0
      %v931 = vadd.f32 0.0, %v930
      %v932 = vpop.f32.mrb[0].mxu0
      %v933 = vpop.f32.mrb[0].mxu0
      %v934 = vpop.f32.mrb[0].mxu0
      %935 = vdwg.mxu0
      %v936 = vadd.f32 %v850, %v931
      %v938 = vlaneseq
      %v939 = vshrl.u32 %v938, 7
      %v940 = vsub.s32 0, %v939
      %v941 = vrot.slane %v170, %v940
      %v943 = vadd.f32 %v936, %v941
      %v944 = vmax.f32 %v943, 0.0
      %v945 = vpack.c.bf16 %v944, %v944
      %vm946 = vcmask 516096
      %947 = vst.msk [vmem:[%s168] sm:$0x1] %vm946, %v945
      %v948 = vld [vmem:[%s425] sm:$0x1]
      %v949 = vld [vmem:[%s1] sm:$0xf]
      %v950 = vld [vmem:[%s1 + $0x4] sm:$0xf]
      %v951 = vld [vmem:[%s1 + $0x8] sm:$0xf]
      %v952 = vld [vmem:[%s1 + $0xc] sm:$0xf]
      %v953 = vld [vmem:[%s1 + $0x10] sm:$0xf]
      %v954 = vld [vmem:[%s1 + $0x14] sm:$0xf]
      %v955 = vld [vmem:[%s1 + $0x18] sm:$0xf]
      %v956 = vld [vmem:[%s1 + $0x1c] sm:$0xf]
      %v957 = vld [vmem:[%s425] sm:$0x3]
      %v958 = vld [vmem:[%s1 + $0x20] sm:$0xf]
      %v959 = vld [vmem:[%s1 + $0x24] sm:$0xf]
      %v960 = vld [vmem:[%s1 + $0x28] sm:$0xf]
      %v961 = vld [vmem:[%s1 + $0x2c] sm:$0xf]
      %v962 = vld [vmem:[%s1 + $0x30] sm:$0xf]
      %v963 = vld [vmem:[%s1 + $0x34] sm:$0xf]
      %v964 = vld [vmem:[%s1 + $0x38] sm:$0xf]
      %v965 = vld [vmem:[%s1 + $0x3c] sm:$0xf]
      %v968 = vunpack.c.l.s4 1983009808
      %v969 = vunpack.c.0.s8 %v968
      %v970 = vlaneseq
      %v971 = vshrl.u32 %v970, 7
      %v972 = vsub.s32 %v969, %v971
      %v973 = vrot.slane %v957, %v972
      %v975 = vshrl.u32 %v973, 16
      %v977 = vshll.u32 %v973, 16
      %v979 = vrot.slane %v977, 1
      %v980 = vor.u32 %v975, %v979
      %v989 = vunpack.c.l.b16 %v958
      %v990 = vunpack.c.l.b16 %v959
      %v991 = vunpack.c.l.b16 %v960
      %v992 = vunpack.c.l.b16 %v961
      %v993 = vunpack.c.l.b16 %v962
      %v994 = vunpack.c.l.b16 %v963
      %v995 = vunpack.c.l.b16 %v964
      %v996 = vunpack.c.l.b16 %v965
      %v997 = vpack.c.b16 %v990, %v989
      %v998 = vpack.c.b16 %v992, %v991
      %v999 = vpack.c.b16 %v994, %v993
      %v1000 = vpack.c.b16 %v996, %v995
      %v1006 = vsel %vm228, %v980, 0
      %1008 = vmatprep.subr.bf16.mxu0 0
      %1009 = vmatpush1.bf16.msra.mxu0 %v997
      %1010 = vmatprep.subr.bf16.mxu0 0
      %1011 = vmatpush1.bf16.msra.mxu0 %v998
      %1012 = vmatprep.subr.bf16.mxu0 0
      %1013 = vmatpush1.bf16.msra.mxu0 %v999
      %1014 = vmatprep.subr.bf16.mxu0 0
      %1015 = vmatpush1.bf16.msra.mxu0 %v1000
      %1016 = vmatprep.subr.bf16.mxu0 0
      %1017 = vmatpush1.bf16.msra.mxu0 0
      %1018 = vmatprep.subr.bf16.mxu0 0
      %1019 = vmatpush1.bf16.msra.mxu0 0
      %1020 = vmatprep.subr.bf16.mxu0 0
      %1021 = vmatpush1.bf16.msra.mxu0 0
      %1022 = vmatprep.subr.bf16.mxu0 0
      %1023 = vmatpush1.bf16.msra.mxu0 0
      %1024 = vmatprep.subr.bf16.mxu0 0
      %1025 = vmatpush1.bf16.msra.mxu0 0
      %1026 = vmatprep.subr.bf16.mxu0 0
      %1027 = vmatpush1.bf16.msra.mxu0 0
      %1028 = vmatprep.subr.bf16.mxu0 0
      %1029 = vmatpush1.bf16.msra.mxu0 0
      %1030 = vmatprep.subr.bf16.mxu0 0
      %1031 = vmatpush1.bf16.msra.mxu0 0
      %1032 = vmatprep.subr.bf16.mxu0 0
      %1033 = vmatpush1.bf16.msra.mxu0 0
      %1034 = vmatprep.subr.bf16.mxu0 0
      %1035 = vmatpush1.bf16.msra.mxu0 0
      %1036 = vmatprep.subr.bf16.mxu0 0
      %1037 = vmatpush1.bf16.msra.mxu0 0
      %1038 = vmatprep.subr.bf16.mxu0 0
      %1039 = vmatpush1.bf16.msra.mxu0 0
      %1040 = vmatprep.mubr.bf16.mxu0 0
      %1041 = vmatmul.mubr.bf16.gmra.mrb[0].mxu0 %v1006
      %v1042 = vpop.f32.mrb[0].mxu0
      %v1043 = vadd.f32 0.0, %v1042
      %v1044 = vpop.f32.mrb[0].mxu0
      %v1045 = vpop.f32.mrb[0].mxu0
      %v1046 = vpop.f32.mrb[0].mxu0
      %1047 = vdwg.mxu0
      %v1056 = vunpack.c.l.b16 %v949
      %v1057 = vunpack.c.l.b16 %v950
      %v1058 = vunpack.c.l.b16 %v951
      %v1059 = vunpack.c.l.b16 %v952
      %v1060 = vunpack.c.l.b16 %v953
      %v1061 = vunpack.c.l.b16 %v954
      %v1062 = vunpack.c.l.b16 %v955
      %v1063 = vunpack.c.l.b16 %v956
      %v1064 = vpack.c.b16 %v1057, %v1056
      %v1065 = vpack.c.b16 %v1059, %v1058
      %v1066 = vpack.c.b16 %v1061, %v1060
      %v1067 = vpack.c.b16 %v1063, %v1062
      %v1073 = vsel %vm228, %v948, 0
      %1075 = vmatprep.subr.bf16.mxu0 0
      %1076 = vmatpush1.bf16.msra.mxu0 %v1064
      %1077 = vmatprep.subr.bf16.mxu0 0
      %1078 = vmatpush1.bf16.msra.mxu0 %v1065
      %1079 = vmatprep.subr.bf16.mxu0 0
      %1080 = vmatpush1.bf16.msra.mxu0 %v1066
      %1081 = vmatprep.subr.bf16.mxu0 0
      %1082 = vmatpush1.bf16.msra.mxu0 %v1067
      %1083 = vmatprep.subr.bf16.mxu0 0
      %1084 = vmatpush1.bf16.msra.mxu0 0
      %1085 = vmatprep.subr.bf16.mxu0 0
      %1086 = vmatpush1.bf16.msra.mxu0 0
      %1087 = vmatprep.subr.bf16.mxu0 0
      %1088 = vmatpush1.bf16.msra.mxu0 0
      %1089 = vmatprep.subr.bf16.mxu0 0
      %1090 = vmatpush1.bf16.msra.mxu0 0
      %1091 = vmatprep.subr.bf16.mxu0 0
      %1092 = vmatpush1.bf16.msra.mxu0 0
      %1093 = vmatprep.subr.bf16.mxu0 0
      %1094 = vmatpush1.bf16.msra.mxu0 0
      %1095 = vmatprep.subr.bf16.mxu0 0
      %1096 = vmatpush1.bf16.msra.mxu0 0
      %1097 = vmatprep.subr.bf16.mxu0 0
      %1098 = vmatpush1.bf16.msra.mxu0 0
      %1099 = vmatprep.subr.bf16.mxu0 0
      %1100 = vmatpush1.bf16.msra.mxu0 0
      %1101 = vmatprep.subr.bf16.mxu0 0
      %1102 = vmatpush1.bf16.msra.mxu0 0
      %1103 = vmatprep.subr.bf16.mxu0 0
      %1104 = vmatpush1.bf16.msra.mxu0 0
      %1105 = vmatprep.subr.bf16.mxu0 0
      %1106 = vmatpush1.bf16.msra.mxu0 0
      %1107 = vmatprep.mubr.bf16.mxu0 0
      %1108 = vmatmul.mubr.bf16.gmra.mrb[0].mxu0 %v1073
      %v1109 = vpop.f32.mrb[0].mxu0
      %v1110 = vadd.f32 %v1043, %v1109
      %v1111 = vpop.f32.mrb[0].mxu0
      %v1112 = vpop.f32.mrb[0].mxu0
      %v1113 = vpop.f32.mrb[0].mxu0
      %1114 = vdwg.mxu0
      %v1115 = vld [vmem:[%s425] sm:$0x2]
      %v1116 = vld [vmem:[%s1 + $0x40] sm:$0xf]
      %v1117 = vld [vmem:[%s1 + $0x44] sm:$0xf]
      %v1118 = vld [vmem:[%s1 + $0x48] sm:$0xf]
      %v1119 = vld [vmem:[%s1 + $0x4c] sm:$0xf]
      %v1120 = vld [vmem:[%s1 + $0x50] sm:$0xf]
      %v1121 = vld [vmem:[%s1 + $0x54] sm:$0xf]
      %v1122 = vld [vmem:[%s1 + $0x58] sm:$0xf]
      %v1123 = vld [vmem:[%s1 + $0x5c] sm:$0xf]
      %v1126 = vunpack.c.l.s4 1983009808
      %v1127 = vunpack.c.0.s8 %v1126
      %v1128 = vlaneseq
      %v1129 = vshrl.u32 %v1128, 7
      %v1130 = vsub.s32 %v1127, %v1129
      %v1131 = vrot.slane %v1115, %v1130
      %v1132 = vrot.slane %v1131, 1
      %v1141 = vunpack.c.l.b16 %v1116
      %v1142 = vunpack.c.l.b16 %v1117
      %v1143 = vunpack.c.l.b16 %v1118
      %v1144 = vunpack.c.l.b16 %v1119
      %v1145 = vunpack.c.l.b16 %v1120
      %v1146 = vunpack.c.l.b16 %v1121
      %v1147 = vunpack.c.l.b16 %v1122
      %v1148 = vunpack.c.l.b16 %v1123
      %v1149 = vpack.c.b16 %v1142, %v1141
      %v1150 = vpack.c.b16 %v1144, %v1143
      %v1151 = vpack.c.b16 %v1146, %v1145
      %v1152 = vpack.c.b16 %v1148, %v1147
      %v1158 = vsel %vm228, %v1132, 0
      %1160 = vmatprep.subr.bf16.mxu0 0
      %1161 = vmatpush1.bf16.msra.mxu0 %v1149
      %1162 = vmatprep.subr.bf16.mxu0 0
      %1163 = vmatpush1.bf16.msra.mxu0 %v1150
      %1164 = vmatprep.subr.bf16.mxu0 0
      %1165 = vmatpush1.bf16.msra.mxu0 %v1151
      %1166 = vmatprep.subr.bf16.mxu0 0
      %1167 = vmatpush1.bf16.msra.mxu0 %v1152
      %1168 = vmatprep.subr.bf16.mxu0 0
      %1169 = vmatpush1.bf16.msra.mxu0 0
      %1170 = vmatprep.subr.bf16.mxu0 0
      %1171 = vmatpush1.bf16.msra.mxu0 0
      %1172 = vmatprep.subr.bf16.mxu0 0
      %1173 = vmatpush1.bf16.msra.mxu0 0
      %1174 = vmatprep.subr.bf16.mxu0 0
      %1175 = vmatpush1.bf16.msra.mxu0 0
      %1176 = vmatprep.subr.bf16.mxu0 0
      %1177 = vmatpush1.bf16.msra.mxu0 0
      %1178 = vmatprep.subr.bf16.mxu0 0
      %1179 = vmatpush1.bf16.msra.mxu0 0
      %1180 = vmatprep.subr.bf16.mxu0 0
      %1181 = vmatpush1.bf16.msra.mxu0 0
      %1182 = vmatprep.subr.bf16.mxu0 0
      %1183 = vmatpush1.bf16.msra.mxu0 0
      %1184 = vmatprep.subr.bf16.mxu0 0
      %1185 = vmatpush1.bf16.msra.mxu0 0
      %1186 = vmatprep.subr.bf16.mxu0 0
      %1187 = vmatpush1.bf16.msra.mxu0 0
      %1188 = vmatprep.subr.bf16.mxu0 0
      %1189 = vmatpush1.bf16.msra.mxu0 0
      %1190 = vmatprep.subr.bf16.mxu0 0
      %1191 = vmatpush1.bf16.msra.mxu0 0
      %1192 = vmatprep.mubr.bf16.mxu0 0
      %1193 = vmatmul.mubr.bf16.gmra.mrb[0].mxu0 %v1158
      %v1194 = vpop.f32.mrb[0].mxu0
      %v1195 = vadd.f32 0.0, %v1194
      %v1196 = vpop.f32.mrb[0].mxu0
      %v1197 = vpop.f32.mrb[0].mxu0
      %v1198 = vpop.f32.mrb[0].mxu0
      %1199 = vdwg.mxu0
      %v1200 = vadd.f32 %v1110, %v1195
      %v1201 = vld [vmem:[%s681] sm:$0x1]
      %v1202 = vld [vmem:[%s1 + $0x60] sm:$0xf]
      %v1203 = vld [vmem:[%s1 + $0x64] sm:$0xf]
      %v1204 = vld [vmem:[%s1 + $0x68] sm:$0xf]
      %v1205 = vld [vmem:[%s1 + $0x6c] sm:$0xf]
      %v1206 = vld [vmem:[%s1 + $0x70] sm:$0xf]
      %v1207 = vld [vmem:[%s1 + $0x74] sm:$0xf]
      %v1208 = vld [vmem:[%s1 + $0x78] sm:$0xf]
      %v1209 = vld [vmem:[%s1 + $0x7c] sm:$0xf]
      %v1218 = vunpack.c.l.b16 %v1202
      %v1219 = vunpack.c.l.b16 %v1203
      %v1220 = vunpack.c.l.b16 %v1204
      %v1221 = vunpack.c.l.b16 %v1205
      %v1222 = vunpack.c.l.b16 %v1206
      %v1223 = vunpack.c.l.b16 %v1207
      %v1224 = vunpack.c.l.b16 %v1208
      %v1225 = vunpack.c.l.b16 %v1209
      %v1226 = vpack.c.b16 %v1219, %v1218
      %v1227 = vpack.c.b16 %v1221, %v1220
      %v1228 = vpack.c.b16 %v1223, %v1222
      %v1229 = vpack.c.b16 %v1225, %v1224
      %v1235 = vsel %vm228, %v1201, 0
      %1237 = vmatprep.subr.bf16.mxu0 0
      %1238 = vmatpush1.bf16.msra.mxu0 %v1226
      %1239 = vmatprep.subr.bf16.mxu0 0
      %1240 = vmatpush1.bf16.msra.mxu0 %v1227
      %1241 = vmatprep.subr.bf16.mxu0 0
      %1242 = vmatpush1.bf16.msra.mxu0 %v1228
      %1243 = vmatprep.subr.bf16.mxu0 0
      %1244 = vmatpush1.bf16.msra.mxu0 %v1229
      %1245 = vmatprep.subr.bf16.mxu0 0
      %1246 = vmatpush1.bf16.msra.mxu0 0
      %1247 = vmatprep.subr.bf16.mxu0 0
      %1248 = vmatpush1.bf16.msra.mxu0 0
      %1249 = vmatprep.subr.bf16.mxu0 0
      %1250 = vmatpush1.bf16.msra.mxu0 0
      %1251 = vmatprep.subr.bf16.mxu0 0
      %1252 = vmatpush1.bf16.msra.mxu0 0
      %1253 = vmatprep.subr.bf16.mxu0 0
      %1254 = vmatpush1.bf16.msra.mxu0 0
      %1255 = vmatprep.subr.bf16.mxu0 0
      %1256 = vmatpush1.bf16.msra.mxu0 0
      %1257 = vmatprep.subr.bf16.mxu0 0
      %1258 = vmatpush1.bf16.msra.mxu0 0
      %1259 = vmatprep.subr.bf16.mxu0 0
      %1260 = vmatpush1.bf16.msra.mxu0 0
      %1261 = vmatprep.subr.bf16.mxu0 0
      %1262 = vmatpush1.bf16.msra.mxu0 0
      %1263 = vmatprep.subr.bf16.mxu0 0
      %1264 = vmatpush1.bf16.msra.mxu0 0
      %1265 = vmatprep.subr.bf16.mxu0 0
      %1266 = vmatpush1.bf16.msra.mxu0 0
      %1267 = vmatprep.subr.bf16.mxu0 0
      %1268 = vmatpush1.bf16.msra.mxu0 0
      %1269 = vmatprep.mubr.bf16.mxu0 0
      %1270 = vmatmul.mubr.bf16.gmra.mrb[0].mxu0 %v1235
      %v1271 = vpop.f32.mrb[0].mxu0
      %v1272 = vadd.f32 0.0, %v1271
      %v1273 = vpop.f32.mrb[0].mxu0
      %v1274 = vpop.f32.mrb[0].mxu0
      %v1275 = vpop.f32.mrb[0].mxu0
      %1276 = vdwg.mxu0
      %v1277 = vadd.f32 %v1200, %v1272
      %v1278 = vld [vmem:[%s681] sm:$0x3]
      %v1279 = vld [vmem:[%s1 + $0x80] sm:$0xf]
      %v1280 = vld [vmem:[%s1 + $0x84] sm:$0xf]
      %v1281 = vld [vmem:[%s1 + $0x88] sm:$0xf]
      %v1282 = vld [vmem:[%s1 + $0x8c] sm:$0xf]
      %v1283 = vld [vmem:[%s1 + $0x90] sm:$0xf]
      %v1284 = vld [vmem:[%s1 + $0x94] sm:$0xf]
      %v1285 = vld [vmem:[%s1 + $0x98] sm:$0xf]
      %v1286 = vld [vmem:[%s1 + $0x9c] sm:$0xf]
      %v1289 = vunpack.c.l.s4 1983009808
      %v1290 = vunpack.c.0.s8 %v1289
      %v1291 = vlaneseq
      %v1292 = vshrl.u32 %v1291, 7
      %v1293 = vsub.s32 %v1290, %v1292
      %v1294 = vrot.slane %v1278, %v1293
      %v1296 = vshrl.u32 %v1294, 16
      %v1298 = vshll.u32 %v1294, 16
      %v1300 = vrot.slane %v1298, 1
      %v1301 = vor.u32 %v1296, %v1300
      %v1310 = vunpack.c.l.b16 %v1279
      %v1311 = vunpack.c.l.b16 %v1280
      %v1312 = vunpack.c.l.b16 %v1281
      %v1313 = vunpack.c.l.b16 %v1282
      %v1314 = vunpack.c.l.b16 %v1283
      %v1315 = vunpack.c.l.b16 %v1284
      %v1316 = vunpack.c.l.b16 %v1285
      %v1317 = vunpack.c.l.b16 %v1286
      %v1318 = vpack.c.b16 %v1311, %v1310
      %v1319 = vpack.c.b16 %v1313, %v1312
      %v1320 = vpack.c.b16 %v1315, %v1314
      %v1321 = vpack.c.b16 %v1317, %v1316
      %v1327 = vsel %vm228, %v1301, 0
      %1329 = vmatprep.subr.bf16.mxu0 0
      %1330 = vmatpush1.bf16.msra.mxu0 %v1318
      %1331 = vmatprep.subr.bf16.mxu0 0
      %1332 = vmatpush1.bf16.msra.mxu0 %v1319
      %1333 = vmatprep.subr.bf16.mxu0 0
      %1334 = vmatpush1.bf16.msra.mxu0 %v1320
      %1335 = vmatprep.subr.bf16.mxu0 0
      %1336 = vmatpush1.bf16.msra.mxu0 %v1321
      %1337 = vmatprep.subr.bf16.mxu0 0
      %1338 = vmatpush1.bf16.msra.mxu0 0
      %1339 = vmatprep.subr.bf16.mxu0 0
      %1340 = vmatpush1.bf16.msra.mxu0 0
      %1341 = vmatprep.subr.bf16.mxu0 0
      %1342 = vmatpush1.bf16.msra.mxu0 0
      %1343 = vmatprep.subr.bf16.mxu0 0
      %1344 = vmatpush1.bf16.msra.mxu0 0
      %1345 = vmatprep.subr.bf16.mxu0 0
      %1346 = vmatpush1.bf16.msra.mxu0 0
      %1347 = vmatprep.subr.bf16.mxu0 0
      %1348 = vmatpush1.bf16.msra.mxu0 0
      %1349 = vmatprep.subr.bf16.mxu0 0
      %1350 = vmatpush1.bf16.msra.mxu0 0
      %1351 = vmatprep.subr.bf16.mxu0 0
      %1352 = vmatpush1.bf16.msra.mxu0 0
      %1353 = vmatprep.subr.bf16.mxu0 0
      %1354 = vmatpush1.bf16.msra.mxu0 0
      %1355 = vmatprep.subr.bf16.mxu0 0
      %1356 = vmatpush1.bf16.msra.mxu0 0
      %1357 = vmatprep.subr.bf16.mxu0 0
      %1358 = vmatpush1.bf16.msra.mxu0 0
      %1359 = vmatprep.subr.bf16.mxu0 0
      %1360 = vmatpush1.bf16.msra.mxu0 0
      %1361 = vmatprep.mubr.bf16.mxu0 0
      %1362 = vmatmul.mubr.bf16.gmra.mrb[0].mxu0 %v1327
      %v1363 = vpop.f32.mrb[0].mxu0
      %v1364 = vadd.f32 0.0, %v1363
      %v1365 = vpop.f32.mrb[0].mxu0
      %v1366 = vpop.f32.mrb[0].mxu0
      %v1367 = vpop.f32.mrb[0].mxu0
      %1368 = vdwg.mxu0
      %v1369 = vadd.f32 %v1277, %v1364
      %v1370 = vld [vmem:[%s681] sm:$0x2]
      %v1371 = vld [vmem:[%s1 + $0xa0] sm:$0xf]
      %v1372 = vld [vmem:[%s1 + $0xa4] sm:$0xf]
      %v1373 = vld [vmem:[%s1 + $0xa8] sm:$0xf]
      %v1374 = vld [vmem:[%s1 + $0xac] sm:$0xf]
      %v1375 = vld [vmem:[%s1 + $0xb0] sm:$0xf]
      %v1376 = vld [vmem:[%s1 + $0xb4] sm:$0xf]
      %v1377 = vld [vmem:[%s1 + $0xb8] sm:$0xf]
      %v1378 = vld [vmem:[%s1 + $0xbc] sm:$0xf]
      %v1381 = vunpack.c.l.s4 1983009808
      %v1382 = vunpack.c.0.s8 %v1381
      %v1383 = vlaneseq
      %v1384 = vshrl.u32 %v1383, 7
      %v1385 = vsub.s32 %v1382, %v1384
      %v1386 = vrot.slane %v1370, %v1385
      %v1387 = vrot.slane %v1386, 1
      %v1396 = vunpack.c.l.b16 %v1371
      %v1397 = vunpack.c.l.b16 %v1372
      %v1398 = vunpack.c.l.b16 %v1373
      %v1399 = vunpack.c.l.b16 %v1374
      %v1400 = vunpack.c.l.b16 %v1375
      %v1401 = vunpack.c.l.b16 %v1376
      %v1402 = vunpack.c.l.b16 %v1377
      %v1403 = vunpack.c.l.b16 %v1378
      %v1404 = vpack.c.b16 %v1397, %v1396
      %v1405 = vpack.c.b16 %v1399, %v1398
      %v1406 = vpack.c.b16 %v1401, %v1400
      %v1407 = vpack.c.b16 %v1403, %v1402
      %v1413 = vsel %vm228, %v1387, 0
      %1415 = vmatprep.subr.bf16.mxu0 0
      %1416 = vmatpush1.bf16.msra.mxu0 %v1404
      %1417 = vmatprep.subr.bf16.mxu0 0
      %1418 = vmatpush1.bf16.msra.mxu0 %v1405
      %1419 = vmatprep.subr.bf16.mxu0 0
      %1420 = vmatpush1.bf16.msra.mxu0 %v1406
      %1421 = vmatprep.subr.bf16.mxu0 0
      %1422 = vmatpush1.bf16.msra.mxu0 %v1407
      %1423 = vmatprep.subr.bf16.mxu0 0
      %1424 = vmatpush1.bf16.msra.mxu0 0
      %1425 = vmatprep.subr.bf16.mxu0 0
      %1426 = vmatpush1.bf16.msra.mxu0 0
      %1427 = vmatprep.subr.bf16.mxu0 0
      %1428 = vmatpush1.bf16.msra.mxu0 0
      %1429 = vmatprep.subr.bf16.mxu0 0
      %1430 = vmatpush1.bf16.msra.mxu0 0
      %1431 = vmatprep.subr.bf16.mxu0 0
      %1432 = vmatpush1.bf16.msra.mxu0 0
      %1433 = vmatprep.subr.bf16.mxu0 0
      %1434 = vmatpush1.bf16.msra.mxu0 0
      %1435 = vmatprep.subr.bf16.mxu0 0
      %1436 = vmatpush1.bf16.msra.mxu0 0
      %1437 = vmatprep.subr.bf16.mxu0 0
      %1438 = vmatpush1.bf16.msra.mxu0 0
      %1439 = vmatprep.subr.bf16.mxu0 0
      %1440 = vmatpush1.bf16.msra.mxu0 0
      %1441 = vmatprep.subr.bf16.mxu0 0
      %1442 = vmatpush1.bf16.msra.mxu0 0
      %1443 = vmatprep.subr.bf16.mxu0 0
      %1444 = vmatpush1.bf16.msra.mxu0 0
      %1445 = vmatprep.subr.bf16.mxu0 0
      %1446 = vmatpush1.bf16.msra.mxu0 0
      %1447 = vmatprep.mubr.bf16.mxu0 0
      %1448 = vmatmul.mubr.bf16.gmra.mrb[0].mxu0 %v1413
      %v1449 = vpop.f32.mrb[0].mxu0
      %v1450 = vadd.f32 0.0, %v1449
      %v1451 = vpop.f32.mrb[0].mxu0
      %v1452 = vpop.f32.mrb[0].mxu0
      %v1453 = vpop.f32.mrb[0].mxu0
      %1454 = vdwg.mxu0
      %v1455 = vadd.f32 %v1369, %v1450
      %s1456 = scalar_lea.vmem %s164, 6
      %v1457 = vld [vmem:[%s1456] sm:$0x1]
      %v1458 = vld [vmem:[%s1 + $0xc0] sm:$0xf]
      %v1459 = vld [vmem:[%s1 + $0xc4] sm:$0xf]
      %v1460 = vld [vmem:[%s1 + $0xc8] sm:$0xf]
      %v1461 = vld [vmem:[%s1 + $0xcc] sm:$0xf]
      %v1462 = vld [vmem:[%s1 + $0xd0] sm:$0xf]
      %v1463 = vld [vmem:[%s1 + $0xd4] sm:$0xf]
      %v1464 = vld [vmem:[%s1 + $0xd8] sm:$0xf]
      %v1465 = vld [vmem:[%s1 + $0xdc] sm:$0xf]
      %v1474 = vunpack.c.l.b16 %v1458
      %v1475 = vunpack.c.l.b16 %v1459
      %v1476 = vunpack.c.l.b16 %v1460
      %v1477 = vunpack.c.l.b16 %v1461
      %v1478 = vunpack.c.l.b16 %v1462
      %v1479 = vunpack.c.l.b16 %v1463
      %v1480 = vunpack.c.l.b16 %v1464
      %v1481 = vunpack.c.l.b16 %v1465
      %v1482 = vpack.c.b16 %v1475, %v1474
      %v1483 = vpack.c.b16 %v1477, %v1476
      %v1484 = vpack.c.b16 %v1479, %v1478
      %v1485 = vpack.c.b16 %v1481, %v1480
      %v1491 = vsel %vm228, %v1457, 0
      %1493 = vmatprep.subr.bf16.mxu0 0
      %1494 = vmatpush1.bf16.msra.mxu0 %v1482
      %1495 = vmatprep.subr.bf16.mxu0 0
      %1496 = vmatpush1.bf16.msra.mxu0 %v1483
      %1497 = vmatprep.subr.bf16.mxu0 0
      %1498 = vmatpush1.bf16.msra.mxu0 %v1484
      %1499 = vmatprep.subr.bf16.mxu0 0
      %1500 = vmatpush1.bf16.msra.mxu0 %v1485
      %1501 = vmatprep.subr.bf16.mxu0 0
      %1502 = vmatpush1.bf16.msra.mxu0 0
      %1503 = vmatprep.subr.bf16.mxu0 0
      %1504 = vmatpush1.bf16.msra.mxu0 0
      %1505 = vmatprep.subr.bf16.mxu0 0
      %1506 = vmatpush1.bf16.msra.mxu0 0
      %1507 = vmatprep.subr.bf16.mxu0 0
      %1508 = vmatpush1.bf16.msra.mxu0 0
      %1509 = vmatprep.subr.bf16.mxu0 0
      %1510 = vmatpush1.bf16.msra.mxu0 0
      %1511 = vmatprep.subr.bf16.mxu0 0
      %1512 = vmatpush1.bf16.msra.mxu0 0
      %1513 = vmatprep.subr.bf16.mxu0 0
      %1514 = vmatpush1.bf16.msra.mxu0 0
      %1515 = vmatprep.subr.bf16.mxu0 0
      %1516 = vmatpush1.bf16.msra.mxu0 0
      %1517 = vmatprep.subr.bf16.mxu0 0
      %1518 = vmatpush1.bf16.msra.mxu0 0
      %1519 = vmatprep.subr.bf16.mxu0 0
      %1520 = vmatpush1.bf16.msra.mxu0 0
      %1521 = vmatprep.subr.bf16.mxu0 0
      %1522 = vmatpush1.bf16.msra.mxu0 0
      %1523 = vmatprep.subr.bf16.mxu0 0
      %1524 = vmatpush1.bf16.msra.mxu0 0
      %1525 = vmatprep.mubr.bf16.mxu0 0
      %1526 = vmatmul.mubr.bf16.gmra.mrb[0].mxu0 %v1491
      %v1527 = vpop.f32.mrb[0].mxu0
      %v1528 = vadd.f32 0.0, %v1527
      %v1529 = vpop.f32.mrb[0].mxu0
      %v1530 = vpop.f32.mrb[0].mxu0
      %v1531 = vpop.f32.mrb[0].mxu0
      %1532 = vdwg.mxu0
      %v1533 = vadd.f32 %v1455, %v1528
      %v1534 = vld [vmem:[%s1456] sm:$0x3]
      %v1535 = vld [vmem:[%s1 + $0xe0] sm:$0xf]
      %v1536 = vld [vmem:[%s1 + $0xe4] sm:$0xf]
      %v1537 = vld [vmem:[%s1 + $0xe8] sm:$0xf]
      %v1538 = vld [vmem:[%s1 + $0xec] sm:$0xf]
      %v1539 = vld [vmem:[%s1 + $0xf0] sm:$0xf]
      %v1540 = vld [vmem:[%s1 + $0xf4] sm:$0xf]
      %v1541 = vld [vmem:[%s1 + $0xf8] sm:$0xf]
      %v1542 = vld [vmem:[%s1 + $0xfc] sm:$0xf]
      %v1545 = vunpack.c.l.s4 1983009808
      %v1546 = vunpack.c.0.s8 %v1545
      %v1547 = vlaneseq
      %v1548 = vshrl.u32 %v1547, 7
      %v1549 = vsub.s32 %v1546, %v1548
      %v1550 = vrot.slane %v1534, %v1549
      %v1552 = vshrl.u32 %v1550, 16
      %v1554 = vshll.u32 %v1550, 16
      %v1556 = vrot.slane %v1554, 1
      %v1557 = vor.u32 %v1552, %v1556
      %v1566 = vunpack.c.l.b16 %v1535
      %v1567 = vunpack.c.l.b16 %v1536
      %v1568 = vunpack.c.l.b16 %v1537
      %v1569 = vunpack.c.l.b16 %v1538
      %v1570 = vunpack.c.l.b16 %v1539
      %v1571 = vunpack.c.l.b16 %v1540
      %v1572 = vunpack.c.l.b16 %v1541
      %v1573 = vunpack.c.l.b16 %v1542
      %v1574 = vpack.c.b16 %v1567, %v1566
      %v1575 = vpack.c.b16 %v1569, %v1568
      %v1576 = vpack.c.b16 %v1571, %v1570
      %v1577 = vpack.c.b16 %v1573, %v1572
      %v1583 = vsel %vm228, %v1557, 0
      %1585 = vmatprep.subr.bf16.mxu0 0
      %1586 = vmatpush1.bf16.msra.mxu0 %v1574
      %1587 = vmatprep.subr.bf16.mxu0 0
      %1588 = vmatpush1.bf16.msra.mxu0 %v1575
      %1589 = vmatprep.subr.bf16.mxu0 0
      %1590 = vmatpush1.bf16.msra.mxu0 %v1576
      %1591 = vmatprep.subr.bf16.mxu0 0
      %1592 = vmatpush1.bf16.msra.mxu0 %v1577
      %1593 = vmatprep.subr.bf16.mxu0 0
      %1594 = vmatpush1.bf16.msra.mxu0 0
      %1595 = vmatprep.subr.bf16.mxu0 0
      %1596 = vmatpush1.bf16.msra.mxu0 0
      %1597 = vmatprep.subr.bf16.mxu0 0
      %1598 = vmatpush1.bf16.msra.mxu0 0
      %1599 = vmatprep.subr.bf16.mxu0 0
      %1600 = vmatpush1.bf16.msra.mxu0 0
      %1601 = vmatprep.subr.bf16.mxu0 0
      %1602 = vmatpush1.bf16.msra.mxu0 0
      %1603 = vmatprep.subr.bf16.mxu0 0
      %1604 = vmatpush1.bf16.msra.mxu0 0
      %1605 = vmatprep.subr.bf16.mxu0 0
      %1606 = vmatpush1.bf16.msra.mxu0 0
      %1607 = vmatprep.subr.bf16.mxu0 0
      %1608 = vmatpush1.bf16.msra.mxu0 0
      %1609 = vmatprep.subr.bf16.mxu0 0
      %1610 = vmatpush1.bf16.msra.mxu0 0
      %1611 = vmatprep.subr.bf16.mxu0 0
      %1612 = vmatpush1.bf16.msra.mxu0 0
      %1613 = vmatprep.subr.bf16.mxu0 0
      %1614 = vmatpush1.bf16.msra.mxu0 0
      %1615 = vmatprep.subr.bf16.mxu0 0
      %1616 = vmatpush1.bf16.msra.mxu0 0
      %1617 = vmatprep.mubr.bf16.mxu0 0
      %1618 = vmatmul.mubr.bf16.gmra.mrb[0].mxu0 %v1583
      %v1619 = vpop.f32.mrb[0].mxu0
      %v1620 = vadd.f32 0.0, %v1619
      %v1621 = vpop.f32.mrb[0].mxu0
      %v1622 = vpop.f32.mrb[0].mxu0
      %v1623 = vpop.f32.mrb[0].mxu0
      %1624 = vdwg.mxu0
      %v1625 = vadd.f32 %v1533, %v1620
      %v1626 = vld [vmem:[%s1456] sm:$0x2]
      %v1627 = vld [vmem:[%s1 + $0x100] sm:$0xf]
      %v1628 = vld [vmem:[%s1 + $0x104] sm:$0xf]
      %v1629 = vld [vmem:[%s1 + $0x108] sm:$0xf]
      %v1630 = vld [vmem:[%s1 + $0x10c] sm:$0xf]
      %v1631 = vld [vmem:[%s1 + $0x110] sm:$0xf]
      %v1632 = vld [vmem:[%s1 + $0x114] sm:$0xf]
      %v1633 = vld [vmem:[%s1 + $0x118] sm:$0xf]
      %v1634 = vld [vmem:[%s1 + $0x11c] sm:$0xf]
      %v1637 = vunpack.c.l.s4 1983009808
      %v1638 = vunpack.c.0.s8 %v1637
      %v1639 = vlaneseq
      %v1640 = vshrl.u32 %v1639, 7
      %v1641 = vsub.s32 %v1638, %v1640
      %v1642 = vrot.slane %v1626, %v1641
      %v1643 = vrot.slane %v1642, 1
      %v1652 = vunpack.c.l.b16 %v1627
      %v1653 = vunpack.c.l.b16 %v1628
      %v1654 = vunpack.c.l.b16 %v1629
      %v1655 = vunpack.c.l.b16 %v1630
      %v1656 = vunpack.c.l.b16 %v1631
      %v1657 = vunpack.c.l.b16 %v1632
      %v1658 = vunpack.c.l.b16 %v1633
      %v1659 = vunpack.c.l.b16 %v1634
      %v1660 = vpack.c.b16 %v1653, %v1652
      %v1661 = vpack.c.b16 %v1655, %v1654
      %v1662 = vpack.c.b16 %v1657, %v1656
      %v1663 = vpack.c.b16 %v1659, %v1658
      %v1669 = vsel %vm228, %v1643, 0
      %1671 = vmatprep.subr.bf16.mxu0 0
      %1672 = vmatpush1.bf16.msra.mxu0 %v1660
      %1673 = vmatprep.subr.bf16.mxu0 0
      %1674 = vmatpush1.bf16.msra.mxu0 %v1661
      %1675 = vmatprep.subr.bf16.mxu0 0
      %1676 = vmatpush1.bf16.msra.mxu0 %v1662
      %1677 = vmatprep.subr.bf16.mxu0 0
      %1678 = vmatpush1.bf16.msra.mxu0 %v1663
      %1679 = vmatprep.subr.bf16.mxu0 0
      %1680 = vmatpush1.bf16.msra.mxu0 0
      %1681 = vmatprep.subr.bf16.mxu0 0
      %1682 = vmatpush1.bf16.msra.mxu0 0
      %1683 = vmatprep.subr.bf16.mxu0 0
      %1684 = vmatpush1.bf16.msra.mxu0 0
      %1685 = vmatprep.subr.bf16.mxu0 0
      %1686 = vmatpush1.bf16.msra.mxu0 0
      %1687 = vmatprep.subr.bf16.mxu0 0
      %1688 = vmatpush1.bf16.msra.mxu0 0
      %1689 = vmatprep.subr.bf16.mxu0 0
      %1690 = vmatpush1.bf16.msra.mxu0 0
      %1691 = vmatprep.subr.bf16.mxu0 0
      %1692 = vmatpush1.bf16.msra.mxu0 0
      %1693 = vmatprep.subr.bf16.mxu0 0
      %1694 = vmatpush1.bf16.msra.mxu0 0
      %1695 = vmatprep.subr.bf16.mxu0 0
      %1696 = vmatpush1.bf16.msra.mxu0 0
      %1697 = vmatprep.subr.bf16.mxu0 0
      %1698 = vmatpush1.bf16.msra.mxu0 0
      %1699 = vmatprep.subr.bf16.mxu0 0
      %1700 = vmatpush1.bf16.msra.mxu0 0
      %1701 = vmatprep.subr.bf16.mxu0 0
      %1702 = vmatpush1.bf16.msra.mxu0 0
      %1703 = vmatprep.mubr.bf16.mxu0 0
      %1704 = vmatmul.mubr.bf16.gmra.mrb[0].mxu0 %v1669
      %v1705 = vpop.f32.mrb[0].mxu0
      %v1706 = vadd.f32 0.0, %v1705
      %v1707 = vpop.f32.mrb[0].mxu0
      %v1708 = vpop.f32.mrb[0].mxu0
      %v1709 = vpop.f32.mrb[0].mxu0
      %1710 = vdwg.mxu0
      %v1711 = vadd.f32 %v1625, %v1706
      %v1712 = vadd.f32 %v1711, %v941
      %v1713 = vmax.f32 %v1712, 0.0
      %v1714 = vpack.c.bf16 %v1713, %v1713
      %s1715 = scalar_lea.vmem %s168, 1
      %1716 = vst.msk [vmem:[%s1715] sm:$0x1] %vm946, %v1714
      %p1717 = scmp.lt.s32.totalorder %s14, 1
      %s1718 = scalar_select %p1717, %s14, 1
      %s1719 = smul.addr %s1718, 2
      %s1720 = scalar_lea.vmem %s3, %s1719
      // Predicated region
      $region33: #{dqn_forward.6} parent=31 // pred_check
        %p1721 = pneg %p100
      $region34: #{dqn_forward.6} parent=31 // pred_check_branch
        %1723 = sbr.rel (%p1721) target = $region36
      $region35: #{dqn_forward.6} parent=31 // pred_region
        _
      $region36: #{dqn_forward.6} parent=31 // pred_fallthru
        _
    $region32: #{dqn_forward.6} parent=5 // pred_fallthru
      _
    %p1724 = scmp.le.s32.totalorder 2, %s9
    // Predicated region
    $region37: #{dqn_forward.6} parent=5 // pred_check
      %p1725 = pneg %p1724
    $region38: #{dqn_forward.6} parent=5 // pred_check_branch
      %1727 = sbr.rel (%p1725) target = $region40
    $region39: #{dqn_forward.6} parent=5 // pred_region
      %s1728 = ssub.s32 %s9, 2
      // Predicated region
      $region41: #{dqn_forward.6} parent=39 // pred_check
        %p1729 = pneg %p106
      $region42: #{dqn_forward.6} parent=39 // pred_check_branch
        %1731 = sbr.rel (%p1729) target = $region44
      $region43: #{dqn_forward.6} parent=39 // pred_region
        %p1732 = scmp.lt.s32.totalorder %s15, 1
        %s1733 = scalar_select %p1732, %s15, 1
        %s1734 = smul.addr %s1733, 2
        %s1735 = scalar_lea.vmem %s3, %s1734
      $region44: #{dqn_forward.6} parent=39 // pred_fallthru
        _
    $region40: #{dqn_forward.6} parent=5 // pred_fallthru
      _
  $region6: #{dqn_forward.6} parent=0 // loop_footer
    %s13 = sadd.s32 1, %s9
  $region7: #{dqn_forward.6} parent=0 // loop_footer_branch
    %8 = sbr.rel target = $region3
  $region8: #{dqn_forward.6} parent=0 // loop_exit
    _

// kernel: dqn_forward.5
$region0: #{dqn_forward.5}
  #allocation0 [shape = 'u32[]', space=smem, size = 0x4, offset = 0x4, fixed_abs, tag = 'smem constant byte address 0x4 - core index']
  #allocation1 [shape = 'u32[144,128]{1,0:T(1,128)}', space=vmem, size = 0x12000, scoped, tag = 'internal scratch']
  %s0 = inlined_call_operand.vmem [shape: bf16[2,5,5,128], index: 0, kind: input, shape index: {}]
  %s1 = inlined_call_operand.vmem [shape: bf16[512,64], index: 1, kind: input, shape index: {}]
  %s2 = inlined_call_operand.vmem [shape: f32[1,64], index: 2, kind: input, shape index: {}]
  %s3 = inlined_call_operand.vmem [shape: bf16[2,4,4,64], index: 3, kind: output, shape index: {}]
  %s4 = sld [smem:[#allocation0]]
  $region45: #{dqn_forward.5} parent=0
    _
  %s6 = ssub.s32 1, %s4
  %s7 = scalar_select 0, %s6, %s4
  loop: start=0, step=1, limit=4
  $region2: #{dqn_forward.5} parent=0 // loop_pre_header
    _
  $region3: #{dqn_forward.5} parent=0 // loop_header
    %s9 = sphi 0, %s13
    %p10 = scmp.ge.s32.totalorder %s9, 4
    %s19 = sphi 0, %s21
    %s22 = sphi 0, %s19
    %s23 = sphi 0, %s22
    %s39 = sphi 0, %s23
    %s43 = sphi 0, %s43
    %s45 = sphi 0, %s43
    %s46 = sphi 0, %s45
    %s60 = sphi 0, %s46
    %s64 = sphi 0, %s64
    %s66 = sphi 0, %s64
    %s67 = sphi 0, %s66
    %s81 = sphi 0, %s67
    %s87 = sphi 0, %s89
    %s90 = sphi 0, %s87
    %s91 = sphi 0, %s90
    %s107 = sphi 0, %s91
  $region4: #{dqn_forward.5} parent=0 // loop_header_branch
    %12 = sbr.rel (%p10) target = $region8
  $region5: #{dqn_forward.5} parent=0 // loop_body
    %s14 = ssub.s32 %s9, 1
    %s15 = ssub.s32 %s9, 2
    %s16 = sadd.s32 %s9, 1
    %s17 = ssub.s32 %s9, %s16
    %p18 = scmp.eq.s32.totalorder %s17, 0
    %s20 = sadd.s32 %s19, 1
    %s21 = scalar_select %p18, %s19, %s20
    %p24 = pneg %p18
    %p25 = scmp.eq.s32.totalorder %s9, 1
    %p26 = por %p24, %p25
    %p27 = scmp.ne.s32.totalorder %s19, %s22
    %p28 = scmp.eq.s32.totalorder %s9, 0
    %p29 = por %p27, %p28
    %p30 = scmp.ne.s32.totalorder %s19, %s22
    %p31 = scmp.eq.s32.totalorder %s14, 1
    %p32 = por %p30, %p31
    %p33 = scmp.ne.s32.totalorder %s22, %s23
    %p34 = scmp.eq.s32.totalorder %s14, 0
    %p35 = por %p33, %p34
    %p36 = scmp.ne.s32.totalorder %s22, %s23
    %p37 = scmp.eq.s32.totalorder %s15, 1
    %p38 = por %p36, %p37
    %p40 = scmp.ne.s32.totalorder %s23, %s39
    %p41 = scmp.eq.s32.totalorder %s15, 0
    %p42 = por %p40, %p41
    %s44 = sadd.s32 %s43, 1
    %p47 = scmp.eq.s32.totalorder %s9, 1
    %p48 = scmp.ne.s32.totalorder %s43, %s45
    %p49 = scmp.eq.s32.totalorder %s9, 0
    %p50 = por %p48, %p49
    %p51 = scmp.ne.s32.totalorder %s43, %s45
    %p52 = scmp.eq.s32.totalorder %s14, 1
    %p53 = por %p51, %p52
    %p54 = scmp.ne.s32.totalorder %s45, %s46
    %p55 = scmp.eq.s32.totalorder %s14, 0
    %p56 = por %p54, %p55
    %p57 = scmp.ne.s32.totalorder %s45, %s46
    %p58 = scmp.eq.s32.totalorder %s15, 1
    %p59 = por %p57, %p58
    %p61 = scmp.ne.s32.totalorder %s46, %s60
    %p62 = scmp.eq.s32.totalorder %s15, 0
    %p63 = por %p61, %p62
    %s65 = sadd.s32 %s64, 1
    %p68 = scmp.eq.s32.totalorder %s9, 1
    %p69 = scmp.ne.s32.totalorder %s64, %s66
    %p70 = scmp.eq.s32.totalorder %s9, 0
    %p71 = por %p69, %p70
    %p72 = scmp.ne.s32.totalorder %s64, %s66
    %p73 = scmp.eq.s32.totalorder %s14, 1
    %p74 = por %p72, %p73
    %p75 = scmp.ne.s32.totalorder %s66, %s67
    %p76 = scmp.eq.s32.totalorder %s14, 0
    %p77 = por %p75, %p76
    %p78 = scmp.ne.s32.totalorder %s66, %s67
    %p79 = scmp.eq.s32.totalorder %s15, 1
    %p80 = por %p78, %p79
    %p82 = scmp.ne.s32.totalorder %s67, %s81
    %p83 = scmp.eq.s32.totalorder %s15, 0
    %p84 = por %p82, %p83
    %s85 = ssub.s32 %s9, %s16
    %p86 = scmp.eq.s32.totalorder %s85, 0
    %s88 = sadd.s32 %s87, 1
    %s89 = scalar_select %p86, %s87, %s88
    %p92 = pneg %p86
    %p93 = scmp.eq.s32.totalorder %s9, 1
    %p94 = por %p92, %p93
    %p95 = scmp.ne.s32.totalorder %s87, %s90
    %p96 = scmp.eq.s32.totalorder %s9, 0
    %p97 = por %p95, %p96
    %p98 = scmp.ne.s32.totalorder %s87, %s90
    %p99 = scmp.eq.s32.totalorder %s14, 1
    %p100 = por %p98, %p99
    %p101 = scmp.ne.s32.totalorder %s90, %s91
    %p102 = scmp.eq.s32.totalorder %s14, 0
    %p103 = por %p101, %p102
    %p104 = scmp.ne.s32.totalorder %s90, %s91
    %p105 = scmp.eq.s32.totalorder %s15, 1
    %p106 = por %p104, %p105
    %p108 = scmp.ne.s32.totalorder %s91, %s107
    %p109 = scmp.eq.s32.totalorder %s15, 0
    %p110 = por %p108, %p109
    %p111 = scmp.le.s32.totalorder 1, %s9
    %p112 = scmp.lt.s32.totalorder %s9, 3
    %p113 = pnand %p111, %p112
    %p114 = pneg %p113
    // Predicated region
    $region9: #{dqn_forward.5} parent=5 // pred_check
      _
    $region10: #{dqn_forward.5} parent=5 // pred_check_branch
      %116 = sbr.rel (%p113) target = $region12
    $region11: #{dqn_forward.5} parent=5 // pred_region
      %s117 = ssub.s32 %s9, 1
      // Predicated region
      $region13: #{dqn_forward.5} parent=11 // pred_check
        %p118 = pneg %p56
      $region14: #{dqn_forward.5} parent=11 // pred_check_branch
        %120 = sbr.rel (%p118) target = $region16
      $region15: #{dqn_forward.5} parent=11 // pred_region
        _
      $region16: #{dqn_forward.5} parent=11 // pred_fallthru
        _
      // Predicated region
      $region17: #{dqn_forward.5} parent=11 // pred_check
        %p121 = pneg %p77
      $region18: #{dqn_forward.5} parent=11 // pred_check_branch
        %123 = sbr.rel (%p121) target = $region20
      $region19: #{dqn_forward.5} parent=11 // pred_region
        _
      $region20: #{dqn_forward.5} parent=11 // pred_fallthru
        _
    $region12: #{dqn_forward.5} parent=5 // pred_fallthru
      _
    %p124 = scmp.lt.s32.totalorder %s9, 2
    // Predicated region
    $region21: #{dqn_forward.5} parent=5 // pred_check
      %p125 = pneg %p124
    $region22: #{dqn_forward.5} parent=5 // pred_check_branch
      %127 = sbr.rel (%p125) target = $region24
    $region23: #{dqn_forward.5} parent=5 // pred_region
      // Predicated region
      $region25: #{dqn_forward.5} parent=23 // pred_check
        %p128 = pneg %p29
      $region26: #{dqn_forward.5} parent=23 // pred_check_branch
        %130 = sbr.rel (%p128) target = $region28
      $region27: #{dqn_forward.5} parent=23 // pred_region
        %p131 = scmp.lt.s32.totalorder %s9, 1
        %s132 = scalar_select %p131, %s9, 1
        %s133 = smul.addr %s132, 5
        %s134 = smul.addr %s133, 4
        %s135 = scalar_lea.vmem %s0, %s134
      $region28: #{dqn_forward.5} parent=23 // pred_fallthru
        _
    $region24: #{dqn_forward.5} parent=5 // pred_fallthru
      _
    %p136 = scmp.le.s32.totalorder 1, %s9
    %p137 = scmp.lt.s32.totalorder %s9, 3
    %p138 = pnand %p136, %p137
    %p139 = pneg %p138
    // Predicated region
    $region29: #{dqn_forward.5} parent=5 // pred_check
      _
    $region30: #{dqn_forward.5} parent=5 // pred_check_branch
      %141 = sbr.rel (%p138) target = $region32
    $region31: #{dqn_forward.5} parent=5 // pred_region
      %s142 = ssub.s32 %s9, 1
      %p143 = scmp.lt.s32.totalorder %s14, 1
      %s144 = scalar_select %p143, %s14, 1
      %s145 = smul.addr %s144, 5
      %s146 = smul.addr %s145, 4
      %s147 = scalar_lea.vmem %s0, %s146
      %p148 = pneg %p35
      %p149 = pneg %p32
      %p150 = pneg %p56
      %p151 = pneg %p53
      %p152 = pneg %p77
      %p153 = pneg %p74
      %p154 = pneg %p103
      %p155 = pneg %p100
      %p156 = scmp.lt.s32.totalorder %s14, 1
      %s157 = scalar_select %p156, %s14, 1
      %s158 = smul.addr %s157, 4
      %s159 = smul.addr %s158, 2
      %s160 = scalar_lea.vmem %s3, %s159
      %p161 = scmp.lt.s32.totalorder %s14, 1
      %s162 = scalar_select %p161, %s14, 1
      %s163 = smul.addr %s162, 5
      %s164 = smul.addr %s163, 4
      %s165 = scalar_lea.vmem %s0, %s164
      %p166 = scmp.lt.s32.totalorder %s14, 1
      %s167 = scalar_select %p166, %s14, 1
      %s168 = smul.addr %s167, 4
      %s169 = smul.addr %s168, 2
      %s170 = scalar_lea.vmem %s3, %s169
      %v172 = vld [vmem:[%s2] sm:$0x1]
      %v173 = vld [vmem:[%s165] sm:$0x3]
      %v174 = vld [vmem:[%s1] sm:$0xf]
      %v175 = vld [vmem:[%s1 + $0x4] sm:$0xf]
      %v176 = vld [vmem:[%s1 + $0x8] sm:$0xf]
      %v177 = vld [vmem:[%s1 + $0xc] sm:$0xf]
      %v178 = vld [vmem:[%s1 + $0x10] sm:$0xf]
      %v179 = vld [vmem:[%s1 + $0x14] sm:$0xf]
      %v180 = vld [vmem:[%s1 + $0x18] sm:$0xf]
      %v181 = vld [vmem:[%s1 + $0x1c] sm:$0xf]
      %v182 = vld [vmem:[%s1 + $0x20] sm:$0xf]
      %v183 = vld [vmem:[%s1 + $0x24] sm:$0xf]
      %v184 = vld [vmem:[%s1 + $0x28] sm:$0xf]
      %v185 = vld [vmem:[%s1 + $0x2c] sm:$0xf]
      %v186 = vld [vmem:[%s1 + $0x30] sm:$0xf]
      %v187 = vld [vmem:[%s1 + $0x34] sm:$0xf]
      %v188 = vld [vmem:[%s1 + $0x38] sm:$0xf]
      %v189 = vld [vmem:[%s1 + $0x3c] sm:$0xf]
      %v190 = vld [vmem:[%s165] sm:$0x7]
      %v191 = vld [vmem:[%s1 + $0x40] sm:$0xf]
      %v192 = vld [vmem:[%s1 + $0x44] sm:$0xf]
      %v193 = vld [vmem:[%s1 + $0x48] sm:$0xf]
      %v194 = vld [vmem:[%s1 + $0x4c] sm:$0xf]
      %v195 = vld [vmem:[%s1 + $0x50] sm:$0xf]
      %v196 = vld [vmem:[%s1 + $0x54] sm:$0xf]
      %v197 = vld [vmem:[%s1 + $0x58] sm:$0xf]
      %v198 = vld [vmem:[%s1 + $0x5c] sm:$0xf]
      %v199 = vld [vmem:[%s1 + $0x60] sm:$0xf]
      %v200 = vld [vmem:[%s1 + $0x64] sm:$0xf]
      %v201 = vld [vmem:[%s1 + $0x68] sm:$0xf]
      %v202 = vld [vmem:[%s1 + $0x6c] sm:$0xf]
      %v203 = vld [vmem:[%s1 + $0x70] sm:$0xf]
      %v204 = vld [vmem:[%s1 + $0x74] sm:$0xf]
      %v205 = vld [vmem:[%s1 + $0x78] sm:$0xf]
      %v206 = vld [vmem:[%s1 + $0x7c] sm:$0xf]
      %v208 = vunpack.c.l.b16 %v190
      %v209 = vpack.c.b16 %v208, %v208
      %v211 = vshrl.u32 %v209, 16
      %v213 = vshll.u32 %v209, 16
      %v215 = vrot.slane %v213, 1
      %v216 = vor.u32 %v211, %v215
      %v234 = vunpack.c.l.b16 %v191
      %v235 = vunpack.c.l.b16 %v192
      %v236 = vunpack.c.l.b16 %v193
      %v237 = vunpack.c.l.b16 %v194
      %v238 = vunpack.c.l.b16 %v195
      %v239 = vunpack.c.l.b16 %v196
      %v240 = vunpack.c.l.b16 %v197
      %v241 = vunpack.c.l.b16 %v198
      %v242 = vunpack.c.l.b16 %v199
      %v243 = vunpack.c.l.b16 %v200
      %v244 = vunpack.c.l.b16 %v201
      %v245 = vunpack.c.l.b16 %v202
      %v246 = vunpack.c.l.b16 %v203
      %v247 = vunpack.c.l.b16 %v204
      %v248 = vunpack.c.l.b16 %v205
      %v249 = vunpack.c.l.b16 %v206
      %v250 = vpack.c.b16 %v235, %v234
      %v251 = vpack.c.b16 %v237, %v236
      %v252 = vpack.c.b16 %v239, %v238
      %v253 = vpack.c.b16 %v241, %v240
      %v254 = vpack.c.b16 %v243, %v242
      %v255 = vpack.c.b16 %v245, %v244
      %v256 = vpack.c.b16 %v247, %v246
      %v257 = vpack.c.b16 %v249, %v248
      %266 = vmatprep.subr.bf16.mxu0 0
      %267 = vmatpush1.bf16.msra.mxu0 %v250
      %268 = vmatprep.subr.bf16.mxu0 0
      %269 = vmatpush1.bf16.msra.mxu0 %v251
      %270 = vmatprep.subr.bf16.mxu0 0
      %271 = vmatpush1.bf16.msra.mxu0 %v252
      %272 = vmatprep.subr.bf16.mxu0 0
      %273 = vmatpush1.bf16.msra.mxu0 %v253
      %274 = vmatprep.subr.bf16.mxu0 0
      %275 = vmatpush1.bf16.msra.mxu0 %v254
      %276 = vmatprep.subr.bf16.mxu0 0
      %277 = vmatpush1.bf16.msra.mxu0 %v255
      %278 = vmatprep.subr.bf16.mxu0 0
      %279 = vmatpush1.bf16.msra.mxu0 %v256
      %280 = vmatprep.subr.bf16.mxu0 0
      %281 = vmatpush1.bf16.msra.mxu0 %v257
      %282 = vmatprep.subr.bf16.mxu0 0
      %283 = vmatpush1.bf16.msra.mxu0 0
      %284 = vmatprep.subr.bf16.mxu0 0
      %285 = vmatpush1.bf16.msra.mxu0 0
      %286 = vmatprep.subr.bf16.mxu0 0
      %287 = vmatpush1.bf16.msra.mxu0 0
      %288 = vmatprep.subr.bf16.mxu0 0
      %289 = vmatpush1.bf16.msra.mxu0 0
      %290 = vmatprep.subr.bf16.mxu0 0
      %291 = vmatpush1.bf16.msra.mxu0 0
      %292 = vmatprep.subr.bf16.mxu0 0
      %293 = vmatpush1.bf16.msra.mxu0 0
      %294 = vmatprep.subr.bf16.mxu0 0
      %295 = vmatpush1.bf16.msra.mxu0 0
      %296 = vmatprep.subr.bf16.mxu0 0
      %297 = vmatpush1.bf16.msra.mxu0 0
      %298 = vmatprep.mubr.bf16.mxu0 0
      %299 = vmatmul.mubr.bf16.gmra.mrb[0].mxu0 %v216
      %v300 = vpop.f32.mrb[0].mxu0
      %v301 = vadd.f32 0.0, %v300
      %v302 = vpop.f32.mrb[0].mxu0
      %v303 = vpop.f32.mrb[0].mxu0
      %v304 = vpop.f32.mrb[0].mxu0
      %305 = vdwg.mxu0
      %v322 = vunpack.c.l.b16 %v174
      %v323 = vunpack.c.l.b16 %v175
      %v324 = vunpack.c.l.b16 %v176
      %v325 = vunpack.c.l.b16 %v177
      %v326 = vunpack.c.l.b16 %v178
      %v327 = vunpack.c.l.b16 %v179
      %v328 = vunpack.c.l.b16 %v180
      %v329 = vunpack.c.l.b16 %v181
      %v330 = vunpack.c.l.b16 %v182
      %v331 = vunpack.c.l.b16 %v183
      %v332 = vunpack.c.l.b16 %v184
      %v333 = vunpack.c.l.b16 %v185
      %v334 = vunpack.c.l.b16 %v186
      %v335 = vunpack.c.l.b16 %v187
      %v336 = vunpack.c.l.b16 %v188
      %v337 = vunpack.c.l.b16 %v189
      %v338 = vpack.c.b16 %v323, %v322
      %v339 = vpack.c.b16 %v325, %v324
      %v340 = vpack.c.b16 %v327, %v326
      %v341 = vpack.c.b16 %v329, %v328
      %v342 = vpack.c.b16 %v331, %v330
      %v343 = vpack.c.b16 %v333, %v332
      %v344 = vpack.c.b16 %v335, %v334
      %v345 = vpack.c.b16 %v337, %v336
      %354 = vmatprep.subr.bf16.mxu0 0
      %355 = vmatpush1.bf16.msra.mxu0 %v338
      %356 = vmatprep.subr.bf16.mxu0 0
      %357 = vmatpush1.bf16.msra.mxu0 %v339
      %358 = vmatprep.subr.bf16.mxu0 0
      %359 = vmatpush1.bf16.msra.mxu0 %v340
      %360 = vmatprep.subr.bf16.mxu0 0
      %361 = vmatpush1.bf16.msra.mxu0 %v341
      %362 = vmatprep.subr.bf16.mxu0 0
      %363 = vmatpush1.bf16.msra.mxu0 %v342
      %364 = vmatprep.subr.bf16.mxu0 0
      %365 = vmatpush1.bf16.msra.mxu0 %v343
      %366 = vmatprep.subr.bf16.mxu0 0
      %367 = vmatpush1.bf16.msra.mxu0 %v344
      %368 = vmatprep.subr.bf16.mxu0 0
      %369 = vmatpush1.bf16.msra.mxu0 %v345
      %370 = vmatprep.subr.bf16.mxu0 0
      %371 = vmatpush1.bf16.msra.mxu0 0
      %372 = vmatprep.subr.bf16.mxu0 0
      %373 = vmatpush1.bf16.msra.mxu0 0
      %374 = vmatprep.subr.bf16.mxu0 0
      %375 = vmatpush1.bf16.msra.mxu0 0
      %376 = vmatprep.subr.bf16.mxu0 0
      %377 = vmatpush1.bf16.msra.mxu0 0
      %378 = vmatprep.subr.bf16.mxu0 0
      %379 = vmatpush1.bf16.msra.mxu0 0
      %380 = vmatprep.subr.bf16.mxu0 0
      %381 = vmatpush1.bf16.msra.mxu0 0
      %382 = vmatprep.subr.bf16.mxu0 0
      %383 = vmatpush1.bf16.msra.mxu0 0
      %384 = vmatprep.subr.bf16.mxu0 0
      %385 = vmatpush1.bf16.msra.mxu0 0
      %386 = vmatprep.mubr.bf16.mxu0 0
      %387 = vmatmul.mubr.bf16.gmra.mrb[0].mxu0 %v173
      %v388 = vpop.f32.mrb[0].mxu0
      %v389 = vadd.f32 %v301, %v388
      %v390 = vpop.f32.mrb[0].mxu0
      %v391 = vpop.f32.mrb[0].mxu0
      %v392 = vpop.f32.mrb[0].mxu0
      %393 = vdwg.mxu0
      %s394 = scalar_lea.vmem %s165, 4
      %v395 = vld [vmem:[%s394] sm:$0x3]
      %v396 = vld [vmem:[%s1 + $0x80] sm:$0xf]
      %v397 = vld [vmem:[%s1 + $0x84] sm:$0xf]
      %v398 = vld [vmem:[%s1 + $0x88] sm:$0xf]
      %v399 = vld [vmem:[%s1 + $0x8c] sm:$0xf]
      %v400 = vld [vmem:[%s1 + $0x90] sm:$0xf]
      %v401 = vld [vmem:[%s1 + $0x94] sm:$0xf]
      %v402 = vld [vmem:[%s1 + $0x98] sm:$0xf]
      %v403 = vld [vmem:[%s1 + $0x9c] sm:$0xf]
      %v404 = vld [vmem:[%s1 + $0xa0] sm:$0xf]
      %v405 = vld [vmem:[%s1 + $0xa4] sm:$0xf]
      %v406 = vld [vmem:[%s1 + $0xa8] sm:$0xf]
      %v407 = vld [vmem:[%s1 + $0xac] sm:$0xf]
      %v408 = vld [vmem:[%s1 + $0xb0] sm:$0xf]
      %v409 = vld [vmem:[%s1 + $0xb4] sm:$0xf]
      %v410 = vld [vmem:[%s1 + $0xb8] sm:$0xf]
      %v411 = vld [vmem:[%s1 + $0xbc] sm:$0xf]
      %v428 = vunpack.c.l.b16 %v396
      %v429 = vunpack.c.l.b16 %v397
      %v430 = vunpack.c.l.b16 %v398
      %v431 = vunpack.c.l.b16 %v399
      %v432 = vunpack.c.l.b16 %v400
      %v433 = vunpack.c.l.b16 %v401
      %v434 = vunpack.c.l.b16 %v402
      %v435 = vunpack.c.l.b16 %v403
      %v436 = vunpack.c.l.b16 %v404
      %v437 = vunpack.c.l.b16 %v405
      %v438 = vunpack.c.l.b16 %v406
      %v439 = vunpack.c.l.b16 %v407
      %v440 = vunpack.c.l.b16 %v408
      %v441 = vunpack.c.l.b16 %v409
      %v442 = vunpack.c.l.b16 %v410
      %v443 = vunpack.c.l.b16 %v411
      %v444 = vpack.c.b16 %v429, %v428
      %v445 = vpack.c.b16 %v431, %v430
      %v446 = vpack.c.b16 %v433, %v432
      %v447 = vpack.c.b16 %v435, %v434
      %v448 = vpack.c.b16 %v437, %v436
      %v449 = vpack.c.b16 %v439, %v438
      %v450 = vpack.c.b16 %v441, %v440
      %v451 = vpack.c.b16 %v443, %v442
      %460 = vmatprep.subr.bf16.mxu0 0
      %461 = vmatpush1.bf16.msra.mxu0 %v444
      %462 = vmatprep.subr.bf16.mxu0 0
      %463 = vmatpush1.bf16.msra.mxu0 %v445
      %464 = vmatprep.subr.bf16.mxu0 0
      %465 = vmatpush1.bf16.msra.mxu0 %v446
      %466 = vmatprep.subr.bf16.mxu0 0
      %467 = vmatpush1.bf16.msra.mxu0 %v447
      %468 = vmatprep.subr.bf16.mxu0 0
      %469 = vmatpush1.bf16.msra.mxu0 %v448
      %470 = vmatprep.subr.bf16.mxu0 0
      %471 = vmatpush1.bf16.msra.mxu0 %v449
      %472 = vmatprep.subr.bf16.mxu0 0
      %473 = vmatpush1.bf16.msra.mxu0 %v450
      %474 = vmatprep.subr.bf16.mxu0 0
      %475 = vmatpush1.bf16.msra.mxu0 %v451
      %476 = vmatprep.subr.bf16.mxu0 0
      %477 = vmatpush1.bf16.msra.mxu0 0
      %478 = vmatprep.subr.bf16.mxu0 0
      %479 = vmatpush1.bf16.msra.mxu0 0
      %480 = vmatprep.subr.bf16.mxu0 0
      %481 = vmatpush1.bf16.msra.mxu0 0
      %482 = vmatprep.subr.bf16.mxu0 0
      %483 = vmatpush1.bf16.msra.mxu0 0
      %484 = vmatprep.subr.bf16.mxu0 0
      %485 = vmatpush1.bf16.msra.mxu0 0
      %486 = vmatprep.subr.bf16.mxu0 0
      %487 = vmatpush1.bf16.msra.mxu0 0
      %488 = vmatprep.subr.bf16.mxu0 0
      %489 = vmatpush1.bf16.msra.mxu0 0
      %490 = vmatprep.subr.bf16.mxu0 0
      %491 = vmatpush1.bf16.msra.mxu0 0
      %492 = vmatprep.mubr.bf16.mxu0 0
      %493 = vmatmul.mubr.bf16.gmra.mrb[0].mxu0 %v395
      %v494 = vpop.f32.mrb[0].mxu0
      %v495 = vadd.f32 0.0, %v494
      %v496 = vpop.f32.mrb[0].mxu0
      %v497 = vpop.f32.mrb[0].mxu0
      %v498 = vpop.f32.mrb[0].mxu0
      %499 = vdwg.mxu0
      %v500 = vadd.f32 %v389, %v495
      %v501 = vld [vmem:[%s394] sm:$0x7]
      %v502 = vld [vmem:[%s1 + $0xc0] sm:$0xf]
      %v503 = vld [vmem:[%s1 + $0xc4] sm:$0xf]
      %v504 = vld [vmem:[%s1 + $0xc8] sm:$0xf]
      %v505 = vld [vmem:[%s1 + $0xcc] sm:$0xf]
      %v506 = vld [vmem:[%s1 + $0xd0] sm:$0xf]
      %v507 = vld [vmem:[%s1 + $0xd4] sm:$0xf]
      %v508 = vld [vmem:[%s1 + $0xd8] sm:$0xf]
      %v509 = vld [vmem:[%s1 + $0xdc] sm:$0xf]
      %v510 = vld [vmem:[%s1 + $0xe0] sm:$0xf]
      %v511 = vld [vmem:[%s1 + $0xe4] sm:$0xf]
      %v512 = vld [vmem:[%s1 + $0xe8] sm:$0xf]
      %v513 = vld [vmem:[%s1 + $0xec] sm:$0xf]
      %v514 = vld [vmem:[%s1 + $0xf0] sm:$0xf]
      %v515 = vld [vmem:[%s1 + $0xf4] sm:$0xf]
      %v516 = vld [vmem:[%s1 + $0xf8] sm:$0xf]
      %v517 = vld [vmem:[%s1 + $0xfc] sm:$0xf]
      %v519 = vunpack.c.l.b16 %v501
      %v520 = vpack.c.b16 %v519, %v519
      %v522 = vshrl.u32 %v520, 16
      %v524 = vshll.u32 %v520, 16
      %v526 = vrot.slane %v524, 1
      %v527 = vor.u32 %v522, %v526
      %v545 = vunpack.c.l.b16 %v502
      %v546 = vunpack.c.l.b16 %v503
      %v547 = vunpack.c.l.b16 %v504
      %v548 = vunpack.c.l.b16 %v505
      %v549 = vunpack.c.l.b16 %v506
      %v550 = vunpack.c.l.b16 %v507
      %v551 = vunpack.c.l.b16 %v508
      %v552 = vunpack.c.l.b16 %v509
      %v553 = vunpack.c.l.b16 %v510
      %v554 = vunpack.c.l.b16 %v511
      %v555 = vunpack.c.l.b16 %v512
      %v556 = vunpack.c.l.b16 %v513
      %v557 = vunpack.c.l.b16 %v514
      %v558 = vunpack.c.l.b16 %v515
      %v559 = vunpack.c.l.b16 %v516
      %v560 = vunpack.c.l.b16 %v517
      %v561 = vpack.c.b16 %v546, %v545
      %v562 = vpack.c.b16 %v548, %v547
      %v563 = vpack.c.b16 %v550, %v549
      %v564 = vpack.c.b16 %v552, %v551
      %v565 = vpack.c.b16 %v554, %v553
      %v566 = vpack.c.b16 %v556, %v555
      %v567 = vpack.c.b16 %v558, %v557
      %v568 = vpack.c.b16 %v560, %v559
      %577 = vmatprep.subr.bf16.mxu0 0
      %578 = vmatpush1.bf16.msra.mxu0 %v561
      %579 = vmatprep.subr.bf16.mxu0 0
      %580 = vmatpush1.bf16.msra.mxu0 %v562
      %581 = vmatprep.subr.bf16.mxu0 0
      %582 = vmatpush1.bf16.msra.mxu0 %v563
      %583 = vmatprep.subr.bf16.mxu0 0
      %584 = vmatpush1.bf16.msra.mxu0 %v564
      %585 = vmatprep.subr.bf16.mxu0 0
      %586 = vmatpush1.bf16.msra.mxu0 %v565
      %587 = vmatprep.subr.bf16.mxu0 0
      %588 = vmatpush1.bf16.msra.mxu0 %v566
      %589 = vmatprep.subr.bf16.mxu0 0
      %590 = vmatpush1.bf16.msra.mxu0 %v567
      %591 = vmatprep.subr.bf16.mxu0 0
      %592 = vmatpush1.bf16.msra.mxu0 %v568
      %593 = vmatprep.subr.bf16.mxu0 0
      %594 = vmatpush1.bf16.msra.mxu0 0
      %595 = vmatprep.subr.bf16.mxu0 0
      %596 = vmatpush1.bf16.msra.mxu0 0
      %597 = vmatprep.subr.bf16.mxu0 0
      %598 = vmatpush1.bf16.msra.mxu0 0
      %599 = vmatprep.subr.bf16.mxu0 0
      %600 = vmatpush1.bf16.msra.mxu0 0
      %601 = vmatprep.subr.bf16.mxu0 0
      %602 = vmatpush1.bf16.msra.mxu0 0
      %603 = vmatprep.subr.bf16.mxu0 0
      %604 = vmatpush1.bf16.msra.mxu0 0
      %605 = vmatprep.subr.bf16.mxu0 0
      %606 = vmatpush1.bf16.msra.mxu0 0
      %607 = vmatprep.subr.bf16.mxu0 0
      %608 = vmatpush1.bf16.msra.mxu0 0
      %609 = vmatprep.mubr.bf16.mxu0 0
      %610 = vmatmul.mubr.bf16.gmra.mrb[0].mxu0 %v527
      %v611 = vpop.f32.mrb[0].mxu0
      %v612 = vadd.f32 0.0, %v611
      %v613 = vpop.f32.mrb[0].mxu0
      %v614 = vpop.f32.mrb[0].mxu0
      %v615 = vpop.f32.mrb[0].mxu0
      %616 = vdwg.mxu0
      %v617 = vadd.f32 %v500, %v612
      %v619 = vlaneseq
      %v620 = vshrl.u32 %v619, 7
      %v621 = vsub.s32 0, %v620
      %v622 = vrot.slane %v172, %v621
      %v624 = vadd.f32 %v617, %v622
      %v625 = vmax.f32 %v624, 0.0
      %v626 = vpack.c.bf16 %v625, %v625
      %vm627 = vcmask 517120
      %628 = vst.msk [vmem:[%s170] sm:$0x3] %vm627, %v626
      %v629 = vld [vmem:[%s394] sm:$0x3]
      %v630 = vld [vmem:[%s1] sm:$0xf]
      %v631 = vld [vmem:[%s1 + $0x4] sm:$0xf]
      %v632 = vld [vmem:[%s1 + $0x8] sm:$0xf]
      %v633 = vld [vmem:[%s1 + $0xc] sm:$0xf]
      %v634 = vld [vmem:[%s1 + $0x10] sm:$0xf]
      %v635 = vld [vmem:[%s1 + $0x14] sm:$0xf]
      %v636 = vld [vmem:[%s1 + $0x18] sm:$0xf]
      %v637 = vld [vmem:[%s1 + $0x1c] sm:$0xf]
      %v638 = vld [vmem:[%s1 + $0x20] sm:$0xf]
      %v639 = vld [vmem:[%s1 + $0x24] sm:$0xf]
      %v640 = vld [vmem:[%s1 + $0x28] sm:$0xf]
      %v641 = vld [vmem:[%s1 + $0x2c] sm:$0xf]
      %v642 = vld [vmem:[%s1 + $0x30] sm:$0xf]
      %v643 = vld [vmem:[%s1 + $0x34] sm:$0xf]
      %v644 = vld [vmem:[%s1 + $0x38] sm:$0xf]
      %v645 = vld [vmem:[%s1 + $0x3c] sm:$0xf]
      %v646 = vld [vmem:[%s394] sm:$0x7]
      %v647 = vld [vmem:[%s1 + $0x40] sm:$0xf]
      %v648 = vld [vmem:[%s1 + $0x44] sm:$0xf]
      %v649 = vld [vmem:[%s1 + $0x48] sm:$0xf]
      %v650 = vld [vmem:[%s1 + $0x4c] sm:$0xf]
      %v651 = vld [vmem:[%s1 + $0x50] sm:$0xf]
      %v652 = vld [vmem:[%s1 + $0x54] sm:$0xf]
      %v653 = vld [vmem:[%s1 + $0x58] sm:$0xf]
      %v654 = vld [vmem:[%s1 + $0x5c] sm:$0xf]
      %v655 = vld [vmem:[%s1 + $0x60] sm:$0xf]
      %v656 = vld [vmem:[%s1 + $0x64] sm:$0xf]
      %v657 = vld [vmem:[%s1 + $0x68] sm:$0xf]
      %v658 = vld [vmem:[%s1 + $0x6c] sm:$0xf]
      %v659 = vld [vmem:[%s1 + $0x70] sm:$0xf]
      %v660 = vld [vmem:[%s1 + $0x74] sm:$0xf]
      %v661 = vld [vmem:[%s1 + $0x78] sm:$0xf]
      %v662 = vld [vmem:[%s1 + $0x7c] sm:$0xf]
      %v664 = vunpack.c.l.b16 %v646
      %v665 = vpack.c.b16 %v664, %v664
      %v667 = vshrl.u32 %v665, 16
      %v669 = vshll.u32 %v665, 16
      %v671 = vrot.slane %v669, 1
      %v672 = vor.u32 %v667, %v671
      %v690 = vunpack.c.l.b16 %v647
      %v691 = vunpack.c.l.b16 %v648
      %v692 = vunpack.c.l.b16 %v649
      %v693 = vunpack.c.l.b16 %v650
      %v694 = vunpack.c.l.b16 %v651
      %v695 = vunpack.c.l.b16 %v652
      %v696 = vunpack.c.l.b16 %v653
      %v697 = vunpack.c.l.b16 %v654
      %v698 = vunpack.c.l.b16 %v655
      %v699 = vunpack.c.l.b16 %v656
      %v700 = vunpack.c.l.b16 %v657
      %v701 = vunpack.c.l.b16 %v658
      %v702 = vunpack.c.l.b16 %v659
      %v703 = vunpack.c.l.b16 %v660
      %v704 = vunpack.c.l.b16 %v661
      %v705 = vunpack.c.l.b16 %v662
      %v706 = vpack.c.b16 %v691, %v690
      %v707 = vpack.c.b16 %v693, %v692
      %v708 = vpack.c.b16 %v695, %v694
      %v709 = vpack.c.b16 %v697, %v696
      %v710 = vpack.c.b16 %v699, %v698
      %v711 = vpack.c.b16 %v701, %v700
      %v712 = vpack.c.b16 %v703, %v702
      %v713 = vpack.c.b16 %v705, %v704
      %722 = vmatprep.subr.bf16.mxu0 0
      %723 = vmatpush1.bf16.msra.mxu0 %v706
      %724 = vmatprep.subr.bf16.mxu0 0
      %725 = vmatpush1.bf16.msra.mxu0 %v707
      %726 = vmatprep.subr.bf16.mxu0 0
      %727 = vmatpush1.bf16.msra.mxu0 %v708
      %728 = vmatprep.subr.bf16.mxu0 0
      %729 = vmatpush1.bf16.msra.mxu0 %v709
      %730 = vmatprep.subr.bf16.mxu0 0
      %731 = vmatpush1.bf16.msra.mxu0 %v710
      %732 = vmatprep.subr.bf16.mxu0 0
      %733 = vmatpush1.bf16.msra.mxu0 %v711
      %734 = vmatprep.subr.bf16.mxu0 0
      %735 = vmatpush1.bf16.msra.mxu0 %v712
      %736 = vmatprep.subr.bf16.mxu0 0
      %737 = vmatpush1.bf16.msra.mxu0 %v713
      %738 = vmatprep.subr.bf16.mxu0 0
      %739 = vmatpush1.bf16.msra.mxu0 0
      %740 = vmatprep.subr.bf16.mxu0 0
      %741 = vmatpush1.bf16.msra.mxu0 0
      %742 = vmatprep.subr.bf16.mxu0 0
      %743 = vmatpush1.bf16.msra.mxu0 0
      %744 = vmatprep.subr.bf16.mxu0 0
      %745 = vmatpush1.bf16.msra.mxu0 0
      %746 = vmatprep.subr.bf16.mxu0 0
      %747 = vmatpush1.bf16.msra.mxu0 0
      %748 = vmatprep.subr.bf16.mxu0 0
      %749 = vmatpush1.bf16.msra.mxu0 0
      %750 = vmatprep.subr.bf16.mxu0 0
      %751 = vmatpush1.bf16.msra.mxu0 0
      %752 = vmatprep.subr.bf16.mxu0 0
      %753 = vmatpush1.bf16.msra.mxu0 0
      %754 = vmatprep.mubr.bf16.mxu0 0
      %755 = vmatmul.mubr.bf16.gmra.mrb[0].mxu0 %v672
      %v756 = vpop.f32.mrb[0].mxu0
      %v757 = vadd.f32 0.0, %v756
      %v758 = vpop.f32.mrb[0].mxu0
      %v759 = vpop.f32.mrb[0].mxu0
      %v760 = vpop.f32.mrb[0].mxu0
      %761 = vdwg.mxu0
      %v778 = vunpack.c.l.b16 %v630
      %v779 = vunpack.c.l.b16 %v631
      %v780 = vunpack.c.l.b16 %v632
      %v781 = vunpack.c.l.b16 %v633
      %v782 = vunpack.c.l.b16 %v634
      %v783 = vunpack.c.l.b16 %v635
      %v784 = vunpack.c.l.b16 %v636
      %v785 = vunpack.c.l.b16 %v637
      %v786 = vunpack.c.l.b16 %v638
      %v787 = vunpack.c.l.b16 %v639
      %v788 = vunpack.c.l.b16 %v640
      %v789 = vunpack.c.l.b16 %v641
      %v790 = vunpack.c.l.b16 %v642
      %v791 = vunpack.c.l.b16 %v643
      %v792 = vunpack.c.l.b16 %v644
      %v793 = vunpack.c.l.b16 %v645
      %v794 = vpack.c.b16 %v779, %v778
      %v795 = vpack.c.b16 %v781, %v780
      %v796 = vpack.c.b16 %v783, %v782
      %v797 = vpack.c.b16 %v785, %v784
      %v798 = vpack.c.b16 %v787, %v786
      %v799 = vpack.c.b16 %v789, %v788
      %v800 = vpack.c.b16 %v791, %v790
      %v801 = vpack.c.b16 %v793, %v792
      %810 = vmatprep.subr.bf16.mxu0 0
      %811 = vmatpush1.bf16.msra.mxu0 %v794
      %812 = vmatprep.subr.bf16.mxu0 0
      %813 = vmatpush1.bf16.msra.mxu0 %v795
      %814 = vmatprep.subr.bf16.mxu0 0
      %815 = vmatpush1.bf16.msra.mxu0 %v796
      %816 = vmatprep.subr.bf16.mxu0 0
      %817 = vmatpush1.bf16.msra.mxu0 %v797
      %818 = vmatprep.subr.bf16.mxu0 0
      %819 = vmatpush1.bf16.msra.mxu0 %v798
      %820 = vmatprep.subr.bf16.mxu0 0
      %821 = vmatpush1.bf16.msra.mxu0 %v799
      %822 = vmatprep.subr.bf16.mxu0 0
      %823 = vmatpush1.bf16.msra.mxu0 %v800
      %824 = vmatprep.subr.bf16.mxu0 0
      %825 = vmatpush1.bf16.msra.mxu0 %v801
      %826 = vmatprep.subr.bf16.mxu0 0
      %827 = vmatpush1.bf16.msra.mxu0 0
      %828 = vmatprep.subr.bf16.mxu0 0
      %829 = vmatpush1.bf16.msra.mxu0 0
      %830 = vmatprep.subr.bf16.mxu0 0
      %831 = vmatpush1.bf16.msra.mxu0 0
      %832 = vmatprep.subr.bf16.mxu0 0
      %833 = vmatpush1.bf16.msra.mxu0 0
      %834 = vmatprep.subr.bf16.mxu0 0
      %835 = vmatpush1.bf16.msra.mxu0 0
      %836 = vmatprep.subr.bf16.mxu0 0
      %837 = vmatpush1.bf16.msra.mxu0 0
      %838 = vmatprep.subr.bf16.mxu0 0
      %839 = vmatpush1.bf16.msra.mxu0 0
      %840 = vmatprep.subr.bf16.mxu0 0
      %841 = vmatpush1.bf16.msra.mxu0 0
      %842 = vmatprep.mubr.bf16.mxu0 0
      %843 = vmatmul.mubr.bf16.gmra.mrb[0].mxu0 %v629
      %v844 = vpop.f32.mrb[0].mxu0
      %v845 = vadd.f32 %v757, %v844
      %v846 = vpop.f32.mrb[0].mxu0
      %v847 = vpop.f32.mrb[0].mxu0
      %v848 = vpop.f32.mrb[0].mxu0
      %849 = vdwg.mxu0
      %s850 = scalar_lea.vmem %s165, 8
      %v851 = vld [vmem:[%s850] sm:$0x3]
      %v852 = vld [vmem:[%s1 + $0x80] sm:$0xf]
      %v853 = vld [vmem:[%s1 + $0x84] sm:$0xf]
      %v854 = vld [vmem:[%s1 + $0x88] sm:$0xf]
      %v855 = vld [vmem:[%s1 + $0x8c] sm:$0xf]
      %v856 = vld [vmem:[%s1 + $0x90] sm:$0xf]
      %v857 = vld [vmem:[%s1 + $0x94] sm:$0xf]
      %v858 = vld [vmem:[%s1 + $0x98] sm:$0xf]
      %v859 = vld [vmem:[%s1 + $0x9c] sm:$0xf]
      %v860 = vld [vmem:[%s1 + $0xa0] sm:$0xf]
      %v861 = vld [vmem:[%s1 + $0xa4] sm:$0xf]
      %v862 = vld [vmem:[%s1 + $0xa8] sm:$0xf]
      %v863 = vld [vmem:[%s1 + $0xac] sm:$0xf]
      %v864 = vld [vmem:[%s1 + $0xb0] sm:$0xf]
      %v865 = vld [vmem:[%s1 + $0xb4] sm:$0xf]
      %v866 = vld [vmem:[%s1 + $0xb8] sm:$0xf]
      %v867 = vld [vmem:[%s1 + $0xbc] sm:$0xf]
      %v884 = vunpack.c.l.b16 %v852
      %v885 = vunpack.c.l.b16 %v853
      %v886 = vunpack.c.l.b16 %v854
      %v887 = vunpack.c.l.b16 %v855
      %v888 = vunpack.c.l.b16 %v856
      %v889 = vunpack.c.l.b16 %v857
      %v890 = vunpack.c.l.b16 %v858
      %v891 = vunpack.c.l.b16 %v859
      %v892 = vunpack.c.l.b16 %v860
      %v893 = vunpack.c.l.b16 %v861
      %v894 = vunpack.c.l.b16 %v862
      %v895 = vunpack.c.l.b16 %v863
      %v896 = vunpack.c.l.b16 %v864
      %v897 = vunpack.c.l.b16 %v865
      %v898 = vunpack.c.l.b16 %v866
      %v899 = vunpack.c.l.b16 %v867
      %v900 = vpack.c.b16 %v885, %v884
      %v901 = vpack.c.b16 %v887, %v886
      %v902 = vpack.c.b16 %v889, %v888
      %v903 = vpack.c.b16 %v891, %v890
      %v904 = vpack.c.b16 %v893, %v892
      %v905 = vpack.c.b16 %v895, %v894
      %v906 = vpack.c.b16 %v897, %v896
      %v907 = vpack.c.b16 %v899, %v898
      %916 = vmatprep.subr.bf16.mxu0 0
      %917 = vmatpush1.bf16.msra.mxu0 %v900
      %918 = vmatprep.subr.bf16.mxu0 0
      %919 = vmatpush1.bf16.msra.mxu0 %v901
      %920 = vmatprep.subr.bf16.mxu0 0
      %921 = vmatpush1.bf16.msra.mxu0 %v902
      %922 = vmatprep.subr.bf16.mxu0 0
      %923 = vmatpush1.bf16.msra.mxu0 %v903
      %924 = vmatprep.subr.bf16.mxu0 0
      %925 = vmatpush1.bf16.msra.mxu0 %v904
      %926 = vmatprep.subr.bf16.mxu0 0
      %927 = vmatpush1.bf16.msra.mxu0 %v905
      %928 = vmatprep.subr.bf16.mxu0 0
      %929 = vmatpush1.bf16.msra.mxu0 %v906
      %930 = vmatprep.subr.bf16.mxu0 0
      %931 = vmatpush1.bf16.msra.mxu0 %v907
      %932 = vmatprep.subr.bf16.mxu0 0
      %933 = vmatpush1.bf16.msra.mxu0 0
      %934 = vmatprep.subr.bf16.mxu0 0
      %935 = vmatpush1.bf16.msra.mxu0 0
      %936 = vmatprep.subr.bf16.mxu0 0
      %937 = vmatpush1.bf16.msra.mxu0 0
      %938 = vmatprep.subr.bf16.mxu0 0
      %939 = vmatpush1.bf16.msra.mxu0 0
      %940 = vmatprep.subr.bf16.mxu0 0
      %941 = vmatpush1.bf16.msra.mxu0 0
      %942 = vmatprep.subr.bf16.mxu0 0
      %943 = vmatpush1.bf16.msra.mxu0 0
      %944 = vmatprep.subr.bf16.mxu0 0
      %945 = vmatpush1.bf16.msra.mxu0 0
      %946 = vmatprep.subr.bf16.mxu0 0
      %947 = vmatpush1.bf16.msra.mxu0 0
      %948 = vmatprep.mubr.bf16.mxu0 0
      %949 = vmatmul.mubr.bf16.gmra.mrb[0].mxu0 %v851
      %v950 = vpop.f32.mrb[0].mxu0
      %v951 = vadd.f32 0.0, %v950
      %v952 = vpop.f32.mrb[0].mxu0
      %v953 = vpop.f32.mrb[0].mxu0
      %v954 = vpop.f32.mrb[0].mxu0
      %955 = vdwg.mxu0
      %v956 = vadd.f32 %v845, %v951
      %v957 = vld [vmem:[%s850] sm:$0x7]
      %v958 = vld [vmem:[%s1 + $0xc0] sm:$0xf]
      %v959 = vld [vmem:[%s1 + $0xc4] sm:$0xf]
      %v960 = vld [vmem:[%s1 + $0xc8] sm:$0xf]
      %v961 = vld [vmem:[%s1 + $0xcc] sm:$0xf]
      %v962 = vld [vmem:[%s1 + $0xd0] sm:$0xf]
      %v963 = vld [vmem:[%s1 + $0xd4] sm:$0xf]
      %v964 = vld [vmem:[%s1 + $0xd8] sm:$0xf]
      %v965 = vld [vmem:[%s1 + $0xdc] sm:$0xf]
      %v966 = vld [vmem:[%s1 + $0xe0] sm:$0xf]
      %v967 = vld [vmem:[%s1 + $0xe4] sm:$0xf]
      %v968 = vld [vmem:[%s1 + $0xe8] sm:$0xf]
      %v969 = vld [vmem:[%s1 + $0xec] sm:$0xf]
      %v970 = vld [vmem:[%s1 + $0xf0] sm:$0xf]
      %v971 = vld [vmem:[%s1 + $0xf4] sm:$0xf]
      %v972 = vld [vmem:[%s1 + $0xf8] sm:$0xf]
      %v973 = vld [vmem:[%s1 + $0xfc] sm:$0xf]
      %v975 = vunpack.c.l.b16 %v957
      %v976 = vpack.c.b16 %v975, %v975
      %v978 = vshrl.u32 %v976, 16
      %v980 = vshll.u32 %v976, 16
      %v982 = vrot.slane %v980, 1
      %v983 = vor.u32 %v978, %v982
      %v1001 = vunpack.c.l.b16 %v958
      %v1002 = vunpack.c.l.b16 %v959
      %v1003 = vunpack.c.l.b16 %v960
      %v1004 = vunpack.c.l.b16 %v961
      %v1005 = vunpack.c.l.b16 %v962
      %v1006 = vunpack.c.l.b16 %v963
      %v1007 = vunpack.c.l.b16 %v964
      %v1008 = vunpack.c.l.b16 %v965
      %v1009 = vunpack.c.l.b16 %v966
      %v1010 = vunpack.c.l.b16 %v967
      %v1011 = vunpack.c.l.b16 %v968
      %v1012 = vunpack.c.l.b16 %v969
      %v1013 = vunpack.c.l.b16 %v970
      %v1014 = vunpack.c.l.b16 %v971
      %v1015 = vunpack.c.l.b16 %v972
      %v1016 = vunpack.c.l.b16 %v973
      %v1017 = vpack.c.b16 %v1002, %v1001
      %v1018 = vpack.c.b16 %v1004, %v1003
      %v1019 = vpack.c.b16 %v1006, %v1005
      %v1020 = vpack.c.b16 %v1008, %v1007
      %v1021 = vpack.c.b16 %v1010, %v1009
      %v1022 = vpack.c.b16 %v1012, %v1011
      %v1023 = vpack.c.b16 %v1014, %v1013
      %v1024 = vpack.c.b16 %v1016, %v1015
      %1033 = vmatprep.subr.bf16.mxu0 0
      %1034 = vmatpush1.bf16.msra.mxu0 %v1017
      %1035 = vmatprep.subr.bf16.mxu0 0
      %1036 = vmatpush1.bf16.msra.mxu0 %v1018
      %1037 = vmatprep.subr.bf16.mxu0 0
      %1038 = vmatpush1.bf16.msra.mxu0 %v1019
      %1039 = vmatprep.subr.bf16.mxu0 0
      %1040 = vmatpush1.bf16.msra.mxu0 %v1020
      %1041 = vmatprep.subr.bf16.mxu0 0
      %1042 = vmatpush1.bf16.msra.mxu0 %v1021
      %1043 = vmatprep.subr.bf16.mxu0 0
      %1044 = vmatpush1.bf16.msra.mxu0 %v1022
      %1045 = vmatprep.subr.bf16.mxu0 0
      %1046 = vmatpush1.bf16.msra.mxu0 %v1023
      %1047 = vmatprep.subr.bf16.mxu0 0
      %1048 = vmatpush1.bf16.msra.mxu0 %v1024
      %1049 = vmatprep.subr.bf16.mxu0 0
      %1050 = vmatpush1.bf16.msra.mxu0 0
      %1051 = vmatprep.subr.bf16.mxu0 0
      %1052 = vmatpush1.bf16.msra.mxu0 0
      %1053 = vmatprep.subr.bf16.mxu0 0
      %1054 = vmatpush1.bf16.msra.mxu0 0
      %1055 = vmatprep.subr.bf16.mxu0 0
      %1056 = vmatpush1.bf16.msra.mxu0 0
      %1057 = vmatprep.subr.bf16.mxu0 0
      %1058 = vmatpush1.bf16.msra.mxu0 0
      %1059 = vmatprep.subr.bf16.mxu0 0
      %1060 = vmatpush1.bf16.msra.mxu0 0
      %1061 = vmatprep.subr.bf16.mxu0 0
      %1062 = vmatpush1.bf16.msra.mxu0 0
      %1063 = vmatprep.subr.bf16.mxu0 0
      %1064 = vmatpush1.bf16.msra.mxu0 0
      %1065 = vmatprep.mubr.bf16.mxu0 0
      %1066 = vmatmul.mubr.bf16.gmra.mrb[0].mxu0 %v983
      %v1067 = vpop.f32.mrb[0].mxu0
      %v1068 = vadd.f32 0.0, %v1067
      %v1069 = vpop.f32.mrb[0].mxu0
      %v1070 = vpop.f32.mrb[0].mxu0
      %v1071 = vpop.f32.mrb[0].mxu0
      %1072 = vdwg.mxu0
      %v1073 = vadd.f32 %v956, %v1068
      %v1074 = vadd.f32 %v1073, %v622
      %v1075 = vmax.f32 %v1074, 0.0
      %v1076 = vpack.c.bf16 %v1075, %v1075
      %s1077 = scalar_lea.vmem %s170, 2
      %1078 = vst.msk [vmem:[%s1077] sm:$0x3] %vm627, %v1076
      %v1079 = vld [vmem:[%s850] sm:$0x3]
      %v1080 = vld [vmem:[%s1] sm:$0xf]
      %v1081 = vld [vmem:[%s1 + $0x4] sm:$0xf]
      %v1082 = vld [vmem:[%s1 + $0x8] sm:$0xf]
      %v1083 = vld [vmem:[%s1 + $0xc] sm:$0xf]
      %v1084 = vld [vmem:[%s1 + $0x10] sm:$0xf]
      %v1085 = vld [vmem:[%s1 + $0x14] sm:$0xf]
      %v1086 = vld [vmem:[%s1 + $0x18] sm:$0xf]
      %v1087 = vld [vmem:[%s1 + $0x1c] sm:$0xf]
      %v1088 = vld [vmem:[%s1 + $0x20] sm:$0xf]
      %v1089 = vld [vmem:[%s1 + $0x24] sm:$0xf]
      %v1090 = vld [vmem:[%s1 + $0x28] sm:$0xf]
      %v1091 = vld [vmem:[%s1 + $0x2c] sm:$0xf]
      %v1092 = vld [vmem:[%s1 + $0x30] sm:$0xf]
      %v1093 = vld [vmem:[%s1 + $0x34] sm:$0xf]
      %v1094 = vld [vmem:[%s1 + $0x38] sm:$0xf]
      %v1095 = vld [vmem:[%s1 + $0x3c] sm:$0xf]
      %v1096 = vld [vmem:[%s850] sm:$0x7]
      %v1097 = vld [vmem:[%s1 + $0x40] sm:$0xf]
      %v1098 = vld [vmem:[%s1 + $0x44] sm:$0xf]
      %v1099 = vld [vmem:[%s1 + $0x48] sm:$0xf]
      %v1100 = vld [vmem:[%s1 + $0x4c] sm:$0xf]
      %v1101 = vld [vmem:[%s1 + $0x50] sm:$0xf]
      %v1102 = vld [vmem:[%s1 + $0x54] sm:$0xf]
      %v1103 = vld [vmem:[%s1 + $0x58] sm:$0xf]
      %v1104 = vld [vmem:[%s1 + $0x5c] sm:$0xf]
      %v1105 = vld [vmem:[%s1 + $0x60] sm:$0xf]
      %v1106 = vld [vmem:[%s1 + $0x64] sm:$0xf]
      %v1107 = vld [vmem:[%s1 + $0x68] sm:$0xf]
      %v1108 = vld [vmem:[%s1 + $0x6c] sm:$0xf]
      %v1109 = vld [vmem:[%s1 + $0x70] sm:$0xf]
      %v1110 = vld [vmem:[%s1 + $0x74] sm:$0xf]
      %v1111 = vld [vmem:[%s1 + $0x78] sm:$0xf]
      %v1112 = vld [vmem:[%s1 + $0x7c] sm:$0xf]
      %v1114 = vunpack.c.l.b16 %v1096
      %v1115 = vpack.c.b16 %v1114, %v1114
      %v1117 = vshrl.u32 %v1115, 16
      %v1119 = vshll.u32 %v1115, 16
      %v1121 = vrot.slane %v1119, 1
      %v1122 = vor.u32 %v1117, %v1121
      %v1140 = vunpack.c.l.b16 %v1097
      %v1141 = vunpack.c.l.b16 %v1098
      %v1142 = vunpack.c.l.b16 %v1099
      %v1143 = vunpack.c.l.b16 %v1100
      %v1144 = vunpack.c.l.b16 %v1101
      %v1145 = vunpack.c.l.b16 %v1102
      %v1146 = vunpack.c.l.b16 %v1103
      %v1147 = vunpack.c.l.b16 %v1104
      %v1148 = vunpack.c.l.b16 %v1105
      %v1149 = vunpack.c.l.b16 %v1106
      %v1150 = vunpack.c.l.b16 %v1107
      %v1151 = vunpack.c.l.b16 %v1108
      %v1152 = vunpack.c.l.b16 %v1109
      %v1153 = vunpack.c.l.b16 %v1110
      %v1154 = vunpack.c.l.b16 %v1111
      %v1155 = vunpack.c.l.b16 %v1112
      %v1156 = vpack.c.b16 %v1141, %v1140
      %v1157 = vpack.c.b16 %v1143, %v1142
      %v1158 = vpack.c.b16 %v1145, %v1144
      %v1159 = vpack.c.b16 %v1147, %v1146
      %v1160 = vpack.c.b16 %v1149, %v1148
      %v1161 = vpack.c.b16 %v1151, %v1150
      %v1162 = vpack.c.b16 %v1153, %v1152
      %v1163 = vpack.c.b16 %v1155, %v1154
      %1172 = vmatprep.subr.bf16.mxu0 0
      %1173 = vmatpush1.bf16.msra.mxu0 %v1156
      %1174 = vmatprep.subr.bf16.mxu0 0
      %1175 = vmatpush1.bf16.msra.mxu0 %v1157
      %1176 = vmatprep.subr.bf16.mxu0 0
      %1177 = vmatpush1.bf16.msra.mxu0 %v1158
      %1178 = vmatprep.subr.bf16.mxu0 0
      %1179 = vmatpush1.bf16.msra.mxu0 %v1159
      %1180 = vmatprep.subr.bf16.mxu0 0
      %1181 = vmatpush1.bf16.msra.mxu0 %v1160
      %1182 = vmatprep.subr.bf16.mxu0 0
      %1183 = vmatpush1.bf16.msra.mxu0 %v1161
      %1184 = vmatprep.subr.bf16.mxu0 0
      %1185 = vmatpush1.bf16.msra.mxu0 %v1162
      %1186 = vmatprep.subr.bf16.mxu0 0
      %1187 = vmatpush1.bf16.msra.mxu0 %v1163
      %1188 = vmatprep.subr.bf16.mxu0 0
      %1189 = vmatpush1.bf16.msra.mxu0 0
      %1190 = vmatprep.subr.bf16.mxu0 0
      %1191 = vmatpush1.bf16.msra.mxu0 0
      %1192 = vmatprep.subr.bf16.mxu0 0
      %1193 = vmatpush1.bf16.msra.mxu0 0
      %1194 = vmatprep.subr.bf16.mxu0 0
      %1195 = vmatpush1.bf16.msra.mxu0 0
      %1196 = vmatprep.subr.bf16.mxu0 0
      %1197 = vmatpush1.bf16.msra.mxu0 0
      %1198 = vmatprep.subr.bf16.mxu0 0
      %1199 = vmatpush1.bf16.msra.mxu0 0
      %1200 = vmatprep.subr.bf16.mxu0 0
      %1201 = vmatpush1.bf16.msra.mxu0 0
      %1202 = vmatprep.subr.bf16.mxu0 0
      %1203 = vmatpush1.bf16.msra.mxu0 0
      %1204 = vmatprep.mubr.bf16.mxu0 0
      %1205 = vmatmul.mubr.bf16.gmra.mrb[0].mxu0 %v1122
      %v1206 = vpop.f32.mrb[0].mxu0
      %v1207 = vadd.f32 0.0, %v1206
      %v1208 = vpop.f32.mrb[0].mxu0
      %v1209 = vpop.f32.mrb[0].mxu0
      %v1210 = vpop.f32.mrb[0].mxu0
      %1211 = vdwg.mxu0
      %v1228 = vunpack.c.l.b16 %v1080
      %v1229 = vunpack.c.l.b16 %v1081
      %v1230 = vunpack.c.l.b16 %v1082
      %v1231 = vunpack.c.l.b16 %v1083
      %v1232 = vunpack.c.l.b16 %v1084
      %v1233 = vunpack.c.l.b16 %v1085
      %v1234 = vunpack.c.l.b16 %v1086
      %v1235 = vunpack.c.l.b16 %v1087
      %v1236 = vunpack.c.l.b16 %v1088
      %v1237 = vunpack.c.l.b16 %v1089
      %v1238 = vunpack.c.l.b16 %v1090
      %v1239 = vunpack.c.l.b16 %v1091
      %v1240 = vunpack.c.l.b16 %v1092
      %v1241 = vunpack.c.l.b16 %v1093
      %v1242 = vunpack.c.l.b16 %v1094
      %v1243 = vunpack.c.l.b16 %v1095
      %v1244 = vpack.c.b16 %v1229, %v1228
      %v1245 = vpack.c.b16 %v1231, %v1230
      %v1246 = vpack.c.b16 %v1233, %v1232
      %v1247 = vpack.c.b16 %v1235, %v1234
      %v1248 = vpack.c.b16 %v1237, %v1236
      %v1249 = vpack.c.b16 %v1239, %v1238
      %v1250 = vpack.c.b16 %v1241, %v1240
      %v1251 = vpack.c.b16 %v1243, %v1242
      %1260 = vmatprep.subr.bf16.mxu0 0
      %1261 = vmatpush1.bf16.msra.mxu0 %v1244
      %1262 = vmatprep.subr.bf16.mxu0 0
      %1263 = vmatpush1.bf16.msra.mxu0 %v1245
      %1264 = vmatprep.subr.bf16.mxu0 0
      %1265 = vmatpush1.bf16.msra.mxu0 %v1246
      %1266 = vmatprep.subr.bf16.mxu0 0
      %1267 = vmatpush1.bf16.msra.mxu0 %v1247
      %1268 = vmatprep.subr.bf16.mxu0 0
      %1269 = vmatpush1.bf16.msra.mxu0 %v1248
      %1270 = vmatprep.subr.bf16.mxu0 0
      %1271 = vmatpush1.bf16.msra.mxu0 %v1249
      %1272 = vmatprep.subr.bf16.mxu0 0
      %1273 = vmatpush1.bf16.msra.mxu0 %v1250
      %1274 = vmatprep.subr.bf16.mxu0 0
      %1275 = vmatpush1.bf16.msra.mxu0 %v1251
      %1276 = vmatprep.subr.bf16.mxu0 0
      %1277 = vmatpush1.bf16.msra.mxu0 0
      %1278 = vmatprep.subr.bf16.mxu0 0
      %1279 = vmatpush1.bf16.msra.mxu0 0
      %1280 = vmatprep.subr.bf16.mxu0 0
      %1281 = vmatpush1.bf16.msra.mxu0 0
      %1282 = vmatprep.subr.bf16.mxu0 0
      %1283 = vmatpush1.bf16.msra.mxu0 0
      %1284 = vmatprep.subr.bf16.mxu0 0
      %1285 = vmatpush1.bf16.msra.mxu0 0
      %1286 = vmatprep.subr.bf16.mxu0 0
      %1287 = vmatpush1.bf16.msra.mxu0 0
      %1288 = vmatprep.subr.bf16.mxu0 0
      %1289 = vmatpush1.bf16.msra.mxu0 0
      %1290 = vmatprep.subr.bf16.mxu0 0
      %1291 = vmatpush1.bf16.msra.mxu0 0
      %1292 = vmatprep.mubr.bf16.mxu0 0
      %1293 = vmatmul.mubr.bf16.gmra.mrb[0].mxu0 %v1079
      %v1294 = vpop.f32.mrb[0].mxu0
      %v1295 = vadd.f32 %v1207, %v1294
      %v1296 = vpop.f32.mrb[0].mxu0
      %v1297 = vpop.f32.mrb[0].mxu0
      %v1298 = vpop.f32.mrb[0].mxu0
      %1299 = vdwg.mxu0
      %s1300 = scalar_lea.vmem %s165, 12
      %v1301 = vld [vmem:[%s1300] sm:$0x3]
      %v1302 = vld [vmem:[%s1 + $0x80] sm:$0xf]
      %v1303 = vld [vmem:[%s1 + $0x84] sm:$0xf]
      %v1304 = vld [vmem:[%s1 + $0x88] sm:$0xf]
      %v1305 = vld [vmem:[%s1 + $0x8c] sm:$0xf]
      %v1306 = vld [vmem:[%s1 + $0x90] sm:$0xf]
      %v1307 = vld [vmem:[%s1 + $0x94] sm:$0xf]
      %v1308 = vld [vmem:[%s1 + $0x98] sm:$0xf]
      %v1309 = vld [vmem:[%s1 + $0x9c] sm:$0xf]
      %v1310 = vld [vmem:[%s1 + $0xa0] sm:$0xf]
      %v1311 = vld [vmem:[%s1 + $0xa4] sm:$0xf]
      %v1312 = vld [vmem:[%s1 + $0xa8] sm:$0xf]
      %v1313 = vld [vmem:[%s1 + $0xac] sm:$0xf]
      %v1314 = vld [vmem:[%s1 + $0xb0] sm:$0xf]
      %v1315 = vld [vmem:[%s1 + $0xb4] sm:$0xf]
      %v1316 = vld [vmem:[%s1 + $0xb8] sm:$0xf]
      %v1317 = vld [vmem:[%s1 + $0xbc] sm:$0xf]
      %v1334 = vunpack.c.l.b16 %v1302
      %v1335 = vunpack.c.l.b16 %v1303
      %v1336 = vunpack.c.l.b16 %v1304
      %v1337 = vunpack.c.l.b16 %v1305
      %v1338 = vunpack.c.l.b16 %v1306
      %v1339 = vunpack.c.l.b16 %v1307
      %v1340 = vunpack.c.l.b16 %v1308
      %v1341 = vunpack.c.l.b16 %v1309
      %v1342 = vunpack.c.l.b16 %v1310
      %v1343 = vunpack.c.l.b16 %v1311
      %v1344 = vunpack.c.l.b16 %v1312
      %v1345 = vunpack.c.l.b16 %v1313
      %v1346 = vunpack.c.l.b16 %v1314
      %v1347 = vunpack.c.l.b16 %v1315
      %v1348 = vunpack.c.l.b16 %v1316
      %v1349 = vunpack.c.l.b16 %v1317
      %v1350 = vpack.c.b16 %v1335, %v1334
      %v1351 = vpack.c.b16 %v1337, %v1336
      %v1352 = vpack.c.b16 %v1339, %v1338
      %v1353 = vpack.c.b16 %v1341, %v1340
      %v1354 = vpack.c.b16 %v1343, %v1342
      %v1355 = vpack.c.b16 %v1345, %v1344
      %v1356 = vpack.c.b16 %v1347, %v1346
      %v1357 = vpack.c.b16 %v1349, %v1348
      %1366 = vmatprep.subr.bf16.mxu0 0
      %1367 = vmatpush1.bf16.msra.mxu0 %v1350
      %1368 = vmatprep.subr.bf16.mxu0 0
      %1369 = vmatpush1.bf16.msra.mxu0 %v1351
      %1370 = vmatprep.subr.bf16.mxu0 0
      %1371 = vmatpush1.bf16.msra.mxu0 %v1352
      %1372 = vmatprep.subr.bf16.mxu0 0
      %1373 = vmatpush1.bf16.msra.mxu0 %v1353
      %1374 = vmatprep.subr.bf16.mxu0 0
      %1375 = vmatpush1.bf16.msra.mxu0 %v1354
      %1376 = vmatprep.subr.bf16.mxu0 0
      %1377 = vmatpush1.bf16.msra.mxu0 %v1355
      %1378 = vmatprep.subr.bf16.mxu0 0
      %1379 = vmatpush1.bf16.msra.mxu0 %v1356
      %1380 = vmatprep.subr.bf16.mxu0 0
      %1381 = vmatpush1.bf16.msra.mxu0 %v1357
      %1382 = vmatprep.subr.bf16.mxu0 0
      %1383 = vmatpush1.bf16.msra.mxu0 0
      %1384 = vmatprep.subr.bf16.mxu0 0
      %1385 = vmatpush1.bf16.msra.mxu0 0
      %1386 = vmatprep.subr.bf16.mxu0 0
      %1387 = vmatpush1.bf16.msra.mxu0 0
      %1388 = vmatprep.subr.bf16.mxu0 0
      %1389 = vmatpush1.bf16.msra.mxu0 0
      %1390 = vmatprep.subr.bf16.mxu0 0
      %1391 = vmatpush1.bf16.msra.mxu0 0
      %1392 = vmatprep.subr.bf16.mxu0 0
      %1393 = vmatpush1.bf16.msra.mxu0 0
      %1394 = vmatprep.subr.bf16.mxu0 0
      %1395 = vmatpush1.bf16.msra.mxu0 0
      %1396 = vmatprep.subr.bf16.mxu0 0
      %1397 = vmatpush1.bf16.msra.mxu0 0
      %1398 = vmatprep.mubr.bf16.mxu0 0
      %1399 = vmatmul.mubr.bf16.gmra.mrb[0].mxu0 %v1301
      %v1400 = vpop.f32.mrb[0].mxu0
      %v1401 = vadd.f32 0.0, %v1400
      %v1402 = vpop.f32.mrb[0].mxu0
      %v1403 = vpop.f32.mrb[0].mxu0
      %v1404 = vpop.f32.mrb[0].mxu0
      %1405 = vdwg.mxu0
      %v1406 = vadd.f32 %v1295, %v1401
      %v1407 = vld [vmem:[%s1300] sm:$0x7]
      %v1408 = vld [vmem:[%s1 + $0xc0] sm:$0xf]
      %v1409 = vld [vmem:[%s1 + $0xc4] sm:$0xf]
      %v1410 = vld [vmem:[%s1 + $0xc8] sm:$0xf]
      %v1411 = vld [vmem:[%s1 + $0xcc] sm:$0xf]
      %v1412 = vld [vmem:[%s1 + $0xd0] sm:$0xf]
      %v1413 = vld [vmem:[%s1 + $0xd4] sm:$0xf]
      %v1414 = vld [vmem:[%s1 + $0xd8] sm:$0xf]
      %v1415 = vld [vmem:[%s1 + $0xdc] sm:$0xf]
      %v1416 = vld [vmem:[%s1 + $0xe0] sm:$0xf]
      %v1417 = vld [vmem:[%s1 + $0xe4] sm:$0xf]
      %v1418 = vld [vmem:[%s1 + $0xe8] sm:$0xf]
      %v1419 = vld [vmem:[%s1 + $0xec] sm:$0xf]
      %v1420 = vld [vmem:[%s1 + $0xf0] sm:$0xf]
      %v1421 = vld [vmem:[%s1 + $0xf4] sm:$0xf]
      %v1422 = vld [vmem:[%s1 + $0xf8] sm:$0xf]
      %v1423 = vld [vmem:[%s1 + $0xfc] sm:$0xf]
      %v1425 = vunpack.c.l.b16 %v1407
      %v1426 = vpack.c.b16 %v1425, %v1425
      %v1428 = vshrl.u32 %v1426, 16
      %v1430 = vshll.u32 %v1426, 16
      %v1432 = vrot.slane %v1430, 1
      %v1433 = vor.u32 %v1428, %v1432
      %v1451 = vunpack.c.l.b16 %v1408
      %v1452 = vunpack.c.l.b16 %v1409
      %v1453 = vunpack.c.l.b16 %v1410
      %v1454 = vunpack.c.l.b16 %v1411
      %v1455 = vunpack.c.l.b16 %v1412
      %v1456 = vunpack.c.l.b16 %v1413
      %v1457 = vunpack.c.l.b16 %v1414
      %v1458 = vunpack.c.l.b16 %v1415
      %v1459 = vunpack.c.l.b16 %v1416
      %v1460 = vunpack.c.l.b16 %v1417
      %v1461 = vunpack.c.l.b16 %v1418
      %v1462 = vunpack.c.l.b16 %v1419
      %v1463 = vunpack.c.l.b16 %v1420
      %v1464 = vunpack.c.l.b16 %v1421
      %v1465 = vunpack.c.l.b16 %v1422
      %v1466 = vunpack.c.l.b16 %v1423
      %v1467 = vpack.c.b16 %v1452, %v1451
      %v1468 = vpack.c.b16 %v1454, %v1453
      %v1469 = vpack.c.b16 %v1456, %v1455
      %v1470 = vpack.c.b16 %v1458, %v1457
      %v1471 = vpack.c.b16 %v1460, %v1459
      %v1472 = vpack.c.b16 %v1462, %v1461
      %v1473 = vpack.c.b16 %v1464, %v1463
      %v1474 = vpack.c.b16 %v1466, %v1465
      %1483 = vmatprep.subr.bf16.mxu0 0
      %1484 = vmatpush1.bf16.msra.mxu0 %v1467
      %1485 = vmatprep.subr.bf16.mxu0 0
      %1486 = vmatpush1.bf16.msra.mxu0 %v1468
      %1487 = vmatprep.subr.bf16.mxu0 0
      %1488 = vmatpush1.bf16.msra.mxu0 %v1469
      %1489 = vmatprep.subr.bf16.mxu0 0
      %1490 = vmatpush1.bf16.msra.mxu0 %v1470
      %1491 = vmatprep.subr.bf16.mxu0 0
      %1492 = vmatpush1.bf16.msra.mxu0 %v1471
      %1493 = vmatprep.subr.bf16.mxu0 0
      %1494 = vmatpush1.bf16.msra.mxu0 %v1472
      %1495 = vmatprep.subr.bf16.mxu0 0
      %1496 = vmatpush1.bf16.msra.mxu0 %v1473
      %1497 = vmatprep.subr.bf16.mxu0 0
      %1498 = vmatpush1.bf16.msra.mxu0 %v1474
      %1499 = vmatprep.subr.bf16.mxu0 0
      %1500 = vmatpush1.bf16.msra.mxu0 0
      %1501 = vmatprep.subr.bf16.mxu0 0
      %1502 = vmatpush1.bf16.msra.mxu0 0
      %1503 = vmatprep.subr.bf16.mxu0 0
      %1504 = vmatpush1.bf16.msra.mxu0 0
      %1505 = vmatprep.subr.bf16.mxu0 0
      %1506 = vmatpush1.bf16.msra.mxu0 0
      %1507 = vmatprep.subr.bf16.mxu0 0
      %1508 = vmatpush1.bf16.msra.mxu0 0
      %1509 = vmatprep.subr.bf16.mxu0 0
      %1510 = vmatpush1.bf16.msra.mxu0 0
      %1511 = vmatprep.subr.bf16.mxu0 0
      %1512 = vmatpush1.bf16.msra.mxu0 0
      %1513 = vmatprep.subr.bf16.mxu0 0
      %1514 = vmatpush1.bf16.msra.mxu0 0
      %1515 = vmatprep.mubr.bf16.mxu0 0
      %1516 = vmatmul.mubr.bf16.gmra.mrb[0].mxu0 %v1433
      %v1517 = vpop.f32.mrb[0].mxu0
      %v1518 = vadd.f32 0.0, %v1517
      %v1519 = vpop.f32.mrb[0].mxu0
      %v1520 = vpop.f32.mrb[0].mxu0
      %v1521 = vpop.f32.mrb[0].mxu0
      %1522 = vdwg.mxu0
      %v1523 = vadd.f32 %v1406, %v1518
      %v1524 = vadd.f32 %v1523, %v622
      %v1525 = vmax.f32 %v1524, 0.0
      %v1526 = vpack.c.bf16 %v1525, %v1525
      %s1527 = scalar_lea.vmem %s170, 4
      %1528 = vst.msk [vmem:[%s1527] sm:$0x3] %vm627, %v1526
      %v1529 = vld [vmem:[%s1300] sm:$0x3]
      %v1530 = vld [vmem:[%s1] sm:$0xf]
      %v1531 = vld [vmem:[%s1 + $0x4] sm:$0xf]
      %v1532 = vld [vmem:[%s1 + $0x8] sm:$0xf]
      %v1533 = vld [vmem:[%s1 + $0xc] sm:$0xf]
      %v1534 = vld [vmem:[%s1 + $0x10] sm:$0xf]
      %v1535 = vld [vmem:[%s1 + $0x14] sm:$0xf]
      %v1536 = vld [vmem:[%s1 + $0x18] sm:$0xf]
      %v1537 = vld [vmem:[%s1 + $0x1c] sm:$0xf]
      %v1538 = vld [vmem:[%s1 + $0x20] sm:$0xf]
      %v1539 = vld [vmem:[%s1 + $0x24] sm:$0xf]
      %v1540 = vld [vmem:[%s1 + $0x28] sm:$0xf]
      %v1541 = vld [vmem:[%s1 + $0x2c] sm:$0xf]
      %v1542 = vld [vmem:[%s1 + $0x30] sm:$0xf]
      %v1543 = vld [vmem:[%s1 + $0x34] sm:$0xf]
      %v1544 = vld [vmem:[%s1 + $0x38] sm:$0xf]
      %v1545 = vld [vmem:[%s1 + $0x3c] sm:$0xf]
      %v1546 = vld [vmem:[%s1300] sm:$0x7]
      %v1547 = vld [vmem:[%s1 + $0x40] sm:$0xf]
      %v1548 = vld [vmem:[%s1 + $0x44] sm:$0xf]
      %v1549 = vld [vmem:[%s1 + $0x48] sm:$0xf]
      %v1550 = vld [vmem:[%s1 + $0x4c] sm:$0xf]
      %v1551 = vld [vmem:[%s1 + $0x50] sm:$0xf]
      %v1552 = vld [vmem:[%s1 + $0x54] sm:$0xf]
      %v1553 = vld [vmem:[%s1 + $0x58] sm:$0xf]
      %v1554 = vld [vmem:[%s1 + $0x5c] sm:$0xf]
      %v1555 = vld [vmem:[%s1 + $0x60] sm:$0xf]
      %v1556 = vld [vmem:[%s1 + $0x64] sm:$0xf]
      %v1557 = vld [vmem:[%s1 + $0x68] sm:$0xf]
      %v1558 = vld [vmem:[%s1 + $0x6c] sm:$0xf]
      %v1559 = vld [vmem:[%s1 + $0x70] sm:$0xf]
      %v1560 = vld [vmem:[%s1 + $0x74] sm:$0xf]
      %v1561 = vld [vmem:[%s1 + $0x78] sm:$0xf]
      %v1562 = vld [vmem:[%s1 + $0x7c] sm:$0xf]
      %v1564 = vunpack.c.l.b16 %v1546
      %v1565 = vpack.c.b16 %v1564, %v1564
      %v1567 = vshrl.u32 %v1565, 16
      %v1569 = vshll.u32 %v1565, 16
      %v1571 = vrot.slane %v1569, 1
      %v1572 = vor.u32 %v1567, %v1571
      %v1590 = vunpack.c.l.b16 %v1547
      %v1591 = vunpack.c.l.b16 %v1548
      %v1592 = vunpack.c.l.b16 %v1549
      %v1593 = vunpack.c.l.b16 %v1550
      %v1594 = vunpack.c.l.b16 %v1551
      %v1595 = vunpack.c.l.b16 %v1552
      %v1596 = vunpack.c.l.b16 %v1553
      %v1597 = vunpack.c.l.b16 %v1554
      %v1598 = vunpack.c.l.b16 %v1555
      %v1599 = vunpack.c.l.b16 %v1556
      %v1600 = vunpack.c.l.b16 %v1557
      %v1601 = vunpack.c.l.b16 %v1558
      %v1602 = vunpack.c.l.b16 %v1559
      %v1603 = vunpack.c.l.b16 %v1560
      %v1604 = vunpack.c.l.b16 %v1561
      %v1605 = vunpack.c.l.b16 %v1562
      %v1606 = vpack.c.b16 %v1591, %v1590
      %v1607 = vpack.c.b16 %v1593, %v1592
      %v1608 = vpack.c.b16 %v1595, %v1594
      %v1609 = vpack.c.b16 %v1597, %v1596
      %v1610 = vpack.c.b16 %v1599, %v1598
      %v1611 = vpack.c.b16 %v1601, %v1600
      %v1612 = vpack.c.b16 %v1603, %v1602
      %v1613 = vpack.c.b16 %v1605, %v1604
      %1622 = vmatprep.subr.bf16.mxu0 0
      %1623 = vmatpush1.bf16.msra.mxu0 %v1606
      %1624 = vmatprep.subr.bf16.mxu0 0
      %1625 = vmatpush1.bf16.msra.mxu0 %v1607
      %1626 = vmatprep.subr.bf16.mxu0 0
      %1627 = vmatpush1.bf16.msra.mxu0 %v1608
      %1628 = vmatprep.subr.bf16.mxu0 0
      %1629 = vmatpush1.bf16.msra.mxu0 %v1609
      %1630 = vmatprep.subr.bf16.mxu0 0
      %1631 = vmatpush1.bf16.msra.mxu0 %v1610
      %1632 = vmatprep.subr.bf16.mxu0 0
      %1633 = vmatpush1.bf16.msra.mxu0 %v1611
      %1634 = vmatprep.subr.bf16.mxu0 0
      %1635 = vmatpush1.bf16.msra.mxu0 %v1612
      %1636 = vmatprep.subr.bf16.mxu0 0
      %1637 = vmatpush1.bf16.msra.mxu0 %v1613
      %1638 = vmatprep.subr.bf16.mxu0 0
      %1639 = vmatpush1.bf16.msra.mxu0 0
      %1640 = vmatprep.subr.bf16.mxu0 0
      %1641 = vmatpush1.bf16.msra.mxu0 0
      %1642 = vmatprep.subr.bf16.mxu0 0
      %1643 = vmatpush1.bf16.msra.mxu0 0
      %1644 = vmatprep.subr.bf16.mxu0 0
      %1645 = vmatpush1.bf16.msra.mxu0 0
      %1646 = vmatprep.subr.bf16.mxu0 0
      %1647 = vmatpush1.bf16.msra.mxu0 0
      %1648 = vmatprep.subr.bf16.mxu0 0
      %1649 = vmatpush1.bf16.msra.mxu0 0
      %1650 = vmatprep.subr.bf16.mxu0 0
      %1651 = vmatpush1.bf16.msra.mxu0 0
      %1652 = vmatprep.subr.bf16.mxu0 0
      %1653 = vmatpush1.bf16.msra.mxu0 0
      %1654 = vmatprep.mubr.bf16.mxu0 0
      %1655 = vmatmul.mubr.bf16.gmra.mrb[0].mxu0 %v1572
      %v1656 = vpop.f32.mrb[0].mxu0
      %v1657 = vadd.f32 0.0, %v1656
      %v1658 = vpop.f32.mrb[0].mxu0
      %v1659 = vpop.f32.mrb[0].mxu0
      %v1660 = vpop.f32.mrb[0].mxu0
      %1661 = vdwg.mxu0
      %v1678 = vunpack.c.l.b16 %v1530
      %v1679 = vunpack.c.l.b16 %v1531
      %v1680 = vunpack.c.l.b16 %v1532
      %v1681 = vunpack.c.l.b16 %v1533
      %v1682 = vunpack.c.l.b16 %v1534
      %v1683 = vunpack.c.l.b16 %v1535
      %v1684 = vunpack.c.l.b16 %v1536
      %v1685 = vunpack.c.l.b16 %v1537
      %v1686 = vunpack.c.l.b16 %v1538
      %v1687 = vunpack.c.l.b16 %v1539
      %v1688 = vunpack.c.l.b16 %v1540
      %v1689 = vunpack.c.l.b16 %v1541
      %v1690 = vunpack.c.l.b16 %v1542
      %v1691 = vunpack.c.l.b16 %v1543
      %v1692 = vunpack.c.l.b16 %v1544
      %v1693 = vunpack.c.l.b16 %v1545
      %v1694 = vpack.c.b16 %v1679, %v1678
      %v1695 = vpack.c.b16 %v1681, %v1680
      %v1696 = vpack.c.b16 %v1683, %v1682
      %v1697 = vpack.c.b16 %v1685, %v1684
      %v1698 = vpack.c.b16 %v1687, %v1686
      %v1699 = vpack.c.b16 %v1689, %v1688
      %v1700 = vpack.c.b16 %v1691, %v1690
      %v1701 = vpack.c.b16 %v1693, %v1692
      %1710 = vmatprep.subr.bf16.mxu0 0
      %1711 = vmatpush1.bf16.msra.mxu0 %v1694
      %1712 = vmatprep.subr.bf16.mxu0 0
      %1713 = vmatpush1.bf16.msra.mxu0 %v1695
      %1714 = vmatprep.subr.bf16.mxu0 0
      %1715 = vmatpush1.bf16.msra.mxu0 %v1696
      %1716 = vmatprep.subr.bf16.mxu0 0
      %1717 = vmatpush1.bf16.msra.mxu0 %v1697
      %1718 = vmatprep.subr.bf16.mxu0 0
      %1719 = vmatpush1.bf16.msra.mxu0 %v1698
      %1720 = vmatprep.subr.bf16.mxu0 0
      %1721 = vmatpush1.bf16.msra.mxu0 %v1699
      %1722 = vmatprep.subr.bf16.mxu0 0
      %1723 = vmatpush1.bf16.msra.mxu0 %v1700
      %1724 = vmatprep.subr.bf16.mxu0 0
      %1725 = vmatpush1.bf16.msra.mxu0 %v1701
      %1726 = vmatprep.subr.bf16.mxu0 0
      %1727 = vmatpush1.bf16.msra.mxu0 0
      %1728 = vmatprep.subr.bf16.mxu0 0
      %1729 = vmatpush1.bf16.msra.mxu0 0
      %1730 = vmatprep.subr.bf16.mxu0 0
      %1731 = vmatpush1.bf16.msra.mxu0 0
      %1732 = vmatprep.subr.bf16.mxu0 0
      %1733 = vmatpush1.bf16.msra.mxu0 0
      %1734 = vmatprep.subr.bf16.mxu0 0
      %1735 = vmatpush1.bf16.msra.mxu0 0
      %1736 = vmatprep.subr.bf16.mxu0 0
      %1737 = vmatpush1.bf16.msra.mxu0 0
      %1738 = vmatprep.subr.bf16.mxu0 0
      %1739 = vmatpush1.bf16.msra.mxu0 0
      %1740 = vmatprep.subr.bf16.mxu0 0
      %1741 = vmatpush1.bf16.msra.mxu0 0
      %1742 = vmatprep.mubr.bf16.mxu0 0
      %1743 = vmatmul.mubr.bf16.gmra.mrb[0].mxu0 %v1529
      %v1744 = vpop.f32.mrb[0].mxu0
      %v1745 = vadd.f32 %v1657, %v1744
      %v1746 = vpop.f32.mrb[0].mxu0
      %v1747 = vpop.f32.mrb[0].mxu0
      %v1748 = vpop.f32.mrb[0].mxu0
      %1749 = vdwg.mxu0
      %s1750 = scalar_lea.vmem %s165, 16
      %v1751 = vld [vmem:[%s1750] sm:$0x3]
      %v1752 = vld [vmem:[%s1 + $0x80] sm:$0xf]
      %v1753 = vld [vmem:[%s1 + $0x84] sm:$0xf]
      %v1754 = vld [vmem:[%s1 + $0x88] sm:$0xf]
      %v1755 = vld [vmem:[%s1 + $0x8c] sm:$0xf]
      %v1756 = vld [vmem:[%s1 + $0x90] sm:$0xf]
      %v1757 = vld [vmem:[%s1 + $0x94] sm:$0xf]
      %v1758 = vld [vmem:[%s1 + $0x98] sm:$0xf]
      %v1759 = vld [vmem:[%s1 + $0x9c] sm:$0xf]
      %v1760 = vld [vmem:[%s1 + $0xa0] sm:$0xf]
      %v1761 = vld [vmem:[%s1 + $0xa4] sm:$0xf]
      %v1762 = vld [vmem:[%s1 + $0xa8] sm:$0xf]
      %v1763 = vld [vmem:[%s1 + $0xac] sm:$0xf]
      %v1764 = vld [vmem:[%s1 + $0xb0] sm:$0xf]
      %v1765 = vld [vmem:[%s1 + $0xb4] sm:$0xf]
      %v1766 = vld [vmem:[%s1 + $0xb8] sm:$0xf]
      %v1767 = vld [vmem:[%s1 + $0xbc] sm:$0xf]
      %v1784 = vunpack.c.l.b16 %v1752
      %v1785 = vunpack.c.l.b16 %v1753
      %v1786 = vunpack.c.l.b16 %v1754
      %v1787 = vunpack.c.l.b16 %v1755
      %v1788 = vunpack.c.l.b16 %v1756
      %v1789 = vunpack.c.l.b16 %v1757
      %v1790 = vunpack.c.l.b16 %v1758
      %v1791 = vunpack.c.l.b16 %v1759
      %v1792 = vunpack.c.l.b16 %v1760
      %v1793 = vunpack.c.l.b16 %v1761
      %v1794 = vunpack.c.l.b16 %v1762
      %v1795 = vunpack.c.l.b16 %v1763
      %v1796 = vunpack.c.l.b16 %v1764
      %v1797 = vunpack.c.l.b16 %v1765
      %v1798 = vunpack.c.l.b16 %v1766
      %v1799 = vunpack.c.l.b16 %v1767
      %v1800 = vpack.c.b16 %v1785, %v1784
      %v1801 = vpack.c.b16 %v1787, %v1786
      %v1802 = vpack.c.b16 %v1789, %v1788
      %v1803 = vpack.c.b16 %v1791, %v1790
      %v1804 = vpack.c.b16 %v1793, %v1792
      %v1805 = vpack.c.b16 %v1795, %v1794
      %v1806 = vpack.c.b16 %v1797, %v1796
      %v1807 = vpack.c.b16 %v1799, %v1798
      %1816 = vmatprep.subr.bf16.mxu0 0
      %1817 = vmatpush1.bf16.msra.mxu0 %v1800
      %1818 = vmatprep.subr.bf16.mxu0 0
      %1819 = vmatpush1.bf16.msra.mxu0 %v1801
      %1820 = vmatprep.subr.bf16.mxu0 0
      %1821 = vmatpush1.bf16.msra.mxu0 %v1802
      %1822 = vmatprep.subr.bf16.mxu0 0
      %1823 = vmatpush1.bf16.msra.mxu0 %v1803
      %1824 = vmatprep.subr.bf16.mxu0 0
      %1825 = vmatpush1.bf16.msra.mxu0 %v1804
      %1826 = vmatprep.subr.bf16.mxu0 0
      %1827 = vmatpush1.bf16.msra.mxu0 %v1805
      %1828 = vmatprep.subr.bf16.mxu0 0
      %1829 = vmatpush1.bf16.msra.mxu0 %v1806
      %1830 = vmatprep.subr.bf16.mxu0 0
      %1831 = vmatpush1.bf16.msra.mxu0 %v1807
      %1832 = vmatprep.subr.bf16.mxu0 0
      %1833 = vmatpush1.bf16.msra.mxu0 0
      %1834 = vmatprep.subr.bf16.mxu0 0
      %1835 = vmatpush1.bf16.msra.mxu0 0
      %1836 = vmatprep.subr.bf16.mxu0 0
      %1837 = vmatpush1.bf16.msra.mxu0 0
      %1838 = vmatprep.subr.bf16.mxu0 0
      %1839 = vmatpush1.bf16.msra.mxu0 0
      %1840 = vmatprep.subr.bf16.mxu0 0
      %1841 = vmatpush1.bf16.msra.mxu0 0
      %1842 = vmatprep.subr.bf16.mxu0 0
      %1843 = vmatpush1.bf16.msra.mxu0 0
      %1844 = vmatprep.subr.bf16.mxu0 0
      %1845 = vmatpush1.bf16.msra.mxu0 0
      %1846 = vmatprep.subr.bf16.mxu0 0
      %1847 = vmatpush1.bf16.msra.mxu0 0
      %1848 = vmatprep.mubr.bf16.mxu0 0
      %1849 = vmatmul.mubr.bf16.gmra.mrb[0].mxu0 %v1751
      %v1850 = vpop.f32.mrb[0].mxu0
      %v1851 = vadd.f32 0.0, %v1850
      %v1852 = vpop.f32.mrb[0].mxu0
      %v1853 = vpop.f32.mrb[0].mxu0
      %v1854 = vpop.f32.mrb[0].mxu0
      %1855 = vdwg.mxu0
      %v1856 = vadd.f32 %v1745, %v1851
      %v1857 = vld [vmem:[%s1750] sm:$0x7]
      %v1858 = vld [vmem:[%s1 + $0xc0] sm:$0xf]
      %v1859 = vld [vmem:[%s1 + $0xc4] sm:$0xf]
      %v1860 = vld [vmem:[%s1 + $0xc8] sm:$0xf]
      %v1861 = vld [vmem:[%s1 + $0xcc] sm:$0xf]
      %v1862 = vld [vmem:[%s1 + $0xd0] sm:$0xf]
      %v1863 = vld [vmem:[%s1 + $0xd4] sm:$0xf]
      %v1864 = vld [vmem:[%s1 + $0xd8] sm:$0xf]
      %v1865 = vld [vmem:[%s1 + $0xdc] sm:$0xf]
      %v1866 = vld [vmem:[%s1 + $0xe0] sm:$0xf]
      %v1867 = vld [vmem:[%s1 + $0xe4] sm:$0xf]
      %v1868 = vld [vmem:[%s1 + $0xe8] sm:$0xf]
      %v1869 = vld [vmem:[%s1 + $0xec] sm:$0xf]
      %v1870 = vld [vmem:[%s1 + $0xf0] sm:$0xf]
      %v1871 = vld [vmem:[%s1 + $0xf4] sm:$0xf]
      %v1872 = vld [vmem:[%s1 + $0xf8] sm:$0xf]
      %v1873 = vld [vmem:[%s1 + $0xfc] sm:$0xf]
      %v1875 = vunpack.c.l.b16 %v1857
      %v1876 = vpack.c.b16 %v1875, %v1875
      %v1878 = vshrl.u32 %v1876, 16
      %v1880 = vshll.u32 %v1876, 16
      %v1882 = vrot.slane %v1880, 1
      %v1883 = vor.u32 %v1878, %v1882
      %v1901 = vunpack.c.l.b16 %v1858
      %v1902 = vunpack.c.l.b16 %v1859
      %v1903 = vunpack.c.l.b16 %v1860
      %v1904 = vunpack.c.l.b16 %v1861
      %v1905 = vunpack.c.l.b16 %v1862
      %v1906 = vunpack.c.l.b16 %v1863
      %v1907 = vunpack.c.l.b16 %v1864
      %v1908 = vunpack.c.l.b16 %v1865
      %v1909 = vunpack.c.l.b16 %v1866
      %v1910 = vunpack.c.l.b16 %v1867
      %v1911 = vunpack.c.l.b16 %v1868
      %v1912 = vunpack.c.l.b16 %v1869
      %v1913 = vunpack.c.l.b16 %v1870
      %v1914 = vunpack.c.l.b16 %v1871
      %v1915 = vunpack.c.l.b16 %v1872
      %v1916 = vunpack.c.l.b16 %v1873
      %v1917 = vpack.c.b16 %v1902, %v1901
      %v1918 = vpack.c.b16 %v1904, %v1903
      %v1919 = vpack.c.b16 %v1906, %v1905
      %v1920 = vpack.c.b16 %v1908, %v1907
      %v1921 = vpack.c.b16 %v1910, %v1909
      %v1922 = vpack.c.b16 %v1912, %v1911
      %v1923 = vpack.c.b16 %v1914, %v1913
      %v1924 = vpack.c.b16 %v1916, %v1915
      %1933 = vmatprep.subr.bf16.mxu0 0
      %1934 = vmatpush1.bf16.msra.mxu0 %v1917
      %1935 = vmatprep.subr.bf16.mxu0 0
      %1936 = vmatpush1.bf16.msra.mxu0 %v1918
      %1937 = vmatprep.subr.bf16.mxu0 0
      %1938 = vmatpush1.bf16.msra.mxu0 %v1919
      %1939 = vmatprep.subr.bf16.mxu0 0
      %1940 = vmatpush1.bf16.msra.mxu0 %v1920
      %1941 = vmatprep.subr.bf16.mxu0 0
      %1942 = vmatpush1.bf16.msra.mxu0 %v1921
      %1943 = vmatprep.subr.bf16.mxu0 0
      %1944 = vmatpush1.bf16.msra.mxu0 %v1922
      %1945 = vmatprep.subr.bf16.mxu0 0
      %1946 = vmatpush1.bf16.msra.mxu0 %v1923
      %1947 = vmatprep.subr.bf16.mxu0 0
      %1948 = vmatpush1.bf16.msra.mxu0 %v1924
      %1949 = vmatprep.subr.bf16.mxu0 0
      %1950 = vmatpush1.bf16.msra.mxu0 0
      %1951 = vmatprep.subr.bf16.mxu0 0
      %1952 = vmatpush1.bf16.msra.mxu0 0
      %1953 = vmatprep.subr.bf16.mxu0 0
      %1954 = vmatpush1.bf16.msra.mxu0 0
      %1955 = vmatprep.subr.bf16.mxu0 0
      %1956 = vmatpush1.bf16.msra.mxu0 0
      %1957 = vmatprep.subr.bf16.mxu0 0
      %1958 = vmatpush1.bf16.msra.mxu0 0
      %1959 = vmatprep.subr.bf16.mxu0 0
      %1960 = vmatpush1.bf16.msra.mxu0 0
      %1961 = vmatprep.subr.bf16.mxu0 0
      %1962 = vmatpush1.bf16.msra.mxu0 0
      %1963 = vmatprep.subr.bf16.mxu0 0
      %1964 = vmatpush1.bf16.msra.mxu0 0
      %1965 = vmatprep.mubr.bf16.mxu0 0
      %1966 = vmatmul.mubr.bf16.gmra.mrb[0].mxu0 %v1883
      %v1967 = vpop.f32.mrb[0].mxu0
      %v1968 = vadd.f32 0.0, %v1967
      %v1969 = vpop.f32.mrb[0].mxu0
      %v1970 = vpop.f32.mrb[0].mxu0
      %v1971 = vpop.f32.mrb[0].mxu0
      %1972 = vdwg.mxu0
      %v1973 = vadd.f32 %v1856, %v1968
      %v1974 = vadd.f32 %v1973, %v622
      %v1975 = vmax.f32 %v1974, 0.0
      %v1976 = vpack.c.bf16 %v1975, %v1975
      %s1977 = scalar_lea.vmem %s170, 6
      %1978 = vst.msk [vmem:[%s1977] sm:$0x3] %vm627, %v1976
      %p1979 = scmp.lt.s32.totalorder %s14, 1
      %s1980 = scalar_select %p1979, %s14, 1
      %s1981 = smul.addr %s1980, 4
      %s1982 = smul.addr %s1981, 2
      %s1983 = scalar_lea.vmem %s3, %s1982
      // Predicated region
      $region33: #{dqn_forward.5} parent=31 // pred_check
        %p1984 = pneg %p100
      $region34: #{dqn_forward.5} parent=31 // pred_check_branch
        %1986 = sbr.rel (%p1984) target = $region36
      $region35: #{dqn_forward.5} parent=31 // pred_region
        _
      $region36: #{dqn_forward.5} parent=31 // pred_fallthru
        _
    $region32: #{dqn_forward.5} parent=5 // pred_fallthru
      _
    %p1987 = scmp.le.s32.totalorder 2, %s9
    // Predicated region
    $region37: #{dqn_forward.5} parent=5 // pred_check
      %p1988 = pneg %p1987
    $region38: #{dqn_forward.5} parent=5 // pred_check_branch
      %1990 = sbr.rel (%p1988) target = $region40
    $region39: #{dqn_forward.5} parent=5 // pred_region
      %s1991 = ssub.s32 %s9, 2
      // Predicated region
      $region41: #{dqn_forward.5} parent=39 // pred_check
        %p1992 = pneg %p106
      $region42: #{dqn_forward.5} parent=39 // pred_check_branch
        %1994 = sbr.rel (%p1992) target = $region44
      $region43: #{dqn_forward.5} parent=39 // pred_region
        %p1995 = scmp.lt.s32.totalorder %s15, 1
        %s1996 = scalar_select %p1995, %s15, 1
        %s1997 = smul.addr %s1996, 4
        %s1998 = smul.addr %s1997, 2
        %s1999 = scalar_lea.vmem %s3, %s1998
      $region44: #{dqn_forward.5} parent=39 // pred_fallthru
        _
    $region40: #{dqn_forward.5} parent=5 // pred_fallthru
      _
  $region6: #{dqn_forward.5} parent=0 // loop_footer
    %s13 = sadd.s32 1, %s9
  $region7: #{dqn_forward.5} parent=0 // loop_footer_branch
    %8 = sbr.rel target = $region3
  $region8: #{dqn_forward.5} parent=0 // loop_exit
    _

// kernel: dqn_forward.7
$region0: #{dqn_forward.7}
  #allocation0 [shape = 'u32[]', space=smem, size = 0x4, offset = 0x4, fixed_abs, tag = 'smem constant byte address 0x4 - core index']
  #allocation1 [shape = 'u32[144,128]{1,0:T(1,128)}', space=vmem, size = 0x12000, scoped, tag = 'internal scratch']
  %s0 = inlined_call_operand.vmem [shape: bf16[8,256], index: 0, kind: input, shape index: {}]
  %s1 = inlined_call_operand.vmem [shape: bf16[256,512], index: 1, kind: input, shape index: {}]
  %s2 = inlined_call_operand.vmem [shape: f32[1,512], index: 2, kind: input, shape index: {}]
  %s3 = inlined_call_operand.vmem [shape: bf16[512,4], index: 3, kind: input, shape index: {}]
  %s4 = inlined_call_operand.vmem [shape: f32[1,4], index: 4, kind: input, shape index: {}]
  %s5 = inlined_call_operand.vmem [shape: f32[8,4], index: 5, kind: output, shape index: {}]
  %s6 = sld [smem:[#allocation0]]
  $region30: #{dqn_forward.7} parent=0
    _
  %s8 = ssub.s32 1, %s6
  %s9 = scalar_select 0, %s8, %s6
  // Predicated region
  $region2: #{dqn_forward.7} parent=0 // pred_check
    _
  $region3: #{dqn_forward.7} parent=0 // pred_check_branch
    %11 = sbr.rel (0) target = $region5
  $region4: #{dqn_forward.7} parent=0 // pred_region
    _
  $region5: #{dqn_forward.7} parent=0 // pred_fallthru
    _
  // Predicated region
  $region6: #{dqn_forward.7} parent=0 // pred_check
    _
  $region7: #{dqn_forward.7} parent=0 // pred_check_branch
    %13 = sbr.rel (0) target = $region9
  $region8: #{dqn_forward.7} parent=0 // pred_region
    _
  $region9: #{dqn_forward.7} parent=0 // pred_fallthru
    _
  // Predicated region
  $region10: #{dqn_forward.7} parent=0 // pred_check
    _
  $region11: #{dqn_forward.7} parent=0 // pred_check_branch
    %15 = sbr.rel (0) target = $region13
  $region12: #{dqn_forward.7} parent=0 // pred_region
    _
  $region13: #{dqn_forward.7} parent=0 // pred_fallthru
    _
  // Predicated region
  $region14: #{dqn_forward.7} parent=0 // pred_check
    _
  $region15: #{dqn_forward.7} parent=0 // pred_check_branch
    %17 = sbr.rel (0) target = $region17
  $region16: #{dqn_forward.7} parent=0 // pred_region
    _
  $region17: #{dqn_forward.7} parent=0 // pred_fallthru
    _
  // Predicated region
  $region18: #{dqn_forward.7} parent=0 // pred_check
    _
  $region19: #{dqn_forward.7} parent=0 // pred_check_branch
    %19 = sbr.rel (0) target = $region21
  $region20: #{dqn_forward.7} parent=0 // pred_region
    _
  $region21: #{dqn_forward.7} parent=0 // pred_fallthru
    _
  %v21 = vld [vmem:[%s0] sm:$0xff]
  %v22 = vld [vmem:[%s1] sm:$0xff]
  %v23 = vld [vmem:[%s1 + $0x8] sm:$0xff]
  %v24 = vld [vmem:[%s1 + $0x10] sm:$0xff]
  %v25 = vld [vmem:[%s1 + $0x18] sm:$0xff]
  %v26 = vld [vmem:[%s1 + $0x20] sm:$0xff]
  %v27 = vld [vmem:[%s1 + $0x28] sm:$0xff]
  %v28 = vld [vmem:[%s1 + $0x30] sm:$0xff]
  %v29 = vld [vmem:[%s1 + $0x38] sm:$0xff]
  %v30 = vld [vmem:[%s1 + $0x40] sm:$0xff]
  %v31 = vld [vmem:[%s1 + $0x48] sm:$0xff]
  %v32 = vld [vmem:[%s1 + $0x50] sm:$0xff]
  %v33 = vld [vmem:[%s1 + $0x58] sm:$0xff]
  %v34 = vld [vmem:[%s1 + $0x60] sm:$0xff]
  %v35 = vld [vmem:[%s1 + $0x68] sm:$0xff]
  %v36 = vld [vmem:[%s1 + $0x70] sm:$0xff]
  %v37 = vld [vmem:[%s1 + $0x78] sm:$0xff]
  %v38 = vld [vmem:[%s1 + $0x80] sm:$0xff]
  %v39 = vld [vmem:[%s1 + $0x88] sm:$0xff]
  %v40 = vld [vmem:[%s1 + $0x90] sm:$0xff]
  %v41 = vld [vmem:[%s1 + $0x98] sm:$0xff]
  %v42 = vld [vmem:[%s1 + $0xa0] sm:$0xff]
  %v43 = vld [vmem:[%s1 + $0xa8] sm:$0xff]
  %v44 = vld [vmem:[%s1 + $0xb0] sm:$0xff]
  %v45 = vld [vmem:[%s1 + $0xb8] sm:$0xff]
  %v46 = vld [vmem:[%s1 + $0xc0] sm:$0xff]
  %v47 = vld [vmem:[%s1 + $0xc8] sm:$0xff]
  %v48 = vld [vmem:[%s1 + $0xd0] sm:$0xff]
  %v49 = vld [vmem:[%s1 + $0xd8] sm:$0xff]
  %v50 = vld [vmem:[%s1 + $0xe0] sm:$0xff]
  %v51 = vld [vmem:[%s1 + $0xe8] sm:$0xff]
  %v52 = vld [vmem:[%s1 + $0xf0] sm:$0xff]
  %v53 = vld [vmem:[%s1 + $0xf8] sm:$0xff]
  %v54 = vld [vmem:[%s1 + $0x100] sm:$0xff]
  %v55 = vld [vmem:[%s1 + $0x108] sm:$0xff]
  %v56 = vld [vmem:[%s1 + $0x110] sm:$0xff]
  %v57 = vld [vmem:[%s1 + $0x118] sm:$0xff]
  %v58 = vld [vmem:[%s1 + $0x120] sm:$0xff]
  %v59 = vld [vmem:[%s1 + $0x128] sm:$0xff]
  %v60 = vld [vmem:[%s1 + $0x130] sm:$0xff]
  %v61 = vld [vmem:[%s1 + $0x138] sm:$0xff]
  %v62 = vld [vmem:[%s1 + $0x140] sm:$0xff]
  %v63 = vld [vmem:[%s1 + $0x148] sm:$0xff]
  %v64 = vld [vmem:[%s1 + $0x150] sm:$0xff]
  %v65 = vld [vmem:[%s1 + $0x158] sm:$0xff]
  %v66 = vld [vmem:[%s1 + $0x160] sm:$0xff]
  %v67 = vld [vmem:[%s1 + $0x168] sm:$0xff]
  %v68 = vld [vmem:[%s1 + $0x170] sm:$0xff]
  %v69 = vld [vmem:[%s1 + $0x178] sm:$0xff]
  %v70 = vld [vmem:[%s1 + $0x180] sm:$0xff]
  %v71 = vld [vmem:[%s1 + $0x188] sm:$0xff]
  %v72 = vld [vmem:[%s1 + $0x190] sm:$0xff]
  %v73 = vld [vmem:[%s1 + $0x198] sm:$0xff]
  %v74 = vld [vmem:[%s1 + $0x1a0] sm:$0xff]
  %v75 = vld [vmem:[%s1 + $0x1a8] sm:$0xff]
  %v76 = vld [vmem:[%s1 + $0x1b0] sm:$0xff]
  %v77 = vld [vmem:[%s1 + $0x1b8] sm:$0xff]
  %v78 = vld [vmem:[%s1 + $0x1c0] sm:$0xff]
  %v79 = vld [vmem:[%s1 + $0x1c8] sm:$0xff]
  %v80 = vld [vmem:[%s1 + $0x1d0] sm:$0xff]
  %v81 = vld [vmem:[%s1 + $0x1d8] sm:$0xff]
  %v82 = vld [vmem:[%s1 + $0x1e0] sm:$0xff]
  %v83 = vld [vmem:[%s1 + $0x1e8] sm:$0xff]
  %v84 = vld [vmem:[%s1 + $0x1f0] sm:$0xff]
  %v85 = vld [vmem:[%s1 + $0x1f8] sm:$0xff]
  %v86 = vld [vmem:[%s2] sm:$0xf]
  %v88 = vlaneseq
  %v89 = vshrl.u32 %v88, 7
  %v90 = vsub.s32 0, %v89
  %v91 = vrot.slane %v86, %v90
  %v92 = vlaneseq
  %v93 = vshrl.u32 %v92, 7
  %v94 = vsub.s32 1, %v93
  %v95 = vrot.slane %v86, %v94
  %v96 = vlaneseq
  %v97 = vshrl.u32 %v96, 7
  %v98 = vsub.s32 2, %v97
  %v99 = vrot.slane %v86, %v98
  %v100 = vlaneseq
  %v101 = vshrl.u32 %v100, 7
  %v102 = vsub.s32 3, %v101
  %v103 = vrot.slane %v86, %v102
  %v109 = vunpack.c.l.b16 %v21
  %v110 = vunpack.c.h.b16 %v21
  %v111 = vpack.c.b16 %v109, %v109
  %v112 = vpack.c.b16 %v110, %v110
  %v179 = vunpack.c.l.b16 %v22
  %v180 = vunpack.c.h.b16 %v22
  %v181 = vunpack.c.l.b16 %v23
  %v182 = vunpack.c.h.b16 %v23
  %v183 = vunpack.c.l.b16 %v24
  %v184 = vunpack.c.h.b16 %v24
  %v185 = vunpack.c.l.b16 %v25
  %v186 = vunpack.c.h.b16 %v25
  %v187 = vunpack.c.l.b16 %v26
  %v188 = vunpack.c.h.b16 %v26
  %v189 = vunpack.c.l.b16 %v27
  %v190 = vunpack.c.h.b16 %v27
  %v191 = vunpack.c.l.b16 %v28
  %v192 = vunpack.c.h.b16 %v28
  %v193 = vunpack.c.l.b16 %v29
  %v194 = vunpack.c.h.b16 %v29
  %v195 = vunpack.c.l.b16 %v30
  %v196 = vunpack.c.h.b16 %v30
  %v197 = vunpack.c.l.b16 %v31
  %v198 = vunpack.c.h.b16 %v31
  %v199 = vunpack.c.l.b16 %v32
  %v200 = vunpack.c.h.b16 %v32
  %v201 = vunpack.c.l.b16 %v33
  %v202 = vunpack.c.h.b16 %v33
  %v203 = vunpack.c.l.b16 %v34
  %v204 = vunpack.c.h.b16 %v34
  %v205 = vunpack.c.l.b16 %v35
  %v206 = vunpack.c.h.b16 %v35
  %v207 = vunpack.c.l.b16 %v36
  %v208 = vunpack.c.h.b16 %v36
  %v209 = vunpack.c.l.b16 %v37
  %v210 = vunpack.c.h.b16 %v37
  %v211 = vunpack.c.l.b16 %v38
  %v212 = vunpack.c.h.b16 %v38
  %v213 = vunpack.c.l.b16 %v39
  %v214 = vunpack.c.h.b16 %v39
  %v215 = vunpack.c.l.b16 %v40
  %v216 = vunpack.c.h.b16 %v40
  %v217 = vunpack.c.l.b16 %v41
  %v218 = vunpack.c.h.b16 %v41
  %v219 = vunpack.c.l.b16 %v42
  %v220 = vunpack.c.h.b16 %v42
  %v221 = vunpack.c.l.b16 %v43
  %v222 = vunpack.c.h.b16 %v43
  %v223 = vunpack.c.l.b16 %v44
  %v224 = vunpack.c.h.b16 %v44
  %v225 = vunpack.c.l.b16 %v45
  %v226 = vunpack.c.h.b16 %v45
  %v227 = vunpack.c.l.b16 %v46
  %v228 = vunpack.c.h.b16 %v46
  %v229 = vunpack.c.l.b16 %v47
  %v230 = vunpack.c.h.b16 %v47
  %v231 = vunpack.c.l.b16 %v48
  %v232 = vunpack.c.h.b16 %v48
  %v233 = vunpack.c.l.b16 %v49
  %v234 = vunpack.c.h.b16 %v49
  %v235 = vunpack.c.l.b16 %v50
  %v236 = vunpack.c.h.b16 %v50
  %v237 = vunpack.c.l.b16 %v51
  %v238 = vunpack.c.h.b16 %v51
  %v239 = vunpack.c.l.b16 %v52
  %v240 = vunpack.c.h.b16 %v52
  %v241 = vunpack.c.l.b16 %v53
  %v242 = vunpack.c.h.b16 %v53
  %v243 = vunpack.c.l.b16 %v54
  %v244 = vunpack.c.h.b16 %v54
  %v245 = vunpack.c.l.b16 %v55
  %v246 = vunpack.c.h.b16 %v55
  %v247 = vunpack.c.l.b16 %v56
  %v248 = vunpack.c.h.b16 %v56
  %v249 = vunpack.c.l.b16 %v57
  %v250 = vunpack.c.h.b16 %v57
  %v251 = vunpack.c.l.b16 %v58
  %v252 = vunpack.c.h.b16 %v58
  %v253 = vunpack.c.l.b16 %v59
  %v254 = vunpack.c.h.b16 %v59
  %v255 = vunpack.c.l.b16 %v60
  %v256 = vunpack.c.h.b16 %v60
  %v257 = vunpack.c.l.b16 %v61
  %v258 = vunpack.c.h.b16 %v61
  %v259 = vunpack.c.l.b16 %v62
  %v260 = vunpack.c.h.b16 %v62
  %v261 = vunpack.c.l.b16 %v63
  %v262 = vunpack.c.h.b16 %v63
  %v263 = vunpack.c.l.b16 %v64
  %v264 = vunpack.c.h.b16 %v64
  %v265 = vunpack.c.l.b16 %v65
  %v266 = vunpack.c.h.b16 %v65
  %v267 = vunpack.c.l.b16 %v66
  %v268 = vunpack.c.h.b16 %v66
  %v269 = vunpack.c.l.b16 %v67
  %v270 = vunpack.c.h.b16 %v67
  %v271 = vunpack.c.l.b16 %v68
  %v272 = vunpack.c.h.b16 %v68
  %v273 = vunpack.c.l.b16 %v69
  %v274 = vunpack.c.h.b16 %v69
  %v275 = vunpack.c.l.b16 %v70
  %v276 = vunpack.c.h.b16 %v70
  %v277 = vunpack.c.l.b16 %v71
  %v278 = vunpack.c.h.b16 %v71
  %v279 = vunpack.c.l.b16 %v72
  %v280 = vunpack.c.h.b16 %v72
  %v281 = vunpack.c.l.b16 %v73
  %v282 = vunpack.c.h.b16 %v73
  %v283 = vunpack.c.l.b16 %v74
  %v284 = vunpack.c.h.b16 %v74
  %v285 = vunpack.c.l.b16 %v75
  %v286 = vunpack.c.h.b16 %v75
  %v287 = vunpack.c.l.b16 %v76
  %v288 = vunpack.c.h.b16 %v76
  %v289 = vunpack.c.l.b16 %v77
  %v290 = vunpack.c.h.b16 %v77
  %v291 = vunpack.c.l.b16 %v78
  %v292 = vunpack.c.h.b16 %v78
  %v293 = vunpack.c.l.b16 %v79
  %v294 = vunpack.c.h.b16 %v79
  %v295 = vunpack.c.l.b16 %v80
  %v296 = vunpack.c.h.b16 %v80
  %v297 = vunpack.c.l.b16 %v81
  %v298 = vunpack.c.h.b16 %v81
  %v299 = vunpack.c.l.b16 %v82
  %v300 = vunpack.c.h.b16 %v82
  %v301 = vunpack.c.l.b16 %v83
  %v302 = vunpack.c.h.b16 %v83
  %v303 = vunpack.c.l.b16 %v84
  %v304 = vunpack.c.h.b16 %v84
  %v305 = vunpack.c.l.b16 %v85
  %v306 = vunpack.c.h.b16 %v85
  %v307 = vpack.c.b16 %v183, %v179
  %v308 = vpack.c.b16 %v184, %v180
  %v309 = vpack.c.b16 %v185, %v181
  %v310 = vpack.c.b16 %v186, %v182
  %v311 = vpack.c.b16 %v191, %v187
  %v312 = vpack.c.b16 %v192, %v188
  %v313 = vpack.c.b16 %v193, %v189
  %v314 = vpack.c.b16 %v194, %v190
  %v315 = vpack.c.b16 %v199, %v195
  %v316 = vpack.c.b16 %v200, %v196
  %v317 = vpack.c.b16 %v201, %v197
  %v318 = vpack.c.b16 %v202, %v198
  %v319 = vpack.c.b16 %v207, %v203
  %v320 = vpack.c.b16 %v208, %v204
  %v321 = vpack.c.b16 %v209, %v205
  %v322 = vpack.c.b16 %v210, %v206
  %v323 = vpack.c.b16 %v215, %v211
  %v324 = vpack.c.b16 %v216, %v212
  %v325 = vpack.c.b16 %v217, %v213
  %v326 = vpack.c.b16 %v218, %v214
  %v327 = vpack.c.b16 %v223, %v219
  %v328 = vpack.c.b16 %v224, %v220
  %v329 = vpack.c.b16 %v225, %v221
  %v330 = vpack.c.b16 %v226, %v222
  %v331 = vpack.c.b16 %v231, %v227
  %v332 = vpack.c.b16 %v232, %v228
  %v333 = vpack.c.b16 %v233, %v229
  %v334 = vpack.c.b16 %v234, %v230
  %v335 = vpack.c.b16 %v239, %v235
  %v336 = vpack.c.b16 %v240, %v236
  %v337 = vpack.c.b16 %v241, %v237
  %v338 = vpack.c.b16 %v242, %v238
  %v339 = vpack.c.b16 %v247, %v243
  %v340 = vpack.c.b16 %v248, %v244
  %v341 = vpack.c.b16 %v249, %v245
  %v342 = vpack.c.b16 %v250, %v246
  %v343 = vpack.c.b16 %v255, %v251
  %v344 = vpack.c.b16 %v256, %v252
  %v345 = vpack.c.b16 %v257, %v253
  %v346 = vpack.c.b16 %v258, %v254
  %v347 = vpack.c.b16 %v263, %v259
  %v348 = vpack.c.b16 %v264, %v260
  %v349 = vpack.c.b16 %v265, %v261
  %v350 = vpack.c.b16 %v266, %v262
  %v351 = vpack.c.b16 %v271, %v267
  %v352 = vpack.c.b16 %v272, %v268
  %v353 = vpack.c.b16 %v273, %v269
  %v354 = vpack.c.b16 %v274, %v270
  %v355 = vpack.c.b16 %v279, %v275
  %v356 = vpack.c.b16 %v280, %v276
  %v357 = vpack.c.b16 %v281, %v277
  %v358 = vpack.c.b16 %v282, %v278
  %v359 = vpack.c.b16 %v287, %v283
  %v360 = vpack.c.b16 %v288, %v284
  %v361 = vpack.c.b16 %v289, %v285
  %v362 = vpack.c.b16 %v290, %v286
  %v363 = vpack.c.b16 %v295, %v291
  %v364 = vpack.c.b16 %v296, %v292
  %v365 = vpack.c.b16 %v297, %v293
  %v366 = vpack.c.b16 %v298, %v294
  %v367 = vpack.c.b16 %v303, %v299
  %v368 = vpack.c.b16 %v304, %v300
  %v369 = vpack.c.b16 %v305, %v301
  %v370 = vpack.c.b16 %v306, %v302
  %435 = vmatprep.subr.bf16.mxu0 %v308
  %436 = vmatpush1.bf16.msra.mxu0 %v307
  %437 = vmatprep.subr.bf16.mxu0 %v312
  %438 = vmatpush1.bf16.msra.mxu0 %v311
  %439 = vmatprep.subr.bf16.mxu0 %v316
  %440 = vmatpush1.bf16.msra.mxu0 %v315
  %441 = vmatprep.subr.bf16.mxu0 %v320
  %442 = vmatpush1.bf16.msra.mxu0 %v319
  %443 = vmatprep.subr.bf16.mxu0 %v324
  %444 = vmatpush1.bf16.msra.mxu0 %v323
  %445 = vmatprep.subr.bf16.mxu0 %v328
  %446 = vmatpush1.bf16.msra.mxu0 %v327
  %447 = vmatprep.subr.bf16.mxu0 %v332
  %448 = vmatpush1.bf16.msra.mxu0 %v331
  %449 = vmatprep.subr.bf16.mxu0 %v336
  %450 = vmatpush1.bf16.msra.mxu0 %v335
  %451 = vmatprep.subr.bf16.mxu0 %v340
  %452 = vmatpush1.bf16.msra.mxu0 %v339
  %453 = vmatprep.subr.bf16.mxu0 %v344
  %454 = vmatpush1.bf16.msra.mxu0 %v343
  %455 = vmatprep.subr.bf16.mxu0 %v348
  %456 = vmatpush1.bf16.msra.mxu0 %v347
  %457 = vmatprep.subr.bf16.mxu0 %v352
  %458 = vmatpush1.bf16.msra.mxu0 %v351
  %459 = vmatprep.subr.bf16.mxu0 %v356
  %460 = vmatpush1.bf16.msra.mxu0 %v355
  %461 = vmatprep.subr.bf16.mxu0 %v360
  %462 = vmatpush1.bf16.msra.mxu0 %v359
  %463 = vmatprep.subr.bf16.mxu0 %v364
  %464 = vmatpush1.bf16.msra.mxu0 %v363
  %465 = vmatprep.subr.bf16.mxu0 %v368
  %466 = vmatpush1.bf16.msra.mxu0 %v367
  %467 = vmatprep.mubr.bf16.mxu0 %v112
  %468 = vmatmul.mubr.bf16.gmra.mrb[0].mxu0 %v111
  %v469 = vpop.f32.mrb[0].mxu0
  %v470 = vadd.f32 %v91, %v469
  %v471 = vpop.f32.mrb[0].mxu0
  %v472 = vadd.f32 %v95, %v471
  %v473 = vpop.f32.mrb[0].mxu0
  %v474 = vpop.f32.mrb[0].mxu0
  %475 = vdwg.mxu0
  %476 = vmatprep.subr.bf16.mxu0 %v310
  %477 = vmatpush1.bf16.msra.mxu0 %v309
  %478 = vmatprep.subr.bf16.mxu0 %v314
  %479 = vmatpush1.bf16.msra.mxu0 %v313
  %480 = vmatprep.subr.bf16.mxu0 %v318
  %481 = vmatpush1.bf16.msra.mxu0 %v317
  %482 = vmatprep.subr.bf16.mxu0 %v322
  %483 = vmatpush1.bf16.msra.mxu0 %v321
  %484 = vmatprep.subr.bf16.mxu0 %v326
  %485 = vmatpush1.bf16.msra.mxu0 %v325
  %486 = vmatprep.subr.bf16.mxu0 %v330
  %487 = vmatpush1.bf16.msra.mxu0 %v329
  %488 = vmatprep.subr.bf16.mxu0 %v334
  %489 = vmatpush1.bf16.msra.mxu0 %v333
  %490 = vmatprep.subr.bf16.mxu0 %v338
  %491 = vmatpush1.bf16.msra.mxu0 %v337
  %492 = vmatprep.subr.bf16.mxu0 %v342
  %493 = vmatpush1.bf16.msra.mxu0 %v341
  %494 = vmatprep.subr.bf16.mxu0 %v346
  %495 = vmatpush1.bf16.msra.mxu0 %v345
  %496 = vmatprep.subr.bf16.mxu0 %v350
  %497 = vmatpush1.bf16.msra.mxu0 %v349
  %498 = vmatprep.subr.bf16.mxu0 %v354
  %499 = vmatpush1.bf16.msra.mxu0 %v353
  %500 = vmatprep.subr.bf16.mxu0 %v358
  %501 = vmatpush1.bf16.msra.mxu0 %v357
  %502 = vmatprep.subr.bf16.mxu0 %v362
  %503 = vmatpush1.bf16.msra.mxu0 %v361
  %504 = vmatprep.subr.bf16.mxu0 %v366
  %505 = vmatpush1.bf16.msra.mxu0 %v365
  %506 = vmatprep.subr.bf16.mxu0 %v370
  %507 = vmatpush1.bf16.msra.mxu0 %v369
  %508 = vmatprep.mubr.bf16.mxu0 %v112
  %509 = vmatmul.mubr.bf16.gmra.mrb[0].mxu0 %v111
  %v510 = vpop.f32.mrb[0].mxu0
  %v511 = vadd.f32 %v99, %v510
  %v512 = vpop.f32.mrb[0].mxu0
  %v513 = vadd.f32 %v103, %v512
  %v514 = vpop.f32.mrb[0].mxu0
  %v515 = vpop.f32.mrb[0].mxu0
  %516 = vdwg.mxu0
  %v517 = vpack.c.bf16 %v470, %v470
  %v518 = vpack.c.bf16 %v472, %v472
  %v519 = vpack.c.bf16 %v511, %v511
  %v520 = vpack.c.bf16 %v513, %v513
  %v521 = vld [vmem:[%s3] sm:$0xf]
  %v522 = vld [vmem:[%s3 + $0x4] sm:$0xf]
  %v523 = vld [vmem:[%s3 + $0x8] sm:$0xf]
  %v524 = vld [vmem:[%s3 + $0xc] sm:$0xf]
  %v525 = vld [vmem:[%s3 + $0x10] sm:$0xf]
  %v526 = vld [vmem:[%s3 + $0x14] sm:$0xf]
  %v527 = vld [vmem:[%s3 + $0x18] sm:$0xf]
  %v528 = vld [vmem:[%s3 + $0x1c] sm:$0xf]
  %v529 = vld [vmem:[%s3 + $0x20] sm:$0xf]
  %v530 = vld [vmem:[%s3 + $0x24] sm:$0xf]
  %v531 = vld [vmem:[%s3 + $0x28] sm:$0xf]
  %v532 = vld [vmem:[%s3 + $0x2c] sm:$0xf]
  %v533 = vld [vmem:[%s3 + $0x30] sm:$0xf]
  %v534 = vld [vmem:[%s3 + $0x34] sm:$0xf]
  %v535 = vld [vmem:[%s3 + $0x38] sm:$0xf]
  %v536 = vld [vmem:[%s3 + $0x3c] sm:$0xf]
  %v537 = vld [vmem:[%s3 + $0x40] sm:$0xf]
  %v538 = vld [vmem:[%s3 + $0x44] sm:$0xf]
  %v539 = vld [vmem:[%s3 + $0x48] sm:$0xf]
  %v540 = vld [vmem:[%s3 + $0x4c] sm:$0xf]
  %v541 = vld [vmem:[%s3 + $0x50] sm:$0xf]
  %v542 = vld [vmem:[%s3 + $0x54] sm:$0xf]
  %v543 = vld [vmem:[%s3 + $0x58] sm:$0xf]
  %v544 = vld [vmem:[%s3 + $0x5c] sm:$0xf]
  %v545 = vld [vmem:[%s3 + $0x60] sm:$0xf]
  %v546 = vld [vmem:[%s3 + $0x64] sm:$0xf]
  %v547 = vld [vmem:[%s3 + $0x68] sm:$0xf]
  %v548 = vld [vmem:[%s3 + $0x6c] sm:$0xf]
  %v549 = vld [vmem:[%s3 + $0x70] sm:$0xf]
  %v550 = vld [vmem:[%s3 + $0x74] sm:$0xf]
  %v551 = vld [vmem:[%s3 + $0x78] sm:$0xf]
  %v552 = vld [vmem:[%s3 + $0x7c] sm:$0xf]
  %v553 = vld [vmem:[%s3 + $0x80] sm:$0xf]
  %v554 = vld [vmem:[%s3 + $0x84] sm:$0xf]
  %v555 = vld [vmem:[%s3 + $0x88] sm:$0xf]
  %v556 = vld [vmem:[%s3 + $0x8c] sm:$0xf]
  %v557 = vld [vmem:[%s3 + $0x90] sm:$0xf]
  %v558 = vld [vmem:[%s3 + $0x94] sm:$0xf]
  %v559 = vld [vmem:[%s3 + $0x98] sm:$0xf]
  %v560 = vld [vmem:[%s3 + $0x9c] sm:$0xf]
  %v561 = vld [vmem:[%s3 + $0xa0] sm:$0xf]
  %v562 = vld [vmem:[%s3 + $0xa4] sm:$0xf]
  %v563 = vld [vmem:[%s3 + $0xa8] sm:$0xf]
  %v564 = vld [vmem:[%s3 + $0xac] sm:$0xf]
  %v565 = vld [vmem:[%s3 + $0xb0] sm:$0xf]
  %v566 = vld [vmem:[%s3 + $0xb4] sm:$0xf]
  %v567 = vld [vmem:[%s3 + $0xb8] sm:$0xf]
  %v568 = vld [vmem:[%s3 + $0xbc] sm:$0xf]
  %v569 = vld [vmem:[%s3 + $0xc0] sm:$0xf]
  %v570 = vld [vmem:[%s3 + $0xc4] sm:$0xf]
  %v571 = vld [vmem:[%s3 + $0xc8] sm:$0xf]
  %v572 = vld [vmem:[%s3 + $0xcc] sm:$0xf]
  %v573 = vld [vmem:[%s3 + $0xd0] sm:$0xf]
  %v574 = vld [vmem:[%s3 + $0xd4] sm:$0xf]
  %v575 = vld [vmem:[%s3 + $0xd8] sm:$0xf]
  %v576 = vld [vmem:[%s3 + $0xdc] sm:$0xf]
  %v577 = vld [vmem:[%s3 + $0xe0] sm:$0xf]
  %v578 = vld [vmem:[%s3 + $0xe4] sm:$0xf]
  %v579 = vld [vmem:[%s3 + $0xe8] sm:$0xf]
  %v580 = vld [vmem:[%s3 + $0xec] sm:$0xf]
  %v581 = vld [vmem:[%s3 + $0xf0] sm:$0xf]
  %v582 = vld [vmem:[%s3 + $0xf4] sm:$0xf]
  %v583 = vld [vmem:[%s3 + $0xf8] sm:$0xf]
  %v584 = vld [vmem:[%s3 + $0xfc] sm:$0xf]
  %v585 = vld [vmem:[%s4] sm:$0x1]
  %v587 = vlaneseq
  %v588 = vshrl.u32 %v587, 7
  %v589 = vsub.s32 0, %v588
  %v590 = vrot.slane %v585, %v589
  %v656 = vunpack.c.l.b16 %v521
  %v657 = vunpack.c.l.b16 %v522
  %v658 = vunpack.c.l.b16 %v523
  %v659 = vunpack.c.l.b16 %v524
  %v660 = vunpack.c.l.b16 %v525
  %v661 = vunpack.c.l.b16 %v526
  %v662 = vunpack.c.l.b16 %v527
  %v663 = vunpack.c.l.b16 %v528
  %v664 = vunpack.c.l.b16 %v529
  %v665 = vunpack.c.l.b16 %v530
  %v666 = vunpack.c.l.b16 %v531
  %v667 = vunpack.c.l.b16 %v532
  %v668 = vunpack.c.l.b16 %v533
  %v669 = vunpack.c.l.b16 %v534
  %v670 = vunpack.c.l.b16 %v535
  %v671 = vunpack.c.l.b16 %v536
  %v672 = vunpack.c.l.b16 %v537
  %v673 = vunpack.c.l.b16 %v538
  %v674 = vunpack.c.l.b16 %v539
  %v675 = vunpack.c.l.b16 %v540
  %v676 = vunpack.c.l.b16 %v541
  %v677 = vunpack.c.l.b16 %v542
  %v678 = vunpack.c.l.b16 %v543
  %v679 = vunpack.c.l.b16 %v544
  %v680 = vunpack.c.l.b16 %v545
  %v681 = vunpack.c.l.b16 %v546
  %v682 = vunpack.c.l.b16 %v547
  %v683 = vunpack.c.l.b16 %v548
  %v684 = vunpack.c.l.b16 %v549
  %v685 = vunpack.c.l.b16 %v550
  %v686 = vunpack.c.l.b16 %v551
  %v687 = vunpack.c.l.b16 %v552
  %v688 = vunpack.c.l.b16 %v553
  %v689 = vunpack.c.l.b16 %v554
  %v690 = vunpack.c.l.b16 %v555
  %v691 = vunpack.c.l.b16 %v556
  %v692 = vunpack.c.l.b16 %v557
  %v693 = vunpack.c.l.b16 %v558
  %v694 = vunpack.c.l.b16 %v559
  %v695 = vunpack.c.l.b16 %v560
  %v696 = vunpack.c.l.b16 %v561
  %v697 = vunpack.c.l.b16 %v562
  %v698 = vunpack.c.l.b16 %v563
  %v699 = vunpack.c.l.b16 %v564
  %v700 = vunpack.c.l.b16 %v565
  %v701 = vunpack.c.l.b16 %v566
  %v702 = vunpack.c.l.b16 %v567
  %v703 = vunpack.c.l.b16 %v568
  %v704 = vunpack.c.l.b16 %v569
  %v705 = vunpack.c.l.b16 %v570
  %v706 = vunpack.c.l.b16 %v571
  %v707 = vunpack.c.l.b16 %v572
  %v708 = vunpack.c.l.b16 %v573
  %v709 = vunpack.c.l.b16 %v574
  %v710 = vunpack.c.l.b16 %v575
  %v711 = vunpack.c.l.b16 %v576
  %v712 = vunpack.c.l.b16 %v577
  %v713 = vunpack.c.l.b16 %v578
  %v714 = vunpack.c.l.b16 %v579
  %v715 = vunpack.c.l.b16 %v580
  %v716 = vunpack.c.l.b16 %v581
  %v717 = vunpack.c.l.b16 %v582
  %v718 = vunpack.c.l.b16 %v583
  %v719 = vunpack.c.l.b16 %v584
  %v720 = vpack.c.b16 %v657, %v656
  %v721 = vpack.c.b16 %v659, %v658
  %v722 = vpack.c.b16 %v661, %v660
  %v723 = vpack.c.b16 %v663, %v662
  %v724 = vpack.c.b16 %v665, %v664
  %v725 = vpack.c.b16 %v667, %v666
  %v726 = vpack.c.b16 %v669, %v668
  %v727 = vpack.c.b16 %v671, %v670
  %v728 = vpack.c.b16 %v673, %v672
  %v729 = vpack.c.b16 %v675, %v674
  %v730 = vpack.c.b16 %v677, %v676
  %v731 = vpack.c.b16 %v679, %v678
  %v732 = vpack.c.b16 %v681, %v680
  %v733 = vpack.c.b16 %v683, %v682
  %v734 = vpack.c.b16 %v685, %v684
  %v735 = vpack.c.b16 %v687, %v686
  %v736 = vpack.c.b16 %v689, %v688
  %v737 = vpack.c.b16 %v691, %v690
  %v738 = vpack.c.b16 %v693, %v692
  %v739 = vpack.c.b16 %v695, %v694
  %v740 = vpack.c.b16 %v697, %v696
  %v741 = vpack.c.b16 %v699, %v698
  %v742 = vpack.c.b16 %v701, %v700
  %v743 = vpack.c.b16 %v703, %v702
  %v744 = vpack.c.b16 %v705, %v704
  %v745 = vpack.c.b16 %v707, %v706
  %v746 = vpack.c.b16 %v709, %v708
  %v747 = vpack.c.b16 %v711, %v710
  %v748 = vpack.c.b16 %v713, %v712
  %v749 = vpack.c.b16 %v715, %v714
  %v750 = vpack.c.b16 %v717, %v716
  %v751 = vpack.c.b16 %v719, %v718
  %784 = vmatprep.subr.bf16.mxu0 0
  %785 = vmatpush1.bf16.msra.mxu0 %v720
  %786 = vmatprep.subr.bf16.mxu0 0
  %787 = vmatpush1.bf16.msra.mxu0 %v721
  %788 = vmatprep.subr.bf16.mxu0 0
  %789 = vmatpush1.bf16.msra.mxu0 %v722
  %790 = vmatprep.subr.bf16.mxu0 0
  %791 = vmatpush1.bf16.msra.mxu0 %v723
  %792 = vmatprep.subr.bf16.mxu0 0
  %793 = vmatpush1.bf16.msra.mxu0 %v724
  %794 = vmatprep.subr.bf16.mxu0 0
  %795 = vmatpush1.bf16.msra.mxu0 %v725
  %796 = vmatprep.subr.bf16.mxu0 0
  %797 = vmatpush1.bf16.msra.mxu0 %v726
  %798 = vmatprep.subr.bf16.mxu0 0
  %799 = vmatpush1.bf16.msra.mxu0 %v727
  %800 = vmatprep.subr.bf16.mxu0 0
  %801 = vmatpush1.bf16.msra.mxu0 %v728
  %802 = vmatprep.subr.bf16.mxu0 0
  %803 = vmatpush1.bf16.msra.mxu0 %v729
  %804 = vmatprep.subr.bf16.mxu0 0
  %805 = vmatpush1.bf16.msra.mxu0 %v730
  %806 = vmatprep.subr.bf16.mxu0 0
  %807 = vmatpush1.bf16.msra.mxu0 %v731
  %808 = vmatprep.subr.bf16.mxu0 0
  %809 = vmatpush1.bf16.msra.mxu0 %v732
  %810 = vmatprep.subr.bf16.mxu0 0
  %811 = vmatpush1.bf16.msra.mxu0 %v733
  %812 = vmatprep.subr.bf16.mxu0 0
  %813 = vmatpush1.bf16.msra.mxu0 %v734
  %814 = vmatprep.subr.bf16.mxu0 0
  %815 = vmatpush1.bf16.msra.mxu0 %v735
  %816 = vmatprep.mubr.bf16.mxu0 %v518
  %817 = vmatmul.mubr.bf16.gmra.mrb[0].mxu0 %v517
  %v818 = vpop.f32.mrb[0].mxu0
  %v819 = vadd.f32 %v590, %v818
  %v820 = vpop.f32.mrb[0].mxu0
  %v821 = vpop.f32.mrb[0].mxu0
  %v822 = vpop.f32.mrb[0].mxu0
  %823 = vdwg.mxu0
  %824 = vmatprep.subr.bf16.mxu0 0
  %825 = vmatpush1.bf16.msra.mxu0 %v736
  %826 = vmatprep.subr.bf16.mxu0 0
  %827 = vmatpush1.bf16.msra.mxu0 %v737
  %828 = vmatprep.subr.bf16.mxu0 0
  %829 = vmatpush1.bf16.msra.mxu0 %v738
  %830 = vmatprep.subr.bf16.mxu0 0
  %831 = vmatpush1.bf16.msra.mxu0 %v739
  %832 = vmatprep.subr.bf16.mxu0 0
  %833 = vmatpush1.bf16.msra.mxu0 %v740
  %834 = vmatprep.subr.bf16.mxu0 0
  %835 = vmatpush1.bf16.msra.mxu0 %v741
  %836 = vmatprep.subr.bf16.mxu0 0
  %837 = vmatpush1.bf16.msra.mxu0 %v742
  %838 = vmatprep.subr.bf16.mxu0 0
  %839 = vmatpush1.bf16.msra.mxu0 %v743
  %840 = vmatprep.subr.bf16.mxu0 0
  %841 = vmatpush1.bf16.msra.mxu0 %v744
  %842 = vmatprep.subr.bf16.mxu0 0
  %843 = vmatpush1.bf16.msra.mxu0 %v745
  %844 = vmatprep.subr.bf16.mxu0 0
  %845 = vmatpush1.bf16.msra.mxu0 %v746
  %846 = vmatprep.subr.bf16.mxu0 0
  %847 = vmatpush1.bf16.msra.mxu0 %v747
  %848 = vmatprep.subr.bf16.mxu0 0
  %849 = vmatpush1.bf16.msra.mxu0 %v748
  %850 = vmatprep.subr.bf16.mxu0 0
  %851 = vmatpush1.bf16.msra.mxu0 %v749
  %852 = vmatprep.subr.bf16.mxu0 0
  %853 = vmatpush1.bf16.msra.mxu0 %v750
  %854 = vmatprep.subr.bf16.mxu0 0
  %855 = vmatpush1.bf16.msra.mxu0 %v751
  %856 = vmatprep.mubr.bf16.mxu0 %v520
  %857 = vmatmul.mubr.bf16.gmra.mrb[0].mxu0 %v519
  %v858 = vpop.f32.mrb[0].mxu0
  %v859 = vadd.f32 %v819, %v858
  %v860 = vpop.f32.mrb[0].mxu0
  %v861 = vpop.f32.mrb[0].mxu0
  %v862 = vpop.f32.mrb[0].mxu0
  %863 = vdwg.mxu0
  %vm864 = vcmask 31744
  %865 = vst.msk [vmem:[%s5] sm:$0xff] %vm864, %v859
  // Predicated region
  $region22: #{dqn_forward.7} parent=0 // pred_check
    _
  $region23: #{dqn_forward.7} parent=0 // pred_check_branch
    %867 = sbr.rel (0) target = $region25
  $region24: #{dqn_forward.7} parent=0 // pred_region
    _
  $region25: #{dqn_forward.7} parent=0 // pred_fallthru
    _
  // Predicated region
  $region26: #{dqn_forward.7} parent=0 // pred_check
    _
  $region27: #{dqn_forward.7} parent=0 // pred_check_branch
    %869 = sbr.rel (0) target = $region29
  $region28: #{dqn_forward.7} parent=0 // pred_region
    _
  $region29: #{dqn_forward.7} parent=0 // pred_fallthru
    _

// kernel: dqn_forward.4
$region0: #{dqn_forward.4}
  #allocation0 [shape = 'u32[]', space=smem, size = 0x4, offset = 0x4, fixed_abs, tag = 'smem constant byte address 0x4 - core index']
  #allocation1 [shape = 'u32[144,128]{1,0:T(1,128)}', space=vmem, size = 0x12000, scoped, tag = 'internal scratch']
  %s0 = inlined_call_operand.vmem [shape: bf16[2,11,11,16], index: 0, kind: input, shape index: {}]
  %s1 = inlined_call_operand.vmem [shape: bf16[64,32], index: 1, kind: input, shape index: {}]
  %s2 = inlined_call_operand.vmem [shape: f32[1,32], index: 2, kind: input, shape index: {}]
  %s3 = inlined_call_operand.vmem [shape: bf16[2,10,10,32], index: 3, kind: output, shape index: {}]
  %s4 = sld [smem:[#allocation0]]
  $region45: #{dqn_forward.4} parent=0
    _
  %s6 = ssub.s32 1, %s4
  %s7 = scalar_select 0, %s6, %s4
  loop: start=0, step=1, limit=4
  $region2: #{dqn_forward.4} parent=0 // loop_pre_header
    _
  $region3: #{dqn_forward.4} parent=0 // loop_header
    %s9 = sphi 0, %s13
    %p10 = scmp.ge.s32.totalorder %s9, 4
    %s19 = sphi 0, %s21
    %s22 = sphi 0, %s19
    %s23 = sphi 0, %s22
    %s39 = sphi 0, %s23
    %s43 = sphi 0, %s43
    %s45 = sphi 0, %s43
    %s46 = sphi 0, %s45
    %s60 = sphi 0, %s46
    %s64 = sphi 0, %s64
    %s66 = sphi 0, %s64
    %s67 = sphi 0, %s66
    %s81 = sphi 0, %s67
    %s87 = sphi 0, %s89
    %s90 = sphi 0, %s87
    %s91 = sphi 0, %s90
    %s107 = sphi 0, %s91
  $region4: #{dqn_forward.4} parent=0 // loop_header_branch
    %12 = sbr.rel (%p10) target = $region8
  $region5: #{dqn_forward.4} parent=0 // loop_body
    %s14 = ssub.s32 %s9, 1
    %s15 = ssub.s32 %s9, 2
    %s16 = sadd.s32 %s9, 1
    %s17 = ssub.s32 %s9, %s16
    %p18 = scmp.eq.s32.totalorder %s17, 0
    %s20 = sadd.s32 %s19, 1
    %s21 = scalar_select %p18, %s19, %s20
    %p24 = pneg %p18
    %p25 = scmp.eq.s32.totalorder %s9, 1
    %p26 = por %p24, %p25
    %p27 = scmp.ne.s32.totalorder %s19, %s22
    %p28 = scmp.eq.s32.totalorder %s9, 0
    %p29 = por %p27, %p28
    %p30 = scmp.ne.s32.totalorder %s19, %s22
    %p31 = scmp.eq.s32.totalorder %s14, 1
    %p32 = por %p30, %p31
    %p33 = scmp.ne.s32.totalorder %s22, %s23
    %p34 = scmp.eq.s32.totalorder %s14, 0
    %p35 = por %p33, %p34
    %p36 = scmp.ne.s32.totalorder %s22, %s23
    %p37 = scmp.eq.s32.totalorder %s15, 1
    %p38 = por %p36, %p37
    %p40 = scmp.ne.s32.totalorder %s23, %s39
    %p41 = scmp.eq.s32.totalorder %s15, 0
    %p42 = por %p40, %p41
    %s44 = sadd.s32 %s43, 1
    %p47 = scmp.eq.s32.totalorder %s9, 1
    %p48 = scmp.ne.s32.totalorder %s43, %s45
    %p49 = scmp.eq.s32.totalorder %s9, 0
    %p50 = por %p48, %p49
    %p51 = scmp.ne.s32.totalorder %s43, %s45
    %p52 = scmp.eq.s32.totalorder %s14, 1
    %p53 = por %p51, %p52
    %p54 = scmp.ne.s32.totalorder %s45, %s46
    %p55 = scmp.eq.s32.totalorder %s14, 0
    %p56 = por %p54, %p55
    %p57 = scmp.ne.s32.totalorder %s45, %s46
    %p58 = scmp.eq.s32.totalorder %s15, 1
    %p59 = por %p57, %p58
    %p61 = scmp.ne.s32.totalorder %s46, %s60
    %p62 = scmp.eq.s32.totalorder %s15, 0
    %p63 = por %p61, %p62
    %s65 = sadd.s32 %s64, 1
    %p68 = scmp.eq.s32.totalorder %s9, 1
    %p69 = scmp.ne.s32.totalorder %s64, %s66
    %p70 = scmp.eq.s32.totalorder %s9, 0
    %p71 = por %p69, %p70
    %p72 = scmp.ne.s32.totalorder %s64, %s66
    %p73 = scmp.eq.s32.totalorder %s14, 1
    %p74 = por %p72, %p73
    %p75 = scmp.ne.s32.totalorder %s66, %s67
    %p76 = scmp.eq.s32.totalorder %s14, 0
    %p77 = por %p75, %p76
    %p78 = scmp.ne.s32.totalorder %s66, %s67
    %p79 = scmp.eq.s32.totalorder %s15, 1
    %p80 = por %p78, %p79
    %p82 = scmp.ne.s32.totalorder %s67, %s81
    %p83 = scmp.eq.s32.totalorder %s15, 0
    %p84 = por %p82, %p83
    %s85 = ssub.s32 %s9, %s16
    %p86 = scmp.eq.s32.totalorder %s85, 0
    %s88 = sadd.s32 %s87, 1
    %s89 = scalar_select %p86, %s87, %s88
    %p92 = pneg %p86
    %p93 = scmp.eq.s32.totalorder %s9, 1
    %p94 = por %p92, %p93
    %p95 = scmp.ne.s32.totalorder %s87, %s90
    %p96 = scmp.eq.s32.totalorder %s9, 0
    %p97 = por %p95, %p96
    %p98 = scmp.ne.s32.totalorder %s87, %s90
    %p99 = scmp.eq.s32.totalorder %s14, 1
    %p100 = por %p98, %p99
    %p101 = scmp.ne.s32.totalorder %s90, %s91
    %p102 = scmp.eq.s32.totalorder %s14, 0
    %p103 = por %p101, %p102
    %p104 = scmp.ne.s32.totalorder %s90, %s91
    %p105 = scmp.eq.s32.totalorder %s15, 1
    %p106 = por %p104, %p105
    %p108 = scmp.ne.s32.totalorder %s91, %s107
    %p109 = scmp.eq.s32.totalorder %s15, 0
    %p110 = por %p108, %p109
    %p111 = scmp.le.s32.totalorder 1, %s9
    %p112 = scmp.lt.s32.totalorder %s9, 3
    %p113 = pnand %p111, %p112
    %p114 = pneg %p113
    // Predicated region
    $region9: #{dqn_forward.4} parent=5 // pred_check
      _
    $region10: #{dqn_forward.4} parent=5 // pred_check_branch
      %116 = sbr.rel (%p113) target = $region12
    $region11: #{dqn_forward.4} parent=5 // pred_region
      %s117 = ssub.s32 %s9, 1
      // Predicated region
      $region13: #{dqn_forward.4} parent=11 // pred_check
        %p118 = pneg %p56
      $region14: #{dqn_forward.4} parent=11 // pred_check_branch
        %120 = sbr.rel (%p118) target = $region16
      $region15: #{dqn_forward.4} parent=11 // pred_region
        _
      $region16: #{dqn_forward.4} parent=11 // pred_fallthru
        _
      // Predicated region
      $region17: #{dqn_forward.4} parent=11 // pred_check
        %p121 = pneg %p77
      $region18: #{dqn_forward.4} parent=11 // pred_check_branch
        %123 = sbr.rel (%p121) target = $region20
      $region19: #{dqn_forward.4} parent=11 // pred_region
        _
      $region20: #{dqn_forward.4} parent=11 // pred_fallthru
        _
    $region12: #{dqn_forward.4} parent=5 // pred_fallthru
      _
    %p124 = scmp.lt.s32.totalorder %s9, 2
    // Predicated region
    $region21: #{dqn_forward.4} parent=5 // pred_check
      %p125 = pneg %p124
    $region22: #{dqn_forward.4} parent=5 // pred_check_branch
      %127 = sbr.rel (%p125) target = $region24
    $region23: #{dqn_forward.4} parent=5 // pred_region
      // Predicated region
      $region25: #{dqn_forward.4} parent=23 // pred_check
        %p128 = pneg %p29
      $region26: #{dqn_forward.4} parent=23 // pred_check_branch
        %130 = sbr.rel (%p128) target = $region28
      $region27: #{dqn_forward.4} parent=23 // pred_region
        %p131 = scmp.lt.s32.totalorder %s9, 1
        %s132 = scalar_select %p131, %s9, 1
        %s133 = smul.addr %s132, 22
        %s134 = smul.addr %s133, 4
        %s135 = scalar_lea.vmem %s0, %s134
      $region28: #{dqn_forward.4} parent=23 // pred_fallthru
        _
    $region24: #{dqn_forward.4} parent=5 // pred_fallthru
      _
    %p136 = scmp.le.s32.totalorder 1, %s9
    %p137 = scmp.lt.s32.totalorder %s9, 3
    %p138 = pnand %p136, %p137
    %p139 = pneg %p138
    // Predicated region
    $region29: #{dqn_forward.4} parent=5 // pred_check
      _
    $region30: #{dqn_forward.4} parent=5 // pred_check_branch
      %141 = sbr.rel (%p138) target = $region32
    $region31: #{dqn_forward.4} parent=5 // pred_region
      %s142 = ssub.s32 %s9, 1
      %p143 = scmp.lt.s32.totalorder %s14, 1
      %s144 = scalar_select %p143, %s14, 1
      %s145 = smul.addr %s144, 22
      %s146 = smul.addr %s145, 4
      %s147 = scalar_lea.vmem %s0, %s146
      %p148 = pneg %p35
      %p149 = pneg %p32
      %p150 = pneg %p56
      %p151 = pneg %p53
      %p152 = pneg %p77
      %p153 = pneg %p74
      %p154 = pneg %p103
      %p155 = pneg %p100
      %p156 = scmp.lt.s32.totalorder %s14, 1
      %s157 = scalar_select %p156, %s14, 1
      %s158 = smul.addr %s157, 20
      %s159 = smul.addr %s158, 4
      %s160 = scalar_lea.vmem %s3, %s159
      %p161 = scmp.lt.s32.totalorder %s14, 1
      %s162 = scalar_select %p161, %s14, 1
      %s163 = smul.addr %s162, 22
      %s164 = smul.addr %s163, 4
      %s165 = scalar_lea.vmem %s0, %s164
      %p166 = scmp.lt.s32.totalorder %s14, 1
      %s167 = scalar_select %p166, %s14, 1
      %s168 = smul.addr %s167, 20
      %s169 = smul.addr %s168, 4
      %s170 = scalar_lea.vmem %s3, %s169
      %v172 = vld [vmem:[%s2] sm:$0x1]
      %v173 = vld [vmem:[%s165] sm:$0xf]
      %v174 = vld [vmem:[%s165 + $0x4] sm:$0x1]
      %v175 = vld [vmem:[%s1] sm:$0xf]
      %v176 = vld [vmem:[%s1 + $0x4] sm:$0xf]
      %v177 = vld [vmem:[%s165 + $0x4] sm:$0x3]
      %v178 = vld [vmem:[%s1 + $0x8] sm:$0xf]
      %v179 = vld [vmem:[%s1 + $0xc] sm:$0xf]
      %v182 = vunpack.c.l.b16 %v173
      %v183 = vunpack.c.l.b16 %v177
      %v184 = vpack.c.b16 %v183, %v182
      %v186 = vshrl.u32 %v184, 16
      %v188 = vshll.u32 %v184, 16
      %v190 = vrot.slane %v188, 1
      %v191 = vor.u32 %v186, %v190
      %v194 = vunpack.c.l.b16 %v178
      %v195 = vunpack.c.l.b16 %v179
      %v196 = vpack.c.b16 %v195, %v194
      %vm198 = vcmask 130048
      %v200 = vsel %vm198, %v191, 0
      %202 = vmatprep.subr.bf16.mxu0 0
      %203 = vmatpush1.bf16.msra.mxu0 %v196
      %204 = vmatprep.subr.bf16.mxu0 0
      %205 = vmatpush1.bf16.msra.mxu0 0
      %206 = vmatprep.subr.bf16.mxu0 0
      %207 = vmatpush1.bf16.msra.mxu0 0
      %208 = vmatprep.subr.bf16.mxu0 0
      %209 = vmatpush1.bf16.msra.mxu0 0
      %210 = vmatprep.subr.bf16.mxu0 0
      %211 = vmatpush1.bf16.msra.mxu0 0
      %212 = vmatprep.subr.bf16.mxu0 0
      %213 = vmatpush1.bf16.msra.mxu0 0
      %214 = vmatprep.subr.bf16.mxu0 0
      %215 = vmatpush1.bf16.msra.mxu0 0
      %216 = vmatprep.subr.bf16.mxu0 0
      %217 = vmatpush1.bf16.msra.mxu0 0
      %218 = vmatprep.subr.bf16.mxu0 0
      %219 = vmatpush1.bf16.msra.mxu0 0
      %220 = vmatprep.subr.bf16.mxu0 0
      %221 = vmatpush1.bf16.msra.mxu0 0
      %222 = vmatprep.subr.bf16.mxu0 0
      %223 = vmatpush1.bf16.msra.mxu0 0
      %224 = vmatprep.subr.bf16.mxu0 0
      %225 = vmatpush1.bf16.msra.mxu0 0
      %226 = vmatprep.subr.bf16.mxu0 0
      %227 = vmatpush1.bf16.msra.mxu0 0
      %228 = vmatprep.subr.bf16.mxu0 0
      %229 = vmatpush1.bf16.msra.mxu0 0
      %230 = vmatprep.subr.bf16.mxu0 0
      %231 = vmatpush1.bf16.msra.mxu0 0
      %232 = vmatprep.subr.bf16.mxu0 0
      %233 = vmatpush1.bf16.msra.mxu0 0
      %234 = vmatprep.mubr.bf16.mxu0 0
      %235 = vmatmul.mubr.bf16.gmra.mrb[0].mxu0 %v200
      %v236 = vpop.f32.mrb[0].mxu0
      %v237 = vadd.f32 0.0, %v236
      %v238 = vpop.f32.mrb[0].mxu0
      %v239 = vpop.f32.mrb[0].mxu0
      %v240 = vadd.f32 0.0, %v239
      %v241 = vpop.f32.mrb[0].mxu0
      %242 = vdwg.mxu0
      %v244 = vunpack.c.l.b16 %v174
      %v245 = vpack.c.b16 %v244, %v182
      %v248 = vunpack.c.l.b16 %v175
      %v249 = vunpack.c.l.b16 %v176
      %v250 = vpack.c.b16 %v249, %v248
      %v253 = vsel %vm198, %v245, 0
      %255 = vmatprep.subr.bf16.mxu0 0
      %256 = vmatpush1.bf16.msra.mxu0 %v250
      %257 = vmatprep.subr.bf16.mxu0 0
      %258 = vmatpush1.bf16.msra.mxu0 0
      %259 = vmatprep.subr.bf16.mxu0 0
      %260 = vmatpush1.bf16.msra.mxu0 0
      %261 = vmatprep.subr.bf16.mxu0 0
      %262 = vmatpush1.bf16.msra.mxu0 0
      %263 = vmatprep.subr.bf16.mxu0 0
      %264 = vmatpush1.bf16.msra.mxu0 0
      %265 = vmatprep.subr.bf16.mxu0 0
      %266 = vmatpush1.bf16.msra.mxu0 0
      %267 = vmatprep.subr.bf16.mxu0 0
      %268 = vmatpush1.bf16.msra.mxu0 0
      %269 = vmatprep.subr.bf16.mxu0 0
      %270 = vmatpush1.bf16.msra.mxu0 0
      %271 = vmatprep.subr.bf16.mxu0 0
      %272 = vmatpush1.bf16.msra.mxu0 0
      %273 = vmatprep.subr.bf16.mxu0 0
      %274 = vmatpush1.bf16.msra.mxu0 0
      %275 = vmatprep.subr.bf16.mxu0 0
      %276 = vmatpush1.bf16.msra.mxu0 0
      %277 = vmatprep.subr.bf16.mxu0 0
      %278 = vmatpush1.bf16.msra.mxu0 0
      %279 = vmatprep.subr.bf16.mxu0 0
      %280 = vmatpush1.bf16.msra.mxu0 0
      %281 = vmatprep.subr.bf16.mxu0 0
      %282 = vmatpush1.bf16.msra.mxu0 0
      %283 = vmatprep.subr.bf16.mxu0 0
      %284 = vmatpush1.bf16.msra.mxu0 0
      %285 = vmatprep.subr.bf16.mxu0 0
      %286 = vmatpush1.bf16.msra.mxu0 0
      %287 = vmatprep.mubr.bf16.mxu0 0
      %288 = vmatmul.mubr.bf16.gmra.mrb[0].mxu0 %v253
      %v289 = vpop.f32.mrb[0].mxu0
      %v290 = vadd.f32 %v237, %v289
      %v291 = vpop.f32.mrb[0].mxu0
      %v292 = vpop.f32.mrb[0].mxu0
      %v293 = vadd.f32 %v240, %v292
      %v294 = vpop.f32.mrb[0].mxu0
      %295 = vdwg.mxu0
      %s296 = scalar_lea.vmem %s165, 8
      %v297 = vld [vmem:[%s296] sm:$0xf]
      %v298 = vld [vmem:[%s296 + $0x4] sm:$0x1]
      %v299 = vld [vmem:[%s1 + $0x10] sm:$0xf]
      %v300 = vld [vmem:[%s1 + $0x14] sm:$0xf]
      %v303 = vunpack.c.l.b16 %v297
      %v304 = vunpack.c.l.b16 %v298
      %v305 = vpack.c.b16 %v304, %v303
      %v308 = vunpack.c.l.b16 %v299
      %v309 = vunpack.c.l.b16 %v300
      %v310 = vpack.c.b16 %v309, %v308
      %v313 = vsel %vm198, %v305, 0
      %315 = vmatprep.subr.bf16.mxu0 0
      %316 = vmatpush1.bf16.msra.mxu0 %v310
      %317 = vmatprep.subr.bf16.mxu0 0
      %318 = vmatpush1.bf16.msra.mxu0 0
      %319 = vmatprep.subr.bf16.mxu0 0
      %320 = vmatpush1.bf16.msra.mxu0 0
      %321 = vmatprep.subr.bf16.mxu0 0
      %322 = vmatpush1.bf16.msra.mxu0 0
      %323 = vmatprep.subr.bf16.mxu0 0
      %324 = vmatpush1.bf16.msra.mxu0 0
      %325 = vmatprep.subr.bf16.mxu0 0
      %326 = vmatpush1.bf16.msra.mxu0 0
      %327 = vmatprep.subr.bf16.mxu0 0
      %328 = vmatpush1.bf16.msra.mxu0 0
      %329 = vmatprep.subr.bf16.mxu0 0
      %330 = vmatpush1.bf16.msra.mxu0 0
      %331 = vmatprep.subr.bf16.mxu0 0
      %332 = vmatpush1.bf16.msra.mxu0 0
      %333 = vmatprep.subr.bf16.mxu0 0
      %334 = vmatpush1.bf16.msra.mxu0 0
      %335 = vmatprep.subr.bf16.mxu0 0
      %336 = vmatpush1.bf16.msra.mxu0 0
      %337 = vmatprep.subr.bf16.mxu0 0
      %338 = vmatpush1.bf16.msra.mxu0 0
      %339 = vmatprep.subr.bf16.mxu0 0
      %340 = vmatpush1.bf16.msra.mxu0 0
      %341 = vmatprep.subr.bf16.mxu0 0
      %342 = vmatpush1.bf16.msra.mxu0 0
      %343 = vmatprep.subr.bf16.mxu0 0
      %344 = vmatpush1.bf16.msra.mxu0 0
      %345 = vmatprep.subr.bf16.mxu0 0
      %346 = vmatpush1.bf16.msra.mxu0 0
      %347 = vmatprep.mubr.bf16.mxu0 0
      %348 = vmatmul.mubr.bf16.gmra.mrb[0].mxu0 %v313
      %v349 = vpop.f32.mrb[0].mxu0
      %v350 = vadd.f32 0.0, %v349
      %v351 = vpop.f32.mrb[0].mxu0
      %v352 = vpop.f32.mrb[0].mxu0
      %v353 = vadd.f32 0.0, %v352
      %v354 = vpop.f32.mrb[0].mxu0
      %355 = vdwg.mxu0
      %v356 = vadd.f32 %v290, %v350
      %v357 = vadd.f32 %v293, %v353
      %v358 = vld [vmem:[%s296 + $0x4] sm:$0x3]
      %v359 = vld [vmem:[%s1 + $0x18] sm:$0xf]
      %v360 = vld [vmem:[%s1 + $0x1c] sm:$0xf]
      %v362 = vunpack.c.l.b16 %v358
      %v363 = vpack.c.b16 %v362, %v303
      %v365 = vshrl.u32 %v363, 16
      %v367 = vshll.u32 %v363, 16
      %v369 = vrot.slane %v367, 1
      %v370 = vor.u32 %v365, %v369
      %v373 = vunpack.c.l.b16 %v359
      %v374 = vunpack.c.l.b16 %v360
      %v375 = vpack.c.b16 %v374, %v373
      %v378 = vsel %vm198, %v370, 0
      %380 = vmatprep.subr.bf16.mxu0 0
      %381 = vmatpush1.bf16.msra.mxu0 %v375
      %382 = vmatprep.subr.bf16.mxu0 0
      %383 = vmatpush1.bf16.msra.mxu0 0
      %384 = vmatprep.subr.bf16.mxu0 0
      %385 = vmatpush1.bf16.msra.mxu0 0
      %386 = vmatprep.subr.bf16.mxu0 0
      %387 = vmatpush1.bf16.msra.mxu0 0
      %388 = vmatprep.subr.bf16.mxu0 0
      %389 = vmatpush1.bf16.msra.mxu0 0
      %390 = vmatprep.subr.bf16.mxu0 0
      %391 = vmatpush1.bf16.msra.mxu0 0
      %392 = vmatprep.subr.bf16.mxu0 0
      %393 = vmatpush1.bf16.msra.mxu0 0
      %394 = vmatprep.subr.bf16.mxu0 0
      %395 = vmatpush1.bf16.msra.mxu0 0
      %396 = vmatprep.subr.bf16.mxu0 0
      %397 = vmatpush1.bf16.msra.mxu0 0
      %398 = vmatprep.subr.bf16.mxu0 0
      %399 = vmatpush1.bf16.msra.mxu0 0
      %400 = vmatprep.subr.bf16.mxu0 0
      %401 = vmatpush1.bf16.msra.mxu0 0
      %402 = vmatprep.subr.bf16.mxu0 0
      %403 = vmatpush1.bf16.msra.mxu0 0
      %404 = vmatprep.subr.bf16.mxu0 0
      %405 = vmatpush1.bf16.msra.mxu0 0
      %406 = vmatprep.subr.bf16.mxu0 0
      %407 = vmatpush1.bf16.msra.mxu0 0
      %408 = vmatprep.subr.bf16.mxu0 0
      %409 = vmatpush1.bf16.msra.mxu0 0
      %410 = vmatprep.subr.bf16.mxu0 0
      %411 = vmatpush1.bf16.msra.mxu0 0
      %412 = vmatprep.mubr.bf16.mxu0 0
      %413 = vmatmul.mubr.bf16.gmra.mrb[0].mxu0 %v378
      %v414 = vpop.f32.mrb[0].mxu0
      %v415 = vadd.f32 0.0, %v414
      %v416 = vpop.f32.mrb[0].mxu0
      %v417 = vpop.f32.mrb[0].mxu0
      %v418 = vadd.f32 0.0, %v417
      %v419 = vpop.f32.mrb[0].mxu0
      %420 = vdwg.mxu0
      %v421 = vadd.f32 %v356, %v415
      %v422 = vadd.f32 %v357, %v418
      %v424 = vlaneseq
      %v425 = vshrl.u32 %v424, 7
      %v426 = vsub.s32 0, %v425
      %v427 = vrot.slane %v172, %v426
      %v429 = vadd.f32 %v421, %v427
      %v430 = vadd.f32 %v422, %v427
      %v431 = vmax.f32 %v429, 0.0
      %v432 = vmax.f32 %v430, 0.0
      %v433 = vpack.c.bf16 %v432, %v431
      %v435 = vunpack.c.l.b16 %v433
      %v436 = vunpack.c.h.b16 %v433
      %v437 = vpack.c.b16 %v435, %v435
      %v438 = vpack.c.b16 %v436, %v436
      %vm441 = vcmask 257024
      %442 = vst.msk [vmem:[%s170] sm:$0xf] %vm441, %v437
      %vm443 = vcmask 253952
      %444 = vst.msk [vmem:[%s170 + $0x4] sm:$0x1] %vm443, %v438
      %v445 = vld [vmem:[%s296] sm:$0xf]
      %v446 = vld [vmem:[%s296 + $0x4] sm:$0x1]
      %v447 = vld [vmem:[%s1] sm:$0xf]
      %v448 = vld [vmem:[%s1 + $0x4] sm:$0xf]
      %v449 = vld [vmem:[%s296 + $0x4] sm:$0x3]
      %v450 = vld [vmem:[%s1 + $0x8] sm:$0xf]
      %v451 = vld [vmem:[%s1 + $0xc] sm:$0xf]
      %v454 = vunpack.c.l.b16 %v445
      %v455 = vunpack.c.l.b16 %v449
      %v456 = vpack.c.b16 %v455, %v454
      %v458 = vshrl.u32 %v456, 16
      %v460 = vshll.u32 %v456, 16
      %v462 = vrot.slane %v460, 1
      %v463 = vor.u32 %v458, %v462
      %v466 = vunpack.c.l.b16 %v450
      %v467 = vunpack.c.l.b16 %v451
      %v468 = vpack.c.b16 %v467, %v466
      %v471 = vsel %vm198, %v463, 0
      %473 = vmatprep.subr.bf16.mxu0 0
      %474 = vmatpush1.bf16.msra.mxu0 %v468
      %475 = vmatprep.subr.bf16.mxu0 0
      %476 = vmatpush1.bf16.msra.mxu0 0
      %477 = vmatprep.subr.bf16.mxu0 0
      %478 = vmatpush1.bf16.msra.mxu0 0
      %479 = vmatprep.subr.bf16.mxu0 0
      %480 = vmatpush1.bf16.msra.mxu0 0
      %481 = vmatprep.subr.bf16.mxu0 0
      %482 = vmatpush1.bf16.msra.mxu0 0
      %483 = vmatprep.subr.bf16.mxu0 0
      %484 = vmatpush1.bf16.msra.mxu0 0
      %485 = vmatprep.subr.bf16.mxu0 0
      %486 = vmatpush1.bf16.msra.mxu0 0
      %487 = vmatprep.subr.bf16.mxu0 0
      %488 = vmatpush1.bf16.msra.mxu0 0
      %489 = vmatprep.subr.bf16.mxu0 0
      %490 = vmatpush1.bf16.msra.mxu0 0
      %491 = vmatprep.subr.bf16.mxu0 0
      %492 = vmatpush1.bf16.msra.mxu0 0
      %493 = vmatprep.subr.bf16.mxu0 0
      %494 = vmatpush1.bf16.msra.mxu0 0
      %495 = vmatprep.subr.bf16.mxu0 0
      %496 = vmatpush1.bf16.msra.mxu0 0
      %497 = vmatprep.subr.bf16.mxu0 0
      %498 = vmatpush1.bf16.msra.mxu0 0
      %499 = vmatprep.subr.bf16.mxu0 0
      %500 = vmatpush1.bf16.msra.mxu0 0
      %501 = vmatprep.subr.bf16.mxu0 0
      %502 = vmatpush1.bf16.msra.mxu0 0
      %503 = vmatprep.subr.bf16.mxu0 0
      %504 = vmatpush1.bf16.msra.mxu0 0
      %505 = vmatprep.mubr.bf16.mxu0 0
      %506 = vmatmul.mubr.bf16.gmra.mrb[0].mxu0 %v471
      %v507 = vpop.f32.mrb[0].mxu0
      %v508 = vadd.f32 0.0, %v507
      %v509 = vpop.f32.mrb[0].mxu0
      %v510 = vpop.f32.mrb[0].mxu0
      %v511 = vadd.f32 0.0, %v510
      %v512 = vpop.f32.mrb[0].mxu0
      %513 = vdwg.mxu0
      %v515 = vunpack.c.l.b16 %v446
      %v516 = vpack.c.b16 %v515, %v454
      %v519 = vunpack.c.l.b16 %v447
      %v520 = vunpack.c.l.b16 %v448
      %v521 = vpack.c.b16 %v520, %v519
      %v524 = vsel %vm198, %v516, 0
      %526 = vmatprep.subr.bf16.mxu0 0
      %527 = vmatpush1.bf16.msra.mxu0 %v521
      %528 = vmatprep.subr.bf16.mxu0 0
      %529 = vmatpush1.bf16.msra.mxu0 0
      %530 = vmatprep.subr.bf16.mxu0 0
      %531 = vmatpush1.bf16.msra.mxu0 0
      %532 = vmatprep.subr.bf16.mxu0 0
      %533 = vmatpush1.bf16.msra.mxu0 0
      %534 = vmatprep.subr.bf16.mxu0 0
      %535 = vmatpush1.bf16.msra.mxu0 0
      %536 = vmatprep.subr.bf16.mxu0 0
      %537 = vmatpush1.bf16.msra.mxu0 0
      %538 = vmatprep.subr.bf16.mxu0 0
      %539 = vmatpush1.bf16.msra.mxu0 0
      %540 = vmatprep.subr.bf16.mxu0 0
      %541 = vmatpush1.bf16.msra.mxu0 0
      %542 = vmatprep.subr.bf16.mxu0 0
      %543 = vmatpush1.bf16.msra.mxu0 0
      %544 = vmatprep.subr.bf16.mxu0 0
      %545 = vmatpush1.bf16.msra.mxu0 0
      %546 = vmatprep.subr.bf16.mxu0 0
      %547 = vmatpush1.bf16.msra.mxu0 0
      %548 = vmatprep.subr.bf16.mxu0 0
      %549 = vmatpush1.bf16.msra.mxu0 0
      %550 = vmatprep.subr.bf16.mxu0 0
      %551 = vmatpush1.bf16.msra.mxu0 0
      %552 = vmatprep.subr.bf16.mxu0 0
      %553 = vmatpush1.bf16.msra.mxu0 0
      %554 = vmatprep.subr.bf16.mxu0 0
      %555 = vmatpush1.bf16.msra.mxu0 0
      %556 = vmatprep.subr.bf16.mxu0 0
      %557 = vmatpush1.bf16.msra.mxu0 0
      %558 = vmatprep.mubr.bf16.mxu0 0
      %559 = vmatmul.mubr.bf16.gmra.mrb[0].mxu0 %v524
      %v560 = vpop.f32.mrb[0].mxu0
      %v561 = vadd.f32 %v508, %v560
      %v562 = vpop.f32.mrb[0].mxu0
      %v563 = vpop.f32.mrb[0].mxu0
      %v564 = vadd.f32 %v511, %v563
      %v565 = vpop.f32.mrb[0].mxu0
      %566 = vdwg.mxu0
      %s567 = scalar_lea.vmem %s165, 16
      %v568 = vld [vmem:[%s567] sm:$0xf]
      %v569 = vld [vmem:[%s567 + $0x4] sm:$0x1]
      %v570 = vld [vmem:[%s1 + $0x10] sm:$0xf]
      %v571 = vld [vmem:[%s1 + $0x14] sm:$0xf]
      %v574 = vunpack.c.l.b16 %v568
      %v575 = vunpack.c.l.b16 %v569
      %v576 = vpack.c.b16 %v575, %v574
      %v579 = vunpack.c.l.b16 %v570
      %v580 = vunpack.c.l.b16 %v571
      %v581 = vpack.c.b16 %v580, %v579
      %v584 = vsel %vm198, %v576, 0
      %586 = vmatprep.subr.bf16.mxu0 0
      %587 = vmatpush1.bf16.msra.mxu0 %v581
      %588 = vmatprep.subr.bf16.mxu0 0
      %589 = vmatpush1.bf16.msra.mxu0 0
      %590 = vmatprep.subr.bf16.mxu0 0
      %591 = vmatpush1.bf16.msra.mxu0 0
      %592 = vmatprep.subr.bf16.mxu0 0
      %593 = vmatpush1.bf16.msra.mxu0 0
      %594 = vmatprep.subr.bf16.mxu0 0
      %595 = vmatpush1.bf16.msra.mxu0 0
      %596 = vmatprep.subr.bf16.mxu0 0
      %597 = vmatpush1.bf16.msra.mxu0 0
      %598 = vmatprep.subr.bf16.mxu0 0
      %599 = vmatpush1.bf16.msra.mxu0 0
      %600 = vmatprep.subr.bf16.mxu0 0
      %601 = vmatpush1.bf16.msra.mxu0 0
      %602 = vmatprep.subr.bf16.mxu0 0
      %603 = vmatpush1.bf16.msra.mxu0 0
      %604 = vmatprep.subr.bf16.mxu0 0
      %605 = vmatpush1.bf16.msra.mxu0 0
      %606 = vmatprep.subr.bf16.mxu0 0
      %607 = vmatpush1.bf16.msra.mxu0 0
      %608 = vmatprep.subr.bf16.mxu0 0
      %609 = vmatpush1.bf16.msra.mxu0 0
      %610 = vmatprep.subr.bf16.mxu0 0
      %611 = vmatpush1.bf16.msra.mxu0 0
      %612 = vmatprep.subr.bf16.mxu0 0
      %613 = vmatpush1.bf16.msra.mxu0 0
      %614 = vmatprep.subr.bf16.mxu0 0
      %615 = vmatpush1.bf16.msra.mxu0 0
      %616 = vmatprep.subr.bf16.mxu0 0
      %617 = vmatpush1.bf16.msra.mxu0 0
      %618 = vmatprep.mubr.bf16.mxu0 0
      %619 = vmatmul.mubr.bf16.gmra.mrb[0].mxu0 %v584
      %v620 = vpop.f32.mrb[0].mxu0
      %v621 = vadd.f32 0.0, %v620
      %v622 = vpop.f32.mrb[0].mxu0
      %v623 = vpop.f32.mrb[0].mxu0
      %v624 = vadd.f32 0.0, %v623
      %v625 = vpop.f32.mrb[0].mxu0
      %626 = vdwg.mxu0
      %v627 = vadd.f32 %v561, %v621
      %v628 = vadd.f32 %v564, %v624
      %v629 = vld [vmem:[%s567 + $0x4] sm:$0x3]
      %v630 = vld [vmem:[%s1 + $0x18] sm:$0xf]
      %v631 = vld [vmem:[%s1 + $0x1c] sm:$0xf]
      %v633 = vunpack.c.l.b16 %v629
      %v634 = vpack.c.b16 %v633, %v574
      %v636 = vshrl.u32 %v634, 16
      %v638 = vshll.u32 %v634, 16
      %v640 = vrot.slane %v638, 1
      %v641 = vor.u32 %v636, %v640
      %v644 = vunpack.c.l.b16 %v630
      %v645 = vunpack.c.l.b16 %v631
      %v646 = vpack.c.b16 %v645, %v644
      %v649 = vsel %vm198, %v641, 0
      %651 = vmatprep.subr.bf16.mxu0 0
      %652 = vmatpush1.bf16.msra.mxu0 %v646
      %653 = vmatprep.subr.bf16.mxu0 0
      %654 = vmatpush1.bf16.msra.mxu0 0
      %655 = vmatprep.subr.bf16.mxu0 0
      %656 = vmatpush1.bf16.msra.mxu0 0
      %657 = vmatprep.subr.bf16.mxu0 0
      %658 = vmatpush1.bf16.msra.mxu0 0
      %659 = vmatprep.subr.bf16.mxu0 0
      %660 = vmatpush1.bf16.msra.mxu0 0
      %661 = vmatprep.subr.bf16.mxu0 0
      %662 = vmatpush1.bf16.msra.mxu0 0
      %663 = vmatprep.subr.bf16.mxu0 0
      %664 = vmatpush1.bf16.msra.mxu0 0
      %665 = vmatprep.subr.bf16.mxu0 0
      %666 = vmatpush1.bf16.msra.mxu0 0
      %667 = vmatprep.subr.bf16.mxu0 0
      %668 = vmatpush1.bf16.msra.mxu0 0
      %669 = vmatprep.subr.bf16.mxu0 0
      %670 = vmatpush1.bf16.msra.mxu0 0
      %671 = vmatprep.subr.bf16.mxu0 0
      %672 = vmatpush1.bf16.msra.mxu0 0
      %673 = vmatprep.subr.bf16.mxu0 0
      %674 = vmatpush1.bf16.msra.mxu0 0
      %675 = vmatprep.subr.bf16.mxu0 0
      %676 = vmatpush1.bf16.msra.mxu0 0
      %677 = vmatprep.subr.bf16.mxu0 0
      %678 = vmatpush1.bf16.msra.mxu0 0
      %679 = vmatprep.subr.bf16.mxu0 0
      %680 = vmatpush1.bf16.msra.mxu0 0
      %681 = vmatprep.subr.bf16.mxu0 0
      %682 = vmatpush1.bf16.msra.mxu0 0
      %683 = vmatprep.mubr.bf16.mxu0 0
      %684 = vmatmul.mubr.bf16.gmra.mrb[0].mxu0 %v649
      %v685 = vpop.f32.mrb[0].mxu0
      %v686 = vadd.f32 0.0, %v685
      %v687 = vpop.f32.mrb[0].mxu0
      %v688 = vpop.f32.mrb[0].mxu0
      %v689 = vadd.f32 0.0, %v688
      %v690 = vpop.f32.mrb[0].mxu0
      %691 = vdwg.mxu0
      %v692 = vadd.f32 %v627, %v686
      %v693 = vadd.f32 %v628, %v689
      %v694 = vadd.f32 %v692, %v427
      %v695 = vadd.f32 %v693, %v427
      %v696 = vmax.f32 %v694, 0.0
      %v697 = vmax.f32 %v695, 0.0
      %v698 = vpack.c.bf16 %v697, %v696
      %v700 = vunpack.c.l.b16 %v698
      %v701 = vunpack.c.h.b16 %v698
      %v702 = vpack.c.b16 %v700, %v700
      %v703 = vpack.c.b16 %v701, %v701
      %s706 = scalar_lea.vmem %s170, 8
      %707 = vst.msk [vmem:[%s706] sm:$0xf] %vm441, %v702
      %708 = vst.msk [vmem:[%s706 + $0x4] sm:$0x1] %vm443, %v703
      %v709 = vld [vmem:[%s567] sm:$0xf]
      %v710 = vld [vmem:[%s567 + $0x4] sm:$0x1]
      %v711 = vld [vmem:[%s1] sm:$0xf]
      %v712 = vld [vmem:[%s1 + $0x4] sm:$0xf]
      %v713 = vld [vmem:[%s567 + $0x4] sm:$0x3]
      %v714 = vld [vmem:[%s1 + $0x8] sm:$0xf]
      %v715 = vld [vmem:[%s1 + $0xc] sm:$0xf]
      %v718 = vunpack.c.l.b16 %v709
      %v719 = vunpack.c.l.b16 %v713
      %v720 = vpack.c.b16 %v719, %v718
      %v722 = vshrl.u32 %v720, 16
      %v724 = vshll.u32 %v720, 16
      %v726 = vrot.slane %v724, 1
      %v727 = vor.u32 %v722, %v726
      %v730 = vunpack.c.l.b16 %v714
      %v731 = vunpack.c.l.b16 %v715
      %v732 = vpack.c.b16 %v731, %v730
      %v735 = vsel %vm198, %v727, 0
      %737 = vmatprep.subr.bf16.mxu0 0
      %738 = vmatpush1.bf16.msra.mxu0 %v732
      %739 = vmatprep.subr.bf16.mxu0 0
      %740 = vmatpush1.bf16.msra.mxu0 0
      %741 = vmatprep.subr.bf16.mxu0 0
      %742 = vmatpush1.bf16.msra.mxu0 0
      %743 = vmatprep.subr.bf16.mxu0 0
      %744 = vmatpush1.bf16.msra.mxu0 0
      %745 = vmatprep.subr.bf16.mxu0 0
      %746 = vmatpush1.bf16.msra.mxu0 0
      %747 = vmatprep.subr.bf16.mxu0 0
      %748 = vmatpush1.bf16.msra.mxu0 0
      %749 = vmatprep.subr.bf16.mxu0 0
      %750 = vmatpush1.bf16.msra.mxu0 0
      %751 = vmatprep.subr.bf16.mxu0 0
      %752 = vmatpush1.bf16.msra.mxu0 0
      %753 = vmatprep.subr.bf16.mxu0 0
      %754 = vmatpush1.bf16.msra.mxu0 0
      %755 = vmatprep.subr.bf16.mxu0 0
      %756 = vmatpush1.bf16.msra.mxu0 0
      %757 = vmatprep.subr.bf16.mxu0 0
      %758 = vmatpush1.bf16.msra.mxu0 0
      %759 = vmatprep.subr.bf16.mxu0 0
      %760 = vmatpush1.bf16.msra.mxu0 0
      %761 = vmatprep.subr.bf16.mxu0 0
      %762 = vmatpush1.bf16.msra.mxu0 0
      %763 = vmatprep.subr.bf16.mxu0 0
      %764 = vmatpush1.bf16.msra.mxu0 0
      %765 = vmatprep.subr.bf16.mxu0 0
      %766 = vmatpush1.bf16.msra.mxu0 0
      %767 = vmatprep.subr.bf16.mxu0 0
      %768 = vmatpush1.bf16.msra.mxu0 0
      %769 = vmatprep.mubr.bf16.mxu0 0
      %770 = vmatmul.mubr.bf16.gmra.mrb[0].mxu0 %v735
      %v771 = vpop.f32.mrb[0].mxu0
      %v772 = vadd.f32 0.0, %v771
      %v773 = vpop.f32.mrb[0].mxu0
      %v774 = vpop.f32.mrb[0].mxu0
      %v775 = vadd.f32 0.0, %v774
      %v776 = vpop.f32.mrb[0].mxu0
      %777 = vdwg.mxu0
      %v779 = vunpack.c.l.b16 %v710
      %v780 = vpack.c.b16 %v779, %v718
      %v783 = vunpack.c.l.b16 %v711
      %v784 = vunpack.c.l.b16 %v712
      %v785 = vpack.c.b16 %v784, %v783
      %v788 = vsel %vm198, %v780, 0
      %790 = vmatprep.subr.bf16.mxu0 0
      %791 = vmatpush1.bf16.msra.mxu0 %v785
      %792 = vmatprep.subr.bf16.mxu0 0
      %793 = vmatpush1.bf16.msra.mxu0 0
      %794 = vmatprep.subr.bf16.mxu0 0
      %795 = vmatpush1.bf16.msra.mxu0 0
      %796 = vmatprep.subr.bf16.mxu0 0
      %797 = vmatpush1.bf16.msra.mxu0 0
      %798 = vmatprep.subr.bf16.mxu0 0
      %799 = vmatpush1.bf16.msra.mxu0 0
      %800 = vmatprep.subr.bf16.mxu0 0
      %801 = vmatpush1.bf16.msra.mxu0 0
      %802 = vmatprep.subr.bf16.mxu0 0
      %803 = vmatpush1.bf16.msra.mxu0 0
      %804 = vmatprep.subr.bf16.mxu0 0
      %805 = vmatpush1.bf16.msra.mxu0 0
      %806 = vmatprep.subr.bf16.mxu0 0
      %807 = vmatpush1.bf16.msra.mxu0 0
      %808 = vmatprep.subr.bf16.mxu0 0
      %809 = vmatpush1.bf16.msra.mxu0 0
      %810 = vmatprep.subr.bf16.mxu0 0
      %811 = vmatpush1.bf16.msra.mxu0 0
      %812 = vmatprep.subr.bf16.mxu0 0
      %813 = vmatpush1.bf16.msra.mxu0 0
      %814 = vmatprep.subr.bf16.mxu0 0
      %815 = vmatpush1.bf16.msra.mxu0 0
      %816 = vmatprep.subr.bf16.mxu0 0
      %817 = vmatpush1.bf16.msra.mxu0 0
      %818 = vmatprep.subr.bf16.mxu0 0
      %819 = vmatpush1.bf16.msra.mxu0 0
      %820 = vmatprep.subr.bf16.mxu0 0
      %821 = vmatpush1.bf16.msra.mxu0 0
      %822 = vmatprep.mubr.bf16.mxu0 0
      %823 = vmatmul.mubr.bf16.gmra.mrb[0].mxu0 %v788
      %v824 = vpop.f32.mrb[0].mxu0
      %v825 = vadd.f32 %v772, %v824
      %v826 = vpop.f32.mrb[0].mxu0
      %v827 = vpop.f32.mrb[0].mxu0
      %v828 = vadd.f32 %v775, %v827
      %v829 = vpop.f32.mrb[0].mxu0
      %830 = vdwg.mxu0
      %s831 = scalar_lea.vmem %s165, 24
      %v832 = vld [vmem:[%s831] sm:$0xf]
      %v833 = vld [vmem:[%s831 + $0x4] sm:$0x1]
      %v834 = vld [vmem:[%s1 + $0x10] sm:$0xf]
      %v835 = vld [vmem:[%s1 + $0x14] sm:$0xf]
      %v838 = vunpack.c.l.b16 %v832
      %v839 = vunpack.c.l.b16 %v833
      %v840 = vpack.c.b16 %v839, %v838
      %v843 = vunpack.c.l.b16 %v834
      %v844 = vunpack.c.l.b16 %v835
      %v845 = vpack.c.b16 %v844, %v843
      %v848 = vsel %vm198, %v840, 0
      %850 = vmatprep.subr.bf16.mxu0 0
      %851 = vmatpush1.bf16.msra.mxu0 %v845
      %852 = vmatprep.subr.bf16.mxu0 0
      %853 = vmatpush1.bf16.msra.mxu0 0
      %854 = vmatprep.subr.bf16.mxu0 0
      %855 = vmatpush1.bf16.msra.mxu0 0
      %856 = vmatprep.subr.bf16.mxu0 0
      %857 = vmatpush1.bf16.msra.mxu0 0
      %858 = vmatprep.subr.bf16.mxu0 0
      %859 = vmatpush1.bf16.msra.mxu0 0
      %860 = vmatprep.subr.bf16.mxu0 0
      %861 = vmatpush1.bf16.msra.mxu0 0
      %862 = vmatprep.subr.bf16.mxu0 0
      %863 = vmatpush1.bf16.msra.mxu0 0
      %864 = vmatprep.subr.bf16.mxu0 0
      %865 = vmatpush1.bf16.msra.mxu0 0
      %866 = vmatprep.subr.bf16.mxu0 0
      %867 = vmatpush1.bf16.msra.mxu0 0
      %868 = vmatprep.subr.bf16.mxu0 0
      %869 = vmatpush1.bf16.msra.mxu0 0
      %870 = vmatprep.subr.bf16.mxu0 0
      %871 = vmatpush1.bf16.msra.mxu0 0
      %872 = vmatprep.subr.bf16.mxu0 0
      %873 = vmatpush1.bf16.msra.mxu0 0
      %874 = vmatprep.subr.bf16.mxu0 0
      %875 = vmatpush1.bf16.msra.mxu0 0
      %876 = vmatprep.subr.bf16.mxu0 0
      %877 = vmatpush1.bf16.msra.mxu0 0
      %878 = vmatprep.subr.bf16.mxu0 0
      %879 = vmatpush1.bf16.msra.mxu0 0
      %880 = vmatprep.subr.bf16.mxu0 0
      %881 = vmatpush1.bf16.msra.mxu0 0
      %882 = vmatprep.mubr.bf16.mxu0 0
      %883 = vmatmul.mubr.bf16.gmra.mrb[0].mxu0 %v848
      %v884 = vpop.f32.mrb[0].mxu0
      %v885 = vadd.f32 0.0, %v884
      %v886 = vpop.f32.mrb[0].mxu0
      %v887 = vpop.f32.mrb[0].mxu0
      %v888 = vadd.f32 0.0, %v887
      %v889 = vpop.f32.mrb[0].mxu0
      %890 = vdwg.mxu0
      %v891 = vadd.f32 %v825, %v885
      %v892 = vadd.f32 %v828, %v888
      %v893 = vld [vmem:[%s831 + $0x4] sm:$0x3]
      %v894 = vld [vmem:[%s1 + $0x18] sm:$0xf]
      %v895 = vld [vmem:[%s1 + $0x1c] sm:$0xf]
      %v897 = vunpack.c.l.b16 %v893
      %v898 = vpack.c.b16 %v897, %v838
      %v900 = vshrl.u32 %v898, 16
      %v902 = vshll.u32 %v898, 16
      %v904 = vrot.slane %v902, 1
      %v905 = vor.u32 %v900, %v904
      %v908 = vunpack.c.l.b16 %v894
      %v909 = vunpack.c.l.b16 %v895
      %v910 = vpack.c.b16 %v909, %v908
      %v913 = vsel %vm198, %v905, 0
      %915 = vmatprep.subr.bf16.mxu0 0
      %916 = vmatpush1.bf16.msra.mxu0 %v910
      %917 = vmatprep.subr.bf16.mxu0 0
      %918 = vmatpush1.bf16.msra.mxu0 0
      %919 = vmatprep.subr.bf16.mxu0 0
      %920 = vmatpush1.bf16.msra.mxu0 0
      %921 = vmatprep.subr.bf16.mxu0 0
      %922 = vmatpush1.bf16.msra.mxu0 0
      %923 = vmatprep.subr.bf16.mxu0 0
      %924 = vmatpush1.bf16.msra.mxu0 0
      %925 = vmatprep.subr.bf16.mxu0 0
      %926 = vmatpush1.bf16.msra.mxu0 0
      %927 = vmatprep.subr.bf16.mxu0 0
      %928 = vmatpush1.bf16.msra.mxu0 0
      %929 = vmatprep.subr.bf16.mxu0 0
      %930 = vmatpush1.bf16.msra.mxu0 0
      %931 = vmatprep.subr.bf16.mxu0 0
      %932 = vmatpush1.bf16.msra.mxu0 0
      %933 = vmatprep.subr.bf16.mxu0 0
      %934 = vmatpush1.bf16.msra.mxu0 0
      %935 = vmatprep.subr.bf16.mxu0 0
      %936 = vmatpush1.bf16.msra.mxu0 0
      %937 = vmatprep.subr.bf16.mxu0 0
      %938 = vmatpush1.bf16.msra.mxu0 0
      %939 = vmatprep.subr.bf16.mxu0 0
      %940 = vmatpush1.bf16.msra.mxu0 0
      %941 = vmatprep.subr.bf16.mxu0 0
      %942 = vmatpush1.bf16.msra.mxu0 0
      %943 = vmatprep.subr.bf16.mxu0 0
      %944 = vmatpush1.bf16.msra.mxu0 0
      %945 = vmatprep.subr.bf16.mxu0 0
      %946 = vmatpush1.bf16.msra.mxu0 0
      %947 = vmatprep.mubr.bf16.mxu0 0
      %948 = vmatmul.mubr.bf16.gmra.mrb[0].mxu0 %v913
      %v949 = vpop.f32.mrb[0].mxu0
      %v950 = vadd.f32 0.0, %v949
      %v951 = vpop.f32.mrb[0].mxu0
      %v952 = vpop.f32.mrb[0].mxu0
      %v953 = vadd.f32 0.0, %v952
      %v954 = vpop.f32.mrb[0].mxu0
      %955 = vdwg.mxu0
      %v956 = vadd.f32 %v891, %v950
      %v957 = vadd.f32 %v892, %v953
      %v958 = vadd.f32 %v956, %v427
      %v959 = vadd.f32 %v957, %v427
      %v960 = vmax.f32 %v958, 0.0
      %v961 = vmax.f32 %v959, 0.0
      %v962 = vpack.c.bf16 %v961, %v960
      %v964 = vunpack.c.l.b16 %v962
      %v965 = vunpack.c.h.b16 %v962
      %v966 = vpack.c.b16 %v964, %v964
      %v967 = vpack.c.b16 %v965, %v965
      %s970 = scalar_lea.vmem %s170, 16
      %971 = vst.msk [vmem:[%s970] sm:$0xf] %vm441, %v966
      %972 = vst.msk [vmem:[%s970 + $0x4] sm:$0x1] %vm443, %v967
      %v973 = vld [vmem:[%s831] sm:$0xf]
      %v974 = vld [vmem:[%s831 + $0x4] sm:$0x1]
      %v975 = vld [vmem:[%s1] sm:$0xf]
      %v976 = vld [vmem:[%s1 + $0x4] sm:$0xf]
      %v977 = vld [vmem:[%s831 + $0x4] sm:$0x3]
      %v978 = vld [vmem:[%s1 + $0x8] sm:$0xf]
      %v979 = vld [vmem:[%s1 + $0xc] sm:$0xf]
      %v982 = vunpack.c.l.b16 %v973
      %v983 = vunpack.c.l.b16 %v977
      %v984 = vpack.c.b16 %v983, %v982
      %v986 = vshrl.u32 %v984, 16
      %v988 = vshll.u32 %v984, 16
      %v990 = vrot.slane %v988, 1
      %v991 = vor.u32 %v986, %v990
      %v994 = vunpack.c.l.b16 %v978
      %v995 = vunpack.c.l.b16 %v979
      %v996 = vpack.c.b16 %v995, %v994
      %v999 = vsel %vm198, %v991, 0
      %1001 = vmatprep.subr.bf16.mxu0 0
      %1002 = vmatpush1.bf16.msra.mxu0 %v996
      %1003 = vmatprep.subr.bf16.mxu0 0
      %1004 = vmatpush1.bf16.msra.mxu0 0
      %1005 = vmatprep.subr.bf16.mxu0 0
      %1006 = vmatpush1.bf16.msra.mxu0 0
      %1007 = vmatprep.subr.bf16.mxu0 0
      %1008 = vmatpush1.bf16.msra.mxu0 0
      %1009 = vmatprep.subr.bf16.mxu0 0
      %1010 = vmatpush1.bf16.msra.mxu0 0
      %1011 = vmatprep.subr.bf16.mxu0 0
      %1012 = vmatpush1.bf16.msra.mxu0 0
      %1013 = vmatprep.subr.bf16.mxu0 0
      %1014 = vmatpush1.bf16.msra.mxu0 0
      %1015 = vmatprep.subr.bf16.mxu0 0
      %1016 = vmatpush1.bf16.msra.mxu0 0
      %1017 = vmatprep.subr.bf16.mxu0 0
      %1018 = vmatpush1.bf16.msra.mxu0 0
      %1019 = vmatprep.subr.bf16.mxu0 0
      %1020 = vmatpush1.bf16.msra.mxu0 0
      %1021 = vmatprep.subr.bf16.mxu0 0
      %1022 = vmatpush1.bf16.msra.mxu0 0
      %1023 = vmatprep.subr.bf16.mxu0 0
      %1024 = vmatpush1.bf16.msra.mxu0 0
      %1025 = vmatprep.subr.bf16.mxu0 0
      %1026 = vmatpush1.bf16.msra.mxu0 0
      %1027 = vmatprep.subr.bf16.mxu0 0
      %1028 = vmatpush1.bf16.msra.mxu0 0
      %1029 = vmatprep.subr.bf16.mxu0 0
      %1030 = vmatpush1.bf16.msra.mxu0 0
      %1031 = vmatprep.subr.bf16.mxu0 0
      %1032 = vmatpush1.bf16.msra.mxu0 0
      %1033 = vmatprep.mubr.bf16.mxu0 0
      %1034 = vmatmul.mubr.bf16.gmra.mrb[0].mxu0 %v999
      %v1035 = vpop.f32.mrb[0].mxu0
      %v1036 = vadd.f32 0.0, %v1035
      %v1037 = vpop.f32.mrb[0].mxu0
      %v1038 = vpop.f32.mrb[0].mxu0
      %v1039 = vadd.f32 0.0, %v1038
      %v1040 = vpop.f32.mrb[0].mxu0
      %1041 = vdwg.mxu0
      %v1043 = vunpack.c.l.b16 %v974
      %v1044 = vpack.c.b16 %v1043, %v982
      %v1047 = vunpack.c.l.b16 %v975
      %v1048 = vunpack.c.l.b16 %v976
      %v1049 = vpack.c.b16 %v1048, %v1047
      %v1052 = vsel %vm198, %v1044, 0
      %1054 = vmatprep.subr.bf16.mxu0 0
      %1055 = vmatpush1.bf16.msra.mxu0 %v1049
      %1056 = vmatprep.subr.bf16.mxu0 0
      %1057 = vmatpush1.bf16.msra.mxu0 0
      %1058 = vmatprep.subr.bf16.mxu0 0
      %1059 = vmatpush1.bf16.msra.mxu0 0
      %1060 = vmatprep.subr.bf16.mxu0 0
      %1061 = vmatpush1.bf16.msra.mxu0 0
      %1062 = vmatprep.subr.bf16.mxu0 0
      %1063 = vmatpush1.bf16.msra.mxu0 0
      %1064 = vmatprep.subr.bf16.mxu0 0
      %1065 = vmatpush1.bf16.msra.mxu0 0
      %1066 = vmatprep.subr.bf16.mxu0 0
      %1067 = vmatpush1.bf16.msra.mxu0 0
      %1068 = vmatprep.subr.bf16.mxu0 0
      %1069 = vmatpush1.bf16.msra.mxu0 0
      %1070 = vmatprep.subr.bf16.mxu0 0
      %1071 = vmatpush1.bf16.msra.mxu0 0
      %1072 = vmatprep.subr.bf16.mxu0 0
      %1073 = vmatpush1.bf16.msra.mxu0 0
      %1074 = vmatprep.subr.bf16.mxu0 0
      %1075 = vmatpush1.bf16.msra.mxu0 0
      %1076 = vmatprep.subr.bf16.mxu0 0
      %1077 = vmatpush1.bf16.msra.mxu0 0
      %1078 = vmatprep.subr.bf16.mxu0 0
      %1079 = vmatpush1.bf16.msra.mxu0 0
      %1080 = vmatprep.subr.bf16.mxu0 0
      %1081 = vmatpush1.bf16.msra.mxu0 0
      %1082 = vmatprep.subr.bf16.mxu0 0
      %1083 = vmatpush1.bf16.msra.mxu0 0
      %1084 = vmatprep.subr.bf16.mxu0 0
      %1085 = vmatpush1.bf16.msra.mxu0 0
      %1086 = vmatprep.mubr.bf16.mxu0 0
      %1087 = vmatmul.mubr.bf16.gmra.mrb[0].mxu0 %v1052
      %v1088 = vpop.f32.mrb[0].mxu0
      %v1089 = vadd.f32 %v1036, %v1088
      %v1090 = vpop.f32.mrb[0].mxu0
      %v1091 = vpop.f32.mrb[0].mxu0
      %v1092 = vadd.f32 %v1039, %v1091
      %v1093 = vpop.f32.mrb[0].mxu0
      %1094 = vdwg.mxu0
      %s1095 = scalar_lea.vmem %s165, 32
      %v1096 = vld [vmem:[%s1095] sm:$0xf]
      %v1097 = vld [vmem:[%s1095 + $0x4] sm:$0x1]
      %v1098 = vld [vmem:[%s1 + $0x10] sm:$0xf]
      %v1099 = vld [vmem:[%s1 + $0x14] sm:$0xf]
      %v1102 = vunpack.c.l.b16 %v1096
      %v1103 = vunpack.c.l.b16 %v1097
      %v1104 = vpack.c.b16 %v1103, %v1102
      %v1107 = vunpack.c.l.b16 %v1098
      %v1108 = vunpack.c.l.b16 %v1099
      %v1109 = vpack.c.b16 %v1108, %v1107
      %v1112 = vsel %vm198, %v1104, 0
      %1114 = vmatprep.subr.bf16.mxu0 0
      %1115 = vmatpush1.bf16.msra.mxu0 %v1109
      %1116 = vmatprep.subr.bf16.mxu0 0
      %1117 = vmatpush1.bf16.msra.mxu0 0
      %1118 = vmatprep.subr.bf16.mxu0 0
      %1119 = vmatpush1.bf16.msra.mxu0 0
      %1120 = vmatprep.subr.bf16.mxu0 0
      %1121 = vmatpush1.bf16.msra.mxu0 0
      %1122 = vmatprep.subr.bf16.mxu0 0
      %1123 = vmatpush1.bf16.msra.mxu0 0
      %1124 = vmatprep.subr.bf16.mxu0 0
      %1125 = vmatpush1.bf16.msra.mxu0 0
      %1126 = vmatprep.subr.bf16.mxu0 0
      %1127 = vmatpush1.bf16.msra.mxu0 0
      %1128 = vmatprep.subr.bf16.mxu0 0
      %1129 = vmatpush1.bf16.msra.mxu0 0
      %1130 = vmatprep.subr.bf16.mxu0 0
      %1131 = vmatpush1.bf16.msra.mxu0 0
      %1132 = vmatprep.subr.bf16.mxu0 0
      %1133 = vmatpush1.bf16.msra.mxu0 0
      %1134 = vmatprep.subr.bf16.mxu0 0
      %1135 = vmatpush1.bf16.msra.mxu0 0
      %1136 = vmatprep.subr.bf16.mxu0 0
      %1137 = vmatpush1.bf16.msra.mxu0 0
      %1138 = vmatprep.subr.bf16.mxu0 0
      %1139 = vmatpush1.bf16.msra.mxu0 0
      %1140 = vmatprep.subr.bf16.mxu0 0
      %1141 = vmatpush1.bf16.msra.mxu0 0
      %1142 = vmatprep.subr.bf16.mxu0 0
      %1143 = vmatpush1.bf16.msra.mxu0 0
      %1144 = vmatprep.subr.bf16.mxu0 0
      %1145 = vmatpush1.bf16.msra.mxu0 0
      %1146 = vmatprep.mubr.bf16.mxu0 0
      %1147 = vmatmul.mubr.bf16.gmra.mrb[0].mxu0 %v1112
      %v1148 = vpop.f32.mrb[0].mxu0
      %v1149 = vadd.f32 0.0, %v1148
      %v1150 = vpop.f32.mrb[0].mxu0
      %v1151 = vpop.f32.mrb[0].mxu0
      %v1152 = vadd.f32 0.0, %v1151
      %v1153 = vpop.f32.mrb[0].mxu0
      %1154 = vdwg.mxu0
      %v1155 = vadd.f32 %v1089, %v1149
      %v1156 = vadd.f32 %v1092, %v1152
      %v1157 = vld [vmem:[%s1095 + $0x4] sm:$0x3]
      %v1158 = vld [vmem:[%s1 + $0x18] sm:$0xf]
      %v1159 = vld [vmem:[%s1 + $0x1c] sm:$0xf]
      %v1161 = vunpack.c.l.b16 %v1157
      %v1162 = vpack.c.b16 %v1161, %v1102
      %v1164 = vshrl.u32 %v1162, 16
      %v1166 = vshll.u32 %v1162, 16
      %v1168 = vrot.slane %v1166, 1
      %v1169 = vor.u32 %v1164, %v1168
      %v1172 = vunpack.c.l.b16 %v1158
      %v1173 = vunpack.c.l.b16 %v1159
      %v1174 = vpack.c.b16 %v1173, %v1172
      %v1177 = vsel %vm198, %v1169, 0
      %1179 = vmatprep.subr.bf16.mxu0 0
      %1180 = vmatpush1.bf16.msra.mxu0 %v1174
      %1181 = vmatprep.subr.bf16.mxu0 0
      %1182 = vmatpush1.bf16.msra.mxu0 0
      %1183 = vmatprep.subr.bf16.mxu0 0
      %1184 = vmatpush1.bf16.msra.mxu0 0
      %1185 = vmatprep.subr.bf16.mxu0 0
      %1186 = vmatpush1.bf16.msra.mxu0 0
      %1187 = vmatprep.subr.bf16.mxu0 0
      %1188 = vmatpush1.bf16.msra.mxu0 0
      %1189 = vmatprep.subr.bf16.mxu0 0
      %1190 = vmatpush1.bf16.msra.mxu0 0
      %1191 = vmatprep.subr.bf16.mxu0 0
      %1192 = vmatpush1.bf16.msra.mxu0 0
      %1193 = vmatprep.subr.bf16.mxu0 0
      %1194 = vmatpush1.bf16.msra.mxu0 0
      %1195 = vmatprep.subr.bf16.mxu0 0
      %1196 = vmatpush1.bf16.msra.mxu0 0
      %1197 = vmatprep.subr.bf16.mxu0 0
      %1198 = vmatpush1.bf16.msra.mxu0 0
      %1199 = vmatprep.subr.bf16.mxu0 0
      %1200 = vmatpush1.bf16.msra.mxu0 0
      %1201 = vmatprep.subr.bf16.mxu0 0
      %1202 = vmatpush1.bf16.msra.mxu0 0
      %1203 = vmatprep.subr.bf16.mxu0 0
      %1204 = vmatpush1.bf16.msra.mxu0 0
      %1205 = vmatprep.subr.bf16.mxu0 0
      %1206 = vmatpush1.bf16.msra.mxu0 0
      %1207 = vmatprep.subr.bf16.mxu0 0
      %1208 = vmatpush1.bf16.msra.mxu0 0
      %1209 = vmatprep.subr.bf16.mxu0 0
      %1210 = vmatpush1.bf16.msra.mxu0 0
      %1211 = vmatprep.mubr.bf16.mxu0 0
      %1212 = vmatmul.mubr.bf16.gmra.mrb[0].mxu0 %v1177
      %v1213 = vpop.f32.mrb[0].mxu0
      %v1214 = vadd.f32 0.0, %v1213
      %v1215 = vpop.f32.mrb[0].mxu0
      %v1216 = vpop.f32.mrb[0].mxu0
      %v1217 = vadd.f32 0.0, %v1216
      %v1218 = vpop.f32.mrb[0].mxu0
      %1219 = vdwg.mxu0
      %v1220 = vadd.f32 %v1155, %v1214
      %v1221 = vadd.f32 %v1156, %v1217
      %v1222 = vadd.f32 %v1220, %v427
      %v1223 = vadd.f32 %v1221, %v427
      %v1224 = vmax.f32 %v1222, 0.0
      %v1225 = vmax.f32 %v1223, 0.0
      %v1226 = vpack.c.bf16 %v1225, %v1224
      %v1228 = vunpack.c.l.b16 %v1226
      %v1229 = vunpack.c.h.b16 %v1226
      %v1230 = vpack.c.b16 %v1228, %v1228
      %v1231 = vpack.c.b16 %v1229, %v1229
      %s1234 = scalar_lea.vmem %s170, 24
      %1235 = vst.msk [vmem:[%s1234] sm:$0xf] %vm441, %v1230
      %1236 = vst.msk [vmem:[%s1234 + $0x4] sm:$0x1] %vm443, %v1231
      %v1237 = vld [vmem:[%s1095] sm:$0xf]
      %v1238 = vld [vmem:[%s1095 + $0x4] sm:$0x1]
      %v1239 = vld [vmem:[%s1] sm:$0xf]
      %v1240 = vld [vmem:[%s1 + $0x4] sm:$0xf]
      %v1241 = vld [vmem:[%s1095 + $0x4] sm:$0x3]
      %v1242 = vld [vmem:[%s1 + $0x8] sm:$0xf]
      %v1243 = vld [vmem:[%s1 + $0xc] sm:$0xf]
      %v1246 = vunpack.c.l.b16 %v1237
      %v1247 = vunpack.c.l.b16 %v1241
      %v1248 = vpack.c.b16 %v1247, %v1246
      %v1250 = vshrl.u32 %v1248, 16
      %v1252 = vshll.u32 %v1248, 16
      %v1254 = vrot.slane %v1252, 1
      %v1255 = vor.u32 %v1250, %v1254
      %v1258 = vunpack.c.l.b16 %v1242
      %v1259 = vunpack.c.l.b16 %v1243
      %v1260 = vpack.c.b16 %v1259, %v1258
      %v1263 = vsel %vm198, %v1255, 0
      %1265 = vmatprep.subr.bf16.mxu0 0
      %1266 = vmatpush1.bf16.msra.mxu0 %v1260
      %1267 = vmatprep.subr.bf16.mxu0 0
      %1268 = vmatpush1.bf16.msra.mxu0 0
      %1269 = vmatprep.subr.bf16.mxu0 0
      %1270 = vmatpush1.bf16.msra.mxu0 0
      %1271 = vmatprep.subr.bf16.mxu0 0
      %1272 = vmatpush1.bf16.msra.mxu0 0
      %1273 = vmatprep.subr.bf16.mxu0 0
      %1274 = vmatpush1.bf16.msra.mxu0 0
      %1275 = vmatprep.subr.bf16.mxu0 0
      %1276 = vmatpush1.bf16.msra.mxu0 0
      %1277 = vmatprep.subr.bf16.mxu0 0
      %1278 = vmatpush1.bf16.msra.mxu0 0
      %1279 = vmatprep.subr.bf16.mxu0 0
      %1280 = vmatpush1.bf16.msra.mxu0 0
      %1281 = vmatprep.subr.bf16.mxu0 0
      %1282 = vmatpush1.bf16.msra.mxu0 0
      %1283 = vmatprep.subr.bf16.mxu0 0
      %1284 = vmatpush1.bf16.msra.mxu0 0
      %1285 = vmatprep.subr.bf16.mxu0 0
      %1286 = vmatpush1.bf16.msra.mxu0 0
      %1287 = vmatprep.subr.bf16.mxu0 0
      %1288 = vmatpush1.bf16.msra.mxu0 0
      %1289 = vmatprep.subr.bf16.mxu0 0
      %1290 = vmatpush1.bf16.msra.mxu0 0
      %1291 = vmatprep.subr.bf16.mxu0 0
      %1292 = vmatpush1.bf16.msra.mxu0 0
      %1293 = vmatprep.subr.bf16.mxu0 0
      %1294 = vmatpush1.bf16.msra.mxu0 0
      %1295 = vmatprep.subr.bf16.mxu0 0
      %1296 = vmatpush1.bf16.msra.mxu0 0
      %1297 = vmatprep.mubr.bf16.mxu0 0
      %1298 = vmatmul.mubr.bf16.gmra.mrb[0].mxu0 %v1263
      %v1299 = vpop.f32.mrb[0].mxu0
      %v1300 = vadd.f32 0.0, %v1299
      %v1301 = vpop.f32.mrb[0].mxu0
      %v1302 = vpop.f32.mrb[0].mxu0
      %v1303 = vadd.f32 0.0, %v1302
      %v1304 = vpop.f32.mrb[0].mxu0
      %1305 = vdwg.mxu0
      %v1307 = vunpack.c.l.b16 %v1238
      %v1308 = vpack.c.b16 %v1307, %v1246
      %v1311 = vunpack.c.l.b16 %v1239
      %v1312 = vunpack.c.l.b16 %v1240
      %v1313 = vpack.c.b16 %v1312, %v1311
      %v1316 = vsel %vm198, %v1308, 0
      %1318 = vmatprep.subr.bf16.mxu0 0
      %1319 = vmatpush1.bf16.msra.mxu0 %v1313
      %1320 = vmatprep.subr.bf16.mxu0 0
      %1321 = vmatpush1.bf16.msra.mxu0 0
      %1322 = vmatprep.subr.bf16.mxu0 0
      %1323 = vmatpush1.bf16.msra.mxu0 0
      %1324 = vmatprep.subr.bf16.mxu0 0
      %1325 = vmatpush1.bf16.msra.mxu0 0
      %1326 = vmatprep.subr.bf16.mxu0 0
      %1327 = vmatpush1.bf16.msra.mxu0 0
      %1328 = vmatprep.subr.bf16.mxu0 0
      %1329 = vmatpush1.bf16.msra.mxu0 0
      %1330 = vmatprep.subr.bf16.mxu0 0
      %1331 = vmatpush1.bf16.msra.mxu0 0
      %1332 = vmatprep.subr.bf16.mxu0 0
      %1333 = vmatpush1.bf16.msra.mxu0 0
      %1334 = vmatprep.subr.bf16.mxu0 0
      %1335 = vmatpush1.bf16.msra.mxu0 0
      %1336 = vmatprep.subr.bf16.mxu0 0
      %1337 = vmatpush1.bf16.msra.mxu0 0
      %1338 = vmatprep.subr.bf16.mxu0 0
      %1339 = vmatpush1.bf16.msra.mxu0 0
      %1340 = vmatprep.subr.bf16.mxu0 0
      %1341 = vmatpush1.bf16.msra.mxu0 0
      %1342 = vmatprep.subr.bf16.mxu0 0
      %1343 = vmatpush1.bf16.msra.mxu0 0
      %1344 = vmatprep.subr.bf16.mxu0 0
      %1345 = vmatpush1.bf16.msra.mxu0 0
      %1346 = vmatprep.subr.bf16.mxu0 0
      %1347 = vmatpush1.bf16.msra.mxu0 0
      %1348 = vmatprep.subr.bf16.mxu0 0
      %1349 = vmatpush1.bf16.msra.mxu0 0
      %1350 = vmatprep.mubr.bf16.mxu0 0
      %1351 = vmatmul.mubr.bf16.gmra.mrb[0].mxu0 %v1316
      %v1352 = vpop.f32.mrb[0].mxu0
      %v1353 = vadd.f32 %v1300, %v1352
      %v1354 = vpop.f32.mrb[0].mxu0
      %v1355 = vpop.f32.mrb[0].mxu0
      %v1356 = vadd.f32 %v1303, %v1355
      %v1357 = vpop.f32.mrb[0].mxu0
      %1358 = vdwg.mxu0
      %s1359 = scalar_lea.vmem %s165, 40
      %v1360 = vld [vmem:[%s1359] sm:$0xf]
      %v1361 = vld [vmem:[%s1359 + $0x4] sm:$0x1]
      %v1362 = vld [vmem:[%s1 + $0x10] sm:$0xf]
      %v1363 = vld [vmem:[%s1 + $0x14] sm:$0xf]
      %v1366 = vunpack.c.l.b16 %v1360
      %v1367 = vunpack.c.l.b16 %v1361
      %v1368 = vpack.c.b16 %v1367, %v1366
      %v1371 = vunpack.c.l.b16 %v1362
      %v1372 = vunpack.c.l.b16 %v1363
      %v1373 = vpack.c.b16 %v1372, %v1371
      %v1376 = vsel %vm198, %v1368, 0
      %1378 = vmatprep.subr.bf16.mxu0 0
      %1379 = vmatpush1.bf16.msra.mxu0 %v1373
      %1380 = vmatprep.subr.bf16.mxu0 0
      %1381 = vmatpush1.bf16.msra.mxu0 0
      %1382 = vmatprep.subr.bf16.mxu0 0
      %1383 = vmatpush1.bf16.msra.mxu0 0
      %1384 = vmatprep.subr.bf16.mxu0 0
      %1385 = vmatpush1.bf16.msra.mxu0 0
      %1386 = vmatprep.subr.bf16.mxu0 0
      %1387 = vmatpush1.bf16.msra.mxu0 0
      %1388 = vmatprep.subr.bf16.mxu0 0
      %1389 = vmatpush1.bf16.msra.mxu0 0
      %1390 = vmatprep.subr.bf16.mxu0 0
      %1391 = vmatpush1.bf16.msra.mxu0 0
      %1392 = vmatprep.subr.bf16.mxu0 0
      %1393 = vmatpush1.bf16.msra.mxu0 0
      %1394 = vmatprep.subr.bf16.mxu0 0
      %1395 = vmatpush1.bf16.msra.mxu0 0
      %1396 = vmatprep.subr.bf16.mxu0 0
      %1397 = vmatpush1.bf16.msra.mxu0 0
      %1398 = vmatprep.subr.bf16.mxu0 0
      %1399 = vmatpush1.bf16.msra.mxu0 0
      %1400 = vmatprep.subr.bf16.mxu0 0
      %1401 = vmatpush1.bf16.msra.mxu0 0
      %1402 = vmatprep.subr.bf16.mxu0 0
      %1403 = vmatpush1.bf16.msra.mxu0 0
      %1404 = vmatprep.subr.bf16.mxu0 0
      %1405 = vmatpush1.bf16.msra.mxu0 0
      %1406 = vmatprep.subr.bf16.mxu0 0
      %1407 = vmatpush1.bf16.msra.mxu0 0
      %1408 = vmatprep.subr.bf16.mxu0 0
      %1409 = vmatpush1.bf16.msra.mxu0 0
      %1410 = vmatprep.mubr.bf16.mxu0 0
      %1411 = vmatmul.mubr.bf16.gmra.mrb[0].mxu0 %v1376
      %v1412 = vpop.f32.mrb[0].mxu0
      %v1413 = vadd.f32 0.0, %v1412
      %v1414 = vpop.f32.mrb[0].mxu0
      %v1415 = vpop.f32.mrb[0].mxu0
      %v1416 = vadd.f32 0.0, %v1415
      %v1417 = vpop.f32.mrb[0].mxu0
      %1418 = vdwg.mxu0
      %v1419 = vadd.f32 %v1353, %v1413
      %v1420 = vadd.f32 %v1356, %v1416
      %v1421 = vld [vmem:[%s1359 + $0x4] sm:$0x3]
      %v1422 = vld [vmem:[%s1 + $0x18] sm:$0xf]
      %v1423 = vld [vmem:[%s1 + $0x1c] sm:$0xf]
      %v1425 = vunpack.c.l.b16 %v1421
      %v1426 = vpack.c.b16 %v1425, %v1366
      %v1428 = vshrl.u32 %v1426, 16
      %v1430 = vshll.u32 %v1426, 16
      %v1432 = vrot.slane %v1430, 1
      %v1433 = vor.u32 %v1428, %v1432
      %v1436 = vunpack.c.l.b16 %v1422
      %v1437 = vunpack.c.l.b16 %v1423
      %v1438 = vpack.c.b16 %v1437, %v1436
      %v1441 = vsel %vm198, %v1433, 0
      %1443 = vmatprep.subr.bf16.mxu0 0
      %1444 = vmatpush1.bf16.msra.mxu0 %v1438
      %1445 = vmatprep.subr.bf16.mxu0 0
      %1446 = vmatpush1.bf16.msra.mxu0 0
      %1447 = vmatprep.subr.bf16.mxu0 0
      %1448 = vmatpush1.bf16.msra.mxu0 0
      %1449 = vmatprep.subr.bf16.mxu0 0
      %1450 = vmatpush1.bf16.msra.mxu0 0
      %1451 = vmatprep.subr.bf16.mxu0 0
      %1452 = vmatpush1.bf16.msra.mxu0 0
      %1453 = vmatprep.subr.bf16.mxu0 0
      %1454 = vmatpush1.bf16.msra.mxu0 0
      %1455 = vmatprep.subr.bf16.mxu0 0
      %1456 = vmatpush1.bf16.msra.mxu0 0
      %1457 = vmatprep.subr.bf16.mxu0 0
      %1458 = vmatpush1.bf16.msra.mxu0 0
      %1459 = vmatprep.subr.bf16.mxu0 0
      %1460 = vmatpush1.bf16.msra.mxu0 0
      %1461 = vmatprep.subr.bf16.mxu0 0
      %1462 = vmatpush1.bf16.msra.mxu0 0
      %1463 = vmatprep.subr.bf16.mxu0 0
      %1464 = vmatpush1.bf16.msra.mxu0 0
      %1465 = vmatprep.subr.bf16.mxu0 0
      %1466 = vmatpush1.bf16.msra.mxu0 0
      %1467 = vmatprep.subr.bf16.mxu0 0
      %1468 = vmatpush1.bf16.msra.mxu0 0
      %1469 = vmatprep.subr.bf16.mxu0 0
      %1470 = vmatpush1.bf16.msra.mxu0 0
      %1471 = vmatprep.subr.bf16.mxu0 0
      %1472 = vmatpush1.bf16.msra.mxu0 0
      %1473 = vmatprep.subr.bf16.mxu0 0
      %1474 = vmatpush1.bf16.msra.mxu0 0
      %1475 = vmatprep.mubr.bf16.mxu0 0
      %1476 = vmatmul.mubr.bf16.gmra.mrb[0].mxu0 %v1441
      %v1477 = vpop.f32.mrb[0].mxu0
      %v1478 = vadd.f32 0.0, %v1477
      %v1479 = vpop.f32.mrb[0].mxu0
      %v1480 = vpop.f32.mrb[0].mxu0
      %v1481 = vadd.f32 0.0, %v1480
      %v1482 = vpop.f32.mrb[0].mxu0
      %1483 = vdwg.mxu0
      %v1484 = vadd.f32 %v1419, %v1478
      %v1485 = vadd.f32 %v1420, %v1481
      %v1486 = vadd.f32 %v1484, %v427
      %v1487 = vadd.f32 %v1485, %v427
      %v1488 = vmax.f32 %v1486, 0.0
      %v1489 = vmax.f32 %v1487, 0.0
      %v1490 = vpack.c.bf16 %v1489, %v1488
      %v1492 = vunpack.c.l.b16 %v1490
      %v1493 = vunpack.c.h.b16 %v1490
      %v1494 = vpack.c.b16 %v1492, %v1492
      %v1495 = vpack.c.b16 %v1493, %v1493
      %s1498 = scalar_lea.vmem %s170, 32
      %1499 = vst.msk [vmem:[%s1498] sm:$0xf] %vm441, %v1494
      %1500 = vst.msk [vmem:[%s1498 + $0x4] sm:$0x1] %vm443, %v1495
      %v1501 = vld [vmem:[%s1359] sm:$0xf]
      %v1502 = vld [vmem:[%s1359 + $0x4] sm:$0x1]
      %v1503 = vld [vmem:[%s1] sm:$0xf]
      %v1504 = vld [vmem:[%s1 + $0x4] sm:$0xf]
      %v1505 = vld [vmem:[%s1359 + $0x4] sm:$0x3]
      %v1506 = vld [vmem:[%s1 + $0x8] sm:$0xf]
      %v1507 = vld [vmem:[%s1 + $0xc] sm:$0xf]
      %v1510 = vunpack.c.l.b16 %v1501
      %v1511 = vunpack.c.l.b16 %v1505
      %v1512 = vpack.c.b16 %v1511, %v1510
      %v1514 = vshrl.u32 %v1512, 16
      %v1516 = vshll.u32 %v1512, 16
      %v1518 = vrot.slane %v1516, 1
      %v1519 = vor.u32 %v1514, %v1518
      %v1522 = vunpack.c.l.b16 %v1506
      %v1523 = vunpack.c.l.b16 %v1507
      %v1524 = vpack.c.b16 %v1523, %v1522
      %v1527 = vsel %vm198, %v1519, 0
      %1529 = vmatprep.subr.bf16.mxu0 0
      %1530 = vmatpush1.bf16.msra.mxu0 %v1524
      %1531 = vmatprep.subr.bf16.mxu0 0
      %1532 = vmatpush1.bf16.msra.mxu0 0
      %1533 = vmatprep.subr.bf16.mxu0 0
      %1534 = vmatpush1.bf16.msra.mxu0 0
      %1535 = vmatprep.subr.bf16.mxu0 0
      %1536 = vmatpush1.bf16.msra.mxu0 0
      %1537 = vmatprep.subr.bf16.mxu0 0
      %1538 = vmatpush1.bf16.msra.mxu0 0
      %1539 = vmatprep.subr.bf16.mxu0 0
      %1540 = vmatpush1.bf16.msra.mxu0 0
      %1541 = vmatprep.subr.bf16.mxu0 0
      %1542 = vmatpush1.bf16.msra.mxu0 0
      %1543 = vmatprep.subr.bf16.mxu0 0
      %1544 = vmatpush1.bf16.msra.mxu0 0
      %1545 = vmatprep.subr.bf16.mxu0 0
      %1546 = vmatpush1.bf16.msra.mxu0 0
      %1547 = vmatprep.subr.bf16.mxu0 0
      %1548 = vmatpush1.bf16.msra.mxu0 0
      %1549 = vmatprep.subr.bf16.mxu0 0
      %1550 = vmatpush1.bf16.msra.mxu0 0
      %1551 = vmatprep.subr.bf16.mxu0 0
      %1552 = vmatpush1.bf16.msra.mxu0 0
      %1553 = vmatprep.subr.bf16.mxu0 0
      %1554 = vmatpush1.bf16.msra.mxu0 0
      %1555 = vmatprep.subr.bf16.mxu0 0
      %1556 = vmatpush1.bf16.msra.mxu0 0
      %1557 = vmatprep.subr.bf16.mxu0 0
      %1558 = vmatpush1.bf16.msra.mxu0 0
      %1559 = vmatprep.subr.bf16.mxu0 0
      %1560 = vmatpush1.bf16.msra.mxu0 0
      %1561 = vmatprep.mubr.bf16.mxu0 0
      %1562 = vmatmul.mubr.bf16.gmra.mrb[0].mxu0 %v1527
      %v1563 = vpop.f32.mrb[0].mxu0
      %v1564 = vadd.f32 0.0, %v1563
      %v1565 = vpop.f32.mrb[0].mxu0
      %v1566 = vpop.f32.mrb[0].mxu0
      %v1567 = vadd.f32 0.0, %v1566
      %v1568 = vpop.f32.mrb[0].mxu0
      %1569 = vdwg.mxu0
      %v1571 = vunpack.c.l.b16 %v1502
      %v1572 = vpack.c.b16 %v1571, %v1510
      %v1575 = vunpack.c.l.b16 %v1503
      %v1576 = vunpack.c.l.b16 %v1504
      %v1577 = vpack.c.b16 %v1576, %v1575
      %v1580 = vsel %vm198, %v1572, 0
      %1582 = vmatprep.subr.bf16.mxu0 0
      %1583 = vmatpush1.bf16.msra.mxu0 %v1577
      %1584 = vmatprep.subr.bf16.mxu0 0
      %1585 = vmatpush1.bf16.msra.mxu0 0
      %1586 = vmatprep.subr.bf16.mxu0 0
      %1587 = vmatpush1.bf16.msra.mxu0 0
      %1588 = vmatprep.subr.bf16.mxu0 0
      %1589 = vmatpush1.bf16.msra.mxu0 0
      %1590 = vmatprep.subr.bf16.mxu0 0
      %1591 = vmatpush1.bf16.msra.mxu0 0
      %1592 = vmatprep.subr.bf16.mxu0 0
      %1593 = vmatpush1.bf16.msra.mxu0 0
      %1594 = vmatprep.subr.bf16.mxu0 0
      %1595 = vmatpush1.bf16.msra.mxu0 0
      %1596 = vmatprep.subr.bf16.mxu0 0
      %1597 = vmatpush1.bf16.msra.mxu0 0
      %1598 = vmatprep.subr.bf16.mxu0 0
      %1599 = vmatpush1.bf16.msra.mxu0 0
      %1600 = vmatprep.subr.bf16.mxu0 0
      %1601 = vmatpush1.bf16.msra.mxu0 0
      %1602 = vmatprep.subr.bf16.mxu0 0
      %1603 = vmatpush1.bf16.msra.mxu0 0
      %1604 = vmatprep.subr.bf16.mxu0 0
      %1605 = vmatpush1.bf16.msra.mxu0 0
      %1606 = vmatprep.subr.bf16.mxu0 0
      %1607 = vmatpush1.bf16.msra.mxu0 0
      %1608 = vmatprep.subr.bf16.mxu0 0
      %1609 = vmatpush1.bf16.msra.mxu0 0
      %1610 = vmatprep.subr.bf16.mxu0 0
      %1611 = vmatpush1.bf16.msra.mxu0 0
      %1612 = vmatprep.subr.bf16.mxu0 0
      %1613 = vmatpush1.bf16.msra.mxu0 0
      %1614 = vmatprep.mubr.bf16.mxu0 0
      %1615 = vmatmul.mubr.bf16.gmra.mrb[0].mxu0 %v1580
      %v1616 = vpop.f32.mrb[0].mxu0
      %v1617 = vadd.f32 %v1564, %v1616
      %v1618 = vpop.f32.mrb[0].mxu0
      %v1619 = vpop.f32.mrb[0].mxu0
      %v1620 = vadd.f32 %v1567, %v1619
      %v1621 = vpop.f32.mrb[0].mxu0
      %1622 = vdwg.mxu0
      %s1623 = scalar_lea.vmem %s165, 48
      %v1624 = vld [vmem:[%s1623] sm:$0xf]
      %v1625 = vld [vmem:[%s1623 + $0x4] sm:$0x1]
      %v1626 = vld [vmem:[%s1 + $0x10] sm:$0xf]
      %v1627 = vld [vmem:[%s1 + $0x14] sm:$0xf]
      %v1630 = vunpack.c.l.b16 %v1624
      %v1631 = vunpack.c.l.b16 %v1625
      %v1632 = vpack.c.b16 %v1631, %v1630
      %v1635 = vunpack.c.l.b16 %v1626
      %v1636 = vunpack.c.l.b16 %v1627
      %v1637 = vpack.c.b16 %v1636, %v1635
      %v1640 = vsel %vm198, %v1632, 0
      %1642 = vmatprep.subr.bf16.mxu0 0
      %1643 = vmatpush1.bf16.msra.mxu0 %v1637
      %1644 = vmatprep.subr.bf16.mxu0 0
      %1645 = vmatpush1.bf16.msra.mxu0 0
      %1646 = vmatprep.subr.bf16.mxu0 0
      %1647 = vmatpush1.bf16.msra.mxu0 0
      %1648 = vmatprep.subr.bf16.mxu0 0
      %1649 = vmatpush1.bf16.msra.mxu0 0
      %1650 = vmatprep.subr.bf16.mxu0 0
      %1651 = vmatpush1.bf16.msra.mxu0 0
      %1652 = vmatprep.subr.bf16.mxu0 0
      %1653 = vmatpush1.bf16.msra.mxu0 0
      %1654 = vmatprep.subr.bf16.mxu0 0
      %1655 = vmatpush1.bf16.msra.mxu0 0
      %1656 = vmatprep.subr.bf16.mxu0 0
      %1657 = vmatpush1.bf16.msra.mxu0 0
      %1658 = vmatprep.subr.bf16.mxu0 0
      %1659 = vmatpush1.bf16.msra.mxu0 0
      %1660 = vmatprep.subr.bf16.mxu0 0
      %1661 = vmatpush1.bf16.msra.mxu0 0
      %1662 = vmatprep.subr.bf16.mxu0 0
      %1663 = vmatpush1.bf16.msra.mxu0 0
      %1664 = vmatprep.subr.bf16.mxu0 0
      %1665 = vmatpush1.bf16.msra.mxu0 0
      %1666 = vmatprep.subr.bf16.mxu0 0
      %1667 = vmatpush1.bf16.msra.mxu0 0
      %1668 = vmatprep.subr.bf16.mxu0 0
      %1669 = vmatpush1.bf16.msra.mxu0 0
      %1670 = vmatprep.subr.bf16.mxu0 0
      %1671 = vmatpush1.bf16.msra.mxu0 0
      %1672 = vmatprep.subr.bf16.mxu0 0
      %1673 = vmatpush1.bf16.msra.mxu0 0
      %1674 = vmatprep.mubr.bf16.mxu0 0
      %1675 = vmatmul.mubr.bf16.gmra.mrb[0].mxu0 %v1640
      %v1676 = vpop.f32.mrb[0].mxu0
      %v1677 = vadd.f32 0.0, %v1676
      %v1678 = vpop.f32.mrb[0].mxu0
      %v1679 = vpop.f32.mrb[0].mxu0
      %v1680 = vadd.f32 0.0, %v1679
      %v1681 = vpop.f32.mrb[0].mxu0
      %1682 = vdwg.mxu0
      %v1683 = vadd.f32 %v1617, %v1677
      %v1684 = vadd.f32 %v1620, %v1680
      %v1685 = vld [vmem:[%s1623 + $0x4] sm:$0x3]
      %v1686 = vld [vmem:[%s1 + $0x18] sm:$0xf]
      %v1687 = vld [vmem:[%s1 + $0x1c] sm:$0xf]
      %v1689 = vunpack.c.l.b16 %v1685
      %v1690 = vpack.c.b16 %v1689, %v1630
      %v1692 = vshrl.u32 %v1690, 16
      %v1694 = vshll.u32 %v1690, 16
      %v1696 = vrot.slane %v1694, 1
      %v1697 = vor.u32 %v1692, %v1696
      %v1700 = vunpack.c.l.b16 %v1686
      %v1701 = vunpack.c.l.b16 %v1687
      %v1702 = vpack.c.b16 %v1701, %v1700
      %v1705 = vsel %vm198, %v1697, 0
      %1707 = vmatprep.subr.bf16.mxu0 0
      %1708 = vmatpush1.bf16.msra.mxu0 %v1702
      %1709 = vmatprep.subr.bf16.mxu0 0
      %1710 = vmatpush1.bf16.msra.mxu0 0
      %1711 = vmatprep.subr.bf16.mxu0 0
      %1712 = vmatpush1.bf16.msra.mxu0 0
      %1713 = vmatprep.subr.bf16.mxu0 0
      %1714 = vmatpush1.bf16.msra.mxu0 0
      %1715 = vmatprep.subr.bf16.mxu0 0
      %1716 = vmatpush1.bf16.msra.mxu0 0
      %1717 = vmatprep.subr.bf16.mxu0 0
      %1718 = vmatpush1.bf16.msra.mxu0 0
      %1719 = vmatprep.subr.bf16.mxu0 0
      %1720 = vmatpush1.bf16.msra.mxu0 0
      %1721 = vmatprep.subr.bf16.mxu0 0
      %1722 = vmatpush1.bf16.msra.mxu0 0
      %1723 = vmatprep.subr.bf16.mxu0 0
      %1724 = vmatpush1.bf16.msra.mxu0 0
      %1725 = vmatprep.subr.bf16.mxu0 0
      %1726 = vmatpush1.bf16.msra.mxu0 0
      %1727 = vmatprep.subr.bf16.mxu0 0
      %1728 = vmatpush1.bf16.msra.mxu0 0
      %1729 = vmatprep.subr.bf16.mxu0 0
      %1730 = vmatpush1.bf16.msra.mxu0 0
      %1731 = vmatprep.subr.bf16.mxu0 0
      %1732 = vmatpush1.bf16.msra.mxu0 0
      %1733 = vmatprep.subr.bf16.mxu0 0
      %1734 = vmatpush1.bf16.msra.mxu0 0
      %1735 = vmatprep.subr.bf16.mxu0 0
      %1736 = vmatpush1.bf16.msra.mxu0 0
      %1737 = vmatprep.subr.bf16.mxu0 0
      %1738 = vmatpush1.bf16.msra.mxu0 0
      %1739 = vmatprep.mubr.bf16.mxu0 0
      %1740 = vmatmul.mubr.bf16.gmra.mrb[0].mxu0 %v1705
      %v1741 = vpop.f32.mrb[0].mxu0
      %v1742 = vadd.f32 0.0, %v1741
      %v1743 = vpop.f32.mrb[0].mxu0
      %v1744 = vpop.f32.mrb[0].mxu0
      %v1745 = vadd.f32 0.0, %v1744
      %v1746 = vpop.f32.mrb[0].mxu0
      %1747 = vdwg.mxu0
      %v1748 = vadd.f32 %v1683, %v1742
      %v1749 = vadd.f32 %v1684, %v1745
      %v1750 = vadd.f32 %v1748, %v427
      %v1751 = vadd.f32 %v1749, %v427
      %v1752 = vmax.f32 %v1750, 0.0
      %v1753 = vmax.f32 %v1751, 0.0
      %v1754 = vpack.c.bf16 %v1753, %v1752
      %v1756 = vunpack.c.l.b16 %v1754
      %v1757 = vunpack.c.h.b16 %v1754
      %v1758 = vpack.c.b16 %v1756, %v1756
      %v1759 = vpack.c.b16 %v1757, %v1757
      %s1762 = scalar_lea.vmem %s170, 40
      %1763 = vst.msk [vmem:[%s1762] sm:$0xf] %vm441, %v1758
      %1764 = vst.msk [vmem:[%s1762 + $0x4] sm:$0x1] %vm443, %v1759
      %v1765 = vld [vmem:[%s1623] sm:$0xf]
      %v1766 = vld [vmem:[%s1623 + $0x4] sm:$0x1]
      %v1767 = vld [vmem:[%s1] sm:$0xf]
      %v1768 = vld [vmem:[%s1 + $0x4] sm:$0xf]
      %v1769 = vld [vmem:[%s1623 + $0x4] sm:$0x3]
      %v1770 = vld [vmem:[%s1 + $0x8] sm:$0xf]
      %v1771 = vld [vmem:[%s1 + $0xc] sm:$0xf]
      %v1774 = vunpack.c.l.b16 %v1765
      %v1775 = vunpack.c.l.b16 %v1769
      %v1776 = vpack.c.b16 %v1775, %v1774
      %v1778 = vshrl.u32 %v1776, 16
      %v1780 = vshll.u32 %v1776, 16
      %v1782 = vrot.slane %v1780, 1
      %v1783 = vor.u32 %v1778, %v1782
      %v1786 = vunpack.c.l.b16 %v1770
      %v1787 = vunpack.c.l.b16 %v1771
      %v1788 = vpack.c.b16 %v1787, %v1786
      %v1791 = vsel %vm198, %v1783, 0
      %1793 = vmatprep.subr.bf16.mxu0 0
      %1794 = vmatpush1.bf16.msra.mxu0 %v1788
      %1795 = vmatprep.subr.bf16.mxu0 0
      %1796 = vmatpush1.bf16.msra.mxu0 0
      %1797 = vmatprep.subr.bf16.mxu0 0
      %1798 = vmatpush1.bf16.msra.mxu0 0
      %1799 = vmatprep.subr.bf16.mxu0 0
      %1800 = vmatpush1.bf16.msra.mxu0 0
      %1801 = vmatprep.subr.bf16.mxu0 0
      %1802 = vmatpush1.bf16.msra.mxu0 0
      %1803 = vmatprep.subr.bf16.mxu0 0
      %1804 = vmatpush1.bf16.msra.mxu0 0
      %1805 = vmatprep.subr.bf16.mxu0 0
      %1806 = vmatpush1.bf16.msra.mxu0 0
      %1807 = vmatprep.subr.bf16.mxu0 0
      %1808 = vmatpush1.bf16.msra.mxu0 0
      %1809 = vmatprep.subr.bf16.mxu0 0
      %1810 = vmatpush1.bf16.msra.mxu0 0
      %1811 = vmatprep.subr.bf16.mxu0 0
      %1812 = vmatpush1.bf16.msra.mxu0 0
      %1813 = vmatprep.subr.bf16.mxu0 0
      %1814 = vmatpush1.bf16.msra.mxu0 0
      %1815 = vmatprep.subr.bf16.mxu0 0
      %1816 = vmatpush1.bf16.msra.mxu0 0
      %1817 = vmatprep.subr.bf16.mxu0 0
      %1818 = vmatpush1.bf16.msra.mxu0 0
      %1819 = vmatprep.subr.bf16.mxu0 0
      %1820 = vmatpush1.bf16.msra.mxu0 0
      %1821 = vmatprep.subr.bf16.mxu0 0
      %1822 = vmatpush1.bf16.msra.mxu0 0
      %1823 = vmatprep.subr.bf16.mxu0 0
      %1824 = vmatpush1.bf16.msra.mxu0 0
      %1825 = vmatprep.mubr.bf16.mxu0 0
      %1826 = vmatmul.mubr.bf16.gmra.mrb[0].mxu0 %v1791
      %v1827 = vpop.f32.mrb[0].mxu0
      %v1828 = vadd.f32 0.0, %v1827
      %v1829 = vpop.f32.mrb[0].mxu0
      %v1830 = vpop.f32.mrb[0].mxu0
      %v1831 = vadd.f32 0.0, %v1830
      %v1832 = vpop.f32.mrb[0].mxu0
      %1833 = vdwg.mxu0
      %v1835 = vunpack.c.l.b16 %v1766
      %v1836 = vpack.c.b16 %v1835, %v1774
      %v1839 = vunpack.c.l.b16 %v1767
      %v1840 = vunpack.c.l.b16 %v1768
      %v1841 = vpack.c.b16 %v1840, %v1839
      %v1844 = vsel %vm198, %v1836, 0
      %1846 = vmatprep.subr.bf16.mxu0 0
      %1847 = vmatpush1.bf16.msra.mxu0 %v1841
      %1848 = vmatprep.subr.bf16.mxu0 0
      %1849 = vmatpush1.bf16.msra.mxu0 0
      %1850 = vmatprep.subr.bf16.mxu0 0
      %1851 = vmatpush1.bf16.msra.mxu0 0
      %1852 = vmatprep.subr.bf16.mxu0 0
      %1853 = vmatpush1.bf16.msra.mxu0 0
      %1854 = vmatprep.subr.bf16.mxu0 0
      %1855 = vmatpush1.bf16.msra.mxu0 0
      %1856 = vmatprep.subr.bf16.mxu0 0
      %1857 = vmatpush1.bf16.msra.mxu0 0
      %1858 = vmatprep.subr.bf16.mxu0 0
      %1859 = vmatpush1.bf16.msra.mxu0 0
      %1860 = vmatprep.subr.bf16.mxu0 0
      %1861 = vmatpush1.bf16.msra.mxu0 0
      %1862 = vmatprep.subr.bf16.mxu0 0
      %1863 = vmatpush1.bf16.msra.mxu0 0
      %1864 = vmatprep.subr.bf16.mxu0 0
      %1865 = vmatpush1.bf16.msra.mxu0 0
      %1866 = vmatprep.subr.bf16.mxu0 0
      %1867 = vmatpush1.bf16.msra.mxu0 0
      %1868 = vmatprep.subr.bf16.mxu0 0
      %1869 = vmatpush1.bf16.msra.mxu0 0
      %1870 = vmatprep.subr.bf16.mxu0 0
      %1871 = vmatpush1.bf16.msra.mxu0 0
      %1872 = vmatprep.subr.bf16.mxu0 0
      %1873 = vmatpush1.bf16.msra.mxu0 0
      %1874 = vmatprep.subr.bf16.mxu0 0
      %1875 = vmatpush1.bf16.msra.mxu0 0
      %1876 = vmatprep.subr.bf16.mxu0 0
      %1877 = vmatpush1.bf16.msra.mxu0 0
      %1878 = vmatprep.mubr.bf16.mxu0 0
      %1879 = vmatmul.mubr.bf16.gmra.mrb[0].mxu0 %v1844
      %v1880 = vpop.f32.mrb[0].mxu0
      %v1881 = vadd.f32 %v1828, %v1880
      %v1882 = vpop.f32.mrb[0].mxu0
      %v1883 = vpop.f32.mrb[0].mxu0
      %v1884 = vadd.f32 %v1831, %v1883
      %v1885 = vpop.f32.mrb[0].mxu0
      %1886 = vdwg.mxu0
      %s1887 = scalar_lea.vmem %s165, 56
      %v1888 = vld [vmem:[%s1887] sm:$0xf]
      %v1889 = vld [vmem:[%s1887 + $0x4] sm:$0x1]
      %v1890 = vld [vmem:[%s1 + $0x10] sm:$0xf]
      %v1891 = vld [vmem:[%s1 + $0x14] sm:$0xf]
      %v1894 = vunpack.c.l.b16 %v1888
      %v1895 = vunpack.c.l.b16 %v1889
      %v1896 = vpack.c.b16 %v1895, %v1894
      %v1899 = vunpack.c.l.b16 %v1890
      %v1900 = vunpack.c.l.b16 %v1891
      %v1901 = vpack.c.b16 %v1900, %v1899
      %v1904 = vsel %vm198, %v1896, 0
      %1906 = vmatprep.subr.bf16.mxu0 0
      %1907 = vmatpush1.bf16.msra.mxu0 %v1901
      %1908 = vmatprep.subr.bf16.mxu0 0
      %1909 = vmatpush1.bf16.msra.mxu0 0
      %1910 = vmatprep.subr.bf16.mxu0 0
      %1911 = vmatpush1.bf16.msra.mxu0 0
      %1912 = vmatprep.subr.bf16.mxu0 0
      %1913 = vmatpush1.bf16.msra.mxu0 0
      %1914 = vmatprep.subr.bf16.mxu0 0
      %1915 = vmatpush1.bf16.msra.mxu0 0
      %1916 = vmatprep.subr.bf16.mxu0 0
      %1917 = vmatpush1.bf16.msra.mxu0 0
      %1918 = vmatprep.subr.bf16.mxu0 0
      %1919 = vmatpush1.bf16.msra.mxu0 0
      %1920 = vmatprep.subr.bf16.mxu0 0
      %1921 = vmatpush1.bf16.msra.mxu0 0
      %1922 = vmatprep.subr.bf16.mxu0 0
      %1923 = vmatpush1.bf16.msra.mxu0 0
      %1924 = vmatprep.subr.bf16.mxu0 0
      %1925 = vmatpush1.bf16.msra.mxu0 0
      %1926 = vmatprep.subr.bf16.mxu0 0
      %1927 = vmatpush1.bf16.msra.mxu0 0
      %1928 = vmatprep.subr.bf16.mxu0 0
      %1929 = vmatpush1.bf16.msra.mxu0 0
      %1930 = vmatprep.subr.bf16.mxu0 0
      %1931 = vmatpush1.bf16.msra.mxu0 0
      %1932 = vmatprep.subr.bf16.mxu0 0
      %1933 = vmatpush1.bf16.msra.mxu0 0
      %1934 = vmatprep.subr.bf16.mxu0 0
      %1935 = vmatpush1.bf16.msra.mxu0 0
      %1936 = vmatprep.subr.bf16.mxu0 0
      %1937 = vmatpush1.bf16.msra.mxu0 0
      %1938 = vmatprep.mubr.bf16.mxu0 0
      %1939 = vmatmul.mubr.bf16.gmra.mrb[0].mxu0 %v1904
      %v1940 = vpop.f32.mrb[0].mxu0
      %v1941 = vadd.f32 0.0, %v1940
      %v1942 = vpop.f32.mrb[0].mxu0
      %v1943 = vpop.f32.mrb[0].mxu0
      %v1944 = vadd.f32 0.0, %v1943
      %v1945 = vpop.f32.mrb[0].mxu0
      %1946 = vdwg.mxu0
      %v1947 = vadd.f32 %v1881, %v1941
      %v1948 = vadd.f32 %v1884, %v1944
      %v1949 = vld [vmem:[%s1887 + $0x4] sm:$0x3]
      %v1950 = vld [vmem:[%s1 + $0x18] sm:$0xf]
      %v1951 = vld [vmem:[%s1 + $0x1c] sm:$0xf]
      %v1953 = vunpack.c.l.b16 %v1949
      %v1954 = vpack.c.b16 %v1953, %v1894
      %v1956 = vshrl.u32 %v1954, 16
      %v1958 = vshll.u32 %v1954, 16
      %v1960 = vrot.slane %v1958, 1
      %v1961 = vor.u32 %v1956, %v1960
      %v1964 = vunpack.c.l.b16 %v1950
      %v1965 = vunpack.c.l.b16 %v1951
      %v1966 = vpack.c.b16 %v1965, %v1964
      %v1969 = vsel %vm198, %v1961, 0
      %1971 = vmatprep.subr.bf16.mxu0 0
      %1972 = vmatpush1.bf16.msra.mxu0 %v1966
      %1973 = vmatprep.subr.bf16.mxu0 0
      %1974 = vmatpush1.bf16.msra.mxu0 0
      %1975 = vmatprep.subr.bf16.mxu0 0
      %1976 = vmatpush1.bf16.msra.mxu0 0
      %1977 = vmatprep.subr.bf16.mxu0 0
      %1978 = vmatpush1.bf16.msra.mxu0 0
      %1979 = vmatprep.subr.bf16.mxu0 0
      %1980 = vmatpush1.bf16.msra.mxu0 0
      %1981 = vmatprep.subr.bf16.mxu0 0
      %1982 = vmatpush1.bf16.msra.mxu0 0
      %1983 = vmatprep.subr.bf16.mxu0 0
      %1984 = vmatpush1.bf16.msra.mxu0 0
      %1985 = vmatprep.subr.bf16.mxu0 0
      %1986 = vmatpush1.bf16.msra.mxu0 0
      %1987 = vmatprep.subr.bf16.mxu0 0
      %1988 = vmatpush1.bf16.msra.mxu0 0
      %1989 = vmatprep.subr.bf16.mxu0 0
      %1990 = vmatpush1.bf16.msra.mxu0 0
      %1991 = vmatprep.subr.bf16.mxu0 0
      %1992 = vmatpush1.bf16.msra.mxu0 0
      %1993 = vmatprep.subr.bf16.mxu0 0
      %1994 = vmatpush1.bf16.msra.mxu0 0
      %1995 = vmatprep.subr.bf16.mxu0 0
      %1996 = vmatpush1.bf16.msra.mxu0 0
      %1997 = vmatprep.subr.bf16.mxu0 0
      %1998 = vmatpush1.bf16.msra.mxu0 0
      %1999 = vmatprep.subr.bf16.mxu0 0
      %2000 = vmatpush1.bf16.msra.mxu0 0
      %2001 = vmatprep.subr.bf16.mxu0 0
      %2002 = vmatpush1.bf16.msra.mxu0 0
      %2003 = vmatprep.mubr.bf16.mxu0 0
      %2004 = vmatmul.mubr.bf16.gmra.mrb[0].mxu0 %v1969
      %v2005 = vpop.f32.mrb[0].mxu0
      %v2006 = vadd.f32 0.0, %v2005
      %v2007 = vpop.f32.mrb[0].mxu0
      %v2008 = vpop.f32.mrb[0].mxu0
      %v2009 = vadd.f32 0.0, %v2008
      %v2010 = vpop.f32.mrb[0].mxu0
      %2011 = vdwg.mxu0
      %v2012 = vadd.f32 %v1947, %v2006
      %v2013 = vadd.f32 %v1948, %v2009
      %v2014 = vadd.f32 %v2012, %v427
      %v2015 = vadd.f32 %v2013, %v427
      %v2016 = vmax.f32 %v2014, 0.0
      %v2017 = vmax.f32 %v2015, 0.0
      %v2018 = vpack.c.bf16 %v2017, %v2016
      %v2020 = vunpack.c.l.b16 %v2018
      %v2021 = vunpack.c.h.b16 %v2018
      %v2022 = vpack.c.b16 %v2020, %v2020
      %v2023 = vpack.c.b16 %v2021, %v2021
      %s2026 = scalar_lea.vmem %s170, 48
      %2027 = vst.msk [vmem:[%s2026] sm:$0xf] %vm441, %v2022
      %2028 = vst.msk [vmem:[%s2026 + $0x4] sm:$0x1] %vm443, %v2023
      %v2029 = vld [vmem:[%s1887] sm:$0xf]
      %v2030 = vld [vmem:[%s1887 + $0x4] sm:$0x1]
      %v2031 = vld [vmem:[%s1] sm:$0xf]
      %v2032 = vld [vmem:[%s1 + $0x4] sm:$0xf]
      %v2033 = vld [vmem:[%s1887 + $0x4] sm:$0x3]
      %v2034 = vld [vmem:[%s1 + $0x8] sm:$0xf]
      %v2035 = vld [vmem:[%s1 + $0xc] sm:$0xf]
      %v2038 = vunpack.c.l.b16 %v2029
      %v2039 = vunpack.c.l.b16 %v2033
      %v2040 = vpack.c.b16 %v2039, %v2038
      %v2042 = vshrl.u32 %v2040, 16
      %v2044 = vshll.u32 %v2040, 16
      %v2046 = vrot.slane %v2044, 1
      %v2047 = vor.u32 %v2042, %v2046
      %v2050 = vunpack.c.l.b16 %v2034
      %v2051 = vunpack.c.l.b16 %v2035
      %v2052 = vpack.c.b16 %v2051, %v2050
      %v2055 = vsel %vm198, %v2047, 0
      %2057 = vmatprep.subr.bf16.mxu0 0
      %2058 = vmatpush1.bf16.msra.mxu0 %v2052
      %2059 = vmatprep.subr.bf16.mxu0 0
      %2060 = vmatpush1.bf16.msra.mxu0 0
      %2061 = vmatprep.subr.bf16.mxu0 0
      %2062 = vmatpush1.bf16.msra.mxu0 0
      %2063 = vmatprep.subr.bf16.mxu0 0
      %2064 = vmatpush1.bf16.msra.mxu0 0
      %2065 = vmatprep.subr.bf16.mxu0 0
      %2066 = vmatpush1.bf16.msra.mxu0 0
      %2067 = vmatprep.subr.bf16.mxu0 0
      %2068 = vmatpush1.bf16.msra.mxu0 0
      %2069 = vmatprep.subr.bf16.mxu0 0
      %2070 = vmatpush1.bf16.msra.mxu0 0
      %2071 = vmatprep.subr.bf16.mxu0 0
      %2072 = vmatpush1.bf16.msra.mxu0 0
      %2073 = vmatprep.subr.bf16.mxu0 0
      %2074 = vmatpush1.bf16.msra.mxu0 0
      %2075 = vmatprep.subr.bf16.mxu0 0
      %2076 = vmatpush1.bf16.msra.mxu0 0
      %2077 = vmatprep.subr.bf16.mxu0 0
      %2078 = vmatpush1.bf16.msra.mxu0 0
      %2079 = vmatprep.subr.bf16.mxu0 0
      %2080 = vmatpush1.bf16.msra.mxu0 0
      %2081 = vmatprep.subr.bf16.mxu0 0
      %2082 = vmatpush1.bf16.msra.mxu0 0
      %2083 = vmatprep.subr.bf16.mxu0 0
      %2084 = vmatpush1.bf16.msra.mxu0 0
      %2085 = vmatprep.subr.bf16.mxu0 0
      %2086 = vmatpush1.bf16.msra.mxu0 0
      %2087 = vmatprep.subr.bf16.mxu0 0
      %2088 = vmatpush1.bf16.msra.mxu0 0
      %2089 = vmatprep.mubr.bf16.mxu0 0
      %2090 = vmatmul.mubr.bf16.gmra.mrb[0].mxu0 %v2055
      %v2091 = vpop.f32.mrb[0].mxu0
      %v2092 = vadd.f32 0.0, %v2091
      %v2093 = vpop.f32.mrb[0].mxu0
      %v2094 = vpop.f32.mrb[0].mxu0
      %v2095 = vadd.f32 0.0, %v2094
      %v2096 = vpop.f32.mrb[0].mxu0
      %2097 = vdwg.mxu0
      %v2099 = vunpack.c.l.b16 %v2030
      %v2100 = vpack.c.b16 %v2099, %v2038
      %v2103 = vunpack.c.l.b16 %v2031
      %v2104 = vunpack.c.l.b16 %v2032
      %v2105 = vpack.c.b16 %v2104, %v2103
      %v2108 = vsel %vm198, %v2100, 0
      %2110 = vmatprep.subr.bf16.mxu0 0
      %2111 = vmatpush1.bf16.msra.mxu0 %v2105
      %2112 = vmatprep.subr.bf16.mxu0 0
      %2113 = vmatpush1.bf16.msra.mxu0 0
      %2114 = vmatprep.subr.bf16.mxu0 0
      %2115 = vmatpush1.bf16.msra.mxu0 0
      %2116 = vmatprep.subr.bf16.mxu0 0
      %2117 = vmatpush1.bf16.msra.mxu0 0
      %2118 = vmatprep.subr.bf16.mxu0 0
      %2119 = vmatpush1.bf16.msra.mxu0 0
      %2120 = vmatprep.subr.bf16.mxu0 0
      %2121 = vmatpush1.bf16.msra.mxu0 0
      %2122 = vmatprep.subr.bf16.mxu0 0
      %2123 = vmatpush1.bf16.msra.mxu0 0
      %2124 = vmatprep.subr.bf16.mxu0 0
      %2125 = vmatpush1.bf16.msra.mxu0 0
      %2126 = vmatprep.subr.bf16.mxu0 0
      %2127 = vmatpush1.bf16.msra.mxu0 0
      %2128 = vmatprep.subr.bf16.mxu0 0
      %2129 = vmatpush1.bf16.msra.mxu0 0
      %2130 = vmatprep.subr.bf16.mxu0 0
      %2131 = vmatpush1.bf16.msra.mxu0 0
      %2132 = vmatprep.subr.bf16.mxu0 0
      %2133 = vmatpush1.bf16.msra.mxu0 0
      %2134 = vmatprep.subr.bf16.mxu0 0
      %2135 = vmatpush1.bf16.msra.mxu0 0
      %2136 = vmatprep.subr.bf16.mxu0 0
      %2137 = vmatpush1.bf16.msra.mxu0 0
      %2138 = vmatprep.subr.bf16.mxu0 0
      %2139 = vmatpush1.bf16.msra.mxu0 0
      %2140 = vmatprep.subr.bf16.mxu0 0
      %2141 = vmatpush1.bf16.msra.mxu0 0
      %2142 = vmatprep.mubr.bf16.mxu0 0
      %2143 = vmatmul.mubr.bf16.gmra.mrb[0].mxu0 %v2108
      %v2144 = vpop.f32.mrb[0].mxu0
      %v2145 = vadd.f32 %v2092, %v2144
      %v2146 = vpop.f32.mrb[0].mxu0
      %v2147 = vpop.f32.mrb[0].mxu0
      %v2148 = vadd.f32 %v2095, %v2147
      %v2149 = vpop.f32.mrb[0].mxu0
      %2150 = vdwg.mxu0
      %s2151 = scalar_lea.vmem %s165, 64
      %v2152 = vld [vmem:[%s2151] sm:$0xf]
      %v2153 = vld [vmem:[%s2151 + $0x4] sm:$0x1]
      %v2154 = vld [vmem:[%s1 + $0x10] sm:$0xf]
      %v2155 = vld [vmem:[%s1 + $0x14] sm:$0xf]
      %v2158 = vunpack.c.l.b16 %v2152
      %v2159 = vunpack.c.l.b16 %v2153
      %v2160 = vpack.c.b16 %v2159, %v2158
      %v2163 = vunpack.c.l.b16 %v2154
      %v2164 = vunpack.c.l.b16 %v2155
      %v2165 = vpack.c.b16 %v2164, %v2163
      %v2168 = vsel %vm198, %v2160, 0
      %2170 = vmatprep.subr.bf16.mxu0 0
      %2171 = vmatpush1.bf16.msra.mxu0 %v2165
      %2172 = vmatprep.subr.bf16.mxu0 0
      %2173 = vmatpush1.bf16.msra.mxu0 0
      %2174 = vmatprep.subr.bf16.mxu0 0
      %2175 = vmatpush1.bf16.msra.mxu0 0
      %2176 = vmatprep.subr.bf16.mxu0 0
      %2177 = vmatpush1.bf16.msra.mxu0 0
      %2178 = vmatprep.subr.bf16.mxu0 0
      %2179 = vmatpush1.bf16.msra.mxu0 0
      %2180 = vmatprep.subr.bf16.mxu0 0
      %2181 = vmatpush1.bf16.msra.mxu0 0
      %2182 = vmatprep.subr.bf16.mxu0 0
      %2183 = vmatpush1.bf16.msra.mxu0 0
      %2184 = vmatprep.subr.bf16.mxu0 0
      %2185 = vmatpush1.bf16.msra.mxu0 0
      %2186 = vmatprep.subr.bf16.mxu0 0
      %2187 = vmatpush1.bf16.msra.mxu0 0
      %2188 = vmatprep.subr.bf16.mxu0 0
      %2189 = vmatpush1.bf16.msra.mxu0 0
      %2190 = vmatprep.subr.bf16.mxu0 0
      %2191 = vmatpush1.bf16.msra.mxu0 0
      %2192 = vmatprep.subr.bf16.mxu0 0
      %2193 = vmatpush1.bf16.msra.mxu0 0
      %2194 = vmatprep.subr.bf16.mxu0 0
      %2195 = vmatpush1.bf16.msra.mxu0 0
      %2196 = vmatprep.subr.bf16.mxu0 0
      %2197 = vmatpush1.bf16.msra.mxu0 0
      %2198 = vmatprep.subr.bf16.mxu0 0
      %2199 = vmatpush1.bf16.msra.mxu0 0
      %2200 = vmatprep.subr.bf16.mxu0 0
      %2201 = vmatpush1.bf16.msra.mxu0 0
      %2202 = vmatprep.mubr.bf16.mxu0 0
      %2203 = vmatmul.mubr.bf16.gmra.mrb[0].mxu0 %v2168
      %v2204 = vpop.f32.mrb[0].mxu0
      %v2205 = vadd.f32 0.0, %v2204
      %v2206 = vpop.f32.mrb[0].mxu0
      %v2207 = vpop.f32.mrb[0].mxu0
      %v2208 = vadd.f32 0.0, %v2207
      %v2209 = vpop.f32.mrb[0].mxu0
      %2210 = vdwg.mxu0
      %v2211 = vadd.f32 %v2145, %v2205
      %v2212 = vadd.f32 %v2148, %v2208
      %v2213 = vld [vmem:[%s2151 + $0x4] sm:$0x3]
      %v2214 = vld [vmem:[%s1 + $0x18] sm:$0xf]
      %v2215 = vld [vmem:[%s1 + $0x1c] sm:$0xf]
      %v2217 = vunpack.c.l.b16 %v2213
      %v2218 = vpack.c.b16 %v2217, %v2158
      %v2220 = vshrl.u32 %v2218, 16
      %v2222 = vshll.u32 %v2218, 16
      %v2224 = vrot.slane %v2222, 1
      %v2225 = vor.u32 %v2220, %v2224
      %v2228 = vunpack.c.l.b16 %v2214
      %v2229 = vunpack.c.l.b16 %v2215
      %v2230 = vpack.c.b16 %v2229, %v2228
      %v2233 = vsel %vm198, %v2225, 0
      %2235 = vmatprep.subr.bf16.mxu0 0
      %2236 = vmatpush1.bf16.msra.mxu0 %v2230
      %2237 = vmatprep.subr.bf16.mxu0 0
      %2238 = vmatpush1.bf16.msra.mxu0 0
      %2239 = vmatprep.subr.bf16.mxu0 0
      %2240 = vmatpush1.bf16.msra.mxu0 0
      %2241 = vmatprep.subr.bf16.mxu0 0
      %2242 = vmatpush1.bf16.msra.mxu0 0
      %2243 = vmatprep.subr.bf16.mxu0 0
      %2244 = vmatpush1.bf16.msra.mxu0 0
      %2245 = vmatprep.subr.bf16.mxu0 0
      %2246 = vmatpush1.bf16.msra.mxu0 0
      %2247 = vmatprep.subr.bf16.mxu0 0
      %2248 = vmatpush1.bf16.msra.mxu0 0
      %2249 = vmatprep.subr.bf16.mxu0 0
      %2250 = vmatpush1.bf16.msra.mxu0 0
      %2251 = vmatprep.subr.bf16.mxu0 0
      %2252 = vmatpush1.bf16.msra.mxu0 0
      %2253 = vmatprep.subr.bf16.mxu0 0
      %2254 = vmatpush1.bf16.msra.mxu0 0
      %2255 = vmatprep.subr.bf16.mxu0 0
      %2256 = vmatpush1.bf16.msra.mxu0 0
      %2257 = vmatprep.subr.bf16.mxu0 0
      %2258 = vmatpush1.bf16.msra.mxu0 0
      %2259 = vmatprep.subr.bf16.mxu0 0
      %2260 = vmatpush1.bf16.msra.mxu0 0
      %2261 = vmatprep.subr.bf16.mxu0 0
      %2262 = vmatpush1.bf16.msra.mxu0 0
      %2263 = vmatprep.subr.bf16.mxu0 0
      %2264 = vmatpush1.bf16.msra.mxu0 0
      %2265 = vmatprep.subr.bf16.mxu0 0
      %2266 = vmatpush1.bf16.msra.mxu0 0
      %2267 = vmatprep.mubr.bf16.mxu0 0
      %2268 = vmatmul.mubr.bf16.gmra.mrb[0].mxu0 %v2233
      %v2269 = vpop.f32.mrb[0].mxu0
      %v2270 = vadd.f32 0.0, %v2269
      %v2271 = vpop.f32.mrb[0].mxu0
      %v2272 = vpop.f32.mrb[0].mxu0
      %v2273 = vadd.f32 0.0, %v2272
      %v2274 = vpop.f32.mrb[0].mxu0
      %2275 = vdwg.mxu0
      %v2276 = vadd.f32 %v2211, %v2270
      %v2277 = vadd.f32 %v2212, %v2273
      %v2278 = vadd.f32 %v2276, %v427
      %v2279 = vadd.f32 %v2277, %v427
      %v2280 = vmax.f32 %v2278, 0.0
      %v2281 = vmax.f32 %v2279, 0.0
      %v2282 = vpack.c.bf16 %v2281, %v2280
      %v2284 = vunpack.c.l.b16 %v2282
      %v2285 = vunpack.c.h.b16 %v2282
      %v2286 = vpack.c.b16 %v2284, %v2284
      %v2287 = vpack.c.b16 %v2285, %v2285
      %s2290 = scalar_lea.vmem %s170, 56
      %2291 = vst.msk [vmem:[%s2290] sm:$0xf] %vm441, %v2286
      %2292 = vst.msk [vmem:[%s2290 + $0x4] sm:$0x1] %vm443, %v2287
      %v2293 = vld [vmem:[%s2151] sm:$0xf]
      %v2294 = vld [vmem:[%s2151 + $0x4] sm:$0x1]
      %v2295 = vld [vmem:[%s1] sm:$0xf]
      %v2296 = vld [vmem:[%s1 + $0x4] sm:$0xf]
      %v2297 = vld [vmem:[%s2151 + $0x4] sm:$0x3]
      %v2298 = vld [vmem:[%s1 + $0x8] sm:$0xf]
      %v2299 = vld [vmem:[%s1 + $0xc] sm:$0xf]
      %v2302 = vunpack.c.l.b16 %v2293
      %v2303 = vunpack.c.l.b16 %v2297
      %v2304 = vpack.c.b16 %v2303, %v2302
      %v2306 = vshrl.u32 %v2304, 16
      %v2308 = vshll.u32 %v2304, 16
      %v2310 = vrot.slane %v2308, 1
      %v2311 = vor.u32 %v2306, %v2310
      %v2314 = vunpack.c.l.b16 %v2298
      %v2315 = vunpack.c.l.b16 %v2299
      %v2316 = vpack.c.b16 %v2315, %v2314
      %v2319 = vsel %vm198, %v2311, 0
      %2321 = vmatprep.subr.bf16.mxu0 0
      %2322 = vmatpush1.bf16.msra.mxu0 %v2316
      %2323 = vmatprep.subr.bf16.mxu0 0
      %2324 = vmatpush1.bf16.msra.mxu0 0
      %2325 = vmatprep.subr.bf16.mxu0 0
      %2326 = vmatpush1.bf16.msra.mxu0 0
      %2327 = vmatprep.subr.bf16.mxu0 0
      %2328 = vmatpush1.bf16.msra.mxu0 0
      %2329 = vmatprep.subr.bf16.mxu0 0
      %2330 = vmatpush1.bf16.msra.mxu0 0
      %2331 = vmatprep.subr.bf16.mxu0 0
      %2332 = vmatpush1.bf16.msra.mxu0 0
      %2333 = vmatprep.subr.bf16.mxu0 0
      %2334 = vmatpush1.bf16.msra.mxu0 0
      %2335 = vmatprep.subr.bf16.mxu0 0
      %2336 = vmatpush1.bf16.msra.mxu0 0
      %2337 = vmatprep.subr.bf16.mxu0 0
      %2338 = vmatpush1.bf16.msra.mxu0 0
      %2339 = vmatprep.subr.bf16.mxu0 0
      %2340 = vmatpush1.bf16.msra.mxu0 0
      %2341 = vmatprep.subr.bf16.mxu0 0
      %2342 = vmatpush1.bf16.msra.mxu0 0
      %2343 = vmatprep.subr.bf16.mxu0 0
      %2344 = vmatpush1.bf16.msra.mxu0 0
      %2345 = vmatprep.subr.bf16.mxu0 0
      %2346 = vmatpush1.bf16.msra.mxu0 0
      %2347 = vmatprep.subr.bf16.mxu0 0
      %2348 = vmatpush1.bf16.msra.mxu0 0
      %2349 = vmatprep.subr.bf16.mxu0 0
      %2350 = vmatpush1.bf16.msra.mxu0 0
      %2351 = vmatprep.subr.bf16.mxu0 0
      %2352 = vmatpush1.bf16.msra.mxu0 0
      %2353 = vmatprep.mubr.bf16.mxu0 0
      %2354 = vmatmul.mubr.bf16.gmra.mrb[0].mxu0 %v2319
      %v2355 = vpop.f32.mrb[0].mxu0
      %v2356 = vadd.f32 0.0, %v2355
      %v2357 = vpop.f32.mrb[0].mxu0
      %v2358 = vpop.f32.mrb[0].mxu0
      %v2359 = vadd.f32 0.0, %v2358
      %v2360 = vpop.f32.mrb[0].mxu0
      %2361 = vdwg.mxu0
      %v2363 = vunpack.c.l.b16 %v2294
      %v2364 = vpack.c.b16 %v2363, %v2302
      %v2367 = vunpack.c.l.b16 %v2295
      %v2368 = vunpack.c.l.b16 %v2296
      %v2369 = vpack.c.b16 %v2368, %v2367
      %v2372 = vsel %vm198, %v2364, 0
      %2374 = vmatprep.subr.bf16.mxu0 0
      %2375 = vmatpush1.bf16.msra.mxu0 %v2369
      %2376 = vmatprep.subr.bf16.mxu0 0
      %2377 = vmatpush1.bf16.msra.mxu0 0
      %2378 = vmatprep.subr.bf16.mxu0 0
      %2379 = vmatpush1.bf16.msra.mxu0 0
      %2380 = vmatprep.subr.bf16.mxu0 0
      %2381 = vmatpush1.bf16.msra.mxu0 0
      %2382 = vmatprep.subr.bf16.mxu0 0
      %2383 = vmatpush1.bf16.msra.mxu0 0
      %2384 = vmatprep.subr.bf16.mxu0 0
      %2385 = vmatpush1.bf16.msra.mxu0 0
      %2386 = vmatprep.subr.bf16.mxu0 0
      %2387 = vmatpush1.bf16.msra.mxu0 0
      %2388 = vmatprep.subr.bf16.mxu0 0
      %2389 = vmatpush1.bf16.msra.mxu0 0
      %2390 = vmatprep.subr.bf16.mxu0 0
      %2391 = vmatpush1.bf16.msra.mxu0 0
      %2392 = vmatprep.subr.bf16.mxu0 0
      %2393 = vmatpush1.bf16.msra.mxu0 0
      %2394 = vmatprep.subr.bf16.mxu0 0
      %2395 = vmatpush1.bf16.msra.mxu0 0
      %2396 = vmatprep.subr.bf16.mxu0 0
      %2397 = vmatpush1.bf16.msra.mxu0 0
      %2398 = vmatprep.subr.bf16.mxu0 0
      %2399 = vmatpush1.bf16.msra.mxu0 0
      %2400 = vmatprep.subr.bf16.mxu0 0
      %2401 = vmatpush1.bf16.msra.mxu0 0
      %2402 = vmatprep.subr.bf16.mxu0 0
      %2403 = vmatpush1.bf16.msra.mxu0 0
      %2404 = vmatprep.subr.bf16.mxu0 0
      %2405 = vmatpush1.bf16.msra.mxu0 0
      %2406 = vmatprep.mubr.bf16.mxu0 0
      %2407 = vmatmul.mubr.bf16.gmra.mrb[0].mxu0 %v2372
      %v2408 = vpop.f32.mrb[0].mxu0
      %v2409 = vadd.f32 %v2356, %v2408
      %v2410 = vpop.f32.mrb[0].mxu0
      %v2411 = vpop.f32.mrb[0].mxu0
      %v2412 = vadd.f32 %v2359, %v2411
      %v2413 = vpop.f32.mrb[0].mxu0
      %2414 = vdwg.mxu0
      %s2415 = scalar_lea.vmem %s165, 72
      %v2416 = vld [vmem:[%s2415] sm:$0xf]
      %v2417 = vld [vmem:[%s2415 + $0x4] sm:$0x1]
      %v2418 = vld [vmem:[%s1 + $0x10] sm:$0xf]
      %v2419 = vld [vmem:[%s1 + $0x14] sm:$0xf]
      %v2422 = vunpack.c.l.b16 %v2416
      %v2423 = vunpack.c.l.b16 %v2417
      %v2424 = vpack.c.b16 %v2423, %v2422
      %v2427 = vunpack.c.l.b16 %v2418
      %v2428 = vunpack.c.l.b16 %v2419
      %v2429 = vpack.c.b16 %v2428, %v2427
      %v2432 = vsel %vm198, %v2424, 0
      %2434 = vmatprep.subr.bf16.mxu0 0
      %2435 = vmatpush1.bf16.msra.mxu0 %v2429
      %2436 = vmatprep.subr.bf16.mxu0 0
      %2437 = vmatpush1.bf16.msra.mxu0 0
      %2438 = vmatprep.subr.bf16.mxu0 0
      %2439 = vmatpush1.bf16.msra.mxu0 0
      %2440 = vmatprep.subr.bf16.mxu0 0
      %2441 = vmatpush1.bf16.msra.mxu0 0
      %2442 = vmatprep.subr.bf16.mxu0 0
      %2443 = vmatpush1.bf16.msra.mxu0 0
      %2444 = vmatprep.subr.bf16.mxu0 0
      %2445 = vmatpush1.bf16.msra.mxu0 0
      %2446 = vmatprep.subr.bf16.mxu0 0
      %2447 = vmatpush1.bf16.msra.mxu0 0
      %2448 = vmatprep.subr.bf16.mxu0 0
      %2449 = vmatpush1.bf16.msra.mxu0 0
      %2450 = vmatprep.subr.bf16.mxu0 0
      %2451 = vmatpush1.bf16.msra.mxu0 0
      %2452 = vmatprep.subr.bf16.mxu0 0
      %2453 = vmatpush1.bf16.msra.mxu0 0
      %2454 = vmatprep.subr.bf16.mxu0 0
      %2455 = vmatpush1.bf16.msra.mxu0 0
      %2456 = vmatprep.subr.bf16.mxu0 0
      %2457 = vmatpush1.bf16.msra.mxu0 0
      %2458 = vmatprep.subr.bf16.mxu0 0
      %2459 = vmatpush1.bf16.msra.mxu0 0
      %2460 = vmatprep.subr.bf16.mxu0 0
      %2461 = vmatpush1.bf16.msra.mxu0 0
      %2462 = vmatprep.subr.bf16.mxu0 0
      %2463 = vmatpush1.bf16.msra.mxu0 0
      %2464 = vmatprep.subr.bf16.mxu0 0
      %2465 = vmatpush1.bf16.msra.mxu0 0
      %2466 = vmatprep.mubr.bf16.mxu0 0
      %2467 = vmatmul.mubr.bf16.gmra.mrb[0].mxu0 %v2432
      %v2468 = vpop.f32.mrb[0].mxu0
      %v2469 = vadd.f32 0.0, %v2468
      %v2470 = vpop.f32.mrb[0].mxu0
      %v2471 = vpop.f32.mrb[0].mxu0
      %v2472 = vadd.f32 0.0, %v2471
      %v2473 = vpop.f32.mrb[0].mxu0
      %2474 = vdwg.mxu0
      %v2475 = vadd.f32 %v2409, %v2469
      %v2476 = vadd.f32 %v2412, %v2472
      %v2477 = vld [vmem:[%s2415 + $0x4] sm:$0x3]
      %v2478 = vld [vmem:[%s1 + $0x18] sm:$0xf]
      %v2479 = vld [vmem:[%s1 + $0x1c] sm:$0xf]
      %v2481 = vunpack.c.l.b16 %v2477
      %v2482 = vpack.c.b16 %v2481, %v2422
      %v2484 = vshrl.u32 %v2482, 16
      %v2486 = vshll.u32 %v2482, 16
      %v2488 = vrot.slane %v2486, 1
      %v2489 = vor.u32 %v2484, %v2488
      %v2492 = vunpack.c.l.b16 %v2478
      %v2493 = vunpack.c.l.b16 %v2479
      %v2494 = vpack.c.b16 %v2493, %v2492
      %v2497 = vsel %vm198, %v2489, 0
      %2499 = vmatprep.subr.bf16.mxu0 0
      %2500 = vmatpush1.bf16.msra.mxu0 %v2494
      %2501 = vmatprep.subr.bf16.mxu0 0
      %2502 = vmatpush1.bf16.msra.mxu0 0
      %2503 = vmatprep.subr.bf16.mxu0 0
      %2504 = vmatpush1.bf16.msra.mxu0 0
      %2505 = vmatprep.subr.bf16.mxu0 0
      %2506 = vmatpush1.bf16.msra.mxu0 0
      %2507 = vmatprep.subr.bf16.mxu0 0
      %2508 = vmatpush1.bf16.msra.mxu0 0
      %2509 = vmatprep.subr.bf16.mxu0 0
      %2510 = vmatpush1.bf16.msra.mxu0 0
      %2511 = vmatprep.subr.bf16.mxu0 0
      %2512 = vmatpush1.bf16.msra.mxu0 0
      %2513 = vmatprep.subr.bf16.mxu0 0
      %2514 = vmatpush1.bf16.msra.mxu0 0
      %2515 = vmatprep.subr.bf16.mxu0 0
      %2516 = vmatpush1.bf16.msra.mxu0 0
      %2517 = vmatprep.subr.bf16.mxu0 0
      %2518 = vmatpush1.bf16.msra.mxu0 0
      %2519 = vmatprep.subr.bf16.mxu0 0
      %2520 = vmatpush1.bf16.msra.mxu0 0
      %2521 = vmatprep.subr.bf16.mxu0 0
      %2522 = vmatpush1.bf16.msra.mxu0 0
      %2523 = vmatprep.subr.bf16.mxu0 0
      %2524 = vmatpush1.bf16.msra.mxu0 0
      %2525 = vmatprep.subr.bf16.mxu0 0
      %2526 = vmatpush1.bf16.msra.mxu0 0
      %2527 = vmatprep.subr.bf16.mxu0 0
      %2528 = vmatpush1.bf16.msra.mxu0 0
      %2529 = vmatprep.subr.bf16.mxu0 0
      %2530 = vmatpush1.bf16.msra.mxu0 0
      %2531 = vmatprep.mubr.bf16.mxu0 0
      %2532 = vmatmul.mubr.bf16.gmra.mrb[0].mxu0 %v2497
      %v2533 = vpop.f32.mrb[0].mxu0
      %v2534 = vadd.f32 0.0, %v2533
      %v2535 = vpop.f32.mrb[0].mxu0
      %v2536 = vpop.f32.mrb[0].mxu0
      %v2537 = vadd.f32 0.0, %v2536
      %v2538 = vpop.f32.mrb[0].mxu0
      %2539 = vdwg.mxu0
      %v2540 = vadd.f32 %v2475, %v2534
      %v2541 = vadd.f32 %v2476, %v2537
      %v2542 = vadd.f32 %v2540, %v427
      %v2543 = vadd.f32 %v2541, %v427
      %v2544 = vmax.f32 %v2542, 0.0
      %v2545 = vmax.f32 %v2543, 0.0
      %v2546 = vpack.c.bf16 %v2545, %v2544
      %v2548 = vunpack.c.l.b16 %v2546
      %v2549 = vunpack.c.h.b16 %v2546
      %v2550 = vpack.c.b16 %v2548, %v2548
      %v2551 = vpack.c.b16 %v2549, %v2549
      %s2554 = scalar_lea.vmem %s170, 64
      %2555 = vst.msk [vmem:[%s2554] sm:$0xf] %vm441, %v2550
      %2556 = vst.msk [vmem:[%s2554 + $0x4] sm:$0x1] %vm443, %v2551
      %v2557 = vld [vmem:[%s2415] sm:$0xf]
      %v2558 = vld [vmem:[%s2415 + $0x4] sm:$0x1]
      %v2559 = vld [vmem:[%s1] sm:$0xf]
      %v2560 = vld [vmem:[%s1 + $0x4] sm:$0xf]
      %v2561 = vld [vmem:[%s2415 + $0x4] sm:$0x3]
      %v2562 = vld [vmem:[%s1 + $0x8] sm:$0xf]
      %v2563 = vld [vmem:[%s1 + $0xc] sm:$0xf]
      %v2566 = vunpack.c.l.b16 %v2557
      %v2567 = vunpack.c.l.b16 %v2561
      %v2568 = vpack.c.b16 %v2567, %v2566
      %v2570 = vshrl.u32 %v2568, 16
      %v2572 = vshll.u32 %v2568, 16
      %v2574 = vrot.slane %v2572, 1
      %v2575 = vor.u32 %v2570, %v2574
      %v2578 = vunpack.c.l.b16 %v2562
      %v2579 = vunpack.c.l.b16 %v2563
      %v2580 = vpack.c.b16 %v2579, %v2578
      %v2583 = vsel %vm198, %v2575, 0
      %2585 = vmatprep.subr.bf16.mxu0 0
      %2586 = vmatpush1.bf16.msra.mxu0 %v2580
      %2587 = vmatprep.subr.bf16.mxu0 0
      %2588 = vmatpush1.bf16.msra.mxu0 0
      %2589 = vmatprep.subr.bf16.mxu0 0
      %2590 = vmatpush1.bf16.msra.mxu0 0
      %2591 = vmatprep.subr.bf16.mxu0 0
      %2592 = vmatpush1.bf16.msra.mxu0 0
      %2593 = vmatprep.subr.bf16.mxu0 0
      %2594 = vmatpush1.bf16.msra.mxu0 0
      %2595 = vmatprep.subr.bf16.mxu0 0
      %2596 = vmatpush1.bf16.msra.mxu0 0
      %2597 = vmatprep.subr.bf16.mxu0 0
      %2598 = vmatpush1.bf16.msra.mxu0 0
      %2599 = vmatprep.subr.bf16.mxu0 0
      %2600 = vmatpush1.bf16.msra.mxu0 0
      %2601 = vmatprep.subr.bf16.mxu0 0
      %2602 = vmatpush1.bf16.msra.mxu0 0
      %2603 = vmatprep.subr.bf16.mxu0 0
      %2604 = vmatpush1.bf16.msra.mxu0 0
      %2605 = vmatprep.subr.bf16.mxu0 0
      %2606 = vmatpush1.bf16.msra.mxu0 0
      %2607 = vmatprep.subr.bf16.mxu0 0
      %2608 = vmatpush1.bf16.msra.mxu0 0
      %2609 = vmatprep.subr.bf16.mxu0 0
      %2610 = vmatpush1.bf16.msra.mxu0 0
      %2611 = vmatprep.subr.bf16.mxu0 0
      %2612 = vmatpush1.bf16.msra.mxu0 0
      %2613 = vmatprep.subr.bf16.mxu0 0
      %2614 = vmatpush1.bf16.msra.mxu0 0
      %2615 = vmatprep.subr.bf16.mxu0 0
      %2616 = vmatpush1.bf16.msra.mxu0 0
      %2617 = vmatprep.mubr.bf16.mxu0 0
      %2618 = vmatmul.mubr.bf16.gmra.mrb[0].mxu0 %v2583
      %v2619 = vpop.f32.mrb[0].mxu0
      %v2620 = vadd.f32 0.0, %v2619
      %v2621 = vpop.f32.mrb[0].mxu0
      %v2622 = vpop.f32.mrb[0].mxu0
      %v2623 = vadd.f32 0.0, %v2622
      %v2624 = vpop.f32.mrb[0].mxu0
      %2625 = vdwg.mxu0
      %v2627 = vunpack.c.l.b16 %v2558
      %v2628 = vpack.c.b16 %v2627, %v2566
      %v2631 = vunpack.c.l.b16 %v2559
      %v2632 = vunpack.c.l.b16 %v2560
      %v2633 = vpack.c.b16 %v2632, %v2631
      %v2636 = vsel %vm198, %v2628, 0
      %2638 = vmatprep.subr.bf16.mxu0 0
      %2639 = vmatpush1.bf16.msra.mxu0 %v2633
      %2640 = vmatprep.subr.bf16.mxu0 0
      %2641 = vmatpush1.bf16.msra.mxu0 0
      %2642 = vmatprep.subr.bf16.mxu0 0
      %2643 = vmatpush1.bf16.msra.mxu0 0
      %2644 = vmatprep.subr.bf16.mxu0 0
      %2645 = vmatpush1.bf16.msra.mxu0 0
      %2646 = vmatprep.subr.bf16.mxu0 0
      %2647 = vmatpush1.bf16.msra.mxu0 0
      %2648 = vmatprep.subr.bf16.mxu0 0
      %2649 = vmatpush1.bf16.msra.mxu0 0
      %2650 = vmatprep.subr.bf16.mxu0 0
      %2651 = vmatpush1.bf16.msra.mxu0 0
      %2652 = vmatprep.subr.bf16.mxu0 0
      %2653 = vmatpush1.bf16.msra.mxu0 0
      %2654 = vmatprep.subr.bf16.mxu0 0
      %2655 = vmatpush1.bf16.msra.mxu0 0
      %2656 = vmatprep.subr.bf16.mxu0 0
      %2657 = vmatpush1.bf16.msra.mxu0 0
      %2658 = vmatprep.subr.bf16.mxu0 0
      %2659 = vmatpush1.bf16.msra.mxu0 0
      %2660 = vmatprep.subr.bf16.mxu0 0
      %2661 = vmatpush1.bf16.msra.mxu0 0
      %2662 = vmatprep.subr.bf16.mxu0 0
      %2663 = vmatpush1.bf16.msra.mxu0 0
      %2664 = vmatprep.subr.bf16.mxu0 0
      %2665 = vmatpush1.bf16.msra.mxu0 0
      %2666 = vmatprep.subr.bf16.mxu0 0
      %2667 = vmatpush1.bf16.msra.mxu0 0
      %2668 = vmatprep.subr.bf16.mxu0 0
      %2669 = vmatpush1.bf16.msra.mxu0 0
      %2670 = vmatprep.mubr.bf16.mxu0 0
      %2671 = vmatmul.mubr.bf16.gmra.mrb[0].mxu0 %v2636
      %v2672 = vpop.f32.mrb[0].mxu0
      %v2673 = vadd.f32 %v2620, %v2672
      %v2674 = vpop.f32.mrb[0].mxu0
      %v2675 = vpop.f32.mrb[0].mxu0
      %v2676 = vadd.f32 %v2623, %v2675
      %v2677 = vpop.f32.mrb[0].mxu0
      %2678 = vdwg.mxu0
      %s2679 = scalar_lea.vmem %s165, 80
      %v2680 = vld [vmem:[%s2679] sm:$0xf]
      %v2681 = vld [vmem:[%s2679 + $0x4] sm:$0x1]
      %v2682 = vld [vmem:[%s1 + $0x10] sm:$0xf]
      %v2683 = vld [vmem:[%s1 + $0x14] sm:$0xf]
      %v2686 = vunpack.c.l.b16 %v2680
      %v2687 = vunpack.c.l.b16 %v2681
      %v2688 = vpack.c.b16 %v2687, %v2686
      %v2691 = vunpack.c.l.b16 %v2682
      %v2692 = vunpack.c.l.b16 %v2683
      %v2693 = vpack.c.b16 %v2692, %v2691
      %v2696 = vsel %vm198, %v2688, 0
      %2698 = vmatprep.subr.bf16.mxu0 0
      %2699 = vmatpush1.bf16.msra.mxu0 %v2693
      %2700 = vmatprep.subr.bf16.mxu0 0
      %2701 = vmatpush1.bf16.msra.mxu0 0
      %2702 = vmatprep.subr.bf16.mxu0 0
      %2703 = vmatpush1.bf16.msra.mxu0 0
      %2704 = vmatprep.subr.bf16.mxu0 0
      %2705 = vmatpush1.bf16.msra.mxu0 0
      %2706 = vmatprep.subr.bf16.mxu0 0
      %2707 = vmatpush1.bf16.msra.mxu0 0
      %2708 = vmatprep.subr.bf16.mxu0 0
      %2709 = vmatpush1.bf16.msra.mxu0 0
      %2710 = vmatprep.subr.bf16.mxu0 0
      %2711 = vmatpush1.bf16.msra.mxu0 0
      %2712 = vmatprep.subr.bf16.mxu0 0
      %2713 = vmatpush1.bf16.msra.mxu0 0
      %2714 = vmatprep.subr.bf16.mxu0 0
      %2715 = vmatpush1.bf16.msra.mxu0 0
      %2716 = vmatprep.subr.bf16.mxu0 0
      %2717 = vmatpush1.bf16.msra.mxu0 0
      %2718 = vmatprep.subr.bf16.mxu0 0
      %2719 = vmatpush1.bf16.msra.mxu0 0
      %2720 = vmatprep.subr.bf16.mxu0 0
      %2721 = vmatpush1.bf16.msra.mxu0 0
      %2722 = vmatprep.subr.bf16.mxu0 0
      %2723 = vmatpush1.bf16.msra.mxu0 0
      %2724 = vmatprep.subr.bf16.mxu0 0
      %2725 = vmatpush1.bf16.msra.mxu0 0
      %2726 = vmatprep.subr.bf16.mxu0 0
      %2727 = vmatpush1.bf16.msra.mxu0 0
      %2728 = vmatprep.subr.bf16.mxu0 0
      %2729 = vmatpush1.bf16.msra.mxu0 0
      %2730 = vmatprep.mubr.bf16.mxu0 0
      %2731 = vmatmul.mubr.bf16.gmra.mrb[0].mxu0 %v2696
      %v2732 = vpop.f32.mrb[0].mxu0
      %v2733 = vadd.f32 0.0, %v2732
      %v2734 = vpop.f32.mrb[0].mxu0
      %v2735 = vpop.f32.mrb[0].mxu0
      %v2736 = vadd.f32 0.0, %v2735
      %v2737 = vpop.f32.mrb[0].mxu0
      %2738 = vdwg.mxu0
      %v2739 = vadd.f32 %v2673, %v2733
      %v2740 = vadd.f32 %v2676, %v2736
      %v2741 = vld [vmem:[%s2679 + $0x4] sm:$0x3]
      %v2742 = vld [vmem:[%s1 + $0x18] sm:$0xf]
      %v2743 = vld [vmem:[%s1 + $0x1c] sm:$0xf]
      %v2745 = vunpack.c.l.b16 %v2741
      %v2746 = vpack.c.b16 %v2745, %v2686
      %v2748 = vshrl.u32 %v2746, 16
      %v2750 = vshll.u32 %v2746, 16
      %v2752 = vrot.slane %v2750, 1
      %v2753 = vor.u32 %v2748, %v2752
      %v2756 = vunpack.c.l.b16 %v2742
      %v2757 = vunpack.c.l.b16 %v2743
      %v2758 = vpack.c.b16 %v2757, %v2756
      %v2761 = vsel %vm198, %v2753, 0
      %2763 = vmatprep.subr.bf16.mxu0 0
      %2764 = vmatpush1.bf16.msra.mxu0 %v2758
      %2765 = vmatprep.subr.bf16.mxu0 0
      %2766 = vmatpush1.bf16.msra.mxu0 0
      %2767 = vmatprep.subr.bf16.mxu0 0
      %2768 = vmatpush1.bf16.msra.mxu0 0
      %2769 = vmatprep.subr.bf16.mxu0 0
      %2770 = vmatpush1.bf16.msra.mxu0 0
      %2771 = vmatprep.subr.bf16.mxu0 0
      %2772 = vmatpush1.bf16.msra.mxu0 0
      %2773 = vmatprep.subr.bf16.mxu0 0
      %2774 = vmatpush1.bf16.msra.mxu0 0
      %2775 = vmatprep.subr.bf16.mxu0 0
      %2776 = vmatpush1.bf16.msra.mxu0 0
      %2777 = vmatprep.subr.bf16.mxu0 0
      %2778 = vmatpush1.bf16.msra.mxu0 0
      %2779 = vmatprep.subr.bf16.mxu0 0
      %2780 = vmatpush1.bf16.msra.mxu0 0
      %2781 = vmatprep.subr.bf16.mxu0 0
      %2782 = vmatpush1.bf16.msra.mxu0 0
      %2783 = vmatprep.subr.bf16.mxu0 0
      %2784 = vmatpush1.bf16.msra.mxu0 0
      %2785 = vmatprep.subr.bf16.mxu0 0
      %2786 = vmatpush1.bf16.msra.mxu0 0
      %2787 = vmatprep.subr.bf16.mxu0 0
      %2788 = vmatpush1.bf16.msra.mxu0 0
      %2789 = vmatprep.subr.bf16.mxu0 0
      %2790 = vmatpush1.bf16.msra.mxu0 0
      %2791 = vmatprep.subr.bf16.mxu0 0
      %2792 = vmatpush1.bf16.msra.mxu0 0
      %2793 = vmatprep.subr.bf16.mxu0 0
      %2794 = vmatpush1.bf16.msra.mxu0 0
      %2795 = vmatprep.mubr.bf16.mxu0 0
      %2796 = vmatmul.mubr.bf16.gmra.mrb[0].mxu0 %v2761
      %v2797 = vpop.f32.mrb[0].mxu0
      %v2798 = vadd.f32 0.0, %v2797
      %v2799 = vpop.f32.mrb[0].mxu0
      %v2800 = vpop.f32.mrb[0].mxu0
      %v2801 = vadd.f32 0.0, %v2800
      %v2802 = vpop.f32.mrb[0].mxu0
      %2803 = vdwg.mxu0
      %v2804 = vadd.f32 %v2739, %v2798
      %v2805 = vadd.f32 %v2740, %v2801
      %v2806 = vadd.f32 %v2804, %v427
      %v2807 = vadd.f32 %v2805, %v427
      %v2808 = vmax.f32 %v2806, 0.0
      %v2809 = vmax.f32 %v2807, 0.0
      %v2810 = vpack.c.bf16 %v2809, %v2808
      %v2812 = vunpack.c.l.b16 %v2810
      %v2813 = vunpack.c.h.b16 %v2810
      %v2814 = vpack.c.b16 %v2812, %v2812
      %v2815 = vpack.c.b16 %v2813, %v2813
      %s2818 = scalar_lea.vmem %s170, 72
      %2819 = vst.msk [vmem:[%s2818] sm:$0xf] %vm441, %v2814
      %2820 = vst.msk [vmem:[%s2818 + $0x4] sm:$0x1] %vm443, %v2815
      %p2821 = scmp.lt.s32.totalorder %s14, 1
      %s2822 = scalar_select %p2821, %s14, 1
      %s2823 = smul.addr %s2822, 20
      %s2824 = smul.addr %s2823, 4
      %s2825 = scalar_lea.vmem %s3, %s2824
      // Predicated region
      $region33: #{dqn_forward.4} parent=31 // pred_check
        %p2826 = pneg %p100
      $region34: #{dqn_forward.4} parent=31 // pred_check_branch
        %2828 = sbr.rel (%p2826) target = $region36
      $region35: #{dqn_forward.4} parent=31 // pred_region
        _
      $region36: #{dqn_forward.4} parent=31 // pred_fallthru
        _
    $region32: #{dqn_forward.4} parent=5 // pred_fallthru
      _
    %p2829 = scmp.le.s32.totalorder 2, %s9
    // Predicated region
    $region37: #{dqn_forward.4} parent=5 // pred_check
      %p2830 = pneg %p2829
    $region38: #{dqn_forward.4} parent=5 // pred_check_branch
      %2832 = sbr.rel (%p2830) target = $region40
    $region39: #{dqn_forward.4} parent=5 // pred_region
      %s2833 = ssub.s32 %s9, 2
      // Predicated region
      $region41: #{dqn_forward.4} parent=39 // pred_check
        %p2834 = pneg %p106
      $region42: #{dqn_forward.4} parent=39 // pred_check_branch
        %2836 = sbr.rel (%p2834) target = $region44
      $region43: #{dqn_forward.4} parent=39 // pred_region
        %p2837 = scmp.lt.s32.totalorder %s15, 1
        %s2838 = scalar_select %p2837, %s15, 1
        %s2839 = smul.addr %s2838, 20
        %s2840 = smul.addr %s2839, 4
        %s2841 = scalar_lea.vmem %s3, %s2840
      $region44: #{dqn_forward.4} parent=39 // pred_fallthru
        _
    $region40: #{dqn_forward.4} parent=5 // pred_fallthru
      _
  $region6: #{dqn_forward.4} parent=0 // loop_footer
    %s13 = sadd.s32 1, %s9
  $region7: #{dqn_forward.4} parent=0 // loop_footer_branch
    %8 = sbr.rel target = $region3
  $region8: #{dqn_forward.4} parent=0 // loop_exit
    _

</llo_original>
